<compile_context>
chip_gen: v7x
topology: tpu7x:2x2x1
jax: 0.10.0
libtpu: 0.0.40
codegen_flags: <defaults>
</compile_context>

<pallas_src>
from functools import partial

import numpy as np
import jax
import jax.numpy as jnp
from jax.experimental import pallas as pl
from jax.experimental.pallas import tpu as pltpu

EPS = 1e-5
GROUPS = 8


def _aspp_kernel(x_ref, w1_ref, w3_ref, wp_ref, wproj_ref,
                 gamma_ref, beta_ref, pmat_ref, out_ref, xpad_ref,
                 *, H, W, Cin, Cout, rates, maxr):
    HW = H * W
    Hp, Wp = H + 2 * maxr, W + 2 * maxr
    P = pmat_ref[...]                      # (Cout, Cout) 0/1 same-group indicator

    # ---- zero ONLY the halo border of the padded scratch (interior is fully
    # overwritten each step, so no cross-iteration state; safe under "parallel") ----
    zrow = jnp.zeros((maxr, Wp, Cin), xpad_ref.dtype)
    zcol = jnp.zeros((Hp, maxr, Cin), xpad_ref.dtype)
    xpad_ref[0:maxr, :, :] = zrow
    xpad_ref[maxr + H:Hp, :, :] = zrow
    xpad_ref[:, 0:maxr, :] = zcol
    xpad_ref[:, maxr + W:Wp, :] = zcol
    # interior <- input block (bf16 HBM activations -> f32 scratch)
    xpad_ref[maxr:maxr + H, maxr:maxr + W, :] = x_ref[0].astype(xpad_ref.dtype)

    def gn_relu(y, idx):
        # GroupNorm(8) + ReLU on (n, Cout) f32 activations.
        # Centered two-pass variance (avoids E[x^2]-mean^2 cancellation).
        # Group mixing kept as a tiny (1,Cout)x(Cout,Cout) matmul (proven lowering).
        n = y.shape[0]
        cnt = float(n * (Cout // GROUPS))
        mean = jnp.dot(jnp.sum(y, axis=0, keepdims=True), P,
                       preferred_element_type=jnp.float32) / cnt
        yc = y - mean
        var = jnp.dot(jnp.sum(yc * yc, axis=0, keepdims=True), P,
                      preferred_element_type=jnp.float32) / cnt
        inv = jax.lax.rsqrt(var + EPS)
        g = gamma_ref[idx:idx + 1, :]
        b = beta_ref[idx:idx + 1, :]
        return jnp.maximum(yc * inv * g + b, 0.0)

    def bdot(a, b):
        # bf16 MXU operands, f32 accumulation (weights already bf16; astype is a
        # no-op on already-bf16 activations).
        return jnp.dot(a.astype(jnp.bfloat16), b, preferred_element_type=jnp.float32)

    def wproj_chunk(i):
        return wproj_ref[i * Cout:(i + 1) * Cout, :]

    # un-shifted activations straight from the input block (no scratch round trip)
    x = x_ref[0].reshape(HW, Cin)                             # (HW, Cin) bf16
    xm = jnp.mean(x.astype(jnp.float32), axis=0, keepdims=True)   # pooled mean, f32

    # branch 0: 1x1 conv -> GN -> ReLU, folded straight into the projection
    y = gn_relu(bdot(x, w1_ref[...]), 0)
    proj = bdot(y, wproj_chunk(0))

    # branches 1..3: 3x3 dilated conv (padding = dilation) as ONE im2col matmul each.
    # im2col = channel-concat of the nine shifted (H, W, Cin) views + a single
    # leading-dim reshape (no per-patch (HW, Cin) materializations).
    for bi, d in enumerate(rates):
        off = maxr - d
        col = jnp.concatenate(
            [xpad_ref[off + kh * d: off + kh * d + H,
                      off + kw * d: off + kw * d + W, :]
             for kh in range(3) for kw in range(3)],
            axis=-1).reshape(HW, 9 * Cin)                     # (HW, 9*Cin) f32
        y = gn_relu(bdot(col, w3_ref[bi]), bi + 1)
        proj = proj + bdot(y, wproj_chunk(bi + 1))

    # branch 4: global avg pool -> 1x1 conv -> GN -> ReLU.  Its projection
    # contribution is a single (1, Cout) row broadcast-added to proj
    # (bilinear upsample of a 1x1 map with align_corners=False is a pure broadcast).
    yp = gn_relu(bdot(xm, wp_ref[...]), 4)                    # (1, Cout)
    proj = proj + bdot(yp, wproj_chunk(4))                    # broadcasts over HW

    # final projection GN -> ReLU
    # TODO(synk): nn.Dropout(0.1) implemented as eval-mode identity (no RNG here).
    proj = gn_relu(proj, 5)

    # single sublane-splitting reshape + direct 4-D block store (no W-way concat chain)
    out_ref[0] = proj.reshape(H, W, Cout).astype(out_ref.dtype)


def aspp_forward(x_nchw, params, rates):
    B, Cin, H, W = x_nchw.shape
    Cout = params["w1"].shape[1]
    maxr = max(rates)
    Hp, Wp = H + 2 * maxr, W + 2 * maxr

    bf = jnp.bfloat16
    # NCHW -> NHWC on the XLA side; bf16 HBM activations (MXU operands are bf16 anyway)
    x_nhwc = jnp.transpose(x_nchw, (0, 2, 3, 1)).astype(bf)

    kernel = partial(_aspp_kernel, H=H, W=W, Cin=Cin, Cout=Cout,
                     rates=tuple(rates), maxr=maxr)

    out = pl.pallas_call(
        kernel,
        out_shape=jax.ShapeDtypeStruct((B, H, W, Cout), jnp.float32),
        grid=(B,),
        in_specs=[
            pl.BlockSpec((1, H, W, Cin), lambda b: (b, 0, 0, 0)),         # x (bf16, unpadded)
            pl.BlockSpec((Cin, Cout), lambda b: (0, 0)),                  # w1 (bf16)
            pl.BlockSpec((3, 9 * Cin, Cout), lambda b: (0, 0, 0)),        # w3 im2col weights
            pl.BlockSpec((Cin, Cout), lambda b: (0, 0)),                  # wp (pool branch)
            pl.BlockSpec((5 * Cout, Cout), lambda b: (0, 0)),             # wproj
            pl.BlockSpec((6, Cout), lambda b: (0, 0)),                    # GN gammas
            pl.BlockSpec((6, Cout), lambda b: (0, 0)),                    # GN betas
            pl.BlockSpec((Cout, Cout), lambda b: (0, 0)),                 # group indicator
        ],
        out_specs=pl.BlockSpec((1, H, W, Cout), lambda b: (b, 0, 0, 0)),
        scratch_shapes=[pltpu.VMEM((Hp, Wp, Cin), jnp.float32)],          # padded image
        compiler_params=pltpu.CompilerParams(dimension_semantics=("parallel",)),
    )(x_nhwc,
      params["w1"].astype(bf), params["w3"].astype(bf),
      params["wp"].astype(bf), params["wproj"].astype(bf),
      params["gamma"], params["beta"], params["pmat"])

    return jnp.transpose(out, (0, 3, 1, 2))            # back to NCHW, f32


def aspp_reference(x_nchw, params, rates):
    """Pure-JAX f32 reference (same math, NHWC convs) for validation."""
    x = jnp.transpose(x_nchw, (0, 2, 3, 1))
    B, H, W, Cin = x.shape
    Cout = params["w1"].shape[1]
    dn = ("NHWC", "HWIO", "NHWC")
    hp = jax.lax.Precision.HIGHEST

    def gn_relu(y, idx):
        B_, H_, W_, C = y.shape
        cg = C // GROUPS
        yg = y.reshape(B_, H_, W_, GROUPS, cg)
        mean = yg.mean(axis=(1, 2, 4), keepdims=True)
        var = yg.var(axis=(1, 2, 4), keepdims=True)
        yn = ((yg - mean) / jnp.sqrt(var + EPS)).reshape(B_, H_, W_, C)
        return jnp.maximum(yn * params["gamma"][idx] + params["beta"][idx], 0.0)

    w3 = params["w3"].reshape(3, 3, 3, Cin, Cout)       # (branch, kh, kw, ci, co)
    outs = []
    y0 = jax.lax.conv_general_dilated(x, params["w1"].reshape(1, 1, Cin, Cout),
                                      (1, 1), "VALID", dimension_numbers=dn,
                                      precision=hp)
    outs.append(gn_relu(y0, 0))
    for bi, d in enumerate(rates):
        yk = jax.lax.conv_general_dilated(x, w3[bi], (1, 1), [(d, d), (d, d)],
                                          rhs_dilation=(d, d),
                                          dimension_numbers=dn, precision=hp)
        outs.append(gn_relu(yk, bi + 1))
    xm = x.mean(axis=(1, 2), keepdims=True)
    yp = jax.lax.conv_general_dilated(xm, params["wp"].reshape(1, 1, Cin, Cout),
                                      (1, 1), "VALID", dimension_numbers=dn,
                                      precision=hp)
    yp = gn_relu(yp, 4)
    outs.append(jnp.broadcast_to(yp, (B, H, W, Cout)))
    cat = jnp.concatenate(outs, axis=-1)
    proj = jax.lax.conv_general_dilated(cat, params["wproj"].reshape(1, 1, 5 * Cout, Cout),
                                        (1, 1), "VALID", dimension_numbers=dn,
                                        precision=hp)
    proj = gn_relu(proj, 5)
    return jnp.transpose(proj, (0, 3, 1, 2))


if __name__ == "__main__":
    B, Cin, H, W = 2, 16, 16, 16
    Cout = 32                      # aspp_channel (must be divisible by 8)
    rates = (1, 2, 3)              # atrous_rates

    key = jax.random.PRNGKey(0)
    ks = jax.random.split(key, 7)
    params = {
        "w1":    jax.random.normal(ks[0], (Cin, Cout), jnp.float32) * 0.1,
        "w3":    jax.random.normal(ks[1], (3, 9 * Cin, Cout), jnp.float32) * 0.1,
        "wp":    jax.random.normal(ks[2], (Cin, Cout), jnp.float32) * 0.1,
        "wproj": jax.random.normal(ks[3], (5 * Cout, Cout), jnp.float32) * 0.1,
        "gamma": 1.0 + 0.1 * jax.random.normal(ks[4], (6, Cout), jnp.float32),
        "beta":  0.1 * jax.random.normal(ks[5], (6, Cout), jnp.float32),
    }
    cg = Cout // GROUPS
    gidx = jnp.arange(Cout) // cg
    params["pmat"] = (gidx[:, None] == gidx[None, :]).astype(jnp.float32)

    x = jax.random.normal(ks[6], (B, Cin, H, W), jnp.float32)

    out = aspp_forward(x, params, rates)
    out = jax.block_until_ready(out)
    assert out.shape == (B, Cout, H, W)

    ref = aspp_reference(x, params, rates)
    # Kernel uses bf16 MXU operands and bf16 HBM-side activations (f32 accumulation,
    # f32 GN statistics); reference is pure f32/HIGHEST, so tolerances are relaxed.
    err = np.abs(np.asarray(out) - np.asarray(ref))
    assert float(err.mean()) < 1.5e-2, float(err.mean())
    np.testing.assert_allclose(np.asarray(out), np.asarray(ref),
                               rtol=5e-2, atol=5e-2)
    print("KERNEL_OK")
</pallas_src>

<mosaic_0001>
module attributes {stable_mosaic.version = 11 : i64} {
  func.func @_aspp_kernel(%arg0: i32, %arg1: memref<1x16x16x16xbf16, #tpu.memory_space<vmem>>, %arg2: memref<16x32xbf16, #tpu.memory_space<vmem>>, %arg3: memref<3x144x32xbf16, #tpu.memory_space<vmem>>, %arg4: memref<16x32xbf16, #tpu.memory_space<vmem>>, %arg5: memref<160x32xbf16, #tpu.memory_space<vmem>>, %arg6: memref<6x32xf32, #tpu.memory_space<vmem>>, %arg7: memref<6x32xf32, #tpu.memory_space<vmem>>, %arg8: memref<32x32xf32, #tpu.memory_space<vmem>>, %arg9: memref<1x16x16x32xf32, #tpu.memory_space<vmem>>, %arg10: memref<22x22x16xf32, #tpu.memory_space<vmem>>) attributes {dimension_semantics = [#tpu.dimension_semantics<parallel>], iteration_bounds = array<i64: 2>, scalar_prefetch = 0 : i64, scratch_operands = 1 : i64, tpu.core_type = #tpu.core_type<tc>, window_params = [{transform_indices = @transform_0, window_bounds = array<i64: 1, 16, 16, 16>}, {pipeline_mode = #tpu.pipeline_mode<synchronous>, transform_indices = @transform_1, window_bounds = array<i64: 16, 32>}, {pipeline_mode = #tpu.pipeline_mode<synchronous>, transform_indices = @transform_2, window_bounds = array<i64: 3, 144, 32>}, {pipeline_mode = #tpu.pipeline_mode<synchronous>, transform_indices = @transform_3, window_bounds = array<i64: 16, 32>}, {pipeline_mode = #tpu.pipeline_mode<synchronous>, transform_indices = @transform_4, window_bounds = array<i64: 160, 32>}, {pipeline_mode = #tpu.pipeline_mode<synchronous>, transform_indices = @transform_5, window_bounds = array<i64: 6, 32>}, {pipeline_mode = #tpu.pipeline_mode<synchronous>, transform_indices = @transform_6, window_bounds = array<i64: 6, 32>}, {pipeline_mode = #tpu.pipeline_mode<synchronous>, transform_indices = @transform_7, window_bounds = array<i64: 32, 32>}, {transform_indices = @transform_8, window_bounds = array<i64: 1, 16, 16, 32>}]} {
    %c0 = arith.constant 0 : index
    %c0_0 = arith.constant 0 : index
    %0 = vector.load %arg8[%c0, %c0_0] : memref<32x32xf32, #tpu.memory_space<vmem>>, vector<32x32xf32>
    %cst = arith.constant 0.000000e+00 : f32
    %1 = vector.broadcast %cst : f32 to vector<3x22x16xf32>
    %cst_1 = arith.constant 0.000000e+00 : f32
    %2 = vector.broadcast %cst_1 : f32 to vector<22x3x16xf32>
    %c0_2 = arith.constant 0 : index
    %c0_3 = arith.constant 0 : index
    %c0_4 = arith.constant 0 : index
    %3 = vector.load %arg10[%c0_2, %c0_3, %c0_4] : memref<22x22x16xf32, #tpu.memory_space<vmem>>, vector<3x22x16xf32>
    tpu.vector_store %arg10[%c0_2, %c0_3, %c0_4], %1 {strides = array<i32>} : memref<22x22x16xf32, #tpu.memory_space<vmem>>, vector<3x22x16xf32>,
    %c19 = arith.constant 19 : index
    %c0_5 = arith.constant 0 : index
    %c0_6 = arith.constant 0 : index
    %4 = vector.load %arg10[%c19, %c0_5, %c0_6] : memref<22x22x16xf32, #tpu.memory_space<vmem>>, vector<3x22x16xf32>
    tpu.vector_store %arg10[%c19, %c0_5, %c0_6], %1 {strides = array<i32>} : memref<22x22x16xf32, #tpu.memory_space<vmem>>, vector<3x22x16xf32>,
    %c0_7 = arith.constant 0 : index
    %c0_8 = arith.constant 0 : index
    %c0_9 = arith.constant 0 : index
    %5 = vector.load %arg10[%c0_7, %c0_8, %c0_9] : memref<22x22x16xf32, #tpu.memory_space<vmem>>, vector<22x3x16xf32>
    tpu.vector_store %arg10[%c0_7, %c0_8, %c0_9], %2 {strides = array<i32>} : memref<22x22x16xf32, #tpu.memory_space<vmem>>, vector<22x3x16xf32>,
    %c0_10 = arith.constant 0 : index
    %c19_11 = arith.constant 19 : index
    %c0_12 = arith.constant 0 : index
    %6 = vector.load %arg10[%c0_10, %c19_11, %c0_12] : memref<22x22x16xf32, #tpu.memory_space<vmem>>, vector<22x3x16xf32>
    tpu.vector_store %arg10[%c0_10, %c19_11, %c0_12], %2 {strides = array<i32>} : memref<22x22x16xf32, #tpu.memory_space<vmem>>, vector<22x3x16xf32>,
    %c0_13 = arith.constant 0 : index
    %c0_14 = arith.constant 0 : index
    %c0_15 = arith.constant 0 : index
    %c0_16 = arith.constant 0 : index
    %7 = vector.load %arg1[%c0_13, %c0_14, %c0_15, %c0_16] : memref<1x16x16x16xbf16, #tpu.memory_space<vmem>>, vector<1x16x16x16xbf16>
    %8 = vector.shape_cast %7 : vector<1x16x16x16xbf16> to vector<16x16x16xbf16>
    %9 = arith.extf %8 : vector<16x16x16xbf16> to vector<16x16x16xf32>
    %c3 = arith.constant 3 : index
    %c3_17 = arith.constant 3 : index
    %c0_18 = arith.constant 0 : index
    %10 = vector.load %arg10[%c3, %c3_17, %c0_18] : memref<22x22x16xf32, #tpu.memory_space<vmem>>, vector<16x16x16xf32>
    tpu.vector_store %arg10[%c3, %c3_17, %c0_18], %9 {strides = array<i32>} : memref<22x22x16xf32, #tpu.memory_space<vmem>>, vector<16x16x16xf32>,
    %c0_19 = arith.constant 0 : index
    %c0_20 = arith.constant 0 : index
    %c0_21 = arith.constant 0 : index
    %c0_22 = arith.constant 0 : index
    %11 = vector.load %arg1[%c0_19, %c0_20, %c0_21, %c0_22] : memref<1x16x16x16xbf16, #tpu.memory_space<vmem>>, vector<1x16x16x16xbf16>
    %12 = vector.shape_cast %11 : vector<1x16x16x16xbf16> to vector<16x16x16xbf16>
    %13 = vector.shape_cast %12 : vector<16x16x16xbf16> to vector<256x16xbf16>
    %14 = arith.extf %13 : vector<256x16xbf16> to vector<256x16xf32>
    %cst_23 = arith.constant dense<0.000000e+00> : vector<16xf32>
    %15 = vector.multi_reduction <add>, %14, %cst_23 [0] : vector<256x16xf32> to vector<16xf32>
    %16 = vector.shape_cast %15 : vector<16xf32> to vector<1x16xf32>
    %cst_24 = arith.constant 2.560000e+02 : f32
    %17 = vector.broadcast %cst_24 : f32 to vector<1x16xf32>
    %18 = arith.divf %16, %17 : vector<1x16xf32>
    %c0_25 = arith.constant 0 : index
    %c0_26 = arith.constant 0 : index
    %19 = vector.load %arg2[%c0_25, %c0_26] : memref<16x32xbf16, #tpu.memory_space<vmem>>, vector<16x32xbf16>
    %cst_27 = arith.constant dense<0.000000e+00> : vector<256x32xf32>
    %20 = tpu.matmul %13, %19, %cst_27 {dimension_numbers = #tpu.dot_dimension_numbers<[1], [0], [0], [1], [0, 0, 1, 1], [], []>} : vector<256x16xbf16>, vector<16x32xbf16>, vector<256x32xf32> -> vector<256x32xf32>
    %cst_28 = arith.constant dense<0.000000e+00> : vector<32xf32>
    %21 = vector.multi_reduction <add>, %20, %cst_28 [0] : vector<256x32xf32> to vector<32xf32>
    %22 = vector.shape_cast %21 : vector<32xf32> to vector<1x32xf32>
    %cst_29 = arith.constant dense<0.000000e+00> : vector<1x32xf32>
    %23 = tpu.matmul %22, %0, %cst_29 {dimension_numbers = #tpu.dot_dimension_numbers<[1], [0], [0], [1], [0, 0, 1, 1], [], []>} : vector<1x32xf32>, vector<32x32xf32>, vector<1x32xf32> -> vector<1x32xf32>
    %cst_30 = arith.constant 1.024000e+03 : f32
    %24 = vector.broadcast %cst_30 : f32 to vector<1x32xf32>
    %25 = arith.divf %23, %24 : vector<1x32xf32>
    %26 = vector.broadcast %25 : vector<1x32xf32> to vector<256x32xf32>
    %27 = arith.subf %20, %26 : vector<256x32xf32>
    %28 = arith.mulf %27, %27 : vector<256x32xf32>
    %cst_31 = arith.constant dense<0.000000e+00> : vector<32xf32>
    %29 = vector.multi_reduction <add>, %28, %cst_31 [0] : vector<256x32xf32> to vector<32xf32>
    %30 = vector.shape_cast %29 : vector<32xf32> to vector<1x32xf32>
    %cst_32 = arith.constant dense<0.000000e+00> : vector<1x32xf32>
    %31 = tpu.matmul %30, %0, %cst_32 {dimension_numbers = #tpu.dot_dimension_numbers<[1], [0], [0], [1], [0, 0, 1, 1], [], []>} : vector<1x32xf32>, vector<32x32xf32>, vector<1x32xf32> -> vector<1x32xf32>
    %cst_33 = arith.constant 1.024000e+03 : f32
    %32 = vector.broadcast %cst_33 : f32 to vector<1x32xf32>
    %33 = arith.divf %31, %32 : vector<1x32xf32>
    %cst_34 = arith.constant 9.99999974E-6 : f32
    %34 = vector.broadcast %cst_34 : f32 to vector<1x32xf32>
    %35 = arith.addf %33, %34 : vector<1x32xf32>
    %36 = math.rsqrt %35 : vector<1x32xf32>
    %c0_35 = arith.constant 0 : index
    %c0_36 = arith.constant 0 : index
    %37 = vector.load %arg6[%c0_35, %c0_36] : memref<6x32xf32, #tpu.memory_space<vmem>>, vector<1x32xf32>
    %c0_37 = arith.constant 0 : index
    %c0_38 = arith.constant 0 : index
    %38 = vector.load %arg7[%c0_37, %c0_38] : memref<6x32xf32, #tpu.memory_space<vmem>>, vector<1x32xf32>
    %39 = vector.broadcast %36 : vector<1x32xf32> to vector<256x32xf32>
    %40 = arith.mulf %27, %39 : vector<256x32xf32>
    %41 = vector.broadcast %37 : vector<1x32xf32> to vector<256x32xf32>
    %42 = arith.mulf %40, %41 : vector<256x32xf32>
    %43 = vector.broadcast %38 : vector<1x32xf32> to vector<256x32xf32>
    %44 = arith.addf %42, %43 : vector<256x32xf32>
    %cst_39 = arith.constant 0.000000e+00 : f32
    %45 = vector.broadcast %cst_39 : f32 to vector<256x32xf32>
    %46 = arith.maximumf %44, %45 : vector<256x32xf32>
    %c0_40 = arith.constant 0 : index
    %c0_41 = arith.constant 0 : index
    %47 = vector.load %arg5[%c0_40, %c0_41] : memref<160x32xbf16, #tpu.memory_space<vmem>>, vector<32x32xbf16>
    %48 = arith.truncf %46 : vector<256x32xf32> to vector<256x32xbf16>
    %cst_42 = arith.constant dense<0.000000e+00> : vector<256x32xf32>
    %49 = tpu.matmul %48, %47, %cst_42 {dimension_numbers = #tpu.dot_dimension_numbers<[1], [0], [0], [1], [0, 0, 1, 1], [], []>} : vector<256x32xbf16>, vector<32x32xbf16>, vector<256x32xf32> -> vector<256x32xf32>
    %c2 = arith.constant 2 : index
    %c2_43 = arith.constant 2 : index
    %c0_44 = arith.constant 0 : index
    %50 = vector.load %arg10[%c2, %c2_43, %c0_44] : memref<22x22x16xf32, #tpu.memory_space<vmem>>, vector<16x16x16xf32>
    %c2_45 = arith.constant 2 : index
    %c3_46 = arith.constant 3 : index
    %c0_47 = arith.constant 0 : index
    %51 = vector.load %arg10[%c2_45, %c3_46, %c0_47] : memref<22x22x16xf32, #tpu.memory_space<vmem>>, vector<16x16x16xf32>
    %c2_48 = arith.constant 2 : index
    %c4 = arith.constant 4 : index
    %c0_49 = arith.constant 0 : index
    %52 = vector.load %arg10[%c2_48, %c4, %c0_49] : memref<22x22x16xf32, #tpu.memory_space<vmem>>, vector<16x16x16xf32>
    %c3_50 = arith.constant 3 : index
    %c2_51 = arith.constant 2 : index
    %c0_52 = arith.constant 0 : index
    %53 = vector.load %arg10[%c3_50, %c2_51, %c0_52] : memref<22x22x16xf32, #tpu.memory_space<vmem>>, vector<16x16x16xf32>
    %c3_53 = arith.constant 3 : index
    %c3_54 = arith.constant 3 : index
    %c0_55 = arith.constant 0 : index
    %54 = vector.load %arg10[%c3_53, %c3_54, %c0_55] : memref<22x22x16xf32, #tpu.memory_space<vmem>>, vector<16x16x16xf32>
    %c3_56 = arith.constant 3 : index
    %c4_57 = arith.constant 4 : index
    %c0_58 = arith.constant 0 : index
    %55 = vector.load %arg10[%c3_56, %c4_57, %c0_58] : memref<22x22x16xf32, #tpu.memory_space<vmem>>, vector<16x16x16xf32>
    %c4_59 = arith.constant 4 : index
    %c2_60 = arith.constant 2 : index
    %c0_61 = arith.constant 0 : index
    %56 = vector.load %arg10[%c4_59, %c2_60, %c0_61] : memref<22x22x16xf32, #tpu.memory_space<vmem>>, vector<16x16x16xf32>
    %c4_62 = arith.constant 4 : index
    %c3_63 = arith.constant 3 : index
    %c0_64 = arith.constant 0 : index
    %57 = vector.load %arg10[%c4_62, %c3_63, %c0_64] : memref<22x22x16xf32, #tpu.memory_space<vmem>>, vector<16x16x16xf32>
    %c4_65 = arith.constant 4 : index
    %c4_66 = arith.constant 4 : index
    %c0_67 = arith.constant 0 : index
    %58 = vector.load %arg10[%c4_65, %c4_66, %c0_67] : memref<22x22x16xf32, #tpu.memory_space<vmem>>, vector<16x16x16xf32>
    %59 = tpu.concatenate %50, %51, %52, %53, %54, %55, %56, %57, %58 in 2 : vector<16x16x16xf32>, vector<16x16x16xf32>, vector<16x16x16xf32>, vector<16x16x16xf32>, vector<16x16x16xf32>, vector<16x16x16xf32>, vector<16x16x16xf32>, vector<16x16x16xf32>, vector<16x16x16xf32> -> vector<16x16x144xf32>
    %60 = vector.shape_cast %59 : vector<16x16x144xf32> to vector<256x144xf32>
    %c0_68 = arith.constant 0 : index
    %c0_69 = arith.constant 0 : index
    %c0_70 = arith.constant 0 : index
    %61 = vector.load %arg3[%c0_68, %c0_69, %c0_70] : memref<3x144x32xbf16, #tpu.memory_space<vmem>>, vector<1x144x32xbf16>
    %62 = vector.shape_cast %61 : vector<1x144x32xbf16> to vector<144x32xbf16>
    %63 = arith.truncf %60 : vector<256x144xf32> to vector<256x144xbf16>
    %cst_71 = arith.constant dense<0.000000e+00> : vector<256x32xf32>
    %64 = tpu.matmul %63, %62, %cst_71 {dimension_numbers = #tpu.dot_dimension_numbers<[1], [0], [0], [1], [0, 0, 1, 1], [], []>} : vector<256x144xbf16>, vector<144x32xbf16>, vector<256x32xf32> -> vector<256x32xf32>
    %cst_72 = arith.constant dense<0.000000e+00> : vector<32xf32>
    %65 = vector.multi_reduction <add>, %64, %cst_72 [0] : vector<256x32xf32> to vector<32xf32>
    %66 = vector.shape_cast %65 : vector<32xf32> to vector<1x32xf32>
    %cst_73 = arith.constant dense<0.000000e+00> : vector<1x32xf32>
    %67 = tpu.matmul %66, %0, %cst_73 {dimension_numbers = #tpu.dot_dimension_numbers<[1], [0], [0], [1], [0, 0, 1, 1], [], []>} : vector<1x32xf32>, vector<32x32xf32>, vector<1x32xf32> -> vector<1x32xf32>
    %cst_74 = arith.constant 1.024000e+03 : f32
    %68 = vector.broadcast %cst_74 : f32 to vector<1x32xf32>
    %69 = arith.divf %67, %68 : vector<1x32xf32>
    %70 = vector.broadcast %69 : vector<1x32xf32> to vector<256x32xf32>
    %71 = arith.subf %64, %70 : vector<256x32xf32>
    %72 = arith.mulf %71, %71 : vector<256x32xf32>
    %cst_75 = arith.constant dense<0.000000e+00> : vector<32xf32>
    %73 = vector.multi_reduction <add>, %72, %cst_75 [0] : vector<256x32xf32> to vector<32xf32>
    %74 = vector.shape_cast %73 : vector<32xf32> to vector<1x32xf32>
    %cst_76 = arith.constant dense<0.000000e+00> : vector<1x32xf32>
    %75 = tpu.matmul %74, %0, %cst_76 {dimension_numbers = #tpu.dot_dimension_numbers<[1], [0], [0], [1], [0, 0, 1, 1], [], []>} : vector<1x32xf32>, vector<32x32xf32>, vector<1x32xf32> -> vector<1x32xf32>
    %cst_77 = arith.constant 1.024000e+03 : f32
    %76 = vector.broadcast %cst_77 : f32 to vector<1x32xf32>
    %77 = arith.divf %75, %76 : vector<1x32xf32>
    %cst_78 = arith.constant 9.99999974E-6 : f32
    %78 = vector.broadcast %cst_78 : f32 to vector<1x32xf32>
    %79 = arith.addf %77, %78 : vector<1x32xf32>
    %80 = math.rsqrt %79 : vector<1x32xf32>
    %c1 = arith.constant 1 : index
    %c0_79 = arith.constant 0 : index
    %81 = vector.load %arg6[%c1, %c0_79] : memref<6x32xf32, #tpu.memory_space<vmem>>, vector<1x32xf32>
    %c1_80 = arith.constant 1 : index
    %c0_81 = arith.constant 0 : index
    %82 = vector.load %arg7[%c1_80, %c0_81] : memref<6x32xf32, #tpu.memory_space<vmem>>, vector<1x32xf32>
    %83 = vector.broadcast %80 : vector<1x32xf32> to vector<256x32xf32>
    %84 = arith.mulf %71, %83 : vector<256x32xf32>
    %85 = vector.broadcast %81 : vector<1x32xf32> to vector<256x32xf32>
    %86 = arith.mulf %84, %85 : vector<256x32xf32>
    %87 = vector.broadcast %82 : vector<1x32xf32> to vector<256x32xf32>
    %88 = arith.addf %86, %87 : vector<256x32xf32>
    %cst_82 = arith.constant 0.000000e+00 : f32
    %89 = vector.broadcast %cst_82 : f32 to vector<256x32xf32>
    %90 = arith.maximumf %88, %89 : vector<256x32xf32>
    %c32 = arith.constant 32 : index
    %c0_83 = arith.constant 0 : index
    %91 = vector.load %arg5[%c32, %c0_83] : memref<160x32xbf16, #tpu.memory_space<vmem>>, vector<32x32xbf16>
    %92 = arith.truncf %90 : vector<256x32xf32> to vector<256x32xbf16>
    %cst_84 = arith.constant dense<0.000000e+00> : vector<256x32xf32>
    %93 = tpu.matmul %92, %91, %cst_84 {dimension_numbers = #tpu.dot_dimension_numbers<[1], [0], [0], [1], [0, 0, 1, 1], [], []>} : vector<256x32xbf16>, vector<32x32xbf16>, vector<256x32xf32> -> vector<256x32xf32>
    %94 = arith.addf %49, %93 : vector<256x32xf32>
    %c1_85 = arith.constant 1 : index
    %c1_86 = arith.constant 1 : index
    %c0_87 = arith.constant 0 : index
    %95 = vector.load %arg10[%c1_85, %c1_86, %c0_87] : memref<22x22x16xf32, #tpu.memory_space<vmem>>, vector<16x16x16xf32>
    %c1_88 = arith.constant 1 : index
    %c3_89 = arith.constant 3 : index
    %c0_90 = arith.constant 0 : index
    %96 = vector.load %arg10[%c1_88, %c3_89, %c0_90] : memref<22x22x16xf32, #tpu.memory_space<vmem>>, vector<16x16x16xf32>
    %c1_91 = arith.constant 1 : index
    %c5 = arith.constant 5 : index
    %c0_92 = arith.constant 0 : index
    %97 = vector.load %arg10[%c1_91, %c5, %c0_92] : memref<22x22x16xf32, #tpu.memory_space<vmem>>, vector<16x16x16xf32>
    %c3_93 = arith.constant 3 : index
    %c1_94 = arith.constant 1 : index
    %c0_95 = arith.constant 0 : index
    %98 = vector.load %arg10[%c3_93, %c1_94, %c0_95] : memref<22x22x16xf32, #tpu.memory_space<vmem>>, vector<16x16x16xf32>
    %c3_96 = arith.constant 3 : index
    %c3_97 = arith.constant 3 : index
    %c0_98 = arith.constant 0 : index
    %99 = vector.load %arg10[%c3_96, %c3_97, %c0_98] : memref<22x22x16xf32, #tpu.memory_space<vmem>>, vector<16x16x16xf32>
    %c3_99 = arith.constant 3 : index
    %c5_100 = arith.constant 5 : index
    %c0_101 = arith.constant 0 : index
    %100 = vector.load %arg10[%c3_99, %c5_100, %c0_101] : memref<22x22x16xf32, #tpu.memory_space<vmem>>, vector<16x16x16xf32>
    %c5_102 = arith.constant 5 : index
    %c1_103 = arith.constant 1 : index
    %c0_104 = arith.constant 0 : index
    %101 = vector.load %arg10[%c5_102, %c1_103, %c0_104] : memref<22x22x16xf32, #tpu.memory_space<vmem>>, vector<16x16x16xf32>
    %c5_105 = arith.constant 5 : index
    %c3_106 = arith.constant 3 : index
    %c0_107 = arith.constant 0 : index
    %102 = vector.load %arg10[%c5_105, %c3_106, %c0_107] : memref<22x22x16xf32, #tpu.memory_space<vmem>>, vector<16x16x16xf32>
    %c5_108 = arith.constant 5 : index
    %c5_109 = arith.constant 5 : index
    %c0_110 = arith.constant 0 : index
    %103 = vector.load %arg10[%c5_108, %c5_109, %c0_110] : memref<22x22x16xf32, #tpu.memory_space<vmem>>, vector<16x16x16xf32>
    %104 = tpu.concatenate %95, %96, %97, %98, %99, %100, %101, %102, %103 in 2 : vector<16x16x16xf32>, vector<16x16x16xf32>, vector<16x16x16xf32>, vector<16x16x16xf32>, vector<16x16x16xf32>, vector<16x16x16xf32>, vector<16x16x16xf32>, vector<16x16x16xf32>, vector<16x16x16xf32> -> vector<16x16x144xf32>
    %105 = vector.shape_cast %104 : vector<16x16x144xf32> to vector<256x144xf32>
    %c1_111 = arith.constant 1 : index
    %c0_112 = arith.constant 0 : index
    %c0_113 = arith.constant 0 : index
    %106 = vector.load %arg3[%c1_111, %c0_112, %c0_113] : memref<3x144x32xbf16, #tpu.memory_space<vmem>>, vector<1x144x32xbf16>
    %107 = vector.shape_cast %106 : vector<1x144x32xbf16> to vector<144x32xbf16>
    %108 = arith.truncf %105 : vector<256x144xf32> to vector<256x144xbf16>
    %cst_114 = arith.constant dense<0.000000e+00> : vector<256x32xf32>
    %109 = tpu.matmul %108, %107, %cst_114 {dimension_numbers = #tpu.dot_dimension_numbers<[1], [0], [0], [1], [0, 0, 1, 1], [], []>} : vector<256x144xbf16>, vector<144x32xbf16>, vector<256x32xf32> -> vector<256x32xf32>
    %cst_115 = arith.constant dense<0.000000e+00> : vector<32xf32>
    %110 = vector.multi_reduction <add>, %109, %cst_115 [0] : vector<256x32xf32> to vector<32xf32>
    %111 = vector.shape_cast %110 : vector<32xf32> to vector<1x32xf32>
    %cst_116 = arith.constant dense<0.000000e+00> : vector<1x32xf32>
    %112 = tpu.matmul %111, %0, %cst_116 {dimension_numbers = #tpu.dot_dimension_numbers<[1], [0], [0], [1], [0, 0, 1, 1], [], []>} : vector<1x32xf32>, vector<32x32xf32>, vector<1x32xf32> -> vector<1x32xf32>
    %cst_117 = arith.constant 1.024000e+03 : f32
    %113 = vector.broadcast %cst_117 : f32 to vector<1x32xf32>
    %114 = arith.divf %112, %113 : vector<1x32xf32>
    %115 = vector.broadcast %114 : vector<1x32xf32> to vector<256x32xf32>
    %116 = arith.subf %109, %115 : vector<256x32xf32>
    %117 = arith.mulf %116, %116 : vector<256x32xf32>
    %cst_118 = arith.constant dense<0.000000e+00> : vector<32xf32>
    %118 = vector.multi_reduction <add>, %117, %cst_118 [0] : vector<256x32xf32> to vector<32xf32>
    %119 = vector.shape_cast %118 : vector<32xf32> to vector<1x32xf32>
    %cst_119 = arith.constant dense<0.000000e+00> : vector<1x32xf32>
    %120 = tpu.matmul %119, %0, %cst_119 {dimension_numbers = #tpu.dot_dimension_numbers<[1], [0], [0], [1], [0, 0, 1, 1], [], []>} : vector<1x32xf32>, vector<32x32xf32>, vector<1x32xf32> -> vector<1x32xf32>
    %cst_120 = arith.constant 1.024000e+03 : f32
    %121 = vector.broadcast %cst_120 : f32 to vector<1x32xf32>
    %122 = arith.divf %120, %121 : vector<1x32xf32>
    %cst_121 = arith.constant 9.99999974E-6 : f32
    %123 = vector.broadcast %cst_121 : f32 to vector<1x32xf32>
    %124 = arith.addf %122, %123 : vector<1x32xf32>
    %125 = math.rsqrt %124 : vector<1x32xf32>
    %c2_122 = arith.constant 2 : index
    %c0_123 = arith.constant 0 : index
    %126 = vector.load %arg6[%c2_122, %c0_123] : memref<6x32xf32, #tpu.memory_space<vmem>>, vector<1x32xf32>
    %c2_124 = arith.constant 2 : index
    %c0_125 = arith.constant 0 : index
    %127 = vector.load %arg7[%c2_124, %c0_125] : memref<6x32xf32, #tpu.memory_space<vmem>>, vector<1x32xf32>
    %128 = vector.broadcast %125 : vector<1x32xf32> to vector<256x32xf32>
    %129 = arith.mulf %116, %128 : vector<256x32xf32>
    %130 = vector.broadcast %126 : vector<1x32xf32> to vector<256x32xf32>
    %131 = arith.mulf %129, %130 : vector<256x32xf32>
    %132 = vector.broadcast %127 : vector<1x32xf32> to vector<256x32xf32>
    %133 = arith.addf %131, %132 : vector<256x32xf32>
    %cst_126 = arith.constant 0.000000e+00 : f32
    %134 = vector.broadcast %cst_126 : f32 to vector<256x32xf32>
    %135 = arith.maximumf %133, %134 : vector<256x32xf32>
    %c64 = arith.constant 64 : index
    %c0_127 = arith.constant 0 : index
    %136 = vector.load %arg5[%c64, %c0_127] : memref<160x32xbf16, #tpu.memory_space<vmem>>, vector<32x32xbf16>
    %137 = arith.truncf %135 : vector<256x32xf32> to vector<256x32xbf16>
    %cst_128 = arith.constant dense<0.000000e+00> : vector<256x32xf32>
    %138 = tpu.matmul %137, %136, %cst_128 {dimension_numbers = #tpu.dot_dimension_numbers<[1], [0], [0], [1], [0, 0, 1, 1], [], []>} : vector<256x32xbf16>, vector<32x32xbf16>, vector<256x32xf32> -> vector<256x32xf32>
    %139 = arith.addf %94, %138 : vector<256x32xf32>
    %c0_129 = arith.constant 0 : index
    %c0_130 = arith.constant 0 : index
    %c0_131 = arith.constant 0 : index
    %140 = vector.load %arg10[%c0_129, %c0_130, %c0_131] : memref<22x22x16xf32, #tpu.memory_space<vmem>>, vector<16x16x16xf32>
    %c0_132 = arith.constant 0 : index
    %c3_133 = arith.constant 3 : index
    %c0_134 = arith.constant 0 : index
    %141 = vector.load %arg10[%c0_132, %c3_133, %c0_134] : memref<22x22x16xf32, #tpu.memory_space<vmem>>, vector<16x16x16xf32>
    %c0_135 = arith.constant 0 : index
    %c6 = arith.constant 6 : index
    %c0_136 = arith.constant 0 : index
    %142 = vector.load %arg10[%c0_135, %c6, %c0_136] : memref<22x22x16xf32, #tpu.memory_space<vmem>>, vector<16x16x16xf32>
    %c3_137 = arith.constant 3 : index
    %c0_138 = arith.constant 0 : index
    %c0_139 = arith.constant 0 : index
    %143 = vector.load %arg10[%c3_137, %c0_138, %c0_139] : memref<22x22x16xf32, #tpu.memory_space<vmem>>, vector<16x16x16xf32>
    %c3_140 = arith.constant 3 : index
    %c3_141 = arith.constant 3 : index
    %c0_142 = arith.constant 0 : index
    %144 = vector.load %arg10[%c3_140, %c3_141, %c0_142] : memref<22x22x16xf32, #tpu.memory_space<vmem>>, vector<16x16x16xf32>
    %c3_143 = arith.constant 3 : index
    %c6_144 = arith.constant 6 : index
    %c0_145 = arith.constant 0 : index
    %145 = vector.load %arg10[%c3_143, %c6_144, %c0_145] : memref<22x22x16xf32, #tpu.memory_space<vmem>>, vector<16x16x16xf32>
    %c6_146 = arith.constant 6 : index
    %c0_147 = arith.constant 0 : index
    %c0_148 = arith.constant 0 : index
    %146 = vector.load %arg10[%c6_146, %c0_147, %c0_148] : memref<22x22x16xf32, #tpu.memory_space<vmem>>, vector<16x16x16xf32>
    %c6_149 = arith.constant 6 : index
    %c3_150 = arith.constant 3 : index
    %c0_151 = arith.constant 0 : index
    %147 = vector.load %arg10[%c6_149, %c3_150, %c0_151] : memref<22x22x16xf32, #tpu.memory_space<vmem>>, vector<16x16x16xf32>
    %c6_152 = arith.constant 6 : index
    %c6_153 = arith.constant 6 : index
    %c0_154 = arith.constant 0 : index
    %148 = vector.load %arg10[%c6_152, %c6_153, %c0_154] : memref<22x22x16xf32, #tpu.memory_space<vmem>>, vector<16x16x16xf32>
    %149 = tpu.concatenate %140, %141, %142, %143, %144, %145, %146, %147, %148 in 2 : vector<16x16x16xf32>, vector<16x16x16xf32>, vector<16x16x16xf32>, vector<16x16x16xf32>, vector<16x16x16xf32>, vector<16x16x16xf32>, vector<16x16x16xf32>, vector<16x16x16xf32>, vector<16x16x16xf32> -> vector<16x16x144xf32>
    %150 = vector.shape_cast %149 : vector<16x16x144xf32> to vector<256x144xf32>
    %c2_155 = arith.constant 2 : index
    %c0_156 = arith.constant 0 : index
    %c0_157 = arith.constant 0 : index
    %151 = vector.load %arg3[%c2_155, %c0_156, %c0_157] : memref<3x144x32xbf16, #tpu.memory_space<vmem>>, vector<1x144x32xbf16>
    %152 = vector.shape_cast %151 : vector<1x144x32xbf16> to vector<144x32xbf16>
    %153 = arith.truncf %150 : vector<256x144xf32> to vector<256x144xbf16>
    %cst_158 = arith.constant dense<0.000000e+00> : vector<256x32xf32>
    %154 = tpu.matmul %153, %152, %cst_158 {dimension_numbers = #tpu.dot_dimension_numbers<[1], [0], [0], [1], [0, 0, 1, 1], [], []>} : vector<256x144xbf16>, vector<144x32xbf16>, vector<256x32xf32> -> vector<256x32xf32>
    %cst_159 = arith.constant dense<0.000000e+00> : vector<32xf32>
    %155 = vector.multi_reduction <add>, %154, %cst_159 [0] : vector<256x32xf32> to vector<32xf32>
    %156 = vector.shape_cast %155 : vector<32xf32> to vector<1x32xf32>
    %cst_160 = arith.constant dense<0.000000e+00> : vector<1x32xf32>
    %157 = tpu.matmul %156, %0, %cst_160 {dimension_numbers = #tpu.dot_dimension_numbers<[1], [0], [0], [1], [0, 0, 1, 1], [], []>} : vector<1x32xf32>, vector<32x32xf32>, vector<1x32xf32> -> vector<1x32xf32>
    %cst_161 = arith.constant 1.024000e+03 : f32
    %158 = vector.broadcast %cst_161 : f32 to vector<1x32xf32>
    %159 = arith.divf %157, %158 : vector<1x32xf32>
    %160 = vector.broadcast %159 : vector<1x32xf32> to vector<256x32xf32>
    %161 = arith.subf %154, %160 : vector<256x32xf32>
    %162 = arith.mulf %161, %161 : vector<256x32xf32>
    %cst_162 = arith.constant dense<0.000000e+00> : vector<32xf32>
    %163 = vector.multi_reduction <add>, %162, %cst_162 [0] : vector<256x32xf32> to vector<32xf32>
    %164 = vector.shape_cast %163 : vector<32xf32> to vector<1x32xf32>
    %cst_163 = arith.constant dense<0.000000e+00> : vector<1x32xf32>
    %165 = tpu.matmul %164, %0, %cst_163 {dimension_numbers = #tpu.dot_dimension_numbers<[1], [0], [0], [1], [0, 0, 1, 1], [], []>} : vector<1x32xf32>, vector<32x32xf32>, vector<1x32xf32> -> vector<1x32xf32>
    %cst_164 = arith.constant 1.024000e+03 : f32
    %166 = vector.broadcast %cst_164 : f32 to vector<1x32xf32>
    %167 = arith.divf %165, %166 : vector<1x32xf32>
    %cst_165 = arith.constant 9.99999974E-6 : f32
    %168 = vector.broadcast %cst_165 : f32 to vector<1x32xf32>
    %169 = arith.addf %167, %168 : vector<1x32xf32>
    %170 = math.rsqrt %169 : vector<1x32xf32>
    %c3_166 = arith.constant 3 : index
    %c0_167 = arith.constant 0 : index
    %171 = vector.load %arg6[%c3_166, %c0_167] : memref<6x32xf32, #tpu.memory_space<vmem>>, vector<1x32xf32>
    %c3_168 = arith.constant 3 : index
    %c0_169 = arith.constant 0 : index
    %172 = vector.load %arg7[%c3_168, %c0_169] : memref<6x32xf32, #tpu.memory_space<vmem>>, vector<1x32xf32>
    %173 = vector.broadcast %170 : vector<1x32xf32> to vector<256x32xf32>
    %174 = arith.mulf %161, %173 : vector<256x32xf32>
    %175 = vector.broadcast %171 : vector<1x32xf32> to vector<256x32xf32>
    %176 = arith.mulf %174, %175 : vector<256x32xf32>
    %177 = vector.broadcast %172 : vector<1x32xf32> to vector<256x32xf32>
    %178 = arith.addf %176, %177 : vector<256x32xf32>
    %cst_170 = arith.constant 0.000000e+00 : f32
    %179 = vector.broadcast %cst_170 : f32 to vector<256x32xf32>
    %180 = arith.maximumf %178, %179 : vector<256x32xf32>
    %c96 = arith.constant 96 : index
    %c0_171 = arith.constant 0 : index
    %181 = vector.load %arg5[%c96, %c0_171] : memref<160x32xbf16, #tpu.memory_space<vmem>>, vector<32x32xbf16>
    %182 = arith.truncf %180 : vector<256x32xf32> to vector<256x32xbf16>
    %cst_172 = arith.constant dense<0.000000e+00> : vector<256x32xf32>
    %183 = tpu.matmul %182, %181, %cst_172 {dimension_numbers = #tpu.dot_dimension_numbers<[1], [0], [0], [1], [0, 0, 1, 1], [], []>} : vector<256x32xbf16>, vector<32x32xbf16>, vector<256x32xf32> -> vector<256x32xf32>
    %184 = arith.addf %139, %183 : vector<256x32xf32>
    %c0_173 = arith.constant 0 : index
    %c0_174 = arith.constant 0 : index
    %185 = vector.load %arg4[%c0_173, %c0_174] : memref<16x32xbf16, #tpu.memory_space<vmem>>, vector<16x32xbf16>
    %186 = arith.truncf %18 : vector<1x16xf32> to vector<1x16xbf16>
    %cst_175 = arith.constant dense<0.000000e+00> : vector<1x32xf32>
    %187 = tpu.matmul %186, %185, %cst_175 {dimension_numbers = #tpu.dot_dimension_numbers<[1], [0], [0], [1], [0, 0, 1, 1], [], []>} : vector<1x16xbf16>, vector<16x32xbf16>, vector<1x32xf32> -> vector<1x32xf32>
    %cst_176 = arith.constant dense<0.000000e+00> : vector<32xf32>
    %188 = vector.multi_reduction <add>, %187, %cst_176 [0] : vector<1x32xf32> to vector<32xf32>
    %189 = vector.shape_cast %188 : vector<32xf32> to vector<1x32xf32>
    %cst_177 = arith.constant dense<0.000000e+00> : vector<1x32xf32>
    %190 = tpu.matmul %189, %0, %cst_177 {dimension_numbers = #tpu.dot_dimension_numbers<[1], [0], [0], [1], [0, 0, 1, 1], [], []>} : vector<1x32xf32>, vector<32x32xf32>, vector<1x32xf32> -> vector<1x32xf32>
    %cst_178 = arith.constant 4.000000e+00 : f32
    %191 = vector.broadcast %cst_178 : f32 to vector<1x32xf32>
    %192 = arith.divf %190, %191 : vector<1x32xf32>
    %193 = arith.subf %187, %192 : vector<1x32xf32>
    %194 = arith.mulf %193, %193 : vector<1x32xf32>
    %cst_179 = arith.constant dense<0.000000e+00> : vector<32xf32>
    %195 = vector.multi_reduction <add>, %194, %cst_179 [0] : vector<1x32xf32> to vector<32xf32>
    %196 = vector.shape_cast %195 : vector<32xf32> to vector<1x32xf32>
    %cst_180 = arith.constant dense<0.000000e+00> : vector<1x32xf32>
    %197 = tpu.matmul %196, %0, %cst_180 {dimension_numbers = #tpu.dot_dimension_numbers<[1], [0], [0], [1], [0, 0, 1, 1], [], []>} : vector<1x32xf32>, vector<32x32xf32>, vector<1x32xf32> -> vector<1x32xf32>
    %cst_181 = arith.constant 4.000000e+00 : f32
    %198 = vector.broadcast %cst_181 : f32 to vector<1x32xf32>
    %199 = arith.divf %197, %198 : vector<1x32xf32>
    %cst_182 = arith.constant 9.99999974E-6 : f32
    %200 = vector.broadcast %cst_182 : f32 to vector<1x32xf32>
    %201 = arith.addf %199, %200 : vector<1x32xf32>
    %202 = math.rsqrt %201 : vector<1x32xf32>
    %c4_183 = arith.constant 4 : index
    %c0_184 = arith.constant 0 : index
    %203 = vector.load %arg6[%c4_183, %c0_184] : memref<6x32xf32, #tpu.memory_space<vmem>>, vector<1x32xf32>
    %c4_185 = arith.constant 4 : index
    %c0_186 = arith.constant 0 : index
    %204 = vector.load %arg7[%c4_185, %c0_186] : memref<6x32xf32, #tpu.memory_space<vmem>>, vector<1x32xf32>
    %205 = arith.mulf %193, %202 : vector<1x32xf32>
    %206 = arith.mulf %205, %203 : vector<1x32xf32>
    %207 = arith.addf %206, %204 : vector<1x32xf32>
    %cst_187 = arith.constant 0.000000e+00 : f32
    %208 = vector.broadcast %cst_187 : f32 to vector<1x32xf32>
    %209 = arith.maximumf %207, %208 : vector<1x32xf32>
    %c128 = arith.constant 128 : index
    %c0_188 = arith.constant 0 : index
    %210 = vector.load %arg5[%c128, %c0_188] : memref<160x32xbf16, #tpu.memory_space<vmem>>, vector<32x32xbf16>
    %211 = arith.truncf %209 : vector<1x32xf32> to vector<1x32xbf16>
    %cst_189 = arith.constant dense<0.000000e+00> : vector<1x32xf32>
    %212 = tpu.matmul %211, %210, %cst_189 {dimension_numbers = #tpu.dot_dimension_numbers<[1], [0], [0], [1], [0, 0, 1, 1], [], []>} : vector<1x32xbf16>, vector<32x32xbf16>, vector<1x32xf32> -> vector<1x32xf32>
    %213 = vector.broadcast %212 : vector<1x32xf32> to vector<256x32xf32>
    %214 = arith.addf %184, %213 : vector<256x32xf32>
    %cst_190 = arith.constant dense<0.000000e+00> : vector<32xf32>
    %215 = vector.multi_reduction <add>, %214, %cst_190 [0] : vector<256x32xf32> to vector<32xf32>
    %216 = vector.shape_cast %215 : vector<32xf32> to vector<1x32xf32>
    %cst_191 = arith.constant dense<0.000000e+00> : vector<1x32xf32>
    %217 = tpu.matmul %216, %0, %cst_191 {dimension_numbers = #tpu.dot_dimension_numbers<[1], [0], [0], [1], [0, 0, 1, 1], [], []>} : vector<1x32xf32>, vector<32x32xf32>, vector<1x32xf32> -> vector<1x32xf32>
    %cst_192 = arith.constant 1.024000e+03 : f32
    %218 = vector.broadcast %cst_192 : f32 to vector<1x32xf32>
    %219 = arith.divf %217, %218 : vector<1x32xf32>
    %220 = vector.broadcast %219 : vector<1x32xf32> to vector<256x32xf32>
    %221 = arith.subf %214, %220 : vector<256x32xf32>
    %222 = arith.mulf %221, %221 : vector<256x32xf32>
    %cst_193 = arith.constant dense<0.000000e+00> : vector<32xf32>
    %223 = vector.multi_reduction <add>, %222, %cst_193 [0] : vector<256x32xf32> to vector<32xf32>
    %224 = vector.shape_cast %223 : vector<32xf32> to vector<1x32xf32>
    %cst_194 = arith.constant dense<0.000000e+00> : vector<1x32xf32>
    %225 = tpu.matmul %224, %0, %cst_194 {dimension_numbers = #tpu.dot_dimension_numbers<[1], [0], [0], [1], [0, 0, 1, 1], [], []>} : vector<1x32xf32>, vector<32x32xf32>, vector<1x32xf32> -> vector<1x32xf32>
    %cst_195 = arith.constant 1.024000e+03 : f32
    %226 = vector.broadcast %cst_195 : f32 to vector<1x32xf32>
    %227 = arith.divf %225, %226 : vector<1x32xf32>
    %cst_196 = arith.constant 9.99999974E-6 : f32
    %228 = vector.broadcast %cst_196 : f32 to vector<1x32xf32>
    %229 = arith.addf %227, %228 : vector<1x32xf32>
    %230 = math.rsqrt %229 : vector<1x32xf32>
    %c5_197 = arith.constant 5 : index
    %c0_198 = arith.constant 0 : index
    %231 = vector.load %arg6[%c5_197, %c0_198] : memref<6x32xf32, #tpu.memory_space<vmem>>, vector<1x32xf32>
    %c5_199 = arith.constant 5 : index
    %c0_200 = arith.constant 0 : index
    %232 = vector.load %arg7[%c5_199, %c0_200] : memref<6x32xf32, #tpu.memory_space<vmem>>, vector<1x32xf32>
    %233 = vector.broadcast %230 : vector<1x32xf32> to vector<256x32xf32>
    %234 = arith.mulf %221, %233 : vector<256x32xf32>
    %235 = vector.broadcast %231 : vector<1x32xf32> to vector<256x32xf32>
    %236 = arith.mulf %234, %235 : vector<256x32xf32>
    %237 = vector.broadcast %232 : vector<1x32xf32> to vector<256x32xf32>
    %238 = arith.addf %236, %237 : vector<256x32xf32>
    %cst_201 = arith.constant 0.000000e+00 : f32
    %239 = vector.broadcast %cst_201 : f32 to vector<256x32xf32>
    %240 = arith.maximumf %238, %239 : vector<256x32xf32>
    %241 = vector.shape_cast %240 : vector<256x32xf32> to vector<16x16x32xf32>
    %c0_202 = arith.constant 0 : index
    %c0_203 = arith.constant 0 : index
    %c0_204 = arith.constant 0 : index
    %c0_205 = arith.constant 0 : index
    %242 = vector.load %arg9[%c0_202, %c0_203, %c0_204, %c0_205] : memref<1x16x16x32xf32, #tpu.memory_space<vmem>>, vector<1x16x16x32xf32>
    %243 = vector.shape_cast %242 : vector<1x16x16x32xf32> to vector<16x16x32xf32>
    %244 = vector.shape_cast %241 : vector<16x16x32xf32> to vector<1x16x16x32xf32>
    tpu.vector_store %arg9[%c0_202, %c0_203, %c0_204, %c0_205], %244 {strides = array<i32>} : memref<1x16x16x32xf32, #tpu.memory_space<vmem>>, vector<1x16x16x32xf32>,
    return
  }
  func.func @transform_0(%arg0: i32) -> (i32, i32, i32, i32) {
    %c0_i32 = arith.constant 0 : i32
    %c0_i32_0 = arith.constant 0 : i32
    %c0_i32_1 = arith.constant 0 : i32
    %c0_i32_2 = arith.constant 0 : i32
    return %arg0, %c0_i32, %c0_i32_0, %c0_i32_1 : i32, i32, i32, i32
  }
  func.func @transform_1(%arg0: i32) -> (i32, i32) {
    %c0_i32 = arith.constant 0 : i32
    %c0_i32_0 = arith.constant 0 : i32
    %c0_i32_1 = arith.constant 0 : i32
    return %c0_i32, %c0_i32_0 : i32, i32
  }
  func.func @transform_2(%arg0: i32) -> (i32, i32, i32) {
    %c0_i32 = arith.constant 0 : i32
    %c0_i32_0 = arith.constant 0 : i32
    %c0_i32_1 = arith.constant 0 : i32
    %c0_i32_2 = arith.constant 0 : i32
    return %c0_i32, %c0_i32_0, %c0_i32_1 : i32, i32, i32
  }
  func.func @transform_3(%arg0: i32) -> (i32, i32) {
    %c0_i32 = arith.constant 0 : i32
    %c0_i32_0 = arith.constant 0 : i32
    %c0_i32_1 = arith.constant 0 : i32
    return %c0_i32, %c0_i32_0 : i32, i32
  }
  func.func @transform_4(%arg0: i32) -> (i32, i32) {
    %c0_i32 = arith.constant 0 : i32
    %c0_i32_0 = arith.constant 0 : i32
    %c0_i32_1 = arith.constant 0 : i32
    return %c0_i32, %c0_i32_0 : i32, i32
  }
  func.func @transform_5(%arg0: i32) -> (i32, i32) {
    %c0_i32 = arith.constant 0 : i32
    %c0_i32_0 = arith.constant 0 : i32
    %c0_i32_1 = arith.constant 0 : i32
    return %c0_i32, %c0_i32_0 : i32, i32
  }
  func.func @transform_6(%arg0: i32) -> (i32, i32) {
    %c0_i32 = arith.constant 0 : i32
    %c0_i32_0 = arith.constant 0 : i32
    %c0_i32_1 = arith.constant 0 : i32
    return %c0_i32, %c0_i32_0 : i32, i32
  }
  func.func @transform_7(%arg0: i32) -> (i32, i32) {
    %c0_i32 = arith.constant 0 : i32
    %c0_i32_0 = arith.constant 0 : i32
    %c0_i32_1 = arith.constant 0 : i32
    return %c0_i32, %c0_i32_0 : i32, i32
  }
  func.func @transform_8(%arg0: i32) -> (i32, i32, i32, i32) {
    %c0_i32 = arith.constant 0 : i32
    %c0_i32_0 = arith.constant 0 : i32
    %c0_i32_1 = arith.constant 0 : i32
    %c0_i32_2 = arith.constant 0 : i32
    return %arg0, %c0_i32, %c0_i32_0, %c0_i32_1 : i32, i32, i32, i32
  }
}

</mosaic_0001>

<llo_original>
// kernel: tpu_custom_call.1
$region0: #{tpu_custom_call.1}
  #allocation0 [shape = 'u32[]', space=smem, size = 0x4, offset = 0x4, fixed_abs, tag = 'smem constant byte address 0x4 - core index']
  #allocation1 [shape = 'u32[144,128]{1,0:T(1,128)}', space=vmem, size = 0x12000, scoped, tag = 'internal scratch']
  #allocation2 [shape = 'f32[22,22,16]{2,1,0:T(8,128)}', space=vmem, size = 0x42000, scoped, tag = 'scratch operand']
  %s0 = inlined_call_operand.vmem [shape: bf16[2,16,16,16], index: 0, kind: input, shape index: {}]
  %s1 = inlined_call_operand.vmem [shape: bf16[16,32], index: 1, kind: input, shape index: {}]
  %s2 = inlined_call_operand.vmem [shape: bf16[3,144,32], index: 2, kind: input, shape index: {}]
  %s3 = inlined_call_operand.vmem [shape: bf16[16,32], index: 3, kind: input, shape index: {}]
  %s4 = inlined_call_operand.vmem [shape: bf16[160,32], index: 4, kind: input, shape index: {}]
  %s5 = inlined_call_operand.vmem [shape: f32[6,32], index: 5, kind: input, shape index: {}]
  %s6 = inlined_call_operand.vmem [shape: f32[6,32], index: 6, kind: input, shape index: {}]
  %s7 = inlined_call_operand.vmem [shape: f32[32,32], index: 7, kind: input, shape index: {}]
  %s8 = inlined_call_operand.hbm [shape: f32[2,16,16,32], index: 8, kind: output, shape index: {}]
  %s9 = sld [smem:[#allocation0]]
  $region65: #{tpu_custom_call.1} parent=0
    _
  %s11 = ssub.s32 1, %s9
  %s12 = scalar_select 0, %s11, %s9
  $region1: #{tpu_custom_call.1} parent=0
    #allocation3 [shape = 'u8[262144]{0}', space=vmem, size = 0x40000, scoped, tag = 'output window, operand 0']
    #allocation4 [shape = 's32[2]{0}', space=sflag, size = 0x8, scoped, tag = 'scoped memory for tpu_custom_call.1']
    %13 = vsyncpa [#allocation4], 0
    %s14 = scalar_lea.sflag [#allocation4], 1
    %15 = vsyncpa %s14, 0
    loop: start=0, step=1, limit=4
    $region2: #{tpu_custom_call.1} parent=1 // loop_pre_header
      _
    $region3: #{tpu_custom_call.1} parent=1 // loop_header
      %s17 = sphi 0, %s21
      %p18 = scmp.ge.s32.totalorder %s17, 4
      %s27 = sphi 0, %s29
      %s30 = sphi 0, %s27
      %s31 = sphi 0, %s30
      %s47 = sphi 0, %s31
      %s51 = sphi 0, %s51
      %s53 = sphi 0, %s51
      %s54 = sphi 0, %s53
      %s68 = sphi 0, %s54
      %s72 = sphi 0, %s72
      %s74 = sphi 0, %s72
      %s75 = sphi 0, %s74
      %s89 = sphi 0, %s75
      %s93 = sphi 0, %s93
      %s95 = sphi 0, %s93
      %s96 = sphi 0, %s95
      %s110 = sphi 0, %s96
      %s114 = sphi 0, %s114
      %s116 = sphi 0, %s114
      %s117 = sphi 0, %s116
      %s131 = sphi 0, %s117
      %s135 = sphi 0, %s135
      %s137 = sphi 0, %s135
      %s138 = sphi 0, %s137
      %s152 = sphi 0, %s138
      %s156 = sphi 0, %s156
      %s158 = sphi 0, %s156
      %s159 = sphi 0, %s158
      %s173 = sphi 0, %s159
      %s177 = sphi 0, %s177
      %s179 = sphi 0, %s177
      %s180 = sphi 0, %s179
      %s194 = sphi 0, %s180
      %s200 = sphi 0, %s202
      %s203 = sphi 0, %s200
      %s204 = sphi 0, %s203
      %s220 = sphi 0, %s204
    $region4: #{tpu_custom_call.1} parent=1 // loop_header_branch
      %20 = sbr.rel (%p18) target = $region8
    $region5: #{tpu_custom_call.1} parent=1 // loop_body
      %s22 = ssub.s32 %s17, 1
      %s23 = ssub.s32 %s17, 2
      %s24 = sadd.s32 %s17, 1
      %s25 = ssub.s32 %s17, %s24
      %p26 = scmp.eq.s32.totalorder %s25, 0
      %s28 = sadd.s32 %s27, 1
      %s29 = scalar_select %p26, %s27, %s28
      %p32 = pneg %p26
      %p33 = scmp.eq.s32.totalorder %s17, 1
      %p34 = por %p32, %p33
      %p35 = scmp.ne.s32.totalorder %s27, %s30
      %p36 = scmp.eq.s32.totalorder %s17, 0
      %p37 = por %p35, %p36
      %p38 = scmp.ne.s32.totalorder %s27, %s30
      %p39 = scmp.eq.s32.totalorder %s22, 1
      %p40 = por %p38, %p39
      %p41 = scmp.ne.s32.totalorder %s30, %s31
      %p42 = scmp.eq.s32.totalorder %s22, 0
      %p43 = por %p41, %p42
      %p44 = scmp.ne.s32.totalorder %s30, %s31
      %p45 = scmp.eq.s32.totalorder %s23, 1
      %p46 = por %p44, %p45
      %p48 = scmp.ne.s32.totalorder %s31, %s47
      %p49 = scmp.eq.s32.totalorder %s23, 0
      %p50 = por %p48, %p49
      %s52 = sadd.s32 %s51, 1
      %p55 = scmp.eq.s32.totalorder %s17, 1
      %p56 = scmp.ne.s32.totalorder %s51, %s53
      %p57 = scmp.eq.s32.totalorder %s17, 0
      %p58 = por %p56, %p57
      %p59 = scmp.ne.s32.totalorder %s51, %s53
      %p60 = scmp.eq.s32.totalorder %s22, 1
      %p61 = por %p59, %p60
      %p62 = scmp.ne.s32.totalorder %s53, %s54
      %p63 = scmp.eq.s32.totalorder %s22, 0
      %p64 = por %p62, %p63
      %p65 = scmp.ne.s32.totalorder %s53, %s54
      %p66 = scmp.eq.s32.totalorder %s23, 1
      %p67 = por %p65, %p66
      %p69 = scmp.ne.s32.totalorder %s54, %s68
      %p70 = scmp.eq.s32.totalorder %s23, 0
      %p71 = por %p69, %p70
      %s73 = sadd.s32 %s72, 1
      %p76 = scmp.eq.s32.totalorder %s17, 1
      %p77 = scmp.ne.s32.totalorder %s72, %s74
      %p78 = scmp.eq.s32.totalorder %s17, 0
      %p79 = por %p77, %p78
      %p80 = scmp.ne.s32.totalorder %s72, %s74
      %p81 = scmp.eq.s32.totalorder %s22, 1
      %p82 = por %p80, %p81
      %p83 = scmp.ne.s32.totalorder %s74, %s75
      %p84 = scmp.eq.s32.totalorder %s22, 0
      %p85 = por %p83, %p84
      %p86 = scmp.ne.s32.totalorder %s74, %s75
      %p87 = scmp.eq.s32.totalorder %s23, 1
      %p88 = por %p86, %p87
      %p90 = scmp.ne.s32.totalorder %s75, %s89
      %p91 = scmp.eq.s32.totalorder %s23, 0
      %p92 = por %p90, %p91
      %s94 = sadd.s32 %s93, 1
      %p97 = scmp.eq.s32.totalorder %s17, 1
      %p98 = scmp.ne.s32.totalorder %s93, %s95
      %p99 = scmp.eq.s32.totalorder %s17, 0
      %p100 = por %p98, %p99
      %p101 = scmp.ne.s32.totalorder %s93, %s95
      %p102 = scmp.eq.s32.totalorder %s22, 1
      %p103 = por %p101, %p102
      %p104 = scmp.ne.s32.totalorder %s95, %s96
      %p105 = scmp.eq.s32.totalorder %s22, 0
      %p106 = por %p104, %p105
      %p107 = scmp.ne.s32.totalorder %s95, %s96
      %p108 = scmp.eq.s32.totalorder %s23, 1
      %p109 = por %p107, %p108
      %p111 = scmp.ne.s32.totalorder %s96, %s110
      %p112 = scmp.eq.s32.totalorder %s23, 0
      %p113 = por %p111, %p112
      %s115 = sadd.s32 %s114, 1
      %p118 = scmp.eq.s32.totalorder %s17, 1
      %p119 = scmp.ne.s32.totalorder %s114, %s116
      %p120 = scmp.eq.s32.totalorder %s17, 0
      %p121 = por %p119, %p120
      %p122 = scmp.ne.s32.totalorder %s114, %s116
      %p123 = scmp.eq.s32.totalorder %s22, 1
      %p124 = por %p122, %p123
      %p125 = scmp.ne.s32.totalorder %s116, %s117
      %p126 = scmp.eq.s32.totalorder %s22, 0
      %p127 = por %p125, %p126
      %p128 = scmp.ne.s32.totalorder %s116, %s117
      %p129 = scmp.eq.s32.totalorder %s23, 1
      %p130 = por %p128, %p129
      %p132 = scmp.ne.s32.totalorder %s117, %s131
      %p133 = scmp.eq.s32.totalorder %s23, 0
      %p134 = por %p132, %p133
      %s136 = sadd.s32 %s135, 1
      %p139 = scmp.eq.s32.totalorder %s17, 1
      %p140 = scmp.ne.s32.totalorder %s135, %s137
      %p141 = scmp.eq.s32.totalorder %s17, 0
      %p142 = por %p140, %p141
      %p143 = scmp.ne.s32.totalorder %s135, %s137
      %p144 = scmp.eq.s32.totalorder %s22, 1
      %p145 = por %p143, %p144
      %p146 = scmp.ne.s32.totalorder %s137, %s138
      %p147 = scmp.eq.s32.totalorder %s22, 0
      %p148 = por %p146, %p147
      %p149 = scmp.ne.s32.totalorder %s137, %s138
      %p150 = scmp.eq.s32.totalorder %s23, 1
      %p151 = por %p149, %p150
      %p153 = scmp.ne.s32.totalorder %s138, %s152
      %p154 = scmp.eq.s32.totalorder %s23, 0
      %p155 = por %p153, %p154
      %s157 = sadd.s32 %s156, 1
      %p160 = scmp.eq.s32.totalorder %s17, 1
      %p161 = scmp.ne.s32.totalorder %s156, %s158
      %p162 = scmp.eq.s32.totalorder %s17, 0
      %p163 = por %p161, %p162
      %p164 = scmp.ne.s32.totalorder %s156, %s158
      %p165 = scmp.eq.s32.totalorder %s22, 1
      %p166 = por %p164, %p165
      %p167 = scmp.ne.s32.totalorder %s158, %s159
      %p168 = scmp.eq.s32.totalorder %s22, 0
      %p169 = por %p167, %p168
      %p170 = scmp.ne.s32.totalorder %s158, %s159
      %p171 = scmp.eq.s32.totalorder %s23, 1
      %p172 = por %p170, %p171
      %p174 = scmp.ne.s32.totalorder %s159, %s173
      %p175 = scmp.eq.s32.totalorder %s23, 0
      %p176 = por %p174, %p175
      %s178 = sadd.s32 %s177, 1
      %p181 = scmp.eq.s32.totalorder %s17, 1
      %p182 = scmp.ne.s32.totalorder %s177, %s179
      %p183 = scmp.eq.s32.totalorder %s17, 0
      %p184 = por %p182, %p183
      %p185 = scmp.ne.s32.totalorder %s177, %s179
      %p186 = scmp.eq.s32.totalorder %s22, 1
      %p187 = por %p185, %p186
      %p188 = scmp.ne.s32.totalorder %s179, %s180
      %p189 = scmp.eq.s32.totalorder %s22, 0
      %p190 = por %p188, %p189
      %p191 = scmp.ne.s32.totalorder %s179, %s180
      %p192 = scmp.eq.s32.totalorder %s23, 1
      %p193 = por %p191, %p192
      %p195 = scmp.ne.s32.totalorder %s180, %s194
      %p196 = scmp.eq.s32.totalorder %s23, 0
      %p197 = por %p195, %p196
      %s198 = ssub.s32 %s17, %s24
      %p199 = scmp.eq.s32.totalorder %s198, 0
      %s201 = sadd.s32 %s200, 1
      %s202 = scalar_select %p199, %s200, %s201
      %p205 = pneg %p199
      %p206 = scmp.eq.s32.totalorder %s17, 1
      %p207 = por %p205, %p206
      %p208 = scmp.ne.s32.totalorder %s200, %s203
      %p209 = scmp.eq.s32.totalorder %s17, 0
      %p210 = por %p208, %p209
      %p211 = scmp.ne.s32.totalorder %s200, %s203
      %p212 = scmp.eq.s32.totalorder %s22, 1
      %p213 = por %p211, %p212
      %p214 = scmp.ne.s32.totalorder %s203, %s204
      %p215 = scmp.eq.s32.totalorder %s22, 0
      %p216 = por %p214, %p215
      %p217 = scmp.ne.s32.totalorder %s203, %s204
      %p218 = scmp.eq.s32.totalorder %s23, 1
      %p219 = por %p217, %p218
      %p221 = scmp.ne.s32.totalorder %s204, %s220
      %p222 = scmp.eq.s32.totalorder %s23, 0
      %p223 = por %p221, %p222
      %p224 = scmp.le.s32.totalorder 1, %s17
      %p225 = scmp.lt.s32.totalorder %s17, 3
      %p226 = pnand %p224, %p225
      %p227 = pneg %p226
      // Predicated region
      $region9: #{tpu_custom_call.1} parent=5 // pred_check
        _
      $region10: #{tpu_custom_call.1} parent=5 // pred_check_branch
        %229 = sbr.rel (%p226) target = $region12
      $region11: #{tpu_custom_call.1} parent=5 // pred_region
        %s230 = ssub.s32 %s17, 1
        // Predicated region
        $region13: #{tpu_custom_call.1} parent=11 // pred_check
          %p231 = pneg %p64
        $region14: #{tpu_custom_call.1} parent=11 // pred_check_branch
          %233 = sbr.rel (%p231) target = $region16
        $region15: #{tpu_custom_call.1} parent=11 // pred_region
          _
        $region16: #{tpu_custom_call.1} parent=11 // pred_fallthru
          _
        // Predicated region
        $region17: #{tpu_custom_call.1} parent=11 // pred_check
          %p234 = pneg %p85
        $region18: #{tpu_custom_call.1} parent=11 // pred_check_branch
          %236 = sbr.rel (%p234) target = $region20
        $region19: #{tpu_custom_call.1} parent=11 // pred_region
          _
        $region20: #{tpu_custom_call.1} parent=11 // pred_fallthru
          _
        // Predicated region
        $region21: #{tpu_custom_call.1} parent=11 // pred_check
          %p237 = pneg %p106
        $region22: #{tpu_custom_call.1} parent=11 // pred_check_branch
          %239 = sbr.rel (%p237) target = $region24
        $region23: #{tpu_custom_call.1} parent=11 // pred_region
          _
        $region24: #{tpu_custom_call.1} parent=11 // pred_fallthru
          _
        // Predicated region
        $region25: #{tpu_custom_call.1} parent=11 // pred_check
          %p240 = pneg %p127
        $region26: #{tpu_custom_call.1} parent=11 // pred_check_branch
          %242 = sbr.rel (%p240) target = $region28
        $region27: #{tpu_custom_call.1} parent=11 // pred_region
          _
        $region28: #{tpu_custom_call.1} parent=11 // pred_fallthru
          _
        // Predicated region
        $region29: #{tpu_custom_call.1} parent=11 // pred_check
          %p243 = pneg %p148
        $region30: #{tpu_custom_call.1} parent=11 // pred_check_branch
          %245 = sbr.rel (%p243) target = $region32
        $region31: #{tpu_custom_call.1} parent=11 // pred_region
          _
        $region32: #{tpu_custom_call.1} parent=11 // pred_fallthru
          _
        // Predicated region
        $region33: #{tpu_custom_call.1} parent=11 // pred_check
          %p246 = pneg %p169
        $region34: #{tpu_custom_call.1} parent=11 // pred_check_branch
          %248 = sbr.rel (%p246) target = $region36
        $region35: #{tpu_custom_call.1} parent=11 // pred_region
          _
        $region36: #{tpu_custom_call.1} parent=11 // pred_fallthru
          _
        // Predicated region
        $region37: #{tpu_custom_call.1} parent=11 // pred_check
          %p249 = pneg %p190
        $region38: #{tpu_custom_call.1} parent=11 // pred_check_branch
          %251 = sbr.rel (%p249) target = $region40
        $region39: #{tpu_custom_call.1} parent=11 // pred_region
          _
        $region40: #{tpu_custom_call.1} parent=11 // pred_fallthru
          _
      $region12: #{tpu_custom_call.1} parent=5 // pred_fallthru
        _
      %p252 = scmp.lt.s32.totalorder %s17, 2
      // Predicated region
      $region41: #{tpu_custom_call.1} parent=5 // pred_check
        %p253 = pneg %p252
      $region42: #{tpu_custom_call.1} parent=5 // pred_check_branch
        %255 = sbr.rel (%p253) target = $region44
      $region43: #{tpu_custom_call.1} parent=5 // pred_region
        // Predicated region
        $region45: #{tpu_custom_call.1} parent=43 // pred_check
          %p256 = pneg %p37
        $region46: #{tpu_custom_call.1} parent=43 // pred_check_branch
          %258 = sbr.rel (%p256) target = $region48
        $region47: #{tpu_custom_call.1} parent=43 // pred_region
          %p259 = scmp.lt.s32.totalorder %s17, 1
          %s260 = scalar_select %p259, %s17, 1
          %s261 = smul.addr %s260, 32
          %s262 = smul.addr %s261, 4
          %s263 = scalar_lea.vmem %s0, %s262
        $region48: #{tpu_custom_call.1} parent=43 // pred_fallthru
          _
      $region44: #{tpu_custom_call.1} parent=5 // pred_fallthru
        _
      %p264 = scmp.le.s32.totalorder 1, %s17
      %p265 = scmp.lt.s32.totalorder %s17, 3
      %p266 = pnand %p264, %p265
      %p267 = pneg %p266
      // Predicated region
      $region49: #{tpu_custom_call.1} parent=5 // pred_check
        _
      $region50: #{tpu_custom_call.1} parent=5 // pred_check_branch
        %269 = sbr.rel (%p266) target = $region52
      $region51: #{tpu_custom_call.1} parent=5 // pred_region
        %s270 = ssub.s32 %s17, 1
        %p271 = scmp.lt.s32.totalorder %s22, 1
        %s272 = scalar_select %p271, %s22, 1
        %s273 = smul.addr %s272, 32
        %s274 = smul.addr %s273, 4
        %s275 = scalar_lea.vmem %s0, %s274
        %p276 = pneg %p43
        %p277 = pneg %p40
        %p278 = pneg %p64
        %p279 = pneg %p61
        %p280 = pneg %p85
        %p281 = pneg %p82
        %p282 = pneg %p106
        %p283 = pneg %p103
        %p284 = pneg %p127
        %p285 = pneg %p124
        %p286 = pneg %p148
        %p287 = pneg %p145
        %p288 = pneg %p169
        %p289 = pneg %p166
        %p290 = pneg %p190
        %p291 = pneg %p187
        %p292 = pneg %p216
        %p293 = pneg %p213
        %s294 = sand.u32 %s203, 1
        %s295 = scalar_lea.sflag [#allocation4], %s294
        %s296 = sand.u32 %s203, 1
        %s297 = smul.addr %s296, 256
        %s298 = scalar_lea.vmem [#allocation3], %s297
        %p299 = scmp.lt.s32.totalorder %s22, 1
        %s300 = scalar_select %p299, %s22, 1
        %s301 = smul.addr %s300, 32
        %s302 = smul.addr %s301, 4
        %s303 = scalar_lea.vmem %s0, %s302
        %v305 = vld [vmem:[%s7] sm:$0xff]
        %v306 = vld [vmem:[%s7 + $0x8] sm:$0xff]
        %v307 = vld [vmem:[%s7 + $0x10] sm:$0xff]
        %v308 = vld [vmem:[%s7 + $0x18] sm:$0xff]
        %vm309 = vcmask 130048
        %310 = vst.msk [vmem:[#allocation2] sm:$0xff] %vm309, 0.0
        %311 = vst.msk [vmem:[#allocation2 + $0x8] sm:$0xff] %vm309, 0.0
        %vm312 = vcmask 128000
        %313 = vst.msk [vmem:[#allocation2 + $0x10] sm:$0x3f] %vm312, 0.0
        %314 = vst.msk [vmem:[#allocation2 + $0x18] sm:$0xff] %vm309, 0.0
        %315 = vst.msk [vmem:[#allocation2 + $0x20] sm:$0xff] %vm309, 0.0
        %316 = vst.msk [vmem:[#allocation2 + $0x28] sm:$0x3f] %vm312, 0.0
        %317 = vst.msk [vmem:[#allocation2 + $0x30] sm:$0xff] %vm309, 0.0
        %318 = vst.msk [vmem:[#allocation2 + $0x38] sm:$0xff] %vm309, 0.0
        %319 = vst.msk [vmem:[#allocation2 + $0x40] sm:$0x3f] %vm312, 0.0
        %s320 = scalar_lea.vmem [#allocation2], 456
        %321 = vst.msk [vmem:[%s320] sm:$0xff] %vm309, 0.0
        %322 = vst.msk [vmem:[%s320 + $0x8] sm:$0xff] %vm309, 0.0
        %323 = vst.msk [vmem:[%s320 + $0x10] sm:$0x3f] %vm312, 0.0
        %324 = vst.msk [vmem:[%s320 + $0x18] sm:$0xff] %vm309, 0.0
        %325 = vst.msk [vmem:[%s320 + $0x20] sm:$0xff] %vm309, 0.0
        %326 = vst.msk [vmem:[%s320 + $0x28] sm:$0x3f] %vm312, 0.0
        %327 = vst.msk [vmem:[%s320 + $0x30] sm:$0xff] %vm309, 0.0
        %328 = vst.msk [vmem:[%s320 + $0x38] sm:$0xff] %vm309, 0.0
        %329 = vst.msk [vmem:[%s320 + $0x40] sm:$0x3f] %vm312, 0.0
        %vm330 = vcmask 124928
        %331 = vst.msk [vmem:[#allocation2] sm:$0x7] %vm330, 0.0
        %332 = vst.msk [vmem:[#allocation2 + $0x18] sm:$0x7] %vm330, 0.0
        %333 = vst.msk [vmem:[#allocation2 + $0x30] sm:$0x7] %vm330, 0.0
        %334 = vst.msk [vmem:[#allocation2 + $0x48] sm:$0x7] %vm330, 0.0
        %335 = vst.msk [vmem:[#allocation2 + $0x60] sm:$0x7] %vm330, 0.0
        %336 = vst.msk [vmem:[#allocation2 + $0x78] sm:$0x7] %vm330, 0.0
        %337 = vst.msk [vmem:[#allocation2 + $0x90] sm:$0x7] %vm330, 0.0
        %338 = vst.msk [vmem:[#allocation2 + $0xa8] sm:$0x7] %vm330, 0.0
        %339 = vst.msk [vmem:[#allocation2 + $0xc0] sm:$0x7] %vm330, 0.0
        %340 = vst.msk [vmem:[#allocation2 + $0xd8] sm:$0x7] %vm330, 0.0
        %341 = vst.msk [vmem:[#allocation2 + $0xf0] sm:$0x7] %vm330, 0.0
        %342 = vst.msk [vmem:[#allocation2 + $0x108] sm:$0x7] %vm330, 0.0
        %343 = vst.msk [vmem:[#allocation2 + $0x120] sm:$0x7] %vm330, 0.0
        %344 = vst.msk [vmem:[#allocation2 + $0x138] sm:$0x7] %vm330, 0.0
        %345 = vst.msk [vmem:[#allocation2 + $0x150] sm:$0x7] %vm330, 0.0
        %346 = vst.msk [vmem:[#allocation2 + $0x168] sm:$0x7] %vm330, 0.0
        %347 = vst.msk [vmem:[#allocation2 + $0x180] sm:$0x7] %vm330, 0.0
        %348 = vst.msk [vmem:[#allocation2 + $0x198] sm:$0x7] %vm330, 0.0
        %349 = vst.msk [vmem:[#allocation2 + $0x1b0] sm:$0x7] %vm330, 0.0
        %350 = vst.msk [vmem:[#allocation2 + $0x1c8] sm:$0x7] %vm330, 0.0
        %351 = vst.msk [vmem:[#allocation2 + $0x1e0] sm:$0x7] %vm330, 0.0
        %352 = vst.msk [vmem:[#allocation2 + $0x1f8] sm:$0x7] %vm330, 0.0
        %353 = vst.msk [vmem:[#allocation2 + $0x13] sm:$0x7] %vm330, 0.0
        %354 = vst.msk [vmem:[#allocation2 + $0x2b] sm:$0x7] %vm330, 0.0
        %355 = vst.msk [vmem:[#allocation2 + $0x43] sm:$0x7] %vm330, 0.0
        %356 = vst.msk [vmem:[#allocation2 + $0x5b] sm:$0x7] %vm330, 0.0
        %357 = vst.msk [vmem:[#allocation2 + $0x73] sm:$0x7] %vm330, 0.0
        %358 = vst.msk [vmem:[#allocation2 + $0x8b] sm:$0x7] %vm330, 0.0
        %359 = vst.msk [vmem:[#allocation2 + $0xa3] sm:$0x7] %vm330, 0.0
        %360 = vst.msk [vmem:[#allocation2 + $0xbb] sm:$0x7] %vm330, 0.0
        %361 = vst.msk [vmem:[#allocation2 + $0xd3] sm:$0x7] %vm330, 0.0
        %362 = vst.msk [vmem:[#allocation2 + $0xeb] sm:$0x7] %vm330, 0.0
        %363 = vst.msk [vmem:[#allocation2 + $0x103] sm:$0x7] %vm330, 0.0
        %364 = vst.msk [vmem:[#allocation2 + $0x11b] sm:$0x7] %vm330, 0.0
        %365 = vst.msk [vmem:[#allocation2 + $0x133] sm:$0x7] %vm330, 0.0
        %366 = vst.msk [vmem:[#allocation2 + $0x14b] sm:$0x7] %vm330, 0.0
        %367 = vst.msk [vmem:[#allocation2 + $0x163] sm:$0x7] %vm330, 0.0
        %368 = vst.msk [vmem:[#allocation2 + $0x17b] sm:$0x7] %vm330, 0.0
        %369 = vst.msk [vmem:[#allocation2 + $0x193] sm:$0x7] %vm330, 0.0
        %370 = vst.msk [vmem:[#allocation2 + $0x1ab] sm:$0x7] %vm330, 0.0
        %371 = vst.msk [vmem:[#allocation2 + $0x1c3] sm:$0x7] %vm330, 0.0
        %372 = vst.msk [vmem:[#allocation2 + $0x1db] sm:$0x7] %vm330, 0.0
        %373 = vst.msk [vmem:[#allocation2 + $0x1f3] sm:$0x7] %vm330, 0.0
        %374 = vst.msk [vmem:[#allocation2 + $0x20b] sm:$0x7] %vm330, 0.0
        %v375 = vld [vmem:[%s303] sm:$0xf]
        %v376 = vld [vmem:[%s303 + $0x4] sm:$0xf]
        %v377 = vld [vmem:[%s303 + $0x8] sm:$0xf]
        %v378 = vld [vmem:[%s303 + $0xc] sm:$0xf]
        %v379 = vld [vmem:[%s303 + $0x10] sm:$0xf]
        %v380 = vld [vmem:[%s303 + $0x14] sm:$0xf]
        %v381 = vld [vmem:[%s303 + $0x18] sm:$0xf]
        %v382 = vld [vmem:[%s303 + $0x1c] sm:$0xf]
        %v383 = vld [vmem:[%s303 + $0x20] sm:$0xf]
        %v384 = vld [vmem:[%s303 + $0x24] sm:$0xf]
        %v385 = vld [vmem:[%s303 + $0x28] sm:$0xf]
        %v386 = vld [vmem:[%s303 + $0x2c] sm:$0xf]
        %v387 = vld [vmem:[%s303 + $0x30] sm:$0xf]
        %v388 = vld [vmem:[%s303 + $0x34] sm:$0xf]
        %v389 = vld [vmem:[%s303 + $0x38] sm:$0xf]
        %v390 = vld [vmem:[%s303 + $0x3c] sm:$0xf]
        %v391 = vld [vmem:[%s303 + $0x40] sm:$0xf]
        %v392 = vld [vmem:[%s303 + $0x44] sm:$0xf]
        %v393 = vld [vmem:[%s303 + $0x48] sm:$0xf]
        %v394 = vld [vmem:[%s303 + $0x4c] sm:$0xf]
        %v395 = vld [vmem:[%s303 + $0x50] sm:$0xf]
        %v396 = vld [vmem:[%s303 + $0x54] sm:$0xf]
        %v397 = vld [vmem:[%s303 + $0x58] sm:$0xf]
        %v398 = vld [vmem:[%s303 + $0x5c] sm:$0xf]
        %v399 = vld [vmem:[%s303 + $0x60] sm:$0xf]
        %v400 = vld [vmem:[%s303 + $0x64] sm:$0xf]
        %v401 = vld [vmem:[%s303 + $0x68] sm:$0xf]
        %v402 = vld [vmem:[%s303 + $0x6c] sm:$0xf]
        %v403 = vld [vmem:[%s303 + $0x70] sm:$0xf]
        %v404 = vld [vmem:[%s303 + $0x74] sm:$0xf]
        %v405 = vld [vmem:[%s303 + $0x78] sm:$0xf]
        %v406 = vld [vmem:[%s303 + $0x7c] sm:$0xf]
        %v407 = vunpack.c.l.bf16 %v375
        %v408 = vunpack.c.l.bf16 %v376
        %v409 = vunpack.c.l.bf16 %v377
        %v410 = vunpack.c.l.bf16 %v378
        %v411 = vunpack.c.l.bf16 %v379
        %v412 = vunpack.c.l.bf16 %v380
        %v413 = vunpack.c.l.bf16 %v381
        %v414 = vunpack.c.l.bf16 %v382
        %v415 = vunpack.c.l.bf16 %v383
        %v416 = vunpack.c.l.bf16 %v384
        %v417 = vunpack.c.l.bf16 %v385
        %v418 = vunpack.c.l.bf16 %v386
        %v419 = vunpack.c.l.bf16 %v387
        %v420 = vunpack.c.l.bf16 %v388
        %v421 = vunpack.c.l.bf16 %v389
        %v422 = vunpack.c.l.bf16 %v390
        %v423 = vunpack.c.l.bf16 %v391
        %v424 = vunpack.c.l.bf16 %v392
        %v425 = vunpack.c.l.bf16 %v393
        %v426 = vunpack.c.l.bf16 %v394
        %v427 = vunpack.c.l.bf16 %v395
        %v428 = vunpack.c.l.bf16 %v396
        %v429 = vunpack.c.l.bf16 %v397
        %v430 = vunpack.c.l.bf16 %v398
        %v431 = vunpack.c.l.bf16 %v399
        %v432 = vunpack.c.l.bf16 %v400
        %v433 = vunpack.c.l.bf16 %v401
        %v434 = vunpack.c.l.bf16 %v402
        %v435 = vunpack.c.l.bf16 %v403
        %v436 = vunpack.c.l.bf16 %v404
        %v437 = vunpack.c.l.bf16 %v405
        %v438 = vunpack.c.l.bf16 %v406
        %s439 = scalar_lea.vmem [#allocation2], 72
        %440 = vst.msk [vmem:[%s439 + $0x3] sm:$0xff] %vm309, %v407
        %441 = vst.msk [vmem:[%s439 + $0xb] sm:$0xff] %vm309, %v408
        %442 = vst.msk [vmem:[%s439 + $0x1b] sm:$0xff] %vm309, %v409
        %443 = vst.msk [vmem:[%s439 + $0x23] sm:$0xff] %vm309, %v410
        %444 = vst.msk [vmem:[%s439 + $0x33] sm:$0xff] %vm309, %v411
        %445 = vst.msk [vmem:[%s439 + $0x3b] sm:$0xff] %vm309, %v412
        %446 = vst.msk [vmem:[%s439 + $0x4b] sm:$0xff] %vm309, %v413
        %447 = vst.msk [vmem:[%s439 + $0x53] sm:$0xff] %vm309, %v414
        %448 = vst.msk [vmem:[%s439 + $0x63] sm:$0xff] %vm309, %v415
        %449 = vst.msk [vmem:[%s439 + $0x6b] sm:$0xff] %vm309, %v416
        %450 = vst.msk [vmem:[%s439 + $0x7b] sm:$0xff] %vm309, %v417
        %451 = vst.msk [vmem:[%s439 + $0x83] sm:$0xff] %vm309, %v418
        %452 = vst.msk [vmem:[%s439 + $0x93] sm:$0xff] %vm309, %v419
        %453 = vst.msk [vmem:[%s439 + $0x9b] sm:$0xff] %vm309, %v420
        %454 = vst.msk [vmem:[%s439 + $0xab] sm:$0xff] %vm309, %v421
        %455 = vst.msk [vmem:[%s439 + $0xb3] sm:$0xff] %vm309, %v422
        %456 = vst.msk [vmem:[%s439 + $0xc3] sm:$0xff] %vm309, %v423
        %457 = vst.msk [vmem:[%s439 + $0xcb] sm:$0xff] %vm309, %v424
        %458 = vst.msk [vmem:[%s439 + $0xdb] sm:$0xff] %vm309, %v425
        %459 = vst.msk [vmem:[%s439 + $0xe3] sm:$0xff] %vm309, %v426
        %460 = vst.msk [vmem:[%s439 + $0xf3] sm:$0xff] %vm309, %v427
        %461 = vst.msk [vmem:[%s439 + $0xfb] sm:$0xff] %vm309, %v428
        %462 = vst.msk [vmem:[%s439 + $0x10b] sm:$0xff] %vm309, %v429
        %463 = vst.msk [vmem:[%s439 + $0x113] sm:$0xff] %vm309, %v430
        %464 = vst.msk [vmem:[%s439 + $0x123] sm:$0xff] %vm309, %v431
        %465 = vst.msk [vmem:[%s439 + $0x12b] sm:$0xff] %vm309, %v432
        %466 = vst.msk [vmem:[%s439 + $0x13b] sm:$0xff] %vm309, %v433
        %467 = vst.msk [vmem:[%s439 + $0x143] sm:$0xff] %vm309, %v434
        %468 = vst.msk [vmem:[%s439 + $0x153] sm:$0xff] %vm309, %v435
        %469 = vst.msk [vmem:[%s439 + $0x15b] sm:$0xff] %vm309, %v436
        %470 = vst.msk [vmem:[%s439 + $0x16b] sm:$0xff] %vm309, %v437
        %471 = vst.msk [vmem:[%s439 + $0x173] sm:$0xff] %vm309, %v438
        %v472 = vld [vmem:[%s303] sm:$0xf]
        %v473 = vld [vmem:[%s303 + $0x4] sm:$0xf]
        %v474 = vld [vmem:[%s303 + $0x8] sm:$0xf]
        %v475 = vld [vmem:[%s303 + $0xc] sm:$0xf]
        %v476 = vld [vmem:[%s303 + $0x10] sm:$0xf]
        %v477 = vld [vmem:[%s303 + $0x14] sm:$0xf]
        %v478 = vld [vmem:[%s303 + $0x18] sm:$0xf]
        %v479 = vld [vmem:[%s303 + $0x1c] sm:$0xf]
        %v480 = vld [vmem:[%s303 + $0x20] sm:$0xf]
        %v481 = vld [vmem:[%s303 + $0x24] sm:$0xf]
        %v482 = vld [vmem:[%s303 + $0x28] sm:$0xf]
        %v483 = vld [vmem:[%s303 + $0x2c] sm:$0xf]
        %v484 = vld [vmem:[%s303 + $0x30] sm:$0xf]
        %v485 = vld [vmem:[%s303 + $0x34] sm:$0xf]
        %v486 = vld [vmem:[%s303 + $0x38] sm:$0xf]
        %v487 = vld [vmem:[%s303 + $0x3c] sm:$0xf]
        %v488 = vld [vmem:[%s303 + $0x40] sm:$0xf]
        %v489 = vld [vmem:[%s303 + $0x44] sm:$0xf]
        %v490 = vld [vmem:[%s303 + $0x48] sm:$0xf]
        %v491 = vld [vmem:[%s303 + $0x4c] sm:$0xf]
        %v492 = vld [vmem:[%s303 + $0x50] sm:$0xf]
        %v493 = vld [vmem:[%s303 + $0x54] sm:$0xf]
        %v494 = vld [vmem:[%s303 + $0x58] sm:$0xf]
        %v495 = vld [vmem:[%s303 + $0x5c] sm:$0xf]
        %v496 = vld [vmem:[%s303 + $0x60] sm:$0xf]
        %v497 = vld [vmem:[%s303 + $0x64] sm:$0xf]
        %v498 = vld [vmem:[%s303 + $0x68] sm:$0xf]
        %v499 = vld [vmem:[%s303 + $0x6c] sm:$0xf]
        %v500 = vld [vmem:[%s303 + $0x70] sm:$0xf]
        %v501 = vld [vmem:[%s303 + $0x74] sm:$0xf]
        %v502 = vld [vmem:[%s303 + $0x78] sm:$0xf]
        %v503 = vld [vmem:[%s303 + $0x7c] sm:$0xf]
        %v504 = vunpack.c.l.bf16 %v472
        %v505 = vunpack.c.l.bf16 %v473
        %v506 = vunpack.c.l.bf16 %v474
        %v507 = vunpack.c.l.bf16 %v475
        %v508 = vunpack.c.l.bf16 %v476
        %v509 = vunpack.c.l.bf16 %v477
        %v510 = vunpack.c.l.bf16 %v478
        %v511 = vunpack.c.l.bf16 %v479
        %v512 = vunpack.c.l.bf16 %v480
        %v513 = vunpack.c.l.bf16 %v481
        %v514 = vunpack.c.l.bf16 %v482
        %v515 = vunpack.c.l.bf16 %v483
        %v516 = vunpack.c.l.bf16 %v484
        %v517 = vunpack.c.l.bf16 %v485
        %v518 = vunpack.c.l.bf16 %v486
        %v519 = vunpack.c.l.bf16 %v487
        %v520 = vunpack.c.l.bf16 %v488
        %v521 = vunpack.c.l.bf16 %v489
        %v522 = vunpack.c.l.bf16 %v490
        %v523 = vunpack.c.l.bf16 %v491
        %v524 = vunpack.c.l.bf16 %v492
        %v525 = vunpack.c.l.bf16 %v493
        %v526 = vunpack.c.l.bf16 %v494
        %v527 = vunpack.c.l.bf16 %v495
        %v528 = vunpack.c.l.bf16 %v496
        %v529 = vunpack.c.l.bf16 %v497
        %v530 = vunpack.c.l.bf16 %v498
        %v531 = vunpack.c.l.bf16 %v499
        %v532 = vunpack.c.l.bf16 %v500
        %v533 = vunpack.c.l.bf16 %v501
        %v534 = vunpack.c.l.bf16 %v502
        %v535 = vunpack.c.l.bf16 %v503
        %v536 = vsel %vm309, %v504, 0.0
        %v537 = vsel %vm309, %v505, 0.0
        %v538 = vadd.f32 %v536, %v537
        %v539 = vsel %vm309, %v506, 0.0
        %v540 = vadd.f32 %v538, %v539
        %v541 = vsel %vm309, %v507, 0.0
        %v542 = vadd.f32 %v540, %v541
        %v543 = vsel %vm309, %v508, 0.0
        %v544 = vadd.f32 %v542, %v543
        %v545 = vsel %vm309, %v509, 0.0
        %v546 = vadd.f32 %v544, %v545
        %v547 = vsel %vm309, %v510, 0.0
        %v548 = vadd.f32 %v546, %v547
        %v549 = vsel %vm309, %v511, 0.0
        %v550 = vadd.f32 %v548, %v549
        %v551 = vsel %vm309, %v512, 0.0
        %v552 = vadd.f32 %v550, %v551
        %v553 = vsel %vm309, %v513, 0.0
        %v554 = vadd.f32 %v552, %v553
        %v555 = vsel %vm309, %v514, 0.0
        %v556 = vadd.f32 %v554, %v555
        %v557 = vsel %vm309, %v515, 0.0
        %v558 = vadd.f32 %v556, %v557
        %v559 = vsel %vm309, %v516, 0.0
        %v560 = vadd.f32 %v558, %v559
        %v561 = vsel %vm309, %v517, 0.0
        %v562 = vadd.f32 %v560, %v561
        %v563 = vsel %vm309, %v518, 0.0
        %v564 = vadd.f32 %v562, %v563
        %v565 = vsel %vm309, %v519, 0.0
        %v566 = vadd.f32 %v564, %v565
        %v567 = vsel %vm309, %v520, 0.0
        %v568 = vadd.f32 %v566, %v567
        %v569 = vsel %vm309, %v521, 0.0
        %v570 = vadd.f32 %v568, %v569
        %v571 = vsel %vm309, %v522, 0.0
        %v572 = vadd.f32 %v570, %v571
        %v573 = vsel %vm309, %v523, 0.0
        %v574 = vadd.f32 %v572, %v573
        %v575 = vsel %vm309, %v524, 0.0
        %v576 = vadd.f32 %v574, %v575
        %v577 = vsel %vm309, %v525, 0.0
        %v578 = vadd.f32 %v576, %v577
        %v579 = vsel %vm309, %v526, 0.0
        %v580 = vadd.f32 %v578, %v579
        %v581 = vsel %vm309, %v527, 0.0
        %v582 = vadd.f32 %v580, %v581
        %v583 = vsel %vm309, %v528, 0.0
        %v584 = vadd.f32 %v582, %v583
        %v585 = vsel %vm309, %v529, 0.0
        %v586 = vadd.f32 %v584, %v585
        %v587 = vsel %vm309, %v530, 0.0
        %v588 = vadd.f32 %v586, %v587
        %v589 = vsel %vm309, %v531, 0.0
        %v590 = vadd.f32 %v588, %v589
        %v591 = vsel %vm309, %v532, 0.0
        %v592 = vadd.f32 %v590, %v591
        %v593 = vsel %vm309, %v533, 0.0
        %v594 = vadd.f32 %v592, %v593
        %v595 = vsel %vm309, %v534, 0.0
        %v596 = vadd.f32 %v594, %v595
        %v597 = vsel %vm309, %v535, 0.0
        %v598 = vadd.f32 %v596, %v597
        %v599 = vrot.slane %v598, 4
        %v600 = vadd.f32 %v598, %v599
        %v601 = vrot.slane %v600, 2
        %v602 = vadd.f32 %v600, %v601
        %v603 = vrot.slane %v602, 1
        %v604 = vadd.f32 %v602, %v603
        %v605 = vrcp.pop 256.0
        %v606 = vmul.f32 %v604, %v605
        %v607 = vld [vmem:[%s1] sm:$0xf]
        %v608 = vld [vmem:[%s1 + $0x4] sm:$0xf]
        %v641 = vunpack.c.l.b16 %v472
        %v642 = vunpack.c.l.b16 %v473
        %v643 = vunpack.c.l.b16 %v474
        %v644 = vunpack.c.l.b16 %v475
        %v645 = vunpack.c.l.b16 %v476
        %v646 = vunpack.c.l.b16 %v477
        %v647 = vunpack.c.l.b16 %v478
        %v648 = vunpack.c.l.b16 %v479
        %v649 = vunpack.c.l.b16 %v480
        %v650 = vunpack.c.l.b16 %v481
        %v651 = vunpack.c.l.b16 %v482
        %v652 = vunpack.c.l.b16 %v483
        %v653 = vunpack.c.l.b16 %v484
        %v654 = vunpack.c.l.b16 %v485
        %v655 = vunpack.c.l.b16 %v486
        %v656 = vunpack.c.l.b16 %v487
        %v657 = vunpack.c.l.b16 %v488
        %v658 = vunpack.c.l.b16 %v489
        %v659 = vunpack.c.l.b16 %v490
        %v660 = vunpack.c.l.b16 %v491
        %v661 = vunpack.c.l.b16 %v492
        %v662 = vunpack.c.l.b16 %v493
        %v663 = vunpack.c.l.b16 %v494
        %v664 = vunpack.c.l.b16 %v495
        %v665 = vunpack.c.l.b16 %v496
        %v666 = vunpack.c.l.b16 %v497
        %v667 = vunpack.c.l.b16 %v498
        %v668 = vunpack.c.l.b16 %v499
        %v669 = vunpack.c.l.b16 %v500
        %v670 = vunpack.c.l.b16 %v501
        %v671 = vunpack.c.l.b16 %v502
        %v672 = vunpack.c.l.b16 %v503
        %v673 = vpack.c.b16 %v642, %v641
        %v674 = vpack.c.b16 %v644, %v643
        %v675 = vpack.c.b16 %v646, %v645
        %v676 = vpack.c.b16 %v648, %v647
        %v677 = vpack.c.b16 %v650, %v649
        %v678 = vpack.c.b16 %v652, %v651
        %v679 = vpack.c.b16 %v654, %v653
        %v680 = vpack.c.b16 %v656, %v655
        %v681 = vpack.c.b16 %v658, %v657
        %v682 = vpack.c.b16 %v660, %v659
        %v683 = vpack.c.b16 %v662, %v661
        %v684 = vpack.c.b16 %v664, %v663
        %v685 = vpack.c.b16 %v666, %v665
        %v686 = vpack.c.b16 %v668, %v667
        %v687 = vpack.c.b16 %v670, %v669
        %v688 = vpack.c.b16 %v672, %v671
        %v691 = vunpack.c.l.b16 %v607
        %v692 = vunpack.c.l.b16 %v608
        %v693 = vpack.c.b16 %v692, %v691
        %v696 = vsel %vm309, %v673, 0
        %v699 = vsel %vm309, %v674, 0
        %v702 = vsel %vm309, %v675, 0
        %v705 = vsel %vm309, %v676, 0
        %v708 = vsel %vm309, %v677, 0
        %v711 = vsel %vm309, %v678, 0
        %v714 = vsel %vm309, %v679, 0
        %v717 = vsel %vm309, %v680, 0
        %v720 = vsel %vm309, %v681, 0
        %v723 = vsel %vm309, %v682, 0
        %v726 = vsel %vm309, %v683, 0
        %v729 = vsel %vm309, %v684, 0
        %v732 = vsel %vm309, %v685, 0
        %v735 = vsel %vm309, %v686, 0
        %v738 = vsel %vm309, %v687, 0
        %v741 = vsel %vm309, %v688, 0
        %743 = vmatprep.subr.bf16.mxu0 0
        %744 = vmatpush1.bf16.msra.mxu0 %v693
        %745 = vmatprep.subr.bf16.mxu0 0
        %746 = vmatpush1.bf16.msra.mxu0 0
        %747 = vmatprep.subr.bf16.mxu0 0
        %748 = vmatpush1.bf16.msra.mxu0 0
        %749 = vmatprep.subr.bf16.mxu0 0
        %750 = vmatpush1.bf16.msra.mxu0 0
        %751 = vmatprep.subr.bf16.mxu0 0
        %752 = vmatpush1.bf16.msra.mxu0 0
        %753 = vmatprep.subr.bf16.mxu0 0
        %754 = vmatpush1.bf16.msra.mxu0 0
        %755 = vmatprep.subr.bf16.mxu0 0
        %756 = vmatpush1.bf16.msra.mxu0 0
        %757 = vmatprep.subr.bf16.mxu0 0
        %758 = vmatpush1.bf16.msra.mxu0 0
        %759 = vmatprep.subr.bf16.mxu0 0
        %760 = vmatpush1.bf16.msra.mxu0 0
        %761 = vmatprep.subr.bf16.mxu0 0
        %762 = vmatpush1.bf16.msra.mxu0 0
        %763 = vmatprep.subr.bf16.mxu0 0
        %764 = vmatpush1.bf16.msra.mxu0 0
        %765 = vmatprep.subr.bf16.mxu0 0
        %766 = vmatpush1.bf16.msra.mxu0 0
        %767 = vmatprep.subr.bf16.mxu0 0
        %768 = vmatpush1.bf16.msra.mxu0 0
        %769 = vmatprep.subr.bf16.mxu0 0
        %770 = vmatpush1.bf16.msra.mxu0 0
        %771 = vmatprep.subr.bf16.mxu0 0
        %772 = vmatpush1.bf16.msra.mxu0 0
        %773 = vmatprep.subr.bf16.mxu0 0
        %774 = vmatpush1.bf16.msra.mxu0 0
        %775 = vmatprep.mubr.bf16.mxu0 0
        %776 = vmatmul.mubr.bf16.gmra.mrb[0].mxu0 %v696
        %v777 = vpop.f32.mrb[0].mxu0
        %v778 = vadd.f32 0.0, %v777
        %v779 = vpop.f32.mrb[0].mxu0
        %v780 = vpop.f32.mrb[0].mxu0
        %v781 = vadd.f32 0.0, %v780
        %v782 = vpop.f32.mrb[0].mxu0
        %783 = vmatprep.mubr.bf16.mxu0 0
        %784 = vmatmul.mubr.bf16.gmra.mrb[0].mxu0 %v699
        %v785 = vpop.f32.mrb[0].mxu0
        %v786 = vadd.f32 0.0, %v785
        %v787 = vpop.f32.mrb[0].mxu0
        %v788 = vpop.f32.mrb[0].mxu0
        %v789 = vadd.f32 0.0, %v788
        %v790 = vpop.f32.mrb[0].mxu0
        %791 = vmatprep.mubr.bf16.mxu0 0
        %792 = vmatmul.mubr.bf16.gmra.mrb[0].mxu0 %v702
        %v793 = vpop.f32.mrb[0].mxu0
        %v794 = vadd.f32 0.0, %v793
        %v795 = vpop.f32.mrb[0].mxu0
        %v796 = vpop.f32.mrb[0].mxu0
        %v797 = vadd.f32 0.0, %v796
        %v798 = vpop.f32.mrb[0].mxu0
        %799 = vmatprep.mubr.bf16.mxu0 0
        %800 = vmatmul.mubr.bf16.gmra.mrb[0].mxu0 %v705
        %v801 = vpop.f32.mrb[0].mxu0
        %v802 = vadd.f32 0.0, %v801
        %v803 = vpop.f32.mrb[0].mxu0
        %v804 = vpop.f32.mrb[0].mxu0
        %v805 = vadd.f32 0.0, %v804
        %v806 = vpop.f32.mrb[0].mxu0
        %807 = vmatprep.mubr.bf16.mxu0 0
        %808 = vmatmul.mubr.bf16.gmra.mrb[0].mxu0 %v708
        %v809 = vpop.f32.mrb[0].mxu0
        %v810 = vadd.f32 0.0, %v809
        %v811 = vpop.f32.mrb[0].mxu0
        %v812 = vpop.f32.mrb[0].mxu0
        %v813 = vadd.f32 0.0, %v812
        %v814 = vpop.f32.mrb[0].mxu0
        %815 = vmatprep.mubr.bf16.mxu0 0
        %816 = vmatmul.mubr.bf16.gmra.mrb[0].mxu0 %v711
        %v817 = vpop.f32.mrb[0].mxu0
        %v818 = vadd.f32 0.0, %v817
        %v819 = vpop.f32.mrb[0].mxu0
        %v820 = vpop.f32.mrb[0].mxu0
        %v821 = vadd.f32 0.0, %v820
        %v822 = vpop.f32.mrb[0].mxu0
        %823 = vmatprep.mubr.bf16.mxu0 0
        %824 = vmatmul.mubr.bf16.gmra.mrb[0].mxu0 %v714
        %v825 = vpop.f32.mrb[0].mxu0
        %v826 = vadd.f32 0.0, %v825
        %v827 = vpop.f32.mrb[0].mxu0
        %v828 = vpop.f32.mrb[0].mxu0
        %v829 = vadd.f32 0.0, %v828
        %v830 = vpop.f32.mrb[0].mxu0
        %831 = vmatprep.mubr.bf16.mxu0 0
        %832 = vmatmul.mubr.bf16.gmra.mrb[0].mxu0 %v717
        %v833 = vpop.f32.mrb[0].mxu0
        %v834 = vadd.f32 0.0, %v833
        %v835 = vpop.f32.mrb[0].mxu0
        %v836 = vpop.f32.mrb[0].mxu0
        %v837 = vadd.f32 0.0, %v836
        %v838 = vpop.f32.mrb[0].mxu0
        %839 = vmatprep.mubr.bf16.mxu0 0
        %840 = vmatmul.mubr.bf16.gmra.mrb[0].mxu0 %v720
        %v841 = vpop.f32.mrb[0].mxu0
        %v842 = vadd.f32 0.0, %v841
        %v843 = vpop.f32.mrb[0].mxu0
        %v844 = vpop.f32.mrb[0].mxu0
        %v845 = vadd.f32 0.0, %v844
        %v846 = vpop.f32.mrb[0].mxu0
        %847 = vmatprep.mubr.bf16.mxu0 0
        %848 = vmatmul.mubr.bf16.gmra.mrb[0].mxu0 %v723
        %v849 = vpop.f32.mrb[0].mxu0
        %v850 = vadd.f32 0.0, %v849
        %v851 = vpop.f32.mrb[0].mxu0
        %v852 = vpop.f32.mrb[0].mxu0
        %v853 = vadd.f32 0.0, %v852
        %v854 = vpop.f32.mrb[0].mxu0
        %855 = vmatprep.mubr.bf16.mxu0 0
        %856 = vmatmul.mubr.bf16.gmra.mrb[0].mxu0 %v726
        %v857 = vpop.f32.mrb[0].mxu0
        %v858 = vadd.f32 0.0, %v857
        %v859 = vpop.f32.mrb[0].mxu0
        %v860 = vpop.f32.mrb[0].mxu0
        %v861 = vadd.f32 0.0, %v860
        %v862 = vpop.f32.mrb[0].mxu0
        %863 = vmatprep.mubr.bf16.mxu0 0
        %864 = vmatmul.mubr.bf16.gmra.mrb[0].mxu0 %v729
        %v865 = vpop.f32.mrb[0].mxu0
        %v866 = vadd.f32 0.0, %v865
        %v867 = vpop.f32.mrb[0].mxu0
        %v868 = vpop.f32.mrb[0].mxu0
        %v869 = vadd.f32 0.0, %v868
        %v870 = vpop.f32.mrb[0].mxu0
        %871 = vmatprep.mubr.bf16.mxu0 0
        %872 = vmatmul.mubr.bf16.gmra.mrb[0].mxu0 %v732
        %v873 = vpop.f32.mrb[0].mxu0
        %v874 = vadd.f32 0.0, %v873
        %v875 = vpop.f32.mrb[0].mxu0
        %v876 = vpop.f32.mrb[0].mxu0
        %v877 = vadd.f32 0.0, %v876
        %v878 = vpop.f32.mrb[0].mxu0
        %879 = vmatprep.mubr.bf16.mxu0 0
        %880 = vmatmul.mubr.bf16.gmra.mrb[0].mxu0 %v735
        %v881 = vpop.f32.mrb[0].mxu0
        %v882 = vadd.f32 0.0, %v881
        %v883 = vpop.f32.mrb[0].mxu0
        %v884 = vpop.f32.mrb[0].mxu0
        %v885 = vadd.f32 0.0, %v884
        %v886 = vpop.f32.mrb[0].mxu0
        %887 = vmatprep.mubr.bf16.mxu0 0
        %888 = vmatmul.mubr.bf16.gmra.mrb[0].mxu0 %v738
        %v889 = vpop.f32.mrb[0].mxu0
        %v890 = vadd.f32 0.0, %v889
        %v891 = vpop.f32.mrb[0].mxu0
        %v892 = vpop.f32.mrb[0].mxu0
        %v893 = vadd.f32 0.0, %v892
        %v894 = vpop.f32.mrb[0].mxu0
        %895 = vmatprep.mubr.bf16.mxu0 0
        %896 = vmatmul.mubr.bf16.gmra.mrb[0].mxu0 %v741
        %v897 = vpop.f32.mrb[0].mxu0
        %v898 = vadd.f32 0.0, %v897
        %v899 = vpop.f32.mrb[0].mxu0
        %v900 = vpop.f32.mrb[0].mxu0
        %v901 = vadd.f32 0.0, %v900
        %v902 = vpop.f32.mrb[0].mxu0
        %903 = vdwg.mxu0
        %vm904 = vcmask 261120
        %v905 = vsel %vm904, %v778, 0.0
        %v906 = vsel %vm904, %v781, 0.0
        %v907 = vadd.f32 %v905, %v906
        %v908 = vsel %vm904, %v786, 0.0
        %v909 = vadd.f32 %v907, %v908
        %v910 = vsel %vm904, %v789, 0.0
        %v911 = vadd.f32 %v909, %v910
        %v912 = vsel %vm904, %v794, 0.0
        %v913 = vadd.f32 %v911, %v912
        %v914 = vsel %vm904, %v797, 0.0
        %v915 = vadd.f32 %v913, %v914
        %v916 = vsel %vm904, %v802, 0.0
        %v917 = vadd.f32 %v915, %v916
        %v918 = vsel %vm904, %v805, 0.0
        %v919 = vadd.f32 %v917, %v918
        %v920 = vsel %vm904, %v810, 0.0
        %v921 = vadd.f32 %v919, %v920
        %v922 = vsel %vm904, %v813, 0.0
        %v923 = vadd.f32 %v921, %v922
        %v924 = vsel %vm904, %v818, 0.0
        %v925 = vadd.f32 %v923, %v924
        %v926 = vsel %vm904, %v821, 0.0
        %v927 = vadd.f32 %v925, %v926
        %v928 = vsel %vm904, %v826, 0.0
        %v929 = vadd.f32 %v927, %v928
        %v930 = vsel %vm904, %v829, 0.0
        %v931 = vadd.f32 %v929, %v930
        %v932 = vsel %vm904, %v834, 0.0
        %v933 = vadd.f32 %v931, %v932
        %v934 = vsel %vm904, %v837, 0.0
        %v935 = vadd.f32 %v933, %v934
        %v936 = vsel %vm904, %v842, 0.0
        %v937 = vadd.f32 %v935, %v936
        %v938 = vsel %vm904, %v845, 0.0
        %v939 = vadd.f32 %v937, %v938
        %v940 = vsel %vm904, %v850, 0.0
        %v941 = vadd.f32 %v939, %v940
        %v942 = vsel %vm904, %v853, 0.0
        %v943 = vadd.f32 %v941, %v942
        %v944 = vsel %vm904, %v858, 0.0
        %v945 = vadd.f32 %v943, %v944
        %v946 = vsel %vm904, %v861, 0.0
        %v947 = vadd.f32 %v945, %v946
        %v948 = vsel %vm904, %v866, 0.0
        %v949 = vadd.f32 %v947, %v948
        %v950 = vsel %vm904, %v869, 0.0
        %v951 = vadd.f32 %v949, %v950
        %v952 = vsel %vm904, %v874, 0.0
        %v953 = vadd.f32 %v951, %v952
        %v954 = vsel %vm904, %v877, 0.0
        %v955 = vadd.f32 %v953, %v954
        %v956 = vsel %vm904, %v882, 0.0
        %v957 = vadd.f32 %v955, %v956
        %v958 = vsel %vm904, %v885, 0.0
        %v959 = vadd.f32 %v957, %v958
        %v960 = vsel %vm904, %v890, 0.0
        %v961 = vadd.f32 %v959, %v960
        %v962 = vsel %vm904, %v893, 0.0
        %v963 = vadd.f32 %v961, %v962
        %v964 = vsel %vm904, %v898, 0.0
        %v965 = vadd.f32 %v963, %v964
        %v966 = vsel %vm904, %v901, 0.0
        %v967 = vadd.f32 %v965, %v966
        %v968 = vrot.slane %v967, 4
        %v969 = vadd.f32 %v967, %v968
        %v970 = vrot.slane %v969, 2
        %v971 = vadd.f32 %v969, %v970
        %v972 = vrot.slane %v971, 1
        %v973 = vadd.f32 %v971, %v972
        %v975 = vsel %vm904, %v973, 0
        %977 = vmatprep.subr.mxu0 0.0
        %978 = vmatpush1.msra.mxu0 %v305
        %979 = vmatprep.subr.mxu0 0.0
        %980 = vmatpush1.msra.mxu0 %v306
        %981 = vmatprep.subr.mxu0 0.0
        %982 = vmatpush1.msra.mxu0 %v307
        %983 = vmatprep.subr.mxu0 0.0
        %984 = vmatpush1.msra.mxu0 %v308
        %985 = vmatprep.subr.mxu0 0.0
        %986 = vmatpush1.msra.mxu0 0.0
        %987 = vmatprep.subr.mxu0 0.0
        %988 = vmatpush1.msra.mxu0 0.0
        %989 = vmatprep.subr.mxu0 0.0
        %990 = vmatpush1.msra.mxu0 0.0
        %991 = vmatprep.subr.mxu0 0.0
        %992 = vmatpush1.msra.mxu0 0.0
        %993 = vmatprep.subr.mxu0 0.0
        %994 = vmatpush1.msra.mxu0 0.0
        %995 = vmatprep.subr.mxu0 0.0
        %996 = vmatpush1.msra.mxu0 0.0
        %997 = vmatprep.subr.mxu0 0.0
        %998 = vmatpush1.msra.mxu0 0.0
        %999 = vmatprep.subr.mxu0 0.0
        %1000 = vmatpush1.msra.mxu0 0.0
        %1001 = vmatprep.subr.mxu0 0.0
        %1002 = vmatpush1.msra.mxu0 0.0
        %1003 = vmatprep.subr.mxu0 0.0
        %1004 = vmatpush1.msra.mxu0 0.0
        %1005 = vmatprep.subr.mxu0 0.0
        %1006 = vmatpush1.msra.mxu0 0.0
        %1007 = vmatprep.subr.mxu0 0.0
        %1008 = vmatpush1.msra.mxu0 0.0
        %1009 = vmatprep.subr.mxu0 0.0
        %1010 = vmatpush1.msra.mxu0 0.0
        %1011 = vmatprep.subr.mxu0 0.0
        %1012 = vmatpush1.msra.mxu0 0.0
        %1013 = vmatprep.subr.mxu0 0.0
        %1014 = vmatpush1.msra.mxu0 0.0
        %1015 = vmatprep.subr.mxu0 0.0
        %1016 = vmatpush1.msra.mxu0 0.0
        %1017 = vmatprep.subr.mxu0 0.0
        %1018 = vmatpush1.msra.mxu0 0.0
        %1019 = vmatprep.subr.mxu0 0.0
        %1020 = vmatpush1.msra.mxu0 0.0
        %1021 = vmatprep.subr.mxu0 0.0
        %1022 = vmatpush1.msra.mxu0 0.0
        %1023 = vmatprep.subr.mxu0 0.0
        %1024 = vmatpush1.msra.mxu0 0.0
        %1025 = vmatprep.subr.mxu0 0.0
        %1026 = vmatpush1.msra.mxu0 0.0
        %1027 = vmatprep.subr.mxu0 0.0
        %1028 = vmatpush1.msra.mxu0 0.0
        %1029 = vmatprep.subr.mxu0 0.0
        %1030 = vmatpush1.msra.mxu0 0.0
        %1031 = vmatprep.subr.mxu0 0.0
        %1032 = vmatpush1.msra.mxu0 0.0
        %1033 = vmatprep.subr.mxu0 0.0
        %1034 = vmatpush1.msra.mxu0 0.0
        %1035 = vmatprep.subr.mxu0 0.0
        %1036 = vmatpush1.msra.mxu0 0.0
        %1037 = vmatprep.subr.mxu0 0.0
        %1038 = vmatpush1.msra.mxu0 0.0
        %1039 = vmatprep.subr.mxu0 0.0
        %1040 = vmatpush1.msra.mxu0 0.0
        %1041 = vmatprep.mubr.f32.mxu0 0.0
        %1042 = vmatmul.mubr.f32.gmra.mrb[0].mxu0 %v975
        %v1043 = vpop.f32.mrb[0].mxu0
        %v1044 = vadd.f32 0.0, %v1043
        %v1045 = vpop.f32.mrb[0].mxu0
        %1046 = vdwg.mxu0
        %v1047 = vrcp.pop 1024.0
        %v1048 = vmul.f32 %v1044, %v1047
        %v1049 = vlaneseq
        %v1050 = vshrl.u32 %v1049, 7
        %v1051 = vsub.s32 0, %v1050
        %v1052 = vrot.slane %v1048, %v1051
        %v1053 = vsub.f32 %v778, %v1052
        %v1054 = vsub.f32 %v781, %v1052
        %v1055 = vsub.f32 %v786, %v1052
        %v1056 = vsub.f32 %v789, %v1052
        %v1057 = vsub.f32 %v794, %v1052
        %v1058 = vsub.f32 %v797, %v1052
        %v1059 = vsub.f32 %v802, %v1052
        %v1060 = vsub.f32 %v805, %v1052
        %v1061 = vsub.f32 %v810, %v1052
        %v1062 = vsub.f32 %v813, %v1052
        %v1063 = vsub.f32 %v818, %v1052
        %v1064 = vsub.f32 %v821, %v1052
        %v1065 = vsub.f32 %v826, %v1052
        %v1066 = vsub.f32 %v829, %v1052
        %v1067 = vsub.f32 %v834, %v1052
        %v1068 = vsub.f32 %v837, %v1052
        %v1069 = vsub.f32 %v842, %v1052
        %v1070 = vsub.f32 %v845, %v1052
        %v1071 = vsub.f32 %v850, %v1052
        %v1072 = vsub.f32 %v853, %v1052
        %v1073 = vsub.f32 %v858, %v1052
        %v1074 = vsub.f32 %v861, %v1052
        %v1075 = vsub.f32 %v866, %v1052
        %v1076 = vsub.f32 %v869, %v1052
        %v1077 = vsub.f32 %v874, %v1052
        %v1078 = vsub.f32 %v877, %v1052
        %v1079 = vsub.f32 %v882, %v1052
        %v1080 = vsub.f32 %v885, %v1052
        %v1081 = vsub.f32 %v890, %v1052
        %v1082 = vsub.f32 %v893, %v1052
        %v1083 = vsub.f32 %v898, %v1052
        %v1084 = vsub.f32 %v901, %v1052
        %v1085 = vmul.f32 %v1053, %v1053
        %v1086 = vmul.f32 %v1054, %v1054
        %v1087 = vmul.f32 %v1055, %v1055
        %v1088 = vmul.f32 %v1056, %v1056
        %v1089 = vmul.f32 %v1057, %v1057
        %v1090 = vmul.f32 %v1058, %v1058
        %v1091 = vmul.f32 %v1059, %v1059
        %v1092 = vmul.f32 %v1060, %v1060
        %v1093 = vmul.f32 %v1061, %v1061
        %v1094 = vmul.f32 %v1062, %v1062
        %v1095 = vmul.f32 %v1063, %v1063
        %v1096 = vmul.f32 %v1064, %v1064
        %v1097 = vmul.f32 %v1065, %v1065
        %v1098 = vmul.f32 %v1066, %v1066
        %v1099 = vmul.f32 %v1067, %v1067
        %v1100 = vmul.f32 %v1068, %v1068
        %v1101 = vmul.f32 %v1069, %v1069
        %v1102 = vmul.f32 %v1070, %v1070
        %v1103 = vmul.f32 %v1071, %v1071
        %v1104 = vmul.f32 %v1072, %v1072
        %v1105 = vmul.f32 %v1073, %v1073
        %v1106 = vmul.f32 %v1074, %v1074
        %v1107 = vmul.f32 %v1075, %v1075
        %v1108 = vmul.f32 %v1076, %v1076
        %v1109 = vmul.f32 %v1077, %v1077
        %v1110 = vmul.f32 %v1078, %v1078
        %v1111 = vmul.f32 %v1079, %v1079
        %v1112 = vmul.f32 %v1080, %v1080
        %v1113 = vmul.f32 %v1081, %v1081
        %v1114 = vmul.f32 %v1082, %v1082
        %v1115 = vmul.f32 %v1083, %v1083
        %v1116 = vmul.f32 %v1084, %v1084
        %v1117 = vsel %vm904, %v1085, 0.0
        %v1118 = vsel %vm904, %v1086, 0.0
        %v1119 = vadd.f32 %v1117, %v1118
        %v1120 = vsel %vm904, %v1087, 0.0
        %v1121 = vadd.f32 %v1119, %v1120
        %v1122 = vsel %vm904, %v1088, 0.0
        %v1123 = vadd.f32 %v1121, %v1122
        %v1124 = vsel %vm904, %v1089, 0.0
        %v1125 = vadd.f32 %v1123, %v1124
        %v1126 = vsel %vm904, %v1090, 0.0
        %v1127 = vadd.f32 %v1125, %v1126
        %v1128 = vsel %vm904, %v1091, 0.0
        %v1129 = vadd.f32 %v1127, %v1128
        %v1130 = vsel %vm904, %v1092, 0.0
        %v1131 = vadd.f32 %v1129, %v1130
        %v1132 = vsel %vm904, %v1093, 0.0
        %v1133 = vadd.f32 %v1131, %v1132
        %v1134 = vsel %vm904, %v1094, 0.0
        %v1135 = vadd.f32 %v1133, %v1134
        %v1136 = vsel %vm904, %v1095, 0.0
        %v1137 = vadd.f32 %v1135, %v1136
        %v1138 = vsel %vm904, %v1096, 0.0
        %v1139 = vadd.f32 %v1137, %v1138
        %v1140 = vsel %vm904, %v1097, 0.0
        %v1141 = vadd.f32 %v1139, %v1140
        %v1142 = vsel %vm904, %v1098, 0.0
        %v1143 = vadd.f32 %v1141, %v1142
        %v1144 = vsel %vm904, %v1099, 0.0
        %v1145 = vadd.f32 %v1143, %v1144
        %v1146 = vsel %vm904, %v1100, 0.0
        %v1147 = vadd.f32 %v1145, %v1146
        %v1148 = vsel %vm904, %v1101, 0.0
        %v1149 = vadd.f32 %v1147, %v1148
        %v1150 = vsel %vm904, %v1102, 0.0
        %v1151 = vadd.f32 %v1149, %v1150
        %v1152 = vsel %vm904, %v1103, 0.0
        %v1153 = vadd.f32 %v1151, %v1152
        %v1154 = vsel %vm904, %v1104, 0.0
        %v1155 = vadd.f32 %v1153, %v1154
        %v1156 = vsel %vm904, %v1105, 0.0
        %v1157 = vadd.f32 %v1155, %v1156
        %v1158 = vsel %vm904, %v1106, 0.0
        %v1159 = vadd.f32 %v1157, %v1158
        %v1160 = vsel %vm904, %v1107, 0.0
        %v1161 = vadd.f32 %v1159, %v1160
        %v1162 = vsel %vm904, %v1108, 0.0
        %v1163 = vadd.f32 %v1161, %v1162
        %v1164 = vsel %vm904, %v1109, 0.0
        %v1165 = vadd.f32 %v1163, %v1164
        %v1166 = vsel %vm904, %v1110, 0.0
        %v1167 = vadd.f32 %v1165, %v1166
        %v1168 = vsel %vm904, %v1111, 0.0
        %v1169 = vadd.f32 %v1167, %v1168
        %v1170 = vsel %vm904, %v1112, 0.0
        %v1171 = vadd.f32 %v1169, %v1170
        %v1172 = vsel %vm904, %v1113, 0.0
        %v1173 = vadd.f32 %v1171, %v1172
        %v1174 = vsel %vm904, %v1114, 0.0
        %v1175 = vadd.f32 %v1173, %v1174
        %v1176 = vsel %vm904, %v1115, 0.0
        %v1177 = vadd.f32 %v1175, %v1176
        %v1178 = vsel %vm904, %v1116, 0.0
        %v1179 = vadd.f32 %v1177, %v1178
        %v1180 = vrot.slane %v1179, 4
        %v1181 = vadd.f32 %v1179, %v1180
        %v1182 = vrot.slane %v1181, 2
        %v1183 = vadd.f32 %v1181, %v1182
        %v1184 = vrot.slane %v1183, 1
        %v1185 = vadd.f32 %v1183, %v1184
        %v1187 = vsel %vm904, %v1185, 0
        %1189 = vmatprep.subr.mxu0 0.0
        %1190 = vmatpush1.msra.mxu0 %v305
        %1191 = vmatprep.subr.mxu0 0.0
        %1192 = vmatpush1.msra.mxu0 %v306
        %1193 = vmatprep.subr.mxu0 0.0
        %1194 = vmatpush1.msra.mxu0 %v307
        %1195 = vmatprep.subr.mxu0 0.0
        %1196 = vmatpush1.msra.mxu0 %v308
        %1197 = vmatprep.subr.mxu0 0.0
        %1198 = vmatpush1.msra.mxu0 0.0
        %1199 = vmatprep.subr.mxu0 0.0
        %1200 = vmatpush1.msra.mxu0 0.0
        %1201 = vmatprep.subr.mxu0 0.0
        %1202 = vmatpush1.msra.mxu0 0.0
        %1203 = vmatprep.subr.mxu0 0.0
        %1204 = vmatpush1.msra.mxu0 0.0
        %1205 = vmatprep.subr.mxu0 0.0
        %1206 = vmatpush1.msra.mxu0 0.0
        %1207 = vmatprep.subr.mxu0 0.0
        %1208 = vmatpush1.msra.mxu0 0.0
        %1209 = vmatprep.subr.mxu0 0.0
        %1210 = vmatpush1.msra.mxu0 0.0
        %1211 = vmatprep.subr.mxu0 0.0
        %1212 = vmatpush1.msra.mxu0 0.0
        %1213 = vmatprep.subr.mxu0 0.0
        %1214 = vmatpush1.msra.mxu0 0.0
        %1215 = vmatprep.subr.mxu0 0.0
        %1216 = vmatpush1.msra.mxu0 0.0
        %1217 = vmatprep.subr.mxu0 0.0
        %1218 = vmatpush1.msra.mxu0 0.0
        %1219 = vmatprep.subr.mxu0 0.0
        %1220 = vmatpush1.msra.mxu0 0.0
        %1221 = vmatprep.subr.mxu0 0.0
        %1222 = vmatpush1.msra.mxu0 0.0
        %1223 = vmatprep.subr.mxu0 0.0
        %1224 = vmatpush1.msra.mxu0 0.0
        %1225 = vmatprep.subr.mxu0 0.0
        %1226 = vmatpush1.msra.mxu0 0.0
        %1227 = vmatprep.subr.mxu0 0.0
        %1228 = vmatpush1.msra.mxu0 0.0
        %1229 = vmatprep.subr.mxu0 0.0
        %1230 = vmatpush1.msra.mxu0 0.0
        %1231 = vmatprep.subr.mxu0 0.0
        %1232 = vmatpush1.msra.mxu0 0.0
        %1233 = vmatprep.subr.mxu0 0.0
        %1234 = vmatpush1.msra.mxu0 0.0
        %1235 = vmatprep.subr.mxu0 0.0
        %1236 = vmatpush1.msra.mxu0 0.0
        %1237 = vmatprep.subr.mxu0 0.0
        %1238 = vmatpush1.msra.mxu0 0.0
        %1239 = vmatprep.subr.mxu0 0.0
        %1240 = vmatpush1.msra.mxu0 0.0
        %1241 = vmatprep.subr.mxu0 0.0
        %1242 = vmatpush1.msra.mxu0 0.0
        %1243 = vmatprep.subr.mxu0 0.0
        %1244 = vmatpush1.msra.mxu0 0.0
        %1245 = vmatprep.subr.mxu0 0.0
        %1246 = vmatpush1.msra.mxu0 0.0
        %1247 = vmatprep.subr.mxu0 0.0
        %1248 = vmatpush1.msra.mxu0 0.0
        %1249 = vmatprep.subr.mxu0 0.0
        %1250 = vmatpush1.msra.mxu0 0.0
        %1251 = vmatprep.subr.mxu0 0.0
        %1252 = vmatpush1.msra.mxu0 0.0
        %1253 = vmatprep.mubr.f32.mxu0 0.0
        %1254 = vmatmul.mubr.f32.gmra.mrb[0].mxu0 %v1187
        %v1255 = vpop.f32.mrb[0].mxu0
        %v1256 = vadd.f32 0.0, %v1255
        %v1257 = vpop.f32.mrb[0].mxu0
        %1258 = vdwg.mxu0
        %v1259 = vmul.f32 %v1256, %v1047
        %v1260 = vadd.f32 %v1259, 1e-05
        %v1261 = vrsqrt.pop %v1260
        %v1262 = vld [vmem:[%s5] sm:$0x1]
        %v1263 = vld [vmem:[%s6] sm:$0x1]
        %v1264 = vlaneseq
        %v1265 = vshrl.u32 %v1264, 7
        %v1266 = vsub.s32 0, %v1265
        %v1267 = vrot.slane %v1261, %v1266
        %v1268 = vmul.f32 %v1053, %v1267
        %v1269 = vmul.f32 %v1054, %v1267
        %v1270 = vmul.f32 %v1055, %v1267
        %v1271 = vmul.f32 %v1056, %v1267
        %v1272 = vmul.f32 %v1057, %v1267
        %v1273 = vmul.f32 %v1058, %v1267
        %v1274 = vmul.f32 %v1059, %v1267
        %v1275 = vmul.f32 %v1060, %v1267
        %v1276 = vmul.f32 %v1061, %v1267
        %v1277 = vmul.f32 %v1062, %v1267
        %v1278 = vmul.f32 %v1063, %v1267
        %v1279 = vmul.f32 %v1064, %v1267
        %v1280 = vmul.f32 %v1065, %v1267
        %v1281 = vmul.f32 %v1066, %v1267
        %v1282 = vmul.f32 %v1067, %v1267
        %v1283 = vmul.f32 %v1068, %v1267
        %v1284 = vmul.f32 %v1069, %v1267
        %v1285 = vmul.f32 %v1070, %v1267
        %v1286 = vmul.f32 %v1071, %v1267
        %v1287 = vmul.f32 %v1072, %v1267
        %v1288 = vmul.f32 %v1073, %v1267
        %v1289 = vmul.f32 %v1074, %v1267
        %v1290 = vmul.f32 %v1075, %v1267
        %v1291 = vmul.f32 %v1076, %v1267
        %v1292 = vmul.f32 %v1077, %v1267
        %v1293 = vmul.f32 %v1078, %v1267
        %v1294 = vmul.f32 %v1079, %v1267
        %v1295 = vmul.f32 %v1080, %v1267
        %v1296 = vmul.f32 %v1081, %v1267
        %v1297 = vmul.f32 %v1082, %v1267
        %v1298 = vmul.f32 %v1083, %v1267
        %v1299 = vmul.f32 %v1084, %v1267
        %v1300 = vlaneseq
        %v1301 = vshrl.u32 %v1300, 7
        %v1302 = vsub.s32 0, %v1301
        %v1303 = vrot.slane %v1262, %v1302
        %v1304 = vmul.f32 %v1268, %v1303
        %v1305 = vmul.f32 %v1269, %v1303
        %v1306 = vmul.f32 %v1270, %v1303
        %v1307 = vmul.f32 %v1271, %v1303
        %v1308 = vmul.f32 %v1272, %v1303
        %v1309 = vmul.f32 %v1273, %v1303
        %v1310 = vmul.f32 %v1274, %v1303
        %v1311 = vmul.f32 %v1275, %v1303
        %v1312 = vmul.f32 %v1276, %v1303
        %v1313 = vmul.f32 %v1277, %v1303
        %v1314 = vmul.f32 %v1278, %v1303
        %v1315 = vmul.f32 %v1279, %v1303
        %v1316 = vmul.f32 %v1280, %v1303
        %v1317 = vmul.f32 %v1281, %v1303
        %v1318 = vmul.f32 %v1282, %v1303
        %v1319 = vmul.f32 %v1283, %v1303
        %v1320 = vmul.f32 %v1284, %v1303
        %v1321 = vmul.f32 %v1285, %v1303
        %v1322 = vmul.f32 %v1286, %v1303
        %v1323 = vmul.f32 %v1287, %v1303
        %v1324 = vmul.f32 %v1288, %v1303
        %v1325 = vmul.f32 %v1289, %v1303
        %v1326 = vmul.f32 %v1290, %v1303
        %v1327 = vmul.f32 %v1291, %v1303
        %v1328 = vmul.f32 %v1292, %v1303
        %v1329 = vmul.f32 %v1293, %v1303
        %v1330 = vmul.f32 %v1294, %v1303
        %v1331 = vmul.f32 %v1295, %v1303
        %v1332 = vmul.f32 %v1296, %v1303
        %v1333 = vmul.f32 %v1297, %v1303
        %v1334 = vmul.f32 %v1298, %v1303
        %v1335 = vmul.f32 %v1299, %v1303
        %v1336 = vlaneseq
        %v1337 = vshrl.u32 %v1336, 7
        %v1338 = vsub.s32 0, %v1337
        %v1339 = vrot.slane %v1263, %v1338
        %v1340 = vadd.f32 %v1304, %v1339
        %v1341 = vadd.f32 %v1305, %v1339
        %v1342 = vadd.f32 %v1306, %v1339
        %v1343 = vadd.f32 %v1307, %v1339
        %v1344 = vadd.f32 %v1308, %v1339
        %v1345 = vadd.f32 %v1309, %v1339
        %v1346 = vadd.f32 %v1310, %v1339
        %v1347 = vadd.f32 %v1311, %v1339
        %v1348 = vadd.f32 %v1312, %v1339
        %v1349 = vadd.f32 %v1313, %v1339
        %v1350 = vadd.f32 %v1314, %v1339
        %v1351 = vadd.f32 %v1315, %v1339
        %v1352 = vadd.f32 %v1316, %v1339
        %v1353 = vadd.f32 %v1317, %v1339
        %v1354 = vadd.f32 %v1318, %v1339
        %v1355 = vadd.f32 %v1319, %v1339
        %v1356 = vadd.f32 %v1320, %v1339
        %v1357 = vadd.f32 %v1321, %v1339
        %v1358 = vadd.f32 %v1322, %v1339
        %v1359 = vadd.f32 %v1323, %v1339
        %v1360 = vadd.f32 %v1324, %v1339
        %v1361 = vadd.f32 %v1325, %v1339
        %v1362 = vadd.f32 %v1326, %v1339
        %v1363 = vadd.f32 %v1327, %v1339
        %v1364 = vadd.f32 %v1328, %v1339
        %v1365 = vadd.f32 %v1329, %v1339
        %v1366 = vadd.f32 %v1330, %v1339
        %v1367 = vadd.f32 %v1331, %v1339
        %v1368 = vadd.f32 %v1332, %v1339
        %v1369 = vadd.f32 %v1333, %v1339
        %v1370 = vadd.f32 %v1334, %v1339
        %v1371 = vadd.f32 %v1335, %v1339
        %v1372 = vmax.f32 %v1340, 0.0
        %v1373 = vmax.f32 %v1341, 0.0
        %v1374 = vmax.f32 %v1342, 0.0
        %v1375 = vmax.f32 %v1343, 0.0
        %v1376 = vmax.f32 %v1344, 0.0
        %v1377 = vmax.f32 %v1345, 0.0
        %v1378 = vmax.f32 %v1346, 0.0
        %v1379 = vmax.f32 %v1347, 0.0
        %v1380 = vmax.f32 %v1348, 0.0
        %v1381 = vmax.f32 %v1349, 0.0
        %v1382 = vmax.f32 %v1350, 0.0
        %v1383 = vmax.f32 %v1351, 0.0
        %v1384 = vmax.f32 %v1352, 0.0
        %v1385 = vmax.f32 %v1353, 0.0
        %v1386 = vmax.f32 %v1354, 0.0
        %v1387 = vmax.f32 %v1355, 0.0
        %v1388 = vmax.f32 %v1356, 0.0
        %v1389 = vmax.f32 %v1357, 0.0
        %v1390 = vmax.f32 %v1358, 0.0
        %v1391 = vmax.f32 %v1359, 0.0
        %v1392 = vmax.f32 %v1360, 0.0
        %v1393 = vmax.f32 %v1361, 0.0
        %v1394 = vmax.f32 %v1362, 0.0
        %v1395 = vmax.f32 %v1363, 0.0
        %v1396 = vmax.f32 %v1364, 0.0
        %v1397 = vmax.f32 %v1365, 0.0
        %v1398 = vmax.f32 %v1366, 0.0
        %v1399 = vmax.f32 %v1367, 0.0
        %v1400 = vmax.f32 %v1368, 0.0
        %v1401 = vmax.f32 %v1369, 0.0
        %v1402 = vmax.f32 %v1370, 0.0
        %v1403 = vmax.f32 %v1371, 0.0
        %v1404 = vld [vmem:[%s4] sm:$0xf]
        %v1405 = vld [vmem:[%s4 + $0x4] sm:$0xf]
        %v1406 = vld [vmem:[%s4 + $0x8] sm:$0xf]
        %v1407 = vld [vmem:[%s4 + $0xc] sm:$0xf]
        %v1408 = vpack.c.bf16 %v1373, %v1372
        %v1409 = vpack.c.bf16 %v1375, %v1374
        %v1410 = vpack.c.bf16 %v1377, %v1376
        %v1411 = vpack.c.bf16 %v1379, %v1378
        %v1412 = vpack.c.bf16 %v1381, %v1380
        %v1413 = vpack.c.bf16 %v1383, %v1382
        %v1414 = vpack.c.bf16 %v1385, %v1384
        %v1415 = vpack.c.bf16 %v1387, %v1386
        %v1416 = vpack.c.bf16 %v1389, %v1388
        %v1417 = vpack.c.bf16 %v1391, %v1390
        %v1418 = vpack.c.bf16 %v1393, %v1392
        %v1419 = vpack.c.bf16 %v1395, %v1394
        %v1420 = vpack.c.bf16 %v1397, %v1396
        %v1421 = vpack.c.bf16 %v1399, %v1398
        %v1422 = vpack.c.bf16 %v1401, %v1400
        %v1423 = vpack.c.bf16 %v1403, %v1402
        %s1424 = scalar_lea.vmem [#allocation2], 48
        %v1425 = vld [vmem:[%s1424 + $0x2] sm:$0xff]
        %v1426 = vld [vmem:[%s1424 + $0xa] sm:$0xff]
        %v1427 = vld [vmem:[%s1424 + $0x1a] sm:$0xff]
        %v1428 = vld [vmem:[%s1424 + $0x22] sm:$0xff]
        %v1429 = vld [vmem:[%s1424 + $0x32] sm:$0xff]
        %v1430 = vld [vmem:[%s1424 + $0x3a] sm:$0xff]
        %v1431 = vld [vmem:[%s1424 + $0x4a] sm:$0xff]
        %v1432 = vld [vmem:[%s1424 + $0x52] sm:$0xff]
        %v1433 = vld [vmem:[%s1424 + $0x62] sm:$0xff]
        %v1434 = vld [vmem:[%s1424 + $0x6a] sm:$0xff]
        %v1435 = vld [vmem:[%s1424 + $0x7a] sm:$0xff]
        %v1436 = vld [vmem:[%s1424 + $0x82] sm:$0xff]
        %v1437 = vld [vmem:[%s1424 + $0x92] sm:$0xff]
        %v1438 = vld [vmem:[%s1424 + $0x9a] sm:$0xff]
        %v1439 = vld [vmem:[%s1424 + $0xaa] sm:$0xff]
        %v1440 = vld [vmem:[%s1424 + $0xb2] sm:$0xff]
        %v1441 = vld [vmem:[%s1424 + $0xc2] sm:$0xff]
        %v1442 = vld [vmem:[%s1424 + $0xca] sm:$0xff]
        %v1443 = vld [vmem:[%s1424 + $0xda] sm:$0xff]
        %v1444 = vld [vmem:[%s1424 + $0xe2] sm:$0xff]
        %v1445 = vld [vmem:[%s1424 + $0xf2] sm:$0xff]
        %v1446 = vld [vmem:[%s1424 + $0xfa] sm:$0xff]
        %v1447 = vld [vmem:[%s1424 + $0x10a] sm:$0xff]
        %v1448 = vld [vmem:[%s1424 + $0x112] sm:$0xff]
        %v1449 = vld [vmem:[%s1424 + $0x122] sm:$0xff]
        %v1450 = vld [vmem:[%s1424 + $0x12a] sm:$0xff]
        %v1451 = vld [vmem:[%s1424 + $0x13a] sm:$0xff]
        %v1452 = vld [vmem:[%s1424 + $0x142] sm:$0xff]
        %v1453 = vld [vmem:[%s1424 + $0x152] sm:$0xff]
        %v1454 = vld [vmem:[%s1424 + $0x15a] sm:$0xff]
        %v1455 = vld [vmem:[%s1424 + $0x16a] sm:$0xff]
        %v1456 = vld [vmem:[%s1424 + $0x172] sm:$0xff]
        %v1457 = vld [vmem:[%s1424 + $0x3] sm:$0xff]
        %v1458 = vld [vmem:[%s1424 + $0xb] sm:$0xff]
        %v1459 = vld [vmem:[%s1424 + $0x1b] sm:$0xff]
        %v1460 = vld [vmem:[%s1424 + $0x23] sm:$0xff]
        %v1461 = vld [vmem:[%s1424 + $0x33] sm:$0xff]
        %v1462 = vld [vmem:[%s1424 + $0x3b] sm:$0xff]
        %v1463 = vld [vmem:[%s1424 + $0x4b] sm:$0xff]
        %v1464 = vld [vmem:[%s1424 + $0x53] sm:$0xff]
        %v1465 = vld [vmem:[%s1424 + $0x63] sm:$0xff]
        %v1466 = vld [vmem:[%s1424 + $0x6b] sm:$0xff]
        %v1467 = vld [vmem:[%s1424 + $0x7b] sm:$0xff]
        %v1468 = vld [vmem:[%s1424 + $0x83] sm:$0xff]
        %v1469 = vld [vmem:[%s1424 + $0x93] sm:$0xff]
        %v1470 = vld [vmem:[%s1424 + $0x9b] sm:$0xff]
        %v1471 = vld [vmem:[%s1424 + $0xab] sm:$0xff]
        %v1472 = vld [vmem:[%s1424 + $0xb3] sm:$0xff]
        %v1473 = vld [vmem:[%s1424 + $0xc3] sm:$0xff]
        %v1474 = vld [vmem:[%s1424 + $0xcb] sm:$0xff]
        %v1475 = vld [vmem:[%s1424 + $0xdb] sm:$0xff]
        %v1476 = vld [vmem:[%s1424 + $0xe3] sm:$0xff]
        %v1477 = vld [vmem:[%s1424 + $0xf3] sm:$0xff]
        %v1478 = vld [vmem:[%s1424 + $0xfb] sm:$0xff]
        %v1479 = vld [vmem:[%s1424 + $0x10b] sm:$0xff]
        %v1480 = vld [vmem:[%s1424 + $0x113] sm:$0xff]
        %v1481 = vld [vmem:[%s1424 + $0x123] sm:$0xff]
        %v1482 = vld [vmem:[%s1424 + $0x12b] sm:$0xff]
        %v1483 = vld [vmem:[%s1424 + $0x13b] sm:$0xff]
        %v1484 = vld [vmem:[%s1424 + $0x143] sm:$0xff]
        %v1485 = vld [vmem:[%s1424 + $0x153] sm:$0xff]
        %v1486 = vld [vmem:[%s1424 + $0x15b] sm:$0xff]
        %v1487 = vld [vmem:[%s1424 + $0x16b] sm:$0xff]
        %v1488 = vld [vmem:[%s1424 + $0x173] sm:$0xff]
        %v1489 = vld [vmem:[%s1424 + $0x4] sm:$0xff]
        %v1490 = vld [vmem:[%s1424 + $0xc] sm:$0xff]
        %v1491 = vld [vmem:[%s1424 + $0x1c] sm:$0xff]
        %v1492 = vld [vmem:[%s1424 + $0x24] sm:$0xff]
        %v1493 = vld [vmem:[%s1424 + $0x34] sm:$0xff]
        %v1494 = vld [vmem:[%s1424 + $0x3c] sm:$0xff]
        %v1495 = vld [vmem:[%s1424 + $0x4c] sm:$0xff]
        %v1496 = vld [vmem:[%s1424 + $0x54] sm:$0xff]
        %v1497 = vld [vmem:[%s1424 + $0x64] sm:$0xff]
        %v1498 = vld [vmem:[%s1424 + $0x6c] sm:$0xff]
        %v1499 = vld [vmem:[%s1424 + $0x7c] sm:$0xff]
        %v1500 = vld [vmem:[%s1424 + $0x84] sm:$0xff]
        %v1501 = vld [vmem:[%s1424 + $0x94] sm:$0xff]
        %v1502 = vld [vmem:[%s1424 + $0x9c] sm:$0xff]
        %v1503 = vld [vmem:[%s1424 + $0xac] sm:$0xff]
        %v1504 = vld [vmem:[%s1424 + $0xb4] sm:$0xff]
        %v1505 = vld [vmem:[%s1424 + $0xc4] sm:$0xff]
        %v1506 = vld [vmem:[%s1424 + $0xcc] sm:$0xff]
        %v1507 = vld [vmem:[%s1424 + $0xdc] sm:$0xff]
        %v1508 = vld [vmem:[%s1424 + $0xe4] sm:$0xff]
        %v1509 = vld [vmem:[%s1424 + $0xf4] sm:$0xff]
        %v1510 = vld [vmem:[%s1424 + $0xfc] sm:$0xff]
        %v1511 = vld [vmem:[%s1424 + $0x10c] sm:$0xff]
        %v1512 = vld [vmem:[%s1424 + $0x114] sm:$0xff]
        %v1513 = vld [vmem:[%s1424 + $0x124] sm:$0xff]
        %v1514 = vld [vmem:[%s1424 + $0x12c] sm:$0xff]
        %v1515 = vld [vmem:[%s1424 + $0x13c] sm:$0xff]
        %v1516 = vld [vmem:[%s1424 + $0x144] sm:$0xff]
        %v1517 = vld [vmem:[%s1424 + $0x154] sm:$0xff]
        %v1518 = vld [vmem:[%s1424 + $0x15c] sm:$0xff]
        %v1519 = vld [vmem:[%s1424 + $0x16c] sm:$0xff]
        %v1520 = vld [vmem:[%s1424 + $0x174] sm:$0xff]
        %v1521 = vld [vmem:[%s439 + $0x2] sm:$0xff]
        %v1522 = vld [vmem:[%s439 + $0xa] sm:$0xff]
        %v1523 = vld [vmem:[%s439 + $0x1a] sm:$0xff]
        %v1524 = vld [vmem:[%s439 + $0x22] sm:$0xff]
        %v1525 = vld [vmem:[%s439 + $0x32] sm:$0xff]
        %v1526 = vld [vmem:[%s439 + $0x3a] sm:$0xff]
        %v1527 = vld [vmem:[%s439 + $0x4a] sm:$0xff]
        %v1528 = vld [vmem:[%s439 + $0x52] sm:$0xff]
        %v1529 = vld [vmem:[%s439 + $0x62] sm:$0xff]
        %v1530 = vld [vmem:[%s439 + $0x6a] sm:$0xff]
        %v1531 = vld [vmem:[%s439 + $0x7a] sm:$0xff]
        %v1532 = vld [vmem:[%s439 + $0x82] sm:$0xff]
        %v1533 = vld [vmem:[%s439 + $0x92] sm:$0xff]
        %v1534 = vld [vmem:[%s439 + $0x9a] sm:$0xff]
        %v1535 = vld [vmem:[%s439 + $0xaa] sm:$0xff]
        %v1536 = vld [vmem:[%s439 + $0xb2] sm:$0xff]
        %v1537 = vld [vmem:[%s439 + $0xc2] sm:$0xff]
        %v1538 = vld [vmem:[%s439 + $0xca] sm:$0xff]
        %v1539 = vld [vmem:[%s439 + $0xda] sm:$0xff]
        %v1540 = vld [vmem:[%s439 + $0xe2] sm:$0xff]
        %v1541 = vld [vmem:[%s439 + $0xf2] sm:$0xff]
        %v1542 = vld [vmem:[%s439 + $0xfa] sm:$0xff]
        %v1543 = vld [vmem:[%s439 + $0x10a] sm:$0xff]
        %v1544 = vld [vmem:[%s439 + $0x112] sm:$0xff]
        %v1545 = vld [vmem:[%s439 + $0x122] sm:$0xff]
        %v1546 = vld [vmem:[%s439 + $0x12a] sm:$0xff]
        %v1547 = vld [vmem:[%s439 + $0x13a] sm:$0xff]
        %v1548 = vld [vmem:[%s439 + $0x142] sm:$0xff]
        %v1549 = vld [vmem:[%s439 + $0x152] sm:$0xff]
        %v1550 = vld [vmem:[%s439 + $0x15a] sm:$0xff]
        %v1551 = vld [vmem:[%s439 + $0x16a] sm:$0xff]
        %v1552 = vld [vmem:[%s439 + $0x172] sm:$0xff]
        %v1553 = vld [vmem:[%s439 + $0x3] sm:$0xff]
        %v1554 = vld [vmem:[%s439 + $0xb] sm:$0xff]
        %v1555 = vld [vmem:[%s439 + $0x1b] sm:$0xff]
        %v1556 = vld [vmem:[%s439 + $0x23] sm:$0xff]
        %v1557 = vld [vmem:[%s439 + $0x33] sm:$0xff]
        %v1558 = vld [vmem:[%s439 + $0x3b] sm:$0xff]
        %v1559 = vld [vmem:[%s439 + $0x4b] sm:$0xff]
        %v1560 = vld [vmem:[%s439 + $0x53] sm:$0xff]
        %v1561 = vld [vmem:[%s439 + $0x63] sm:$0xff]
        %v1562 = vld [vmem:[%s439 + $0x6b] sm:$0xff]
        %v1563 = vld [vmem:[%s439 + $0x7b] sm:$0xff]
        %v1564 = vld [vmem:[%s439 + $0x83] sm:$0xff]
        %v1565 = vld [vmem:[%s439 + $0x93] sm:$0xff]
        %v1566 = vld [vmem:[%s439 + $0x9b] sm:$0xff]
        %v1567 = vld [vmem:[%s439 + $0xab] sm:$0xff]
        %v1568 = vld [vmem:[%s439 + $0xb3] sm:$0xff]
        %v1569 = vld [vmem:[%s439 + $0xc3] sm:$0xff]
        %v1570 = vld [vmem:[%s439 + $0xcb] sm:$0xff]
        %v1571 = vld [vmem:[%s439 + $0xdb] sm:$0xff]
        %v1572 = vld [vmem:[%s439 + $0xe3] sm:$0xff]
        %v1573 = vld [vmem:[%s439 + $0xf3] sm:$0xff]
        %v1574 = vld [vmem:[%s439 + $0xfb] sm:$0xff]
        %v1575 = vld [vmem:[%s439 + $0x10b] sm:$0xff]
        %v1576 = vld [vmem:[%s439 + $0x113] sm:$0xff]
        %v1577 = vld [vmem:[%s439 + $0x123] sm:$0xff]
        %v1578 = vld [vmem:[%s439 + $0x12b] sm:$0xff]
        %v1579 = vld [vmem:[%s439 + $0x13b] sm:$0xff]
        %v1580 = vld [vmem:[%s439 + $0x143] sm:$0xff]
        %v1581 = vld [vmem:[%s439 + $0x153] sm:$0xff]
        %v1582 = vld [vmem:[%s439 + $0x15b] sm:$0xff]
        %v1583 = vld [vmem:[%s439 + $0x16b] sm:$0xff]
        %v1584 = vld [vmem:[%s439 + $0x173] sm:$0xff]
        %v1585 = vld [vmem:[%s439 + $0x4] sm:$0xff]
        %v1586 = vld [vmem:[%s439 + $0xc] sm:$0xff]
        %v1587 = vld [vmem:[%s439 + $0x1c] sm:$0xff]
        %v1588 = vld [vmem:[%s439 + $0x24] sm:$0xff]
        %v1589 = vld [vmem:[%s439 + $0x34] sm:$0xff]
        %v1590 = vld [vmem:[%s439 + $0x3c] sm:$0xff]
        %v1591 = vld [vmem:[%s439 + $0x4c] sm:$0xff]
        %v1592 = vld [vmem:[%s439 + $0x54] sm:$0xff]
        %v1593 = vld [vmem:[%s439 + $0x64] sm:$0xff]
        %v1594 = vld [vmem:[%s439 + $0x6c] sm:$0xff]
        %v1595 = vld [vmem:[%s439 + $0x7c] sm:$0xff]
        %v1596 = vld [vmem:[%s439 + $0x84] sm:$0xff]
        %v1597 = vld [vmem:[%s439 + $0x94] sm:$0xff]
        %v1598 = vld [vmem:[%s439 + $0x9c] sm:$0xff]
        %v1599 = vld [vmem:[%s439 + $0xac] sm:$0xff]
        %v1600 = vld [vmem:[%s439 + $0xb4] sm:$0xff]
        %v1601 = vld [vmem:[%s439 + $0xc4] sm:$0xff]
        %v1602 = vld [vmem:[%s439 + $0xcc] sm:$0xff]
        %v1603 = vld [vmem:[%s439 + $0xdc] sm:$0xff]
        %v1604 = vld [vmem:[%s439 + $0xe4] sm:$0xff]
        %v1605 = vld [vmem:[%s439 + $0xf4] sm:$0xff]
        %v1606 = vld [vmem:[%s439 + $0xfc] sm:$0xff]
        %v1607 = vld [vmem:[%s439 + $0x10c] sm:$0xff]
        %v1608 = vld [vmem:[%s439 + $0x114] sm:$0xff]
        %v1609 = vld [vmem:[%s439 + $0x124] sm:$0xff]
        %v1610 = vld [vmem:[%s439 + $0x12c] sm:$0xff]
        %v1611 = vld [vmem:[%s439 + $0x13c] sm:$0xff]
        %v1612 = vld [vmem:[%s439 + $0x144] sm:$0xff]
        %v1613 = vld [vmem:[%s439 + $0x154] sm:$0xff]
        %v1614 = vld [vmem:[%s439 + $0x15c] sm:$0xff]
        %v1615 = vld [vmem:[%s439 + $0x16c] sm:$0xff]
        %v1616 = vld [vmem:[%s439 + $0x174] sm:$0xff]
        %s1617 = scalar_lea.vmem [#allocation2], 96
        %v1618 = vld [vmem:[%s1617 + $0x2] sm:$0xff]
        %v1619 = vld [vmem:[%s1617 + $0xa] sm:$0xff]
        %v1620 = vld [vmem:[%s1617 + $0x1a] sm:$0xff]
        %v1621 = vld [vmem:[%s1617 + $0x22] sm:$0xff]
        %v1622 = vld [vmem:[%s1617 + $0x32] sm:$0xff]
        %v1623 = vld [vmem:[%s1617 + $0x3a] sm:$0xff]
        %v1624 = vld [vmem:[%s1617 + $0x4a] sm:$0xff]
        %v1625 = vld [vmem:[%s1617 + $0x52] sm:$0xff]
        %v1626 = vld [vmem:[%s1617 + $0x62] sm:$0xff]
        %v1627 = vld [vmem:[%s1617 + $0x6a] sm:$0xff]
        %v1628 = vld [vmem:[%s1617 + $0x7a] sm:$0xff]
        %v1629 = vld [vmem:[%s1617 + $0x82] sm:$0xff]
        %v1630 = vld [vmem:[%s1617 + $0x92] sm:$0xff]
        %v1631 = vld [vmem:[%s1617 + $0x9a] sm:$0xff]
        %v1632 = vld [vmem:[%s1617 + $0xaa] sm:$0xff]
        %v1633 = vld [vmem:[%s1617 + $0xb2] sm:$0xff]
        %v1634 = vld [vmem:[%s1617 + $0xc2] sm:$0xff]
        %v1635 = vld [vmem:[%s1617 + $0xca] sm:$0xff]
        %v1636 = vld [vmem:[%s1617 + $0xda] sm:$0xff]
        %v1637 = vld [vmem:[%s1617 + $0xe2] sm:$0xff]
        %v1638 = vld [vmem:[%s1617 + $0xf2] sm:$0xff]
        %v1639 = vld [vmem:[%s1617 + $0xfa] sm:$0xff]
        %v1640 = vld [vmem:[%s1617 + $0x10a] sm:$0xff]
        %v1641 = vld [vmem:[%s1617 + $0x112] sm:$0xff]
        %v1642 = vld [vmem:[%s1617 + $0x122] sm:$0xff]
        %v1643 = vld [vmem:[%s1617 + $0x12a] sm:$0xff]
        %v1644 = vld [vmem:[%s1617 + $0x13a] sm:$0xff]
        %v1645 = vld [vmem:[%s1617 + $0x142] sm:$0xff]
        %v1646 = vld [vmem:[%s1617 + $0x152] sm:$0xff]
        %v1647 = vld [vmem:[%s1617 + $0x15a] sm:$0xff]
        %v1648 = vld [vmem:[%s1617 + $0x16a] sm:$0xff]
        %v1649 = vld [vmem:[%s1617 + $0x172] sm:$0xff]
        %v1650 = vld [vmem:[%s1617 + $0x3] sm:$0xff]
        %v1651 = vld [vmem:[%s1617 + $0xb] sm:$0xff]
        %v1652 = vld [vmem:[%s1617 + $0x1b] sm:$0xff]
        %v1653 = vld [vmem:[%s1617 + $0x23] sm:$0xff]
        %v1654 = vld [vmem:[%s1617 + $0x33] sm:$0xff]
        %v1655 = vld [vmem:[%s1617 + $0x3b] sm:$0xff]
        %v1656 = vld [vmem:[%s1617 + $0x4b] sm:$0xff]
        %v1657 = vld [vmem:[%s1617 + $0x53] sm:$0xff]
        %v1658 = vld [vmem:[%s1617 + $0x63] sm:$0xff]
        %v1659 = vld [vmem:[%s1617 + $0x6b] sm:$0xff]
        %v1660 = vld [vmem:[%s1617 + $0x7b] sm:$0xff]
        %v1661 = vld [vmem:[%s1617 + $0x83] sm:$0xff]
        %v1662 = vld [vmem:[%s1617 + $0x93] sm:$0xff]
        %v1663 = vld [vmem:[%s1617 + $0x9b] sm:$0xff]
        %v1664 = vld [vmem:[%s1617 + $0xab] sm:$0xff]
        %v1665 = vld [vmem:[%s1617 + $0xb3] sm:$0xff]
        %v1666 = vld [vmem:[%s1617 + $0xc3] sm:$0xff]
        %v1667 = vld [vmem:[%s1617 + $0xcb] sm:$0xff]
        %v1668 = vld [vmem:[%s1617 + $0xdb] sm:$0xff]
        %v1669 = vld [vmem:[%s1617 + $0xe3] sm:$0xff]
        %v1670 = vld [vmem:[%s1617 + $0xf3] sm:$0xff]
        %v1671 = vld [vmem:[%s1617 + $0xfb] sm:$0xff]
        %v1672 = vld [vmem:[%s1617 + $0x10b] sm:$0xff]
        %v1673 = vld [vmem:[%s1617 + $0x113] sm:$0xff]
        %v1674 = vld [vmem:[%s1617 + $0x123] sm:$0xff]
        %v1675 = vld [vmem:[%s1617 + $0x12b] sm:$0xff]
        %v1676 = vld [vmem:[%s1617 + $0x13b] sm:$0xff]
        %v1677 = vld [vmem:[%s1617 + $0x143] sm:$0xff]
        %v1678 = vld [vmem:[%s1617 + $0x153] sm:$0xff]
        %v1679 = vld [vmem:[%s1617 + $0x15b] sm:$0xff]
        %v1680 = vld [vmem:[%s1617 + $0x16b] sm:$0xff]
        %v1681 = vld [vmem:[%s1617 + $0x173] sm:$0xff]
        %v1682 = vld [vmem:[%s1617 + $0x4] sm:$0xff]
        %v1683 = vld [vmem:[%s1617 + $0xc] sm:$0xff]
        %v1684 = vld [vmem:[%s1617 + $0x1c] sm:$0xff]
        %v1685 = vld [vmem:[%s1617 + $0x24] sm:$0xff]
        %v1686 = vld [vmem:[%s1617 + $0x34] sm:$0xff]
        %v1687 = vld [vmem:[%s1617 + $0x3c] sm:$0xff]
        %v1688 = vld [vmem:[%s1617 + $0x4c] sm:$0xff]
        %v1689 = vld [vmem:[%s1617 + $0x54] sm:$0xff]
        %v1690 = vld [vmem:[%s1617 + $0x64] sm:$0xff]
        %v1691 = vld [vmem:[%s1617 + $0x6c] sm:$0xff]
        %v1692 = vld [vmem:[%s1617 + $0x7c] sm:$0xff]
        %v1693 = vld [vmem:[%s1617 + $0x84] sm:$0xff]
        %v1694 = vld [vmem:[%s1617 + $0x94] sm:$0xff]
        %v1695 = vld [vmem:[%s1617 + $0x9c] sm:$0xff]
        %v1696 = vld [vmem:[%s1617 + $0xac] sm:$0xff]
        %v1697 = vld [vmem:[%s1617 + $0xb4] sm:$0xff]
        %v1698 = vld [vmem:[%s1617 + $0xc4] sm:$0xff]
        %v1699 = vld [vmem:[%s1617 + $0xcc] sm:$0xff]
        %v1700 = vld [vmem:[%s1617 + $0xdc] sm:$0xff]
        %v1701 = vld [vmem:[%s1617 + $0xe4] sm:$0xff]
        %v1702 = vld [vmem:[%s1617 + $0xf4] sm:$0xff]
        %v1703 = vld [vmem:[%s1617 + $0xfc] sm:$0xff]
        %v1704 = vld [vmem:[%s1617 + $0x10c] sm:$0xff]
        %v1705 = vld [vmem:[%s1617 + $0x114] sm:$0xff]
        %v1706 = vld [vmem:[%s1617 + $0x124] sm:$0xff]
        %v1707 = vld [vmem:[%s1617 + $0x12c] sm:$0xff]
        %v1708 = vld [vmem:[%s1617 + $0x13c] sm:$0xff]
        %v1709 = vld [vmem:[%s1617 + $0x144] sm:$0xff]
        %v1710 = vld [vmem:[%s1617 + $0x154] sm:$0xff]
        %v1711 = vld [vmem:[%s1617 + $0x15c] sm:$0xff]
        %v1712 = vld [vmem:[%s1617 + $0x16c] sm:$0xff]
        %v1713 = vld [vmem:[%s1617 + $0x174] sm:$0xff]
        %1746 = vrot.lane.b32.xlu0 %v1457, 16
        %v1747 = vpop.permute.xlu0 %1746
        %1748 = vrot.lane.b32.xlu0 %v1458, 16
        %v1749 = vpop.permute.xlu0 %1748
        %1750 = vrot.lane.b32.xlu0 %v1459, 16
        %v1751 = vpop.permute.xlu0 %1750
        %1752 = vrot.lane.b32.xlu0 %v1460, 16
        %v1753 = vpop.permute.xlu0 %1752
        %1754 = vrot.lane.b32.xlu0 %v1461, 16
        %v1755 = vpop.permute.xlu0 %1754
        %1756 = vrot.lane.b32.xlu0 %v1462, 16
        %v1757 = vpop.permute.xlu0 %1756
        %1758 = vrot.lane.b32.xlu0 %v1463, 16
        %v1759 = vpop.permute.xlu0 %1758
        %1760 = vrot.lane.b32.xlu0 %v1464, 16
        %v1761 = vpop.permute.xlu0 %1760
        %1762 = vrot.lane.b32.xlu0 %v1465, 16
        %v1763 = vpop.permute.xlu0 %1762
        %1764 = vrot.lane.b32.xlu0 %v1466, 16
        %v1765 = vpop.permute.xlu0 %1764
        %1766 = vrot.lane.b32.xlu0 %v1467, 16
        %v1767 = vpop.permute.xlu0 %1766
        %1768 = vrot.lane.b32.xlu0 %v1468, 16
        %v1769 = vpop.permute.xlu0 %1768
        %1770 = vrot.lane.b32.xlu0 %v1469, 16
        %v1771 = vpop.permute.xlu0 %1770
        %1772 = vrot.lane.b32.xlu0 %v1470, 16
        %v1773 = vpop.permute.xlu0 %1772
        %1774 = vrot.lane.b32.xlu0 %v1471, 16
        %v1775 = vpop.permute.xlu0 %1774
        %1776 = vrot.lane.b32.xlu0 %v1472, 16
        %v1777 = vpop.permute.xlu0 %1776
        %1778 = vrot.lane.b32.xlu0 %v1473, 16
        %v1779 = vpop.permute.xlu0 %1778
        %1780 = vrot.lane.b32.xlu0 %v1474, 16
        %v1781 = vpop.permute.xlu0 %1780
        %1782 = vrot.lane.b32.xlu0 %v1475, 16
        %v1783 = vpop.permute.xlu0 %1782
        %1784 = vrot.lane.b32.xlu0 %v1476, 16
        %v1785 = vpop.permute.xlu0 %1784
        %1786 = vrot.lane.b32.xlu0 %v1477, 16
        %v1787 = vpop.permute.xlu0 %1786
        %1788 = vrot.lane.b32.xlu0 %v1478, 16
        %v1789 = vpop.permute.xlu0 %1788
        %1790 = vrot.lane.b32.xlu0 %v1479, 16
        %v1791 = vpop.permute.xlu0 %1790
        %1792 = vrot.lane.b32.xlu0 %v1480, 16
        %v1793 = vpop.permute.xlu0 %1792
        %1794 = vrot.lane.b32.xlu0 %v1481, 16
        %v1795 = vpop.permute.xlu0 %1794
        %1796 = vrot.lane.b32.xlu0 %v1482, 16
        %v1797 = vpop.permute.xlu0 %1796
        %1798 = vrot.lane.b32.xlu0 %v1483, 16
        %v1799 = vpop.permute.xlu0 %1798
        %1800 = vrot.lane.b32.xlu0 %v1484, 16
        %v1801 = vpop.permute.xlu0 %1800
        %1802 = vrot.lane.b32.xlu0 %v1485, 16
        %v1803 = vpop.permute.xlu0 %1802
        %1804 = vrot.lane.b32.xlu0 %v1486, 16
        %v1805 = vpop.permute.xlu0 %1804
        %1806 = vrot.lane.b32.xlu0 %v1487, 16
        %v1807 = vpop.permute.xlu0 %1806
        %1808 = vrot.lane.b32.xlu0 %v1488, 16
        %v1809 = vpop.permute.xlu0 %1808
        %1874 = vrot.lane.b32.xlu0 %v1489, 32
        %v1875 = vpop.permute.xlu0 %1874
        %1876 = vrot.lane.b32.xlu0 %v1490, 32
        %v1877 = vpop.permute.xlu0 %1876
        %1878 = vrot.lane.b32.xlu0 %v1491, 32
        %v1879 = vpop.permute.xlu0 %1878
        %1880 = vrot.lane.b32.xlu0 %v1492, 32
        %v1881 = vpop.permute.xlu0 %1880
        %1882 = vrot.lane.b32.xlu0 %v1493, 32
        %v1883 = vpop.permute.xlu0 %1882
        %1884 = vrot.lane.b32.xlu0 %v1494, 32
        %v1885 = vpop.permute.xlu0 %1884
        %1886 = vrot.lane.b32.xlu0 %v1495, 32
        %v1887 = vpop.permute.xlu0 %1886
        %1888 = vrot.lane.b32.xlu0 %v1496, 32
        %v1889 = vpop.permute.xlu0 %1888
        %1890 = vrot.lane.b32.xlu0 %v1497, 32
        %v1891 = vpop.permute.xlu0 %1890
        %1892 = vrot.lane.b32.xlu0 %v1498, 32
        %v1893 = vpop.permute.xlu0 %1892
        %1894 = vrot.lane.b32.xlu0 %v1499, 32
        %v1895 = vpop.permute.xlu0 %1894
        %1896 = vrot.lane.b32.xlu0 %v1500, 32
        %v1897 = vpop.permute.xlu0 %1896
        %1898 = vrot.lane.b32.xlu0 %v1501, 32
        %v1899 = vpop.permute.xlu0 %1898
        %1900 = vrot.lane.b32.xlu0 %v1502, 32
        %v1901 = vpop.permute.xlu0 %1900
        %1902 = vrot.lane.b32.xlu0 %v1503, 32
        %v1903 = vpop.permute.xlu0 %1902
        %1904 = vrot.lane.b32.xlu0 %v1504, 32
        %v1905 = vpop.permute.xlu0 %1904
        %1906 = vrot.lane.b32.xlu0 %v1505, 32
        %v1907 = vpop.permute.xlu0 %1906
        %1908 = vrot.lane.b32.xlu0 %v1506, 32
        %v1909 = vpop.permute.xlu0 %1908
        %1910 = vrot.lane.b32.xlu0 %v1507, 32
        %v1911 = vpop.permute.xlu0 %1910
        %1912 = vrot.lane.b32.xlu0 %v1508, 32
        %v1913 = vpop.permute.xlu0 %1912
        %1914 = vrot.lane.b32.xlu0 %v1509, 32
        %v1915 = vpop.permute.xlu0 %1914
        %1916 = vrot.lane.b32.xlu0 %v1510, 32
        %v1917 = vpop.permute.xlu0 %1916
        %1918 = vrot.lane.b32.xlu0 %v1511, 32
        %v1919 = vpop.permute.xlu0 %1918
        %1920 = vrot.lane.b32.xlu0 %v1512, 32
        %v1921 = vpop.permute.xlu0 %1920
        %1922 = vrot.lane.b32.xlu0 %v1513, 32
        %v1923 = vpop.permute.xlu0 %1922
        %1924 = vrot.lane.b32.xlu0 %v1514, 32
        %v1925 = vpop.permute.xlu0 %1924
        %1926 = vrot.lane.b32.xlu0 %v1515, 32
        %v1927 = vpop.permute.xlu0 %1926
        %1928 = vrot.lane.b32.xlu0 %v1516, 32
        %v1929 = vpop.permute.xlu0 %1928
        %1930 = vrot.lane.b32.xlu0 %v1517, 32
        %v1931 = vpop.permute.xlu0 %1930
        %1932 = vrot.lane.b32.xlu0 %v1518, 32
        %v1933 = vpop.permute.xlu0 %1932
        %1934 = vrot.lane.b32.xlu0 %v1519, 32
        %v1935 = vpop.permute.xlu0 %1934
        %1936 = vrot.lane.b32.xlu0 %v1520, 32
        %v1937 = vpop.permute.xlu0 %1936
        %2002 = vrot.lane.b32.xlu0 %v1521, 48
        %v2003 = vpop.permute.xlu0 %2002
        %2004 = vrot.lane.b32.xlu0 %v1522, 48
        %v2005 = vpop.permute.xlu0 %2004
        %2006 = vrot.lane.b32.xlu0 %v1523, 48
        %v2007 = vpop.permute.xlu0 %2006
        %2008 = vrot.lane.b32.xlu0 %v1524, 48
        %v2009 = vpop.permute.xlu0 %2008
        %2010 = vrot.lane.b32.xlu0 %v1525, 48
        %v2011 = vpop.permute.xlu0 %2010
        %2012 = vrot.lane.b32.xlu0 %v1526, 48
        %v2013 = vpop.permute.xlu0 %2012
        %2014 = vrot.lane.b32.xlu0 %v1527, 48
        %v2015 = vpop.permute.xlu0 %2014
        %2016 = vrot.lane.b32.xlu0 %v1528, 48
        %v2017 = vpop.permute.xlu0 %2016
        %2018 = vrot.lane.b32.xlu0 %v1529, 48
        %v2019 = vpop.permute.xlu0 %2018
        %2020 = vrot.lane.b32.xlu0 %v1530, 48
        %v2021 = vpop.permute.xlu0 %2020
        %2022 = vrot.lane.b32.xlu0 %v1531, 48
        %v2023 = vpop.permute.xlu0 %2022
        %2024 = vrot.lane.b32.xlu0 %v1532, 48
        %v2025 = vpop.permute.xlu0 %2024
        %2026 = vrot.lane.b32.xlu0 %v1533, 48
        %v2027 = vpop.permute.xlu0 %2026
        %2028 = vrot.lane.b32.xlu0 %v1534, 48
        %v2029 = vpop.permute.xlu0 %2028
        %2030 = vrot.lane.b32.xlu0 %v1535, 48
        %v2031 = vpop.permute.xlu0 %2030
        %2032 = vrot.lane.b32.xlu0 %v1536, 48
        %v2033 = vpop.permute.xlu0 %2032
        %2034 = vrot.lane.b32.xlu0 %v1537, 48
        %v2035 = vpop.permute.xlu0 %2034
        %2036 = vrot.lane.b32.xlu0 %v1538, 48
        %v2037 = vpop.permute.xlu0 %2036
        %2038 = vrot.lane.b32.xlu0 %v1539, 48
        %v2039 = vpop.permute.xlu0 %2038
        %2040 = vrot.lane.b32.xlu0 %v1540, 48
        %v2041 = vpop.permute.xlu0 %2040
        %2042 = vrot.lane.b32.xlu0 %v1541, 48
        %v2043 = vpop.permute.xlu0 %2042
        %2044 = vrot.lane.b32.xlu0 %v1542, 48
        %v2045 = vpop.permute.xlu0 %2044
        %2046 = vrot.lane.b32.xlu0 %v1543, 48
        %v2047 = vpop.permute.xlu0 %2046
        %2048 = vrot.lane.b32.xlu0 %v1544, 48
        %v2049 = vpop.permute.xlu0 %2048
        %2050 = vrot.lane.b32.xlu0 %v1545, 48
        %v2051 = vpop.permute.xlu0 %2050
        %2052 = vrot.lane.b32.xlu0 %v1546, 48
        %v2053 = vpop.permute.xlu0 %2052
        %2054 = vrot.lane.b32.xlu0 %v1547, 48
        %v2055 = vpop.permute.xlu0 %2054
        %2056 = vrot.lane.b32.xlu0 %v1548, 48
        %v2057 = vpop.permute.xlu0 %2056
        %2058 = vrot.lane.b32.xlu0 %v1549, 48
        %v2059 = vpop.permute.xlu0 %2058
        %2060 = vrot.lane.b32.xlu0 %v1550, 48
        %v2061 = vpop.permute.xlu0 %2060
        %2062 = vrot.lane.b32.xlu0 %v1551, 48
        %v2063 = vpop.permute.xlu0 %2062
        %2064 = vrot.lane.b32.xlu0 %v1552, 48
        %v2065 = vpop.permute.xlu0 %2064
        %2130 = vrot.lane.b32.xlu0 %v1553, 64
        %v2131 = vpop.permute.xlu0 %2130
        %2132 = vrot.lane.b32.xlu0 %v1554, 64
        %v2133 = vpop.permute.xlu0 %2132
        %2134 = vrot.lane.b32.xlu0 %v1555, 64
        %v2135 = vpop.permute.xlu0 %2134
        %2136 = vrot.lane.b32.xlu0 %v1556, 64
        %v2137 = vpop.permute.xlu0 %2136
        %2138 = vrot.lane.b32.xlu0 %v1557, 64
        %v2139 = vpop.permute.xlu0 %2138
        %2140 = vrot.lane.b32.xlu0 %v1558, 64
        %v2141 = vpop.permute.xlu0 %2140
        %2142 = vrot.lane.b32.xlu0 %v1559, 64
        %v2143 = vpop.permute.xlu0 %2142
        %2144 = vrot.lane.b32.xlu0 %v1560, 64
        %v2145 = vpop.permute.xlu0 %2144
        %2146 = vrot.lane.b32.xlu0 %v1561, 64
        %v2147 = vpop.permute.xlu0 %2146
        %2148 = vrot.lane.b32.xlu0 %v1562, 64
        %v2149 = vpop.permute.xlu0 %2148
        %2150 = vrot.lane.b32.xlu0 %v1563, 64
        %v2151 = vpop.permute.xlu0 %2150
        %2152 = vrot.lane.b32.xlu0 %v1564, 64
        %v2153 = vpop.permute.xlu0 %2152
        %2154 = vrot.lane.b32.xlu0 %v1565, 64
        %v2155 = vpop.permute.xlu0 %2154
        %2156 = vrot.lane.b32.xlu0 %v1566, 64
        %v2157 = vpop.permute.xlu0 %2156
        %2158 = vrot.lane.b32.xlu0 %v1567, 64
        %v2159 = vpop.permute.xlu0 %2158
        %2160 = vrot.lane.b32.xlu0 %v1568, 64
        %v2161 = vpop.permute.xlu0 %2160
        %2162 = vrot.lane.b32.xlu0 %v1569, 64
        %v2163 = vpop.permute.xlu0 %2162
        %2164 = vrot.lane.b32.xlu0 %v1570, 64
        %v2165 = vpop.permute.xlu0 %2164
        %2166 = vrot.lane.b32.xlu0 %v1571, 64
        %v2167 = vpop.permute.xlu0 %2166
        %2168 = vrot.lane.b32.xlu0 %v1572, 64
        %v2169 = vpop.permute.xlu0 %2168
        %2170 = vrot.lane.b32.xlu0 %v1573, 64
        %v2171 = vpop.permute.xlu0 %2170
        %2172 = vrot.lane.b32.xlu0 %v1574, 64
        %v2173 = vpop.permute.xlu0 %2172
        %2174 = vrot.lane.b32.xlu0 %v1575, 64
        %v2175 = vpop.permute.xlu0 %2174
        %2176 = vrot.lane.b32.xlu0 %v1576, 64
        %v2177 = vpop.permute.xlu0 %2176
        %2178 = vrot.lane.b32.xlu0 %v1577, 64
        %v2179 = vpop.permute.xlu0 %2178
        %2180 = vrot.lane.b32.xlu0 %v1578, 64
        %v2181 = vpop.permute.xlu0 %2180
        %2182 = vrot.lane.b32.xlu0 %v1579, 64
        %v2183 = vpop.permute.xlu0 %2182
        %2184 = vrot.lane.b32.xlu0 %v1580, 64
        %v2185 = vpop.permute.xlu0 %2184
        %2186 = vrot.lane.b32.xlu0 %v1581, 64
        %v2187 = vpop.permute.xlu0 %2186
        %2188 = vrot.lane.b32.xlu0 %v1582, 64
        %v2189 = vpop.permute.xlu0 %2188
        %2190 = vrot.lane.b32.xlu0 %v1583, 64
        %v2191 = vpop.permute.xlu0 %2190
        %2192 = vrot.lane.b32.xlu0 %v1584, 64
        %v2193 = vpop.permute.xlu0 %2192
        %2258 = vrot.lane.b32.xlu0 %v1585, 80
        %v2259 = vpop.permute.xlu0 %2258
        %2260 = vrot.lane.b32.xlu0 %v1586, 80
        %v2261 = vpop.permute.xlu0 %2260
        %2262 = vrot.lane.b32.xlu0 %v1587, 80
        %v2263 = vpop.permute.xlu0 %2262
        %2264 = vrot.lane.b32.xlu0 %v1588, 80
        %v2265 = vpop.permute.xlu0 %2264
        %2266 = vrot.lane.b32.xlu0 %v1589, 80
        %v2267 = vpop.permute.xlu0 %2266
        %2268 = vrot.lane.b32.xlu0 %v1590, 80
        %v2269 = vpop.permute.xlu0 %2268
        %2270 = vrot.lane.b32.xlu0 %v1591, 80
        %v2271 = vpop.permute.xlu0 %2270
        %2272 = vrot.lane.b32.xlu0 %v1592, 80
        %v2273 = vpop.permute.xlu0 %2272
        %2274 = vrot.lane.b32.xlu0 %v1593, 80
        %v2275 = vpop.permute.xlu0 %2274
        %2276 = vrot.lane.b32.xlu0 %v1594, 80
        %v2277 = vpop.permute.xlu0 %2276
        %2278 = vrot.lane.b32.xlu0 %v1595, 80
        %v2279 = vpop.permute.xlu0 %2278
        %2280 = vrot.lane.b32.xlu0 %v1596, 80
        %v2281 = vpop.permute.xlu0 %2280
        %2282 = vrot.lane.b32.xlu0 %v1597, 80
        %v2283 = vpop.permute.xlu0 %2282
        %2284 = vrot.lane.b32.xlu0 %v1598, 80
        %v2285 = vpop.permute.xlu0 %2284
        %2286 = vrot.lane.b32.xlu0 %v1599, 80
        %v2287 = vpop.permute.xlu0 %2286
        %2288 = vrot.lane.b32.xlu0 %v1600, 80
        %v2289 = vpop.permute.xlu0 %2288
        %2290 = vrot.lane.b32.xlu0 %v1601, 80
        %v2291 = vpop.permute.xlu0 %2290
        %2292 = vrot.lane.b32.xlu0 %v1602, 80
        %v2293 = vpop.permute.xlu0 %2292
        %2294 = vrot.lane.b32.xlu0 %v1603, 80
        %v2295 = vpop.permute.xlu0 %2294
        %2296 = vrot.lane.b32.xlu0 %v1604, 80
        %v2297 = vpop.permute.xlu0 %2296
        %2298 = vrot.lane.b32.xlu0 %v1605, 80
        %v2299 = vpop.permute.xlu0 %2298
        %2300 = vrot.lane.b32.xlu0 %v1606, 80
        %v2301 = vpop.permute.xlu0 %2300
        %2302 = vrot.lane.b32.xlu0 %v1607, 80
        %v2303 = vpop.permute.xlu0 %2302
        %2304 = vrot.lane.b32.xlu0 %v1608, 80
        %v2305 = vpop.permute.xlu0 %2304
        %2306 = vrot.lane.b32.xlu0 %v1609, 80
        %v2307 = vpop.permute.xlu0 %2306
        %2308 = vrot.lane.b32.xlu0 %v1610, 80
        %v2309 = vpop.permute.xlu0 %2308
        %2310 = vrot.lane.b32.xlu0 %v1611, 80
        %v2311 = vpop.permute.xlu0 %2310
        %2312 = vrot.lane.b32.xlu0 %v1612, 80
        %v2313 = vpop.permute.xlu0 %2312
        %2314 = vrot.lane.b32.xlu0 %v1613, 80
        %v2315 = vpop.permute.xlu0 %2314
        %2316 = vrot.lane.b32.xlu0 %v1614, 80
        %v2317 = vpop.permute.xlu0 %2316
        %2318 = vrot.lane.b32.xlu0 %v1615, 80
        %v2319 = vpop.permute.xlu0 %2318
        %2320 = vrot.lane.b32.xlu0 %v1616, 80
        %v2321 = vpop.permute.xlu0 %2320
        %2386 = vrot.lane.b32.xlu0 %v1618, 96
        %v2387 = vpop.permute.xlu0 %2386
        %2388 = vrot.lane.b32.xlu0 %v1619, 96
        %v2389 = vpop.permute.xlu0 %2388
        %2390 = vrot.lane.b32.xlu0 %v1620, 96
        %v2391 = vpop.permute.xlu0 %2390
        %2392 = vrot.lane.b32.xlu0 %v1621, 96
        %v2393 = vpop.permute.xlu0 %2392
        %2394 = vrot.lane.b32.xlu0 %v1622, 96
        %v2395 = vpop.permute.xlu0 %2394
        %2396 = vrot.lane.b32.xlu0 %v1623, 96
        %v2397 = vpop.permute.xlu0 %2396
        %2398 = vrot.lane.b32.xlu0 %v1624, 96
        %v2399 = vpop.permute.xlu0 %2398
        %2400 = vrot.lane.b32.xlu0 %v1625, 96
        %v2401 = vpop.permute.xlu0 %2400
        %2402 = vrot.lane.b32.xlu0 %v1626, 96
        %v2403 = vpop.permute.xlu0 %2402
        %2404 = vrot.lane.b32.xlu0 %v1627, 96
        %v2405 = vpop.permute.xlu0 %2404
        %2406 = vrot.lane.b32.xlu0 %v1628, 96
        %v2407 = vpop.permute.xlu0 %2406
        %2408 = vrot.lane.b32.xlu0 %v1629, 96
        %v2409 = vpop.permute.xlu0 %2408
        %2410 = vrot.lane.b32.xlu0 %v1630, 96
        %v2411 = vpop.permute.xlu0 %2410
        %2412 = vrot.lane.b32.xlu0 %v1631, 96
        %v2413 = vpop.permute.xlu0 %2412
        %2414 = vrot.lane.b32.xlu0 %v1632, 96
        %v2415 = vpop.permute.xlu0 %2414
        %2416 = vrot.lane.b32.xlu0 %v1633, 96
        %v2417 = vpop.permute.xlu0 %2416
        %2418 = vrot.lane.b32.xlu0 %v1634, 96
        %v2419 = vpop.permute.xlu0 %2418
        %2420 = vrot.lane.b32.xlu0 %v1635, 96
        %v2421 = vpop.permute.xlu0 %2420
        %2422 = vrot.lane.b32.xlu0 %v1636, 96
        %v2423 = vpop.permute.xlu0 %2422
        %2424 = vrot.lane.b32.xlu0 %v1637, 96
        %v2425 = vpop.permute.xlu0 %2424
        %2426 = vrot.lane.b32.xlu0 %v1638, 96
        %v2427 = vpop.permute.xlu0 %2426
        %2428 = vrot.lane.b32.xlu0 %v1639, 96
        %v2429 = vpop.permute.xlu0 %2428
        %2430 = vrot.lane.b32.xlu0 %v1640, 96
        %v2431 = vpop.permute.xlu0 %2430
        %2432 = vrot.lane.b32.xlu0 %v1641, 96
        %v2433 = vpop.permute.xlu0 %2432
        %2434 = vrot.lane.b32.xlu0 %v1642, 96
        %v2435 = vpop.permute.xlu0 %2434
        %2436 = vrot.lane.b32.xlu0 %v1643, 96
        %v2437 = vpop.permute.xlu0 %2436
        %2438 = vrot.lane.b32.xlu0 %v1644, 96
        %v2439 = vpop.permute.xlu0 %2438
        %2440 = vrot.lane.b32.xlu0 %v1645, 96
        %v2441 = vpop.permute.xlu0 %2440
        %2442 = vrot.lane.b32.xlu0 %v1646, 96
        %v2443 = vpop.permute.xlu0 %2442
        %2444 = vrot.lane.b32.xlu0 %v1647, 96
        %v2445 = vpop.permute.xlu0 %2444
        %2446 = vrot.lane.b32.xlu0 %v1648, 96
        %v2447 = vpop.permute.xlu0 %2446
        %2448 = vrot.lane.b32.xlu0 %v1649, 96
        %v2449 = vpop.permute.xlu0 %2448
        %2514 = vrot.lane.b32.xlu0 %v1650, 112
        %v2515 = vpop.permute.xlu0 %2514
        %2516 = vrot.lane.b32.xlu0 %v1651, 112
        %v2517 = vpop.permute.xlu0 %2516
        %2518 = vrot.lane.b32.xlu0 %v1652, 112
        %v2519 = vpop.permute.xlu0 %2518
        %2520 = vrot.lane.b32.xlu0 %v1653, 112
        %v2521 = vpop.permute.xlu0 %2520
        %2522 = vrot.lane.b32.xlu0 %v1654, 112
        %v2523 = vpop.permute.xlu0 %2522
        %2524 = vrot.lane.b32.xlu0 %v1655, 112
        %v2525 = vpop.permute.xlu0 %2524
        %2526 = vrot.lane.b32.xlu0 %v1656, 112
        %v2527 = vpop.permute.xlu0 %2526
        %2528 = vrot.lane.b32.xlu0 %v1657, 112
        %v2529 = vpop.permute.xlu0 %2528
        %2530 = vrot.lane.b32.xlu0 %v1658, 112
        %v2531 = vpop.permute.xlu0 %2530
        %2532 = vrot.lane.b32.xlu0 %v1659, 112
        %v2533 = vpop.permute.xlu0 %2532
        %2534 = vrot.lane.b32.xlu0 %v1660, 112
        %v2535 = vpop.permute.xlu0 %2534
        %2536 = vrot.lane.b32.xlu0 %v1661, 112
        %v2537 = vpop.permute.xlu0 %2536
        %2538 = vrot.lane.b32.xlu0 %v1662, 112
        %v2539 = vpop.permute.xlu0 %2538
        %2540 = vrot.lane.b32.xlu0 %v1663, 112
        %v2541 = vpop.permute.xlu0 %2540
        %2542 = vrot.lane.b32.xlu0 %v1664, 112
        %v2543 = vpop.permute.xlu0 %2542
        %2544 = vrot.lane.b32.xlu0 %v1665, 112
        %v2545 = vpop.permute.xlu0 %2544
        %2546 = vrot.lane.b32.xlu0 %v1666, 112
        %v2547 = vpop.permute.xlu0 %2546
        %2548 = vrot.lane.b32.xlu0 %v1667, 112
        %v2549 = vpop.permute.xlu0 %2548
        %2550 = vrot.lane.b32.xlu0 %v1668, 112
        %v2551 = vpop.permute.xlu0 %2550
        %2552 = vrot.lane.b32.xlu0 %v1669, 112
        %v2553 = vpop.permute.xlu0 %2552
        %2554 = vrot.lane.b32.xlu0 %v1670, 112
        %v2555 = vpop.permute.xlu0 %2554
        %2556 = vrot.lane.b32.xlu0 %v1671, 112
        %v2557 = vpop.permute.xlu0 %2556
        %2558 = vrot.lane.b32.xlu0 %v1672, 112
        %v2559 = vpop.permute.xlu0 %2558
        %2560 = vrot.lane.b32.xlu0 %v1673, 112
        %v2561 = vpop.permute.xlu0 %2560
        %2562 = vrot.lane.b32.xlu0 %v1674, 112
        %v2563 = vpop.permute.xlu0 %2562
        %2564 = vrot.lane.b32.xlu0 %v1675, 112
        %v2565 = vpop.permute.xlu0 %2564
        %2566 = vrot.lane.b32.xlu0 %v1676, 112
        %v2567 = vpop.permute.xlu0 %2566
        %2568 = vrot.lane.b32.xlu0 %v1677, 112
        %v2569 = vpop.permute.xlu0 %2568
        %2570 = vrot.lane.b32.xlu0 %v1678, 112
        %v2571 = vpop.permute.xlu0 %2570
        %2572 = vrot.lane.b32.xlu0 %v1679, 112
        %v2573 = vpop.permute.xlu0 %2572
        %2574 = vrot.lane.b32.xlu0 %v1680, 112
        %v2575 = vpop.permute.xlu0 %2574
        %2576 = vrot.lane.b32.xlu0 %v1681, 112
        %v2577 = vpop.permute.xlu0 %2576
        %v2610 = vsel %vm309, %v1425, %v1747
        %v2611 = vsel %vm309, %v1426, %v1749
        %v2612 = vsel %vm309, %v1427, %v1751
        %v2613 = vsel %vm309, %v1428, %v1753
        %v2614 = vsel %vm309, %v1429, %v1755
        %v2615 = vsel %vm309, %v1430, %v1757
        %v2616 = vsel %vm309, %v1431, %v1759
        %v2617 = vsel %vm309, %v1432, %v1761
        %v2618 = vsel %vm309, %v1433, %v1763
        %v2619 = vsel %vm309, %v1434, %v1765
        %v2620 = vsel %vm309, %v1435, %v1767
        %v2621 = vsel %vm309, %v1436, %v1769
        %v2622 = vsel %vm309, %v1437, %v1771
        %v2623 = vsel %vm309, %v1438, %v1773
        %v2624 = vsel %vm309, %v1439, %v1775
        %v2625 = vsel %vm309, %v1440, %v1777
        %v2626 = vsel %vm309, %v1441, %v1779
        %v2627 = vsel %vm309, %v1442, %v1781
        %v2628 = vsel %vm309, %v1443, %v1783
        %v2629 = vsel %vm309, %v1444, %v1785
        %v2630 = vsel %vm309, %v1445, %v1787
        %v2631 = vsel %vm309, %v1446, %v1789
        %v2632 = vsel %vm309, %v1447, %v1791
        %v2633 = vsel %vm309, %v1448, %v1793
        %v2634 = vsel %vm309, %v1449, %v1795
        %v2635 = vsel %vm309, %v1450, %v1797
        %v2636 = vsel %vm309, %v1451, %v1799
        %v2637 = vsel %vm309, %v1452, %v1801
        %v2638 = vsel %vm309, %v1453, %v1803
        %v2639 = vsel %vm309, %v1454, %v1805
        %v2640 = vsel %vm309, %v1455, %v1807
        %v2641 = vsel %vm309, %v1456, %v1809
        %v2642 = vsel %vm904, %v2610, %v1875
        %v2643 = vsel %vm904, %v2611, %v1877
        %v2644 = vsel %vm904, %v2612, %v1879
        %v2645 = vsel %vm904, %v2613, %v1881
        %v2646 = vsel %vm904, %v2614, %v1883
        %v2647 = vsel %vm904, %v2615, %v1885
        %v2648 = vsel %vm904, %v2616, %v1887
        %v2649 = vsel %vm904, %v2617, %v1889
        %v2650 = vsel %vm904, %v2618, %v1891
        %v2651 = vsel %vm904, %v2619, %v1893
        %v2652 = vsel %vm904, %v2620, %v1895
        %v2653 = vsel %vm904, %v2621, %v1897
        %v2654 = vsel %vm904, %v2622, %v1899
        %v2655 = vsel %vm904, %v2623, %v1901
        %v2656 = vsel %vm904, %v2624, %v1903
        %v2657 = vsel %vm904, %v2625, %v1905
        %v2658 = vsel %vm904, %v2626, %v1907
        %v2659 = vsel %vm904, %v2627, %v1909
        %v2660 = vsel %vm904, %v2628, %v1911
        %v2661 = vsel %vm904, %v2629, %v1913
        %v2662 = vsel %vm904, %v2630, %v1915
        %v2663 = vsel %vm904, %v2631, %v1917
        %v2664 = vsel %vm904, %v2632, %v1919
        %v2665 = vsel %vm904, %v2633, %v1921
        %v2666 = vsel %vm904, %v2634, %v1923
        %v2667 = vsel %vm904, %v2635, %v1925
        %v2668 = vsel %vm904, %v2636, %v1927
        %v2669 = vsel %vm904, %v2637, %v1929
        %v2670 = vsel %vm904, %v2638, %v1931
        %v2671 = vsel %vm904, %v2639, %v1933
        %v2672 = vsel %vm904, %v2640, %v1935
        %v2673 = vsel %vm904, %v2641, %v1937
        %vm2674 = vcmask 392192
        %v2675 = vsel %vm2674, %v2642, %v2003
        %v2676 = vsel %vm2674, %v2643, %v2005
        %v2677 = vsel %vm2674, %v2644, %v2007
        %v2678 = vsel %vm2674, %v2645, %v2009
        %v2679 = vsel %vm2674, %v2646, %v2011
        %v2680 = vsel %vm2674, %v2647, %v2013
        %v2681 = vsel %vm2674, %v2648, %v2015
        %v2682 = vsel %vm2674, %v2649, %v2017
        %v2683 = vsel %vm2674, %v2650, %v2019
        %v2684 = vsel %vm2674, %v2651, %v2021
        %v2685 = vsel %vm2674, %v2652, %v2023
        %v2686 = vsel %vm2674, %v2653, %v2025
        %v2687 = vsel %vm2674, %v2654, %v2027
        %v2688 = vsel %vm2674, %v2655, %v2029
        %v2689 = vsel %vm2674, %v2656, %v2031
        %v2690 = vsel %vm2674, %v2657, %v2033
        %v2691 = vsel %vm2674, %v2658, %v2035
        %v2692 = vsel %vm2674, %v2659, %v2037
        %v2693 = vsel %vm2674, %v2660, %v2039
        %v2694 = vsel %vm2674, %v2661, %v2041
        %v2695 = vsel %vm2674, %v2662, %v2043
        %v2696 = vsel %vm2674, %v2663, %v2045
        %v2697 = vsel %vm2674, %v2664, %v2047
        %v2698 = vsel %vm2674, %v2665, %v2049
        %v2699 = vsel %vm2674, %v2666, %v2051
        %v2700 = vsel %vm2674, %v2667, %v2053
        %v2701 = vsel %vm2674, %v2668, %v2055
        %v2702 = vsel %vm2674, %v2669, %v2057
        %v2703 = vsel %vm2674, %v2670, %v2059
        %v2704 = vsel %vm2674, %v2671, %v2061
        %v2705 = vsel %vm2674, %v2672, %v2063
        %v2706 = vsel %vm2674, %v2673, %v2065
        %vm2707 = vcmask 523264
        %v2708 = vsel %vm2707, %v2675, %v2131
        %v2709 = vsel %vm2707, %v2676, %v2133
        %v2710 = vsel %vm2707, %v2677, %v2135
        %v2711 = vsel %vm2707, %v2678, %v2137
        %v2712 = vsel %vm2707, %v2679, %v2139
        %v2713 = vsel %vm2707, %v2680, %v2141
        %v2714 = vsel %vm2707, %v2681, %v2143
        %v2715 = vsel %vm2707, %v2682, %v2145
        %v2716 = vsel %vm2707, %v2683, %v2147
        %v2717 = vsel %vm2707, %v2684, %v2149
        %v2718 = vsel %vm2707, %v2685, %v2151
        %v2719 = vsel %vm2707, %v2686, %v2153
        %v2720 = vsel %vm2707, %v2687, %v2155
        %v2721 = vsel %vm2707, %v2688, %v2157
        %v2722 = vsel %vm2707, %v2689, %v2159
        %v2723 = vsel %vm2707, %v2690, %v2161
        %v2724 = vsel %vm2707, %v2691, %v2163
        %v2725 = vsel %vm2707, %v2692, %v2165
        %v2726 = vsel %vm2707, %v2693, %v2167
        %v2727 = vsel %vm2707, %v2694, %v2169
        %v2728 = vsel %vm2707, %v2695, %v2171
        %v2729 = vsel %vm2707, %v2696, %v2173
        %v2730 = vsel %vm2707, %v2697, %v2175
        %v2731 = vsel %vm2707, %v2698, %v2177
        %v2732 = vsel %vm2707, %v2699, %v2179
        %v2733 = vsel %vm2707, %v2700, %v2181
        %v2734 = vsel %vm2707, %v2701, %v2183
        %v2735 = vsel %vm2707, %v2702, %v2185
        %v2736 = vsel %vm2707, %v2703, %v2187
        %v2737 = vsel %vm2707, %v2704, %v2189
        %v2738 = vsel %vm2707, %v2705, %v2191
        %v2739 = vsel %vm2707, %v2706, %v2193
        %vm2740 = vcmask 654336
        %v2741 = vsel %vm2740, %v2708, %v2259
        %v2742 = vsel %vm2740, %v2709, %v2261
        %v2743 = vsel %vm2740, %v2710, %v2263
        %v2744 = vsel %vm2740, %v2711, %v2265
        %v2745 = vsel %vm2740, %v2712, %v2267
        %v2746 = vsel %vm2740, %v2713, %v2269
        %v2747 = vsel %vm2740, %v2714, %v2271
        %v2748 = vsel %vm2740, %v2715, %v2273
        %v2749 = vsel %vm2740, %v2716, %v2275
        %v2750 = vsel %vm2740, %v2717, %v2277
        %v2751 = vsel %vm2740, %v2718, %v2279
        %v2752 = vsel %vm2740, %v2719, %v2281
        %v2753 = vsel %vm2740, %v2720, %v2283
        %v2754 = vsel %vm2740, %v2721, %v2285
        %v2755 = vsel %vm2740, %v2722, %v2287
        %v2756 = vsel %vm2740, %v2723, %v2289
        %v2757 = vsel %vm2740, %v2724, %v2291
        %v2758 = vsel %vm2740, %v2725, %v2293
        %v2759 = vsel %vm2740, %v2726, %v2295
        %v2760 = vsel %vm2740, %v2727, %v2297
        %v2761 = vsel %vm2740, %v2728, %v2299
        %v2762 = vsel %vm2740, %v2729, %v2301
        %v2763 = vsel %vm2740, %v2730, %v2303
        %v2764 = vsel %vm2740, %v2731, %v2305
        %v2765 = vsel %vm2740, %v2732, %v2307
        %v2766 = vsel %vm2740, %v2733, %v2309
        %v2767 = vsel %vm2740, %v2734, %v2311
        %v2768 = vsel %vm2740, %v2735, %v2313
        %v2769 = vsel %vm2740, %v2736, %v2315
        %v2770 = vsel %vm2740, %v2737, %v2317
        %v2771 = vsel %vm2740, %v2738, %v2319
        %v2772 = vsel %vm2740, %v2739, %v2321
        %vm2773 = vcmask 785408
        %v2774 = vsel %vm2773, %v2741, %v2387
        %v2775 = vsel %vm2773, %v2742, %v2389
        %v2776 = vsel %vm2773, %v2743, %v2391
        %v2777 = vsel %vm2773, %v2744, %v2393
        %v2778 = vsel %vm2773, %v2745, %v2395
        %v2779 = vsel %vm2773, %v2746, %v2397
        %v2780 = vsel %vm2773, %v2747, %v2399
        %v2781 = vsel %vm2773, %v2748, %v2401
        %v2782 = vsel %vm2773, %v2749, %v2403
        %v2783 = vsel %vm2773, %v2750, %v2405
        %v2784 = vsel %vm2773, %v2751, %v2407
        %v2785 = vsel %vm2773, %v2752, %v2409
        %v2786 = vsel %vm2773, %v2753, %v2411
        %v2787 = vsel %vm2773, %v2754, %v2413
        %v2788 = vsel %vm2773, %v2755, %v2415
        %v2789 = vsel %vm2773, %v2756, %v2417
        %v2790 = vsel %vm2773, %v2757, %v2419
        %v2791 = vsel %vm2773, %v2758, %v2421
        %v2792 = vsel %vm2773, %v2759, %v2423
        %v2793 = vsel %vm2773, %v2760, %v2425
        %v2794 = vsel %vm2773, %v2761, %v2427
        %v2795 = vsel %vm2773, %v2762, %v2429
        %v2796 = vsel %vm2773, %v2763, %v2431
        %v2797 = vsel %vm2773, %v2764, %v2433
        %v2798 = vsel %vm2773, %v2765, %v2435
        %v2799 = vsel %vm2773, %v2766, %v2437
        %v2800 = vsel %vm2773, %v2767, %v2439
        %v2801 = vsel %vm2773, %v2768, %v2441
        %v2802 = vsel %vm2773, %v2769, %v2443
        %v2803 = vsel %vm2773, %v2770, %v2445
        %v2804 = vsel %vm2773, %v2771, %v2447
        %v2805 = vsel %vm2773, %v2772, %v2449
        %vm2806 = vcmask 916480
        %v2807 = vsel %vm2806, %v2774, %v2515
        %v2808 = vsel %vm2806, %v2775, %v2517
        %v2809 = vsel %vm2806, %v2776, %v2519
        %v2810 = vsel %vm2806, %v2777, %v2521
        %v2811 = vsel %vm2806, %v2778, %v2523
        %v2812 = vsel %vm2806, %v2779, %v2525
        %v2813 = vsel %vm2806, %v2780, %v2527
        %v2814 = vsel %vm2806, %v2781, %v2529
        %v2815 = vsel %vm2806, %v2782, %v2531
        %v2816 = vsel %vm2806, %v2783, %v2533
        %v2817 = vsel %vm2806, %v2784, %v2535
        %v2818 = vsel %vm2806, %v2785, %v2537
        %v2819 = vsel %vm2806, %v2786, %v2539
        %v2820 = vsel %vm2806, %v2787, %v2541
        %v2821 = vsel %vm2806, %v2788, %v2543
        %v2822 = vsel %vm2806, %v2789, %v2545
        %v2823 = vsel %vm2806, %v2790, %v2547
        %v2824 = vsel %vm2806, %v2791, %v2549
        %v2825 = vsel %vm2806, %v2792, %v2551
        %v2826 = vsel %vm2806, %v2793, %v2553
        %v2827 = vsel %vm2806, %v2794, %v2555
        %v2828 = vsel %vm2806, %v2795, %v2557
        %v2829 = vsel %vm2806, %v2796, %v2559
        %v2830 = vsel %vm2806, %v2797, %v2561
        %v2831 = vsel %vm2806, %v2798, %v2563
        %v2832 = vsel %vm2806, %v2799, %v2565
        %v2833 = vsel %vm2806, %v2800, %v2567
        %v2834 = vsel %vm2806, %v2801, %v2569
        %v2835 = vsel %vm2806, %v2802, %v2571
        %v2836 = vsel %vm2806, %v2803, %v2573
        %v2837 = vsel %vm2806, %v2804, %v2575
        %v2838 = vsel %vm2806, %v2805, %v2577
        %v2839 = vld [vmem:[%s2] sm:$0xf]
        %v2840 = vld [vmem:[%s2 + $0x4] sm:$0xf]
        %v2841 = vld [vmem:[%s2 + $0x8] sm:$0xf]
        %v2842 = vld [vmem:[%s2 + $0xc] sm:$0xf]
        %v2843 = vld [vmem:[%s2 + $0x10] sm:$0xf]
        %v2844 = vld [vmem:[%s2 + $0x14] sm:$0xf]
        %v2845 = vld [vmem:[%s2 + $0x18] sm:$0xf]
        %v2846 = vld [vmem:[%s2 + $0x1c] sm:$0xf]
        %v2847 = vld [vmem:[%s2 + $0x20] sm:$0xf]
        %v2848 = vld [vmem:[%s2 + $0x24] sm:$0xf]
        %v2849 = vld [vmem:[%s2 + $0x28] sm:$0xf]
        %v2850 = vld [vmem:[%s2 + $0x2c] sm:$0xf]
        %v2851 = vld [vmem:[%s2 + $0x30] sm:$0xf]
        %v2852 = vld [vmem:[%s2 + $0x34] sm:$0xf]
        %v2853 = vld [vmem:[%s2 + $0x38] sm:$0xf]
        %v2854 = vld [vmem:[%s2 + $0x3c] sm:$0xf]
        %v2855 = vld [vmem:[%s2 + $0x40] sm:$0xf]
        %v2856 = vld [vmem:[%s2 + $0x44] sm:$0xf]
        %v2857 = vpack.c.bf16 %v2808, %v2807
        %v2858 = vpack.c.bf16 %v1683, %v1682
        %v2859 = vpack.c.bf16 %v2810, %v2809
        %v2860 = vpack.c.bf16 %v1685, %v1684
        %v2861 = vpack.c.bf16 %v2812, %v2811
        %v2862 = vpack.c.bf16 %v1687, %v1686
        %v2863 = vpack.c.bf16 %v2814, %v2813
        %v2864 = vpack.c.bf16 %v1689, %v1688
        %v2865 = vpack.c.bf16 %v2816, %v2815
        %v2866 = vpack.c.bf16 %v1691, %v1690
        %v2867 = vpack.c.bf16 %v2818, %v2817
        %v2868 = vpack.c.bf16 %v1693, %v1692
        %v2869 = vpack.c.bf16 %v2820, %v2819
        %v2870 = vpack.c.bf16 %v1695, %v1694
        %v2871 = vpack.c.bf16 %v2822, %v2821
        %v2872 = vpack.c.bf16 %v1697, %v1696
        %v2873 = vpack.c.bf16 %v2824, %v2823
        %v2874 = vpack.c.bf16 %v1699, %v1698
        %v2875 = vpack.c.bf16 %v2826, %v2825
        %v2876 = vpack.c.bf16 %v1701, %v1700
        %v2877 = vpack.c.bf16 %v2828, %v2827
        %v2878 = vpack.c.bf16 %v1703, %v1702
        %v2879 = vpack.c.bf16 %v2830, %v2829
        %v2880 = vpack.c.bf16 %v1705, %v1704
        %v2881 = vpack.c.bf16 %v2832, %v2831
        %v2882 = vpack.c.bf16 %v1707, %v1706
        %v2883 = vpack.c.bf16 %v2834, %v2833
        %v2884 = vpack.c.bf16 %v1709, %v1708
        %v2885 = vpack.c.bf16 %v2836, %v2835
        %v2886 = vpack.c.bf16 %v1711, %v1710
        %v2887 = vpack.c.bf16 %v2838, %v2837
        %v2888 = vpack.c.bf16 %v1713, %v1712
        %v2907 = vunpack.c.l.b16 %v2839
        %v2908 = vunpack.c.l.b16 %v2840
        %v2909 = vunpack.c.l.b16 %v2841
        %v2910 = vunpack.c.l.b16 %v2842
        %v2911 = vunpack.c.l.b16 %v2843
        %v2912 = vunpack.c.l.b16 %v2844
        %v2913 = vunpack.c.l.b16 %v2845
        %v2914 = vunpack.c.l.b16 %v2846
        %v2915 = vunpack.c.l.b16 %v2847
        %v2916 = vunpack.c.l.b16 %v2848
        %v2917 = vunpack.c.l.b16 %v2849
        %v2918 = vunpack.c.l.b16 %v2850
        %v2919 = vunpack.c.l.b16 %v2851
        %v2920 = vunpack.c.l.b16 %v2852
        %v2921 = vunpack.c.l.b16 %v2853
        %v2922 = vunpack.c.l.b16 %v2854
        %v2923 = vunpack.c.l.b16 %v2855
        %v2924 = vunpack.c.l.b16 %v2856
        %v2925 = vpack.c.b16 %v2908, %v2907
        %v2926 = vpack.c.b16 %v2910, %v2909
        %v2927 = vpack.c.b16 %v2912, %v2911
        %v2928 = vpack.c.b16 %v2914, %v2913
        %v2929 = vpack.c.b16 %v2916, %v2915
        %v2930 = vpack.c.b16 %v2918, %v2917
        %v2931 = vpack.c.b16 %v2920, %v2919
        %v2932 = vpack.c.b16 %v2922, %v2921
        %v2933 = vpack.c.b16 %v2924, %v2923
        %v2944 = vsel %vm309, %v2858, 0
        %v2947 = vsel %vm309, %v2860, 0
        %v2950 = vsel %vm309, %v2862, 0
        %v2953 = vsel %vm309, %v2864, 0
        %v2956 = vsel %vm309, %v2866, 0
        %v2959 = vsel %vm309, %v2868, 0
        %v2962 = vsel %vm309, %v2870, 0
        %v2965 = vsel %vm309, %v2872, 0
        %v2968 = vsel %vm309, %v2874, 0
        %v2971 = vsel %vm309, %v2876, 0
        %v2974 = vsel %vm309, %v2878, 0
        %v2977 = vsel %vm309, %v2880, 0
        %v2980 = vsel %vm309, %v2882, 0
        %v2983 = vsel %vm309, %v2884, 0
        %v2986 = vsel %vm309, %v2886, 0
        %v2989 = vsel %vm309, %v2888, 0
        %2991 = vmatprep.subr.bf16.mxu0 0
        %2992 = vmatpush1.bf16.msra.mxu0 %v2925
        %2993 = vmatprep.subr.bf16.mxu0 0
        %2994 = vmatpush1.bf16.msra.mxu0 %v2926
        %2995 = vmatprep.subr.bf16.mxu0 0
        %2996 = vmatpush1.bf16.msra.mxu0 %v2927
        %2997 = vmatprep.subr.bf16.mxu0 0
        %2998 = vmatpush1.bf16.msra.mxu0 %v2928
        %2999 = vmatprep.subr.bf16.mxu0 0
        %3000 = vmatpush1.bf16.msra.mxu0 %v2929
        %3001 = vmatprep.subr.bf16.mxu0 0
        %3002 = vmatpush1.bf16.msra.mxu0 %v2930
        %3003 = vmatprep.subr.bf16.mxu0 0
        %3004 = vmatpush1.bf16.msra.mxu0 %v2931
        %3005 = vmatprep.subr.bf16.mxu0 0
        %3006 = vmatpush1.bf16.msra.mxu0 %v2932
        %3007 = vmatprep.subr.bf16.mxu0 0
        %3008 = vmatpush1.bf16.msra.mxu0 %v2933
        %3009 = vmatprep.subr.bf16.mxu0 0
        %3010 = vmatpush1.bf16.msra.mxu0 0
        %3011 = vmatprep.subr.bf16.mxu0 0
        %3012 = vmatpush1.bf16.msra.mxu0 0
        %3013 = vmatprep.subr.bf16.mxu0 0
        %3014 = vmatpush1.bf16.msra.mxu0 0
        %3015 = vmatprep.subr.bf16.mxu0 0
        %3016 = vmatpush1.bf16.msra.mxu0 0
        %3017 = vmatprep.subr.bf16.mxu0 0
        %3018 = vmatpush1.bf16.msra.mxu0 0
        %3019 = vmatprep.subr.bf16.mxu0 0
        %3020 = vmatpush1.bf16.msra.mxu0 0
        %3021 = vmatprep.subr.bf16.mxu0 0
        %3022 = vmatpush1.bf16.msra.mxu0 0
        %3023 = vmatprep.mubr.bf16.mxu0 %v2944
        %3024 = vmatmul.mubr.bf16.gmra.mrb[0].mxu0 %v2857
        %v3025 = vpop.f32.mrb[0].mxu0
        %v3026 = vadd.f32 0.0, %v3025
        %v3027 = vpop.f32.mrb[0].mxu0
        %v3028 = vpop.f32.mrb[0].mxu0
        %v3029 = vadd.f32 0.0, %v3028
        %v3030 = vpop.f32.mrb[0].mxu0
        %3031 = vmatprep.mubr.bf16.mxu0 %v2947
        %3032 = vmatmul.mubr.bf16.gmra.mrb[0].mxu0 %v2859
        %v3033 = vpop.f32.mrb[0].mxu0
        %v3034 = vadd.f32 0.0, %v3033
        %v3035 = vpop.f32.mrb[0].mxu0
        %v3036 = vpop.f32.mrb[0].mxu0
        %v3037 = vadd.f32 0.0, %v3036
        %v3038 = vpop.f32.mrb[0].mxu0
        %3039 = vmatprep.mubr.bf16.mxu0 %v2950
        %3040 = vmatmul.mubr.bf16.gmra.mrb[0].mxu0 %v2861
        %v3041 = vpop.f32.mrb[0].mxu0
        %v3042 = vadd.f32 0.0, %v3041
        %v3043 = vpop.f32.mrb[0].mxu0
        %v3044 = vpop.f32.mrb[0].mxu0
        %v3045 = vadd.f32 0.0, %v3044
        %v3046 = vpop.f32.mrb[0].mxu0
        %3047 = vmatprep.mubr.bf16.mxu0 %v2953
        %3048 = vmatmul.mubr.bf16.gmra.mrb[0].mxu0 %v2863
        %v3049 = vpop.f32.mrb[0].mxu0
        %v3050 = vadd.f32 0.0, %v3049
        %v3051 = vpop.f32.mrb[0].mxu0
        %v3052 = vpop.f32.mrb[0].mxu0
        %v3053 = vadd.f32 0.0, %v3052
        %v3054 = vpop.f32.mrb[0].mxu0
        %3055 = vmatprep.mubr.bf16.mxu0 %v2956
        %3056 = vmatmul.mubr.bf16.gmra.mrb[0].mxu0 %v2865
        %v3057 = vpop.f32.mrb[0].mxu0
        %v3058 = vadd.f32 0.0, %v3057
        %v3059 = vpop.f32.mrb[0].mxu0
        %v3060 = vpop.f32.mrb[0].mxu0
        %v3061 = vadd.f32 0.0, %v3060
        %v3062 = vpop.f32.mrb[0].mxu0
        %3063 = vmatprep.mubr.bf16.mxu0 %v2959
        %3064 = vmatmul.mubr.bf16.gmra.mrb[0].mxu0 %v2867
        %v3065 = vpop.f32.mrb[0].mxu0
        %v3066 = vadd.f32 0.0, %v3065
        %v3067 = vpop.f32.mrb[0].mxu0
        %v3068 = vpop.f32.mrb[0].mxu0
        %v3069 = vadd.f32 0.0, %v3068
        %v3070 = vpop.f32.mrb[0].mxu0
        %3071 = vmatprep.mubr.bf16.mxu0 %v2962
        %3072 = vmatmul.mubr.bf16.gmra.mrb[0].mxu0 %v2869
        %v3073 = vpop.f32.mrb[0].mxu0
        %v3074 = vadd.f32 0.0, %v3073
        %v3075 = vpop.f32.mrb[0].mxu0
        %v3076 = vpop.f32.mrb[0].mxu0
        %v3077 = vadd.f32 0.0, %v3076
        %v3078 = vpop.f32.mrb[0].mxu0
        %3079 = vmatprep.mubr.bf16.mxu0 %v2965
        %3080 = vmatmul.mubr.bf16.gmra.mrb[0].mxu0 %v2871
        %v3081 = vpop.f32.mrb[0].mxu0
        %v3082 = vadd.f32 0.0, %v3081
        %v3083 = vpop.f32.mrb[0].mxu0
        %v3084 = vpop.f32.mrb[0].mxu0
        %v3085 = vadd.f32 0.0, %v3084
        %v3086 = vpop.f32.mrb[0].mxu0
        %3087 = vmatprep.mubr.bf16.mxu0 %v2968
        %3088 = vmatmul.mubr.bf16.gmra.mrb[0].mxu0 %v2873
        %v3089 = vpop.f32.mrb[0].mxu0
        %v3090 = vadd.f32 0.0, %v3089
        %v3091 = vpop.f32.mrb[0].mxu0
        %v3092 = vpop.f32.mrb[0].mxu0
        %v3093 = vadd.f32 0.0, %v3092
        %v3094 = vpop.f32.mrb[0].mxu0
        %3095 = vmatprep.mubr.bf16.mxu0 %v2971
        %3096 = vmatmul.mubr.bf16.gmra.mrb[0].mxu0 %v2875
        %v3097 = vpop.f32.mrb[0].mxu0
        %v3098 = vadd.f32 0.0, %v3097
        %v3099 = vpop.f32.mrb[0].mxu0
        %v3100 = vpop.f32.mrb[0].mxu0
        %v3101 = vadd.f32 0.0, %v3100
        %v3102 = vpop.f32.mrb[0].mxu0
        %3103 = vmatprep.mubr.bf16.mxu0 %v2974
        %3104 = vmatmul.mubr.bf16.gmra.mrb[0].mxu0 %v2877
        %v3105 = vpop.f32.mrb[0].mxu0
        %v3106 = vadd.f32 0.0, %v3105
        %v3107 = vpop.f32.mrb[0].mxu0
        %v3108 = vpop.f32.mrb[0].mxu0
        %v3109 = vadd.f32 0.0, %v3108
        %v3110 = vpop.f32.mrb[0].mxu0
        %3111 = vmatprep.mubr.bf16.mxu0 %v2977
        %3112 = vmatmul.mubr.bf16.gmra.mrb[0].mxu0 %v2879
        %v3113 = vpop.f32.mrb[0].mxu0
        %v3114 = vadd.f32 0.0, %v3113
        %v3115 = vpop.f32.mrb[0].mxu0
        %v3116 = vpop.f32.mrb[0].mxu0
        %v3117 = vadd.f32 0.0, %v3116
        %v3118 = vpop.f32.mrb[0].mxu0
        %3119 = vmatprep.mubr.bf16.mxu0 %v2980
        %3120 = vmatmul.mubr.bf16.gmra.mrb[0].mxu0 %v2881
        %v3121 = vpop.f32.mrb[0].mxu0
        %v3122 = vadd.f32 0.0, %v3121
        %v3123 = vpop.f32.mrb[0].mxu0
        %v3124 = vpop.f32.mrb[0].mxu0
        %v3125 = vadd.f32 0.0, %v3124
        %v3126 = vpop.f32.mrb[0].mxu0
        %3127 = vmatprep.mubr.bf16.mxu0 %v2983
        %3128 = vmatmul.mubr.bf16.gmra.mrb[0].mxu0 %v2883
        %v3129 = vpop.f32.mrb[0].mxu0
        %v3130 = vadd.f32 0.0, %v3129
        %v3131 = vpop.f32.mrb[0].mxu0
        %v3132 = vpop.f32.mrb[0].mxu0
        %v3133 = vadd.f32 0.0, %v3132
        %v3134 = vpop.f32.mrb[0].mxu0
        %3135 = vmatprep.mubr.bf16.mxu0 %v2986
        %3136 = vmatmul.mubr.bf16.gmra.mrb[0].mxu0 %v2885
        %v3137 = vpop.f32.mrb[0].mxu0
        %v3138 = vadd.f32 0.0, %v3137
        %v3139 = vpop.f32.mrb[0].mxu0
        %v3140 = vpop.f32.mrb[0].mxu0
        %v3141 = vadd.f32 0.0, %v3140
        %v3142 = vpop.f32.mrb[0].mxu0
        %3143 = vmatprep.mubr.bf16.mxu0 %v2989
        %3144 = vmatmul.mubr.bf16.gmra.mrb[0].mxu0 %v2887
        %v3145 = vpop.f32.mrb[0].mxu0
        %v3146 = vadd.f32 0.0, %v3145
        %v3147 = vpop.f32.mrb[0].mxu0
        %v3148 = vpop.f32.mrb[0].mxu0
        %v3149 = vadd.f32 0.0, %v3148
        %v3150 = vpop.f32.mrb[0].mxu0
        %3151 = vdwg.mxu0
        %v3152 = vsel %vm904, %v3026, 0.0
        %v3153 = vsel %vm904, %v3029, 0.0
        %v3154 = vadd.f32 %v3152, %v3153
        %v3155 = vsel %vm904, %v3034, 0.0
        %v3156 = vadd.f32 %v3154, %v3155
        %v3157 = vsel %vm904, %v3037, 0.0
        %v3158 = vadd.f32 %v3156, %v3157
        %v3159 = vsel %vm904, %v3042, 0.0
        %v3160 = vadd.f32 %v3158, %v3159
        %v3161 = vsel %vm904, %v3045, 0.0
        %v3162 = vadd.f32 %v3160, %v3161
        %v3163 = vsel %vm904, %v3050, 0.0
        %v3164 = vadd.f32 %v3162, %v3163
        %v3165 = vsel %vm904, %v3053, 0.0
        %v3166 = vadd.f32 %v3164, %v3165
        %v3167 = vsel %vm904, %v3058, 0.0
        %v3168 = vadd.f32 %v3166, %v3167
        %v3169 = vsel %vm904, %v3061, 0.0
        %v3170 = vadd.f32 %v3168, %v3169
        %v3171 = vsel %vm904, %v3066, 0.0
        %v3172 = vadd.f32 %v3170, %v3171
        %v3173 = vsel %vm904, %v3069, 0.0
        %v3174 = vadd.f32 %v3172, %v3173
        %v3175 = vsel %vm904, %v3074, 0.0
        %v3176 = vadd.f32 %v3174, %v3175
        %v3177 = vsel %vm904, %v3077, 0.0
        %v3178 = vadd.f32 %v3176, %v3177
        %v3179 = vsel %vm904, %v3082, 0.0
        %v3180 = vadd.f32 %v3178, %v3179
        %v3181 = vsel %vm904, %v3085, 0.0
        %v3182 = vadd.f32 %v3180, %v3181
        %v3183 = vsel %vm904, %v3090, 0.0
        %v3184 = vadd.f32 %v3182, %v3183
        %v3185 = vsel %vm904, %v3093, 0.0
        %v3186 = vadd.f32 %v3184, %v3185
        %v3187 = vsel %vm904, %v3098, 0.0
        %v3188 = vadd.f32 %v3186, %v3187
        %v3189 = vsel %vm904, %v3101, 0.0
        %v3190 = vadd.f32 %v3188, %v3189
        %v3191 = vsel %vm904, %v3106, 0.0
        %v3192 = vadd.f32 %v3190, %v3191
        %v3193 = vsel %vm904, %v3109, 0.0
        %v3194 = vadd.f32 %v3192, %v3193
        %v3195 = vsel %vm904, %v3114, 0.0
        %v3196 = vadd.f32 %v3194, %v3195
        %v3197 = vsel %vm904, %v3117, 0.0
        %v3198 = vadd.f32 %v3196, %v3197
        %v3199 = vsel %vm904, %v3122, 0.0
        %v3200 = vadd.f32 %v3198, %v3199
        %v3201 = vsel %vm904, %v3125, 0.0
        %v3202 = vadd.f32 %v3200, %v3201
        %v3203 = vsel %vm904, %v3130, 0.0
        %v3204 = vadd.f32 %v3202, %v3203
        %v3205 = vsel %vm904, %v3133, 0.0
        %v3206 = vadd.f32 %v3204, %v3205
        %v3207 = vsel %vm904, %v3138, 0.0
        %v3208 = vadd.f32 %v3206, %v3207
        %v3209 = vsel %vm904, %v3141, 0.0
        %v3210 = vadd.f32 %v3208, %v3209
        %v3211 = vsel %vm904, %v3146, 0.0
        %v3212 = vadd.f32 %v3210, %v3211
        %v3213 = vsel %vm904, %v3149, 0.0
        %v3214 = vadd.f32 %v3212, %v3213
        %v3215 = vrot.slane %v3214, 4
        %v3216 = vadd.f32 %v3214, %v3215
        %v3217 = vrot.slane %v3216, 2
        %v3218 = vadd.f32 %v3216, %v3217
        %v3219 = vrot.slane %v3218, 1
        %v3220 = vadd.f32 %v3218, %v3219
        %v3222 = vsel %vm904, %v3220, 0
        %3224 = vmatprep.subr.mxu0 0.0
        %3225 = vmatpush1.msra.mxu0 %v305
        %3226 = vmatprep.subr.mxu0 0.0
        %3227 = vmatpush1.msra.mxu0 %v306
        %3228 = vmatprep.subr.mxu0 0.0
        %3229 = vmatpush1.msra.mxu0 %v307
        %3230 = vmatprep.subr.mxu0 0.0
        %3231 = vmatpush1.msra.mxu0 %v308
        %3232 = vmatprep.subr.mxu0 0.0
        %3233 = vmatpush1.msra.mxu0 0.0
        %3234 = vmatprep.subr.mxu0 0.0
        %3235 = vmatpush1.msra.mxu0 0.0
        %3236 = vmatprep.subr.mxu0 0.0
        %3237 = vmatpush1.msra.mxu0 0.0
        %3238 = vmatprep.subr.mxu0 0.0
        %3239 = vmatpush1.msra.mxu0 0.0
        %3240 = vmatprep.subr.mxu0 0.0
        %3241 = vmatpush1.msra.mxu0 0.0
        %3242 = vmatprep.subr.mxu0 0.0
        %3243 = vmatpush1.msra.mxu0 0.0
        %3244 = vmatprep.subr.mxu0 0.0
        %3245 = vmatpush1.msra.mxu0 0.0
        %3246 = vmatprep.subr.mxu0 0.0
        %3247 = vmatpush1.msra.mxu0 0.0
        %3248 = vmatprep.subr.mxu0 0.0
        %3249 = vmatpush1.msra.mxu0 0.0
        %3250 = vmatprep.subr.mxu0 0.0
        %3251 = vmatpush1.msra.mxu0 0.0
        %3252 = vmatprep.subr.mxu0 0.0
        %3253 = vmatpush1.msra.mxu0 0.0
        %3254 = vmatprep.subr.mxu0 0.0
        %3255 = vmatpush1.msra.mxu0 0.0
        %3256 = vmatprep.subr.mxu0 0.0
        %3257 = vmatpush1.msra.mxu0 0.0
        %3258 = vmatprep.subr.mxu0 0.0
        %3259 = vmatpush1.msra.mxu0 0.0
        %3260 = vmatprep.subr.mxu0 0.0
        %3261 = vmatpush1.msra.mxu0 0.0
        %3262 = vmatprep.subr.mxu0 0.0
        %3263 = vmatpush1.msra.mxu0 0.0
        %3264 = vmatprep.subr.mxu0 0.0
        %3265 = vmatpush1.msra.mxu0 0.0
        %3266 = vmatprep.subr.mxu0 0.0
        %3267 = vmatpush1.msra.mxu0 0.0
        %3268 = vmatprep.subr.mxu0 0.0
        %3269 = vmatpush1.msra.mxu0 0.0
        %3270 = vmatprep.subr.mxu0 0.0
        %3271 = vmatpush1.msra.mxu0 0.0
        %3272 = vmatprep.subr.mxu0 0.0
        %3273 = vmatpush1.msra.mxu0 0.0
        %3274 = vmatprep.subr.mxu0 0.0
        %3275 = vmatpush1.msra.mxu0 0.0
        %3276 = vmatprep.subr.mxu0 0.0
        %3277 = vmatpush1.msra.mxu0 0.0
        %3278 = vmatprep.subr.mxu0 0.0
        %3279 = vmatpush1.msra.mxu0 0.0
        %3280 = vmatprep.subr.mxu0 0.0
        %3281 = vmatpush1.msra.mxu0 0.0
        %3282 = vmatprep.subr.mxu0 0.0
        %3283 = vmatpush1.msra.mxu0 0.0
        %3284 = vmatprep.subr.mxu0 0.0
        %3285 = vmatpush1.msra.mxu0 0.0
        %3286 = vmatprep.subr.mxu0 0.0
        %3287 = vmatpush1.msra.mxu0 0.0
        %3288 = vmatprep.mubr.f32.mxu0 0.0
        %3289 = vmatmul.mubr.f32.gmra.mrb[0].mxu0 %v3222
        %v3290 = vpop.f32.mrb[0].mxu0
        %v3291 = vadd.f32 0.0, %v3290
        %v3292 = vpop.f32.mrb[0].mxu0
        %3293 = vdwg.mxu0
        %v3294 = vmul.f32 %v3291, %v1047
        %v3295 = vlaneseq
        %v3296 = vshrl.u32 %v3295, 7
        %v3297 = vsub.s32 0, %v3296
        %v3298 = vrot.slane %v3294, %v3297
        %v3299 = vsub.f32 %v3026, %v3298
        %v3300 = vsub.f32 %v3029, %v3298
        %v3301 = vsub.f32 %v3034, %v3298
        %v3302 = vsub.f32 %v3037, %v3298
        %v3303 = vsub.f32 %v3042, %v3298
        %v3304 = vsub.f32 %v3045, %v3298
        %v3305 = vsub.f32 %v3050, %v3298
        %v3306 = vsub.f32 %v3053, %v3298
        %v3307 = vsub.f32 %v3058, %v3298
        %v3308 = vsub.f32 %v3061, %v3298
        %v3309 = vsub.f32 %v3066, %v3298
        %v3310 = vsub.f32 %v3069, %v3298
        %v3311 = vsub.f32 %v3074, %v3298
        %v3312 = vsub.f32 %v3077, %v3298
        %v3313 = vsub.f32 %v3082, %v3298
        %v3314 = vsub.f32 %v3085, %v3298
        %v3315 = vsub.f32 %v3090, %v3298
        %v3316 = vsub.f32 %v3093, %v3298
        %v3317 = vsub.f32 %v3098, %v3298
        %v3318 = vsub.f32 %v3101, %v3298
        %v3319 = vsub.f32 %v3106, %v3298
        %v3320 = vsub.f32 %v3109, %v3298
        %v3321 = vsub.f32 %v3114, %v3298
        %v3322 = vsub.f32 %v3117, %v3298
        %v3323 = vsub.f32 %v3122, %v3298
        %v3324 = vsub.f32 %v3125, %v3298
        %v3325 = vsub.f32 %v3130, %v3298
        %v3326 = vsub.f32 %v3133, %v3298
        %v3327 = vsub.f32 %v3138, %v3298
        %v3328 = vsub.f32 %v3141, %v3298
        %v3329 = vsub.f32 %v3146, %v3298
        %v3330 = vsub.f32 %v3149, %v3298
        %v3331 = vmul.f32 %v3299, %v3299
        %v3332 = vmul.f32 %v3300, %v3300
        %v3333 = vmul.f32 %v3301, %v3301
        %v3334 = vmul.f32 %v3302, %v3302
        %v3335 = vmul.f32 %v3303, %v3303
        %v3336 = vmul.f32 %v3304, %v3304
        %v3337 = vmul.f32 %v3305, %v3305
        %v3338 = vmul.f32 %v3306, %v3306
        %v3339 = vmul.f32 %v3307, %v3307
        %v3340 = vmul.f32 %v3308, %v3308
        %v3341 = vmul.f32 %v3309, %v3309
        %v3342 = vmul.f32 %v3310, %v3310
        %v3343 = vmul.f32 %v3311, %v3311
        %v3344 = vmul.f32 %v3312, %v3312
        %v3345 = vmul.f32 %v3313, %v3313
        %v3346 = vmul.f32 %v3314, %v3314
        %v3347 = vmul.f32 %v3315, %v3315
        %v3348 = vmul.f32 %v3316, %v3316
        %v3349 = vmul.f32 %v3317, %v3317
        %v3350 = vmul.f32 %v3318, %v3318
        %v3351 = vmul.f32 %v3319, %v3319
        %v3352 = vmul.f32 %v3320, %v3320
        %v3353 = vmul.f32 %v3321, %v3321
        %v3354 = vmul.f32 %v3322, %v3322
        %v3355 = vmul.f32 %v3323, %v3323
        %v3356 = vmul.f32 %v3324, %v3324
        %v3357 = vmul.f32 %v3325, %v3325
        %v3358 = vmul.f32 %v3326, %v3326
        %v3359 = vmul.f32 %v3327, %v3327
        %v3360 = vmul.f32 %v3328, %v3328
        %v3361 = vmul.f32 %v3329, %v3329
        %v3362 = vmul.f32 %v3330, %v3330
        %v3363 = vsel %vm904, %v3331, 0.0
        %v3364 = vsel %vm904, %v3332, 0.0
        %v3365 = vadd.f32 %v3363, %v3364
        %v3366 = vsel %vm904, %v3333, 0.0
        %v3367 = vadd.f32 %v3365, %v3366
        %v3368 = vsel %vm904, %v3334, 0.0
        %v3369 = vadd.f32 %v3367, %v3368
        %v3370 = vsel %vm904, %v3335, 0.0
        %v3371 = vadd.f32 %v3369, %v3370
        %v3372 = vsel %vm904, %v3336, 0.0
        %v3373 = vadd.f32 %v3371, %v3372
        %v3374 = vsel %vm904, %v3337, 0.0
        %v3375 = vadd.f32 %v3373, %v3374
        %v3376 = vsel %vm904, %v3338, 0.0
        %v3377 = vadd.f32 %v3375, %v3376
        %v3378 = vsel %vm904, %v3339, 0.0
        %v3379 = vadd.f32 %v3377, %v3378
        %v3380 = vsel %vm904, %v3340, 0.0
        %v3381 = vadd.f32 %v3379, %v3380
        %v3382 = vsel %vm904, %v3341, 0.0
        %v3383 = vadd.f32 %v3381, %v3382
        %v3384 = vsel %vm904, %v3342, 0.0
        %v3385 = vadd.f32 %v3383, %v3384
        %v3386 = vsel %vm904, %v3343, 0.0
        %v3387 = vadd.f32 %v3385, %v3386
        %v3388 = vsel %vm904, %v3344, 0.0
        %v3389 = vadd.f32 %v3387, %v3388
        %v3390 = vsel %vm904, %v3345, 0.0
        %v3391 = vadd.f32 %v3389, %v3390
        %v3392 = vsel %vm904, %v3346, 0.0
        %v3393 = vadd.f32 %v3391, %v3392
        %v3394 = vsel %vm904, %v3347, 0.0
        %v3395 = vadd.f32 %v3393, %v3394
        %v3396 = vsel %vm904, %v3348, 0.0
        %v3397 = vadd.f32 %v3395, %v3396
        %v3398 = vsel %vm904, %v3349, 0.0
        %v3399 = vadd.f32 %v3397, %v3398
        %v3400 = vsel %vm904, %v3350, 0.0
        %v3401 = vadd.f32 %v3399, %v3400
        %v3402 = vsel %vm904, %v3351, 0.0
        %v3403 = vadd.f32 %v3401, %v3402
        %v3404 = vsel %vm904, %v3352, 0.0
        %v3405 = vadd.f32 %v3403, %v3404
        %v3406 = vsel %vm904, %v3353, 0.0
        %v3407 = vadd.f32 %v3405, %v3406
        %v3408 = vsel %vm904, %v3354, 0.0
        %v3409 = vadd.f32 %v3407, %v3408
        %v3410 = vsel %vm904, %v3355, 0.0
        %v3411 = vadd.f32 %v3409, %v3410
        %v3412 = vsel %vm904, %v3356, 0.0
        %v3413 = vadd.f32 %v3411, %v3412
        %v3414 = vsel %vm904, %v3357, 0.0
        %v3415 = vadd.f32 %v3413, %v3414
        %v3416 = vsel %vm904, %v3358, 0.0
        %v3417 = vadd.f32 %v3415, %v3416
        %v3418 = vsel %vm904, %v3359, 0.0
        %v3419 = vadd.f32 %v3417, %v3418
        %v3420 = vsel %vm904, %v3360, 0.0
        %v3421 = vadd.f32 %v3419, %v3420
        %v3422 = vsel %vm904, %v3361, 0.0
        %v3423 = vadd.f32 %v3421, %v3422
        %v3424 = vsel %vm904, %v3362, 0.0
        %v3425 = vadd.f32 %v3423, %v3424
        %v3426 = vrot.slane %v3425, 4
        %v3427 = vadd.f32 %v3425, %v3426
        %v3428 = vrot.slane %v3427, 2
        %v3429 = vadd.f32 %v3427, %v3428
        %v3430 = vrot.slane %v3429, 1
        %v3431 = vadd.f32 %v3429, %v3430
        %v3433 = vsel %vm904, %v3431, 0
        %3435 = vmatprep.subr.mxu0 0.0
        %3436 = vmatpush1.msra.mxu0 %v305
        %3437 = vmatprep.subr.mxu0 0.0
        %3438 = vmatpush1.msra.mxu0 %v306
        %3439 = vmatprep.subr.mxu0 0.0
        %3440 = vmatpush1.msra.mxu0 %v307
        %3441 = vmatprep.subr.mxu0 0.0
        %3442 = vmatpush1.msra.mxu0 %v308
        %3443 = vmatprep.subr.mxu0 0.0
        %3444 = vmatpush1.msra.mxu0 0.0
        %3445 = vmatprep.subr.mxu0 0.0
        %3446 = vmatpush1.msra.mxu0 0.0
        %3447 = vmatprep.subr.mxu0 0.0
        %3448 = vmatpush1.msra.mxu0 0.0
        %3449 = vmatprep.subr.mxu0 0.0
        %3450 = vmatpush1.msra.mxu0 0.0
        %3451 = vmatprep.subr.mxu0 0.0
        %3452 = vmatpush1.msra.mxu0 0.0
        %3453 = vmatprep.subr.mxu0 0.0
        %3454 = vmatpush1.msra.mxu0 0.0
        %3455 = vmatprep.subr.mxu0 0.0
        %3456 = vmatpush1.msra.mxu0 0.0
        %3457 = vmatprep.subr.mxu0 0.0
        %3458 = vmatpush1.msra.mxu0 0.0
        %3459 = vmatprep.subr.mxu0 0.0
        %3460 = vmatpush1.msra.mxu0 0.0
        %3461 = vmatprep.subr.mxu0 0.0
        %3462 = vmatpush1.msra.mxu0 0.0
        %3463 = vmatprep.subr.mxu0 0.0
        %3464 = vmatpush1.msra.mxu0 0.0
        %3465 = vmatprep.subr.mxu0 0.0
        %3466 = vmatpush1.msra.mxu0 0.0
        %3467 = vmatprep.subr.mxu0 0.0
        %3468 = vmatpush1.msra.mxu0 0.0
        %3469 = vmatprep.subr.mxu0 0.0
        %3470 = vmatpush1.msra.mxu0 0.0
        %3471 = vmatprep.subr.mxu0 0.0
        %3472 = vmatpush1.msra.mxu0 0.0
        %3473 = vmatprep.subr.mxu0 0.0
        %3474 = vmatpush1.msra.mxu0 0.0
        %3475 = vmatprep.subr.mxu0 0.0
        %3476 = vmatpush1.msra.mxu0 0.0
        %3477 = vmatprep.subr.mxu0 0.0
        %3478 = vmatpush1.msra.mxu0 0.0
        %3479 = vmatprep.subr.mxu0 0.0
        %3480 = vmatpush1.msra.mxu0 0.0
        %3481 = vmatprep.subr.mxu0 0.0
        %3482 = vmatpush1.msra.mxu0 0.0
        %3483 = vmatprep.subr.mxu0 0.0
        %3484 = vmatpush1.msra.mxu0 0.0
        %3485 = vmatprep.subr.mxu0 0.0
        %3486 = vmatpush1.msra.mxu0 0.0
        %3487 = vmatprep.subr.mxu0 0.0
        %3488 = vmatpush1.msra.mxu0 0.0
        %3489 = vmatprep.subr.mxu0 0.0
        %3490 = vmatpush1.msra.mxu0 0.0
        %3491 = vmatprep.subr.mxu0 0.0
        %3492 = vmatpush1.msra.mxu0 0.0
        %3493 = vmatprep.subr.mxu0 0.0
        %3494 = vmatpush1.msra.mxu0 0.0
        %3495 = vmatprep.subr.mxu0 0.0
        %3496 = vmatpush1.msra.mxu0 0.0
        %3497 = vmatprep.subr.mxu0 0.0
        %3498 = vmatpush1.msra.mxu0 0.0
        %3499 = vmatprep.mubr.f32.mxu0 0.0
        %3500 = vmatmul.mubr.f32.gmra.mrb[0].mxu0 %v3433
        %v3501 = vpop.f32.mrb[0].mxu0
        %v3502 = vadd.f32 0.0, %v3501
        %v3503 = vpop.f32.mrb[0].mxu0
        %3504 = vdwg.mxu0
        %v3505 = vmul.f32 %v3502, %v1047
        %v3506 = vadd.f32 %v3505, 1e-05
        %v3507 = vrsqrt.pop %v3506
        %v3508 = vld [vmem:[%s5 + $0x1] sm:$0x1]
        %v3509 = vld [vmem:[%s6 + $0x1] sm:$0x1]
        %v3510 = vlaneseq
        %v3511 = vshrl.u32 %v3510, 7
        %v3512 = vsub.s32 0, %v3511
        %v3513 = vrot.slane %v3507, %v3512
        %v3514 = vmul.f32 %v3299, %v3513
        %v3515 = vmul.f32 %v3300, %v3513
        %v3516 = vmul.f32 %v3301, %v3513
        %v3517 = vmul.f32 %v3302, %v3513
        %v3518 = vmul.f32 %v3303, %v3513
        %v3519 = vmul.f32 %v3304, %v3513
        %v3520 = vmul.f32 %v3305, %v3513
        %v3521 = vmul.f32 %v3306, %v3513
        %v3522 = vmul.f32 %v3307, %v3513
        %v3523 = vmul.f32 %v3308, %v3513
        %v3524 = vmul.f32 %v3309, %v3513
        %v3525 = vmul.f32 %v3310, %v3513
        %v3526 = vmul.f32 %v3311, %v3513
        %v3527 = vmul.f32 %v3312, %v3513
        %v3528 = vmul.f32 %v3313, %v3513
        %v3529 = vmul.f32 %v3314, %v3513
        %v3530 = vmul.f32 %v3315, %v3513
        %v3531 = vmul.f32 %v3316, %v3513
        %v3532 = vmul.f32 %v3317, %v3513
        %v3533 = vmul.f32 %v3318, %v3513
        %v3534 = vmul.f32 %v3319, %v3513
        %v3535 = vmul.f32 %v3320, %v3513
        %v3536 = vmul.f32 %v3321, %v3513
        %v3537 = vmul.f32 %v3322, %v3513
        %v3538 = vmul.f32 %v3323, %v3513
        %v3539 = vmul.f32 %v3324, %v3513
        %v3540 = vmul.f32 %v3325, %v3513
        %v3541 = vmul.f32 %v3326, %v3513
        %v3542 = vmul.f32 %v3327, %v3513
        %v3543 = vmul.f32 %v3328, %v3513
        %v3544 = vmul.f32 %v3329, %v3513
        %v3545 = vmul.f32 %v3330, %v3513
        %v3546 = vlaneseq
        %v3547 = vshrl.u32 %v3546, 7
        %v3548 = vsub.s32 0, %v3547
        %v3549 = vrot.slane %v3508, %v3548
        %v3550 = vmul.f32 %v3514, %v3549
        %v3551 = vmul.f32 %v3515, %v3549
        %v3552 = vmul.f32 %v3516, %v3549
        %v3553 = vmul.f32 %v3517, %v3549
        %v3554 = vmul.f32 %v3518, %v3549
        %v3555 = vmul.f32 %v3519, %v3549
        %v3556 = vmul.f32 %v3520, %v3549
        %v3557 = vmul.f32 %v3521, %v3549
        %v3558 = vmul.f32 %v3522, %v3549
        %v3559 = vmul.f32 %v3523, %v3549
        %v3560 = vmul.f32 %v3524, %v3549
        %v3561 = vmul.f32 %v3525, %v3549
        %v3562 = vmul.f32 %v3526, %v3549
        %v3563 = vmul.f32 %v3527, %v3549
        %v3564 = vmul.f32 %v3528, %v3549
        %v3565 = vmul.f32 %v3529, %v3549
        %v3566 = vmul.f32 %v3530, %v3549
        %v3567 = vmul.f32 %v3531, %v3549
        %v3568 = vmul.f32 %v3532, %v3549
        %v3569 = vmul.f32 %v3533, %v3549
        %v3570 = vmul.f32 %v3534, %v3549
        %v3571 = vmul.f32 %v3535, %v3549
        %v3572 = vmul.f32 %v3536, %v3549
        %v3573 = vmul.f32 %v3537, %v3549
        %v3574 = vmul.f32 %v3538, %v3549
        %v3575 = vmul.f32 %v3539, %v3549
        %v3576 = vmul.f32 %v3540, %v3549
        %v3577 = vmul.f32 %v3541, %v3549
        %v3578 = vmul.f32 %v3542, %v3549
        %v3579 = vmul.f32 %v3543, %v3549
        %v3580 = vmul.f32 %v3544, %v3549
        %v3581 = vmul.f32 %v3545, %v3549
        %v3582 = vlaneseq
        %v3583 = vshrl.u32 %v3582, 7
        %v3584 = vsub.s32 0, %v3583
        %v3585 = vrot.slane %v3509, %v3584
        %v3586 = vadd.f32 %v3550, %v3585
        %v3587 = vadd.f32 %v3551, %v3585
        %v3588 = vadd.f32 %v3552, %v3585
        %v3589 = vadd.f32 %v3553, %v3585
        %v3590 = vadd.f32 %v3554, %v3585
        %v3591 = vadd.f32 %v3555, %v3585
        %v3592 = vadd.f32 %v3556, %v3585
        %v3593 = vadd.f32 %v3557, %v3585
        %v3594 = vadd.f32 %v3558, %v3585
        %v3595 = vadd.f32 %v3559, %v3585
        %v3596 = vadd.f32 %v3560, %v3585
        %v3597 = vadd.f32 %v3561, %v3585
        %v3598 = vadd.f32 %v3562, %v3585
        %v3599 = vadd.f32 %v3563, %v3585
        %v3600 = vadd.f32 %v3564, %v3585
        %v3601 = vadd.f32 %v3565, %v3585
        %v3602 = vadd.f32 %v3566, %v3585
        %v3603 = vadd.f32 %v3567, %v3585
        %v3604 = vadd.f32 %v3568, %v3585
        %v3605 = vadd.f32 %v3569, %v3585
        %v3606 = vadd.f32 %v3570, %v3585
        %v3607 = vadd.f32 %v3571, %v3585
        %v3608 = vadd.f32 %v3572, %v3585
        %v3609 = vadd.f32 %v3573, %v3585
        %v3610 = vadd.f32 %v3574, %v3585
        %v3611 = vadd.f32 %v3575, %v3585
        %v3612 = vadd.f32 %v3576, %v3585
        %v3613 = vadd.f32 %v3577, %v3585
        %v3614 = vadd.f32 %v3578, %v3585
        %v3615 = vadd.f32 %v3579, %v3585
        %v3616 = vadd.f32 %v3580, %v3585
        %v3617 = vadd.f32 %v3581, %v3585
        %v3618 = vmax.f32 %v3586, 0.0
        %v3619 = vmax.f32 %v3587, 0.0
        %v3620 = vmax.f32 %v3588, 0.0
        %v3621 = vmax.f32 %v3589, 0.0
        %v3622 = vmax.f32 %v3590, 0.0
        %v3623 = vmax.f32 %v3591, 0.0
        %v3624 = vmax.f32 %v3592, 0.0
        %v3625 = vmax.f32 %v3593, 0.0
        %v3626 = vmax.f32 %v3594, 0.0
        %v3627 = vmax.f32 %v3595, 0.0
        %v3628 = vmax.f32 %v3596, 0.0
        %v3629 = vmax.f32 %v3597, 0.0
        %v3630 = vmax.f32 %v3598, 0.0
        %v3631 = vmax.f32 %v3599, 0.0
        %v3632 = vmax.f32 %v3600, 0.0
        %v3633 = vmax.f32 %v3601, 0.0
        %v3634 = vmax.f32 %v3602, 0.0
        %v3635 = vmax.f32 %v3603, 0.0
        %v3636 = vmax.f32 %v3604, 0.0
        %v3637 = vmax.f32 %v3605, 0.0
        %v3638 = vmax.f32 %v3606, 0.0
        %v3639 = vmax.f32 %v3607, 0.0
        %v3640 = vmax.f32 %v3608, 0.0
        %v3641 = vmax.f32 %v3609, 0.0
        %v3642 = vmax.f32 %v3610, 0.0
        %v3643 = vmax.f32 %v3611, 0.0
        %v3644 = vmax.f32 %v3612, 0.0
        %v3645 = vmax.f32 %v3613, 0.0
        %v3646 = vmax.f32 %v3614, 0.0
        %v3647 = vmax.f32 %v3615, 0.0
        %v3648 = vmax.f32 %v3616, 0.0
        %v3649 = vmax.f32 %v3617, 0.0
        %v3650 = vld [vmem:[%s4 + $0x10] sm:$0xf]
        %v3651 = vld [vmem:[%s4 + $0x14] sm:$0xf]
        %v3652 = vld [vmem:[%s4 + $0x18] sm:$0xf]
        %v3653 = vld [vmem:[%s4 + $0x1c] sm:$0xf]
        %v3654 = vpack.c.bf16 %v3619, %v3618
        %v3655 = vpack.c.bf16 %v3621, %v3620
        %v3656 = vpack.c.bf16 %v3623, %v3622
        %v3657 = vpack.c.bf16 %v3625, %v3624
        %v3658 = vpack.c.bf16 %v3627, %v3626
        %v3659 = vpack.c.bf16 %v3629, %v3628
        %v3660 = vpack.c.bf16 %v3631, %v3630
        %v3661 = vpack.c.bf16 %v3633, %v3632
        %v3662 = vpack.c.bf16 %v3635, %v3634
        %v3663 = vpack.c.bf16 %v3637, %v3636
        %v3664 = vpack.c.bf16 %v3639, %v3638
        %v3665 = vpack.c.bf16 %v3641, %v3640
        %v3666 = vpack.c.bf16 %v3643, %v3642
        %v3667 = vpack.c.bf16 %v3645, %v3644
        %v3668 = vpack.c.bf16 %v3647, %v3646
        %v3669 = vpack.c.bf16 %v3649, %v3648
        %v3674 = vunpack.c.l.b16 %v3650
        %v3675 = vunpack.c.l.b16 %v3651
        %v3676 = vunpack.c.l.b16 %v3652
        %v3677 = vunpack.c.l.b16 %v3653
        %v3678 = vpack.c.b16 %v3675, %v3674
        %v3679 = vpack.c.b16 %v3677, %v3676
        %v3683 = vsel %vm904, %v3654, 0
        %v3686 = vsel %vm904, %v3655, 0
        %v3689 = vsel %vm904, %v3656, 0
        %v3692 = vsel %vm904, %v3657, 0
        %v3695 = vsel %vm904, %v3658, 0
        %v3698 = vsel %vm904, %v3659, 0
        %v3701 = vsel %vm904, %v3660, 0
        %v3704 = vsel %vm904, %v3661, 0
        %v3707 = vsel %vm904, %v3662, 0
        %v3710 = vsel %vm904, %v3663, 0
        %v3713 = vsel %vm904, %v3664, 0
        %v3716 = vsel %vm904, %v3665, 0
        %v3719 = vsel %vm904, %v3666, 0
        %v3722 = vsel %vm904, %v3667, 0
        %v3725 = vsel %vm904, %v3668, 0
        %v3728 = vsel %vm904, %v3669, 0
        %3730 = vmatprep.subr.bf16.mxu0 0
        %3731 = vmatpush1.bf16.msra.mxu0 %v3678
        %3732 = vmatprep.subr.bf16.mxu0 0
        %3733 = vmatpush1.bf16.msra.mxu0 %v3679
        %3734 = vmatprep.subr.bf16.mxu0 0
        %3735 = vmatpush1.bf16.msra.mxu0 0
        %3736 = vmatprep.subr.bf16.mxu0 0
        %3737 = vmatpush1.bf16.msra.mxu0 0
        %3738 = vmatprep.subr.bf16.mxu0 0
        %3739 = vmatpush1.bf16.msra.mxu0 0
        %3740 = vmatprep.subr.bf16.mxu0 0
        %3741 = vmatpush1.bf16.msra.mxu0 0
        %3742 = vmatprep.subr.bf16.mxu0 0
        %3743 = vmatpush1.bf16.msra.mxu0 0
        %3744 = vmatprep.subr.bf16.mxu0 0
        %3745 = vmatpush1.bf16.msra.mxu0 0
        %3746 = vmatprep.subr.bf16.mxu0 0
        %3747 = vmatpush1.bf16.msra.mxu0 0
        %3748 = vmatprep.subr.bf16.mxu0 0
        %3749 = vmatpush1.bf16.msra.mxu0 0
        %3750 = vmatprep.subr.bf16.mxu0 0
        %3751 = vmatpush1.bf16.msra.mxu0 0
        %3752 = vmatprep.subr.bf16.mxu0 0
        %3753 = vmatpush1.bf16.msra.mxu0 0
        %3754 = vmatprep.subr.bf16.mxu0 0
        %3755 = vmatpush1.bf16.msra.mxu0 0
        %3756 = vmatprep.subr.bf16.mxu0 0
        %3757 = vmatpush1.bf16.msra.mxu0 0
        %3758 = vmatprep.subr.bf16.mxu0 0
        %3759 = vmatpush1.bf16.msra.mxu0 0
        %3760 = vmatprep.subr.bf16.mxu0 0
        %3761 = vmatpush1.bf16.msra.mxu0 0
        %3762 = vmatprep.mubr.bf16.mxu0 0
        %3763 = vmatmul.mubr.bf16.gmra.mrb[0].mxu0 %v3683
        %v3764 = vpop.f32.mrb[0].mxu0
        %v3765 = vadd.f32 0.0, %v3764
        %v3766 = vpop.f32.mrb[0].mxu0
        %v3767 = vpop.f32.mrb[0].mxu0
        %v3768 = vadd.f32 0.0, %v3767
        %v3769 = vpop.f32.mrb[0].mxu0
        %3770 = vmatprep.mubr.bf16.mxu0 0
        %3771 = vmatmul.mubr.bf16.gmra.mrb[0].mxu0 %v3686
        %v3772 = vpop.f32.mrb[0].mxu0
        %v3773 = vadd.f32 0.0, %v3772
        %v3774 = vpop.f32.mrb[0].mxu0
        %v3775 = vpop.f32.mrb[0].mxu0
        %v3776 = vadd.f32 0.0, %v3775
        %v3777 = vpop.f32.mrb[0].mxu0
        %3778 = vmatprep.mubr.bf16.mxu0 0
        %3779 = vmatmul.mubr.bf16.gmra.mrb[0].mxu0 %v3689
        %v3780 = vpop.f32.mrb[0].mxu0
        %v3781 = vadd.f32 0.0, %v3780
        %v3782 = vpop.f32.mrb[0].mxu0
        %v3783 = vpop.f32.mrb[0].mxu0
        %v3784 = vadd.f32 0.0, %v3783
        %v3785 = vpop.f32.mrb[0].mxu0
        %3786 = vmatprep.mubr.bf16.mxu0 0
        %3787 = vmatmul.mubr.bf16.gmra.mrb[0].mxu0 %v3692
        %v3788 = vpop.f32.mrb[0].mxu0
        %v3789 = vadd.f32 0.0, %v3788
        %v3790 = vpop.f32.mrb[0].mxu0
        %v3791 = vpop.f32.mrb[0].mxu0
        %v3792 = vadd.f32 0.0, %v3791
        %v3793 = vpop.f32.mrb[0].mxu0
        %3794 = vmatprep.mubr.bf16.mxu0 0
        %3795 = vmatmul.mubr.bf16.gmra.mrb[0].mxu0 %v3695
        %v3796 = vpop.f32.mrb[0].mxu0
        %v3797 = vadd.f32 0.0, %v3796
        %v3798 = vpop.f32.mrb[0].mxu0
        %v3799 = vpop.f32.mrb[0].mxu0
        %v3800 = vadd.f32 0.0, %v3799
        %v3801 = vpop.f32.mrb[0].mxu0
        %3802 = vmatprep.mubr.bf16.mxu0 0
        %3803 = vmatmul.mubr.bf16.gmra.mrb[0].mxu0 %v3698
        %v3804 = vpop.f32.mrb[0].mxu0
        %v3805 = vadd.f32 0.0, %v3804
        %v3806 = vpop.f32.mrb[0].mxu0
        %v3807 = vpop.f32.mrb[0].mxu0
        %v3808 = vadd.f32 0.0, %v3807
        %v3809 = vpop.f32.mrb[0].mxu0
        %3810 = vmatprep.mubr.bf16.mxu0 0
        %3811 = vmatmul.mubr.bf16.gmra.mrb[0].mxu0 %v3701
        %v3812 = vpop.f32.mrb[0].mxu0
        %v3813 = vadd.f32 0.0, %v3812
        %v3814 = vpop.f32.mrb[0].mxu0
        %v3815 = vpop.f32.mrb[0].mxu0
        %v3816 = vadd.f32 0.0, %v3815
        %v3817 = vpop.f32.mrb[0].mxu0
        %3818 = vmatprep.mubr.bf16.mxu0 0
        %3819 = vmatmul.mubr.bf16.gmra.mrb[0].mxu0 %v3704
        %v3820 = vpop.f32.mrb[0].mxu0
        %v3821 = vadd.f32 0.0, %v3820
        %v3822 = vpop.f32.mrb[0].mxu0
        %v3823 = vpop.f32.mrb[0].mxu0
        %v3824 = vadd.f32 0.0, %v3823
        %v3825 = vpop.f32.mrb[0].mxu0
        %3826 = vmatprep.mubr.bf16.mxu0 0
        %3827 = vmatmul.mubr.bf16.gmra.mrb[0].mxu0 %v3707
        %v3828 = vpop.f32.mrb[0].mxu0
        %v3829 = vadd.f32 0.0, %v3828
        %v3830 = vpop.f32.mrb[0].mxu0
        %v3831 = vpop.f32.mrb[0].mxu0
        %v3832 = vadd.f32 0.0, %v3831
        %v3833 = vpop.f32.mrb[0].mxu0
        %3834 = vmatprep.mubr.bf16.mxu0 0
        %3835 = vmatmul.mubr.bf16.gmra.mrb[0].mxu0 %v3710
        %v3836 = vpop.f32.mrb[0].mxu0
        %v3837 = vadd.f32 0.0, %v3836
        %v3838 = vpop.f32.mrb[0].mxu0
        %v3839 = vpop.f32.mrb[0].mxu0
        %v3840 = vadd.f32 0.0, %v3839
        %v3841 = vpop.f32.mrb[0].mxu0
        %3842 = vmatprep.mubr.bf16.mxu0 0
        %3843 = vmatmul.mubr.bf16.gmra.mrb[0].mxu0 %v3713
        %v3844 = vpop.f32.mrb[0].mxu0
        %v3845 = vadd.f32 0.0, %v3844
        %v3846 = vpop.f32.mrb[0].mxu0
        %v3847 = vpop.f32.mrb[0].mxu0
        %v3848 = vadd.f32 0.0, %v3847
        %v3849 = vpop.f32.mrb[0].mxu0
        %3850 = vmatprep.mubr.bf16.mxu0 0
        %3851 = vmatmul.mubr.bf16.gmra.mrb[0].mxu0 %v3716
        %v3852 = vpop.f32.mrb[0].mxu0
        %v3853 = vadd.f32 0.0, %v3852
        %v3854 = vpop.f32.mrb[0].mxu0
        %v3855 = vpop.f32.mrb[0].mxu0
        %v3856 = vadd.f32 0.0, %v3855
        %v3857 = vpop.f32.mrb[0].mxu0
        %3858 = vmatprep.mubr.bf16.mxu0 0
        %3859 = vmatmul.mubr.bf16.gmra.mrb[0].mxu0 %v3719
        %v3860 = vpop.f32.mrb[0].mxu0
        %v3861 = vadd.f32 0.0, %v3860
        %v3862 = vpop.f32.mrb[0].mxu0
        %v3863 = vpop.f32.mrb[0].mxu0
        %v3864 = vadd.f32 0.0, %v3863
        %v3865 = vpop.f32.mrb[0].mxu0
        %3866 = vmatprep.mubr.bf16.mxu0 0
        %3867 = vmatmul.mubr.bf16.gmra.mrb[0].mxu0 %v3722
        %v3868 = vpop.f32.mrb[0].mxu0
        %v3869 = vadd.f32 0.0, %v3868
        %v3870 = vpop.f32.mrb[0].mxu0
        %v3871 = vpop.f32.mrb[0].mxu0
        %v3872 = vadd.f32 0.0, %v3871
        %v3873 = vpop.f32.mrb[0].mxu0
        %3874 = vmatprep.mubr.bf16.mxu0 0
        %3875 = vmatmul.mubr.bf16.gmra.mrb[0].mxu0 %v3725
        %v3876 = vpop.f32.mrb[0].mxu0
        %v3877 = vadd.f32 0.0, %v3876
        %v3878 = vpop.f32.mrb[0].mxu0
        %v3879 = vpop.f32.mrb[0].mxu0
        %v3880 = vadd.f32 0.0, %v3879
        %v3881 = vpop.f32.mrb[0].mxu0
        %3882 = vmatprep.mubr.bf16.mxu0 0
        %3883 = vmatmul.mubr.bf16.gmra.mrb[0].mxu0 %v3728
        %v3884 = vpop.f32.mrb[0].mxu0
        %v3885 = vadd.f32 0.0, %v3884
        %v3886 = vpop.f32.mrb[0].mxu0
        %v3887 = vpop.f32.mrb[0].mxu0
        %v3888 = vadd.f32 0.0, %v3887
        %v3889 = vpop.f32.mrb[0].mxu0
        %3890 = vdwg.mxu0
        %v3895 = vunpack.c.l.b16 %v1404
        %v3896 = vunpack.c.l.b16 %v1405
        %v3897 = vunpack.c.l.b16 %v1406
        %v3898 = vunpack.c.l.b16 %v1407
        %v3899 = vpack.c.b16 %v3896, %v3895
        %v3900 = vpack.c.b16 %v3898, %v3897
        %v3904 = vsel %vm904, %v1408, 0
        %v3907 = vsel %vm904, %v1409, 0
        %v3910 = vsel %vm904, %v1410, 0
        %v3913 = vsel %vm904, %v1411, 0
        %v3916 = vsel %vm904, %v1412, 0
        %v3919 = vsel %vm904, %v1413, 0
        %v3922 = vsel %vm904, %v1414, 0
        %v3925 = vsel %vm904, %v1415, 0
        %v3928 = vsel %vm904, %v1416, 0
        %v3931 = vsel %vm904, %v1417, 0
        %v3934 = vsel %vm904, %v1418, 0
        %v3937 = vsel %vm904, %v1419, 0
        %v3940 = vsel %vm904, %v1420, 0
        %v3943 = vsel %vm904, %v1421, 0
        %v3946 = vsel %vm904, %v1422, 0
        %v3949 = vsel %vm904, %v1423, 0
        %3951 = vmatprep.subr.bf16.mxu0 0
        %3952 = vmatpush1.bf16.msra.mxu0 %v3899
        %3953 = vmatprep.subr.bf16.mxu0 0
        %3954 = vmatpush1.bf16.msra.mxu0 %v3900
        %3955 = vmatprep.subr.bf16.mxu0 0
        %3956 = vmatpush1.bf16.msra.mxu0 0
        %3957 = vmatprep.subr.bf16.mxu0 0
        %3958 = vmatpush1.bf16.msra.mxu0 0
        %3959 = vmatprep.subr.bf16.mxu0 0
        %3960 = vmatpush1.bf16.msra.mxu0 0
        %3961 = vmatprep.subr.bf16.mxu0 0
        %3962 = vmatpush1.bf16.msra.mxu0 0
        %3963 = vmatprep.subr.bf16.mxu0 0
        %3964 = vmatpush1.bf16.msra.mxu0 0
        %3965 = vmatprep.subr.bf16.mxu0 0
        %3966 = vmatpush1.bf16.msra.mxu0 0
        %3967 = vmatprep.subr.bf16.mxu0 0
        %3968 = vmatpush1.bf16.msra.mxu0 0
        %3969 = vmatprep.subr.bf16.mxu0 0
        %3970 = vmatpush1.bf16.msra.mxu0 0
        %3971 = vmatprep.subr.bf16.mxu0 0
        %3972 = vmatpush1.bf16.msra.mxu0 0
        %3973 = vmatprep.subr.bf16.mxu0 0
        %3974 = vmatpush1.bf16.msra.mxu0 0
        %3975 = vmatprep.subr.bf16.mxu0 0
        %3976 = vmatpush1.bf16.msra.mxu0 0
        %3977 = vmatprep.subr.bf16.mxu0 0
        %3978 = vmatpush1.bf16.msra.mxu0 0
        %3979 = vmatprep.subr.bf16.mxu0 0
        %3980 = vmatpush1.bf16.msra.mxu0 0
        %3981 = vmatprep.subr.bf16.mxu0 0
        %3982 = vmatpush1.bf16.msra.mxu0 0
        %3983 = vmatprep.mubr.bf16.mxu0 0
        %3984 = vmatmul.mubr.bf16.gmra.mrb[0].mxu0 %v3904
        %v3985 = vpop.f32.mrb[0].mxu0
        %v3986 = vadd.f32 %v3765, %v3985
        %v3987 = vpop.f32.mrb[0].mxu0
        %v3988 = vpop.f32.mrb[0].mxu0
        %v3989 = vadd.f32 %v3768, %v3988
        %v3990 = vpop.f32.mrb[0].mxu0
        %3991 = vmatprep.mubr.bf16.mxu0 0
        %3992 = vmatmul.mubr.bf16.gmra.mrb[0].mxu0 %v3907
        %v3993 = vpop.f32.mrb[0].mxu0
        %v3994 = vadd.f32 %v3773, %v3993
        %v3995 = vpop.f32.mrb[0].mxu0
        %v3996 = vpop.f32.mrb[0].mxu0
        %v3997 = vadd.f32 %v3776, %v3996
        %v3998 = vpop.f32.mrb[0].mxu0
        %3999 = vmatprep.mubr.bf16.mxu0 0
        %4000 = vmatmul.mubr.bf16.gmra.mrb[0].mxu0 %v3910
        %v4001 = vpop.f32.mrb[0].mxu0
        %v4002 = vadd.f32 %v3781, %v4001
        %v4003 = vpop.f32.mrb[0].mxu0
        %v4004 = vpop.f32.mrb[0].mxu0
        %v4005 = vadd.f32 %v3784, %v4004
        %v4006 = vpop.f32.mrb[0].mxu0
        %4007 = vmatprep.mubr.bf16.mxu0 0
        %4008 = vmatmul.mubr.bf16.gmra.mrb[0].mxu0 %v3913
        %v4009 = vpop.f32.mrb[0].mxu0
        %v4010 = vadd.f32 %v3789, %v4009
        %v4011 = vpop.f32.mrb[0].mxu0
        %v4012 = vpop.f32.mrb[0].mxu0
        %v4013 = vadd.f32 %v3792, %v4012
        %v4014 = vpop.f32.mrb[0].mxu0
        %4015 = vmatprep.mubr.bf16.mxu0 0
        %4016 = vmatmul.mubr.bf16.gmra.mrb[0].mxu0 %v3916
        %v4017 = vpop.f32.mrb[0].mxu0
        %v4018 = vadd.f32 %v3797, %v4017
        %v4019 = vpop.f32.mrb[0].mxu0
        %v4020 = vpop.f32.mrb[0].mxu0
        %v4021 = vadd.f32 %v3800, %v4020
        %v4022 = vpop.f32.mrb[0].mxu0
        %4023 = vmatprep.mubr.bf16.mxu0 0
        %4024 = vmatmul.mubr.bf16.gmra.mrb[0].mxu0 %v3919
        %v4025 = vpop.f32.mrb[0].mxu0
        %v4026 = vadd.f32 %v3805, %v4025
        %v4027 = vpop.f32.mrb[0].mxu0
        %v4028 = vpop.f32.mrb[0].mxu0
        %v4029 = vadd.f32 %v3808, %v4028
        %v4030 = vpop.f32.mrb[0].mxu0
        %4031 = vmatprep.mubr.bf16.mxu0 0
        %4032 = vmatmul.mubr.bf16.gmra.mrb[0].mxu0 %v3922
        %v4033 = vpop.f32.mrb[0].mxu0
        %v4034 = vadd.f32 %v3813, %v4033
        %v4035 = vpop.f32.mrb[0].mxu0
        %v4036 = vpop.f32.mrb[0].mxu0
        %v4037 = vadd.f32 %v3816, %v4036
        %v4038 = vpop.f32.mrb[0].mxu0
        %4039 = vmatprep.mubr.bf16.mxu0 0
        %4040 = vmatmul.mubr.bf16.gmra.mrb[0].mxu0 %v3925
        %v4041 = vpop.f32.mrb[0].mxu0
        %v4042 = vadd.f32 %v3821, %v4041
        %v4043 = vpop.f32.mrb[0].mxu0
        %v4044 = vpop.f32.mrb[0].mxu0
        %v4045 = vadd.f32 %v3824, %v4044
        %v4046 = vpop.f32.mrb[0].mxu0
        %4047 = vmatprep.mubr.bf16.mxu0 0
        %4048 = vmatmul.mubr.bf16.gmra.mrb[0].mxu0 %v3928
        %v4049 = vpop.f32.mrb[0].mxu0
        %v4050 = vadd.f32 %v3829, %v4049
        %v4051 = vpop.f32.mrb[0].mxu0
        %v4052 = vpop.f32.mrb[0].mxu0
        %v4053 = vadd.f32 %v3832, %v4052
        %v4054 = vpop.f32.mrb[0].mxu0
        %4055 = vmatprep.mubr.bf16.mxu0 0
        %4056 = vmatmul.mubr.bf16.gmra.mrb[0].mxu0 %v3931
        %v4057 = vpop.f32.mrb[0].mxu0
        %v4058 = vadd.f32 %v3837, %v4057
        %v4059 = vpop.f32.mrb[0].mxu0
        %v4060 = vpop.f32.mrb[0].mxu0
        %v4061 = vadd.f32 %v3840, %v4060
        %v4062 = vpop.f32.mrb[0].mxu0
        %4063 = vmatprep.mubr.bf16.mxu0 0
        %4064 = vmatmul.mubr.bf16.gmra.mrb[0].mxu0 %v3934
        %v4065 = vpop.f32.mrb[0].mxu0
        %v4066 = vadd.f32 %v3845, %v4065
        %v4067 = vpop.f32.mrb[0].mxu0
        %v4068 = vpop.f32.mrb[0].mxu0
        %v4069 = vadd.f32 %v3848, %v4068
        %v4070 = vpop.f32.mrb[0].mxu0
        %4071 = vmatprep.mubr.bf16.mxu0 0
        %4072 = vmatmul.mubr.bf16.gmra.mrb[0].mxu0 %v3937
        %v4073 = vpop.f32.mrb[0].mxu0
        %v4074 = vadd.f32 %v3853, %v4073
        %v4075 = vpop.f32.mrb[0].mxu0
        %v4076 = vpop.f32.mrb[0].mxu0
        %v4077 = vadd.f32 %v3856, %v4076
        %v4078 = vpop.f32.mrb[0].mxu0
        %4079 = vmatprep.mubr.bf16.mxu0 0
        %4080 = vmatmul.mubr.bf16.gmra.mrb[0].mxu0 %v3940
        %v4081 = vpop.f32.mrb[0].mxu0
        %v4082 = vadd.f32 %v3861, %v4081
        %v4083 = vpop.f32.mrb[0].mxu0
        %v4084 = vpop.f32.mrb[0].mxu0
        %v4085 = vadd.f32 %v3864, %v4084
        %v4086 = vpop.f32.mrb[0].mxu0
        %4087 = vmatprep.mubr.bf16.mxu0 0
        %4088 = vmatmul.mubr.bf16.gmra.mrb[0].mxu0 %v3943
        %v4089 = vpop.f32.mrb[0].mxu0
        %v4090 = vadd.f32 %v3869, %v4089
        %v4091 = vpop.f32.mrb[0].mxu0
        %v4092 = vpop.f32.mrb[0].mxu0
        %v4093 = vadd.f32 %v3872, %v4092
        %v4094 = vpop.f32.mrb[0].mxu0
        %4095 = vmatprep.mubr.bf16.mxu0 0
        %4096 = vmatmul.mubr.bf16.gmra.mrb[0].mxu0 %v3946
        %v4097 = vpop.f32.mrb[0].mxu0
        %v4098 = vadd.f32 %v3877, %v4097
        %v4099 = vpop.f32.mrb[0].mxu0
        %v4100 = vpop.f32.mrb[0].mxu0
        %v4101 = vadd.f32 %v3880, %v4100
        %v4102 = vpop.f32.mrb[0].mxu0
        %4103 = vmatprep.mubr.bf16.mxu0 0
        %4104 = vmatmul.mubr.bf16.gmra.mrb[0].mxu0 %v3949
        %v4105 = vpop.f32.mrb[0].mxu0
        %v4106 = vadd.f32 %v3885, %v4105
        %v4107 = vpop.f32.mrb[0].mxu0
        %v4108 = vpop.f32.mrb[0].mxu0
        %v4109 = vadd.f32 %v3888, %v4108
        %v4110 = vpop.f32.mrb[0].mxu0
        %4111 = vdwg.mxu0
        %s4112 = scalar_lea.vmem [#allocation2], 24
        %v4113 = vld [vmem:[%s4112 + $0x1] sm:$0xff]
        %v4114 = vld [vmem:[%s4112 + $0x9] sm:$0xff]
        %v4115 = vld [vmem:[%s4112 + $0x19] sm:$0xff]
        %v4116 = vld [vmem:[%s4112 + $0x21] sm:$0xff]
        %v4117 = vld [vmem:[%s4112 + $0x31] sm:$0xff]
        %v4118 = vld [vmem:[%s4112 + $0x39] sm:$0xff]
        %v4119 = vld [vmem:[%s4112 + $0x49] sm:$0xff]
        %v4120 = vld [vmem:[%s4112 + $0x51] sm:$0xff]
        %v4121 = vld [vmem:[%s4112 + $0x61] sm:$0xff]
        %v4122 = vld [vmem:[%s4112 + $0x69] sm:$0xff]
        %v4123 = vld [vmem:[%s4112 + $0x79] sm:$0xff]
        %v4124 = vld [vmem:[%s4112 + $0x81] sm:$0xff]
        %v4125 = vld [vmem:[%s4112 + $0x91] sm:$0xff]
        %v4126 = vld [vmem:[%s4112 + $0x99] sm:$0xff]
        %v4127 = vld [vmem:[%s4112 + $0xa9] sm:$0xff]
        %v4128 = vld [vmem:[%s4112 + $0xb1] sm:$0xff]
        %v4129 = vld [vmem:[%s4112 + $0xc1] sm:$0xff]
        %v4130 = vld [vmem:[%s4112 + $0xc9] sm:$0xff]
        %v4131 = vld [vmem:[%s4112 + $0xd9] sm:$0xff]
        %v4132 = vld [vmem:[%s4112 + $0xe1] sm:$0xff]
        %v4133 = vld [vmem:[%s4112 + $0xf1] sm:$0xff]
        %v4134 = vld [vmem:[%s4112 + $0xf9] sm:$0xff]
        %v4135 = vld [vmem:[%s4112 + $0x109] sm:$0xff]
        %v4136 = vld [vmem:[%s4112 + $0x111] sm:$0xff]
        %v4137 = vld [vmem:[%s4112 + $0x121] sm:$0xff]
        %v4138 = vld [vmem:[%s4112 + $0x129] sm:$0xff]
        %v4139 = vld [vmem:[%s4112 + $0x139] sm:$0xff]
        %v4140 = vld [vmem:[%s4112 + $0x141] sm:$0xff]
        %v4141 = vld [vmem:[%s4112 + $0x151] sm:$0xff]
        %v4142 = vld [vmem:[%s4112 + $0x159] sm:$0xff]
        %v4143 = vld [vmem:[%s4112 + $0x169] sm:$0xff]
        %v4144 = vld [vmem:[%s4112 + $0x171] sm:$0xff]
        %v4145 = vld [vmem:[%s4112 + $0x3] sm:$0xff]
        %v4146 = vld [vmem:[%s4112 + $0xb] sm:$0xff]
        %v4147 = vld [vmem:[%s4112 + $0x1b] sm:$0xff]
        %v4148 = vld [vmem:[%s4112 + $0x23] sm:$0xff]
        %v4149 = vld [vmem:[%s4112 + $0x33] sm:$0xff]
        %v4150 = vld [vmem:[%s4112 + $0x3b] sm:$0xff]
        %v4151 = vld [vmem:[%s4112 + $0x4b] sm:$0xff]
        %v4152 = vld [vmem:[%s4112 + $0x53] sm:$0xff]
        %v4153 = vld [vmem:[%s4112 + $0x63] sm:$0xff]
        %v4154 = vld [vmem:[%s4112 + $0x6b] sm:$0xff]
        %v4155 = vld [vmem:[%s4112 + $0x7b] sm:$0xff]
        %v4156 = vld [vmem:[%s4112 + $0x83] sm:$0xff]
        %v4157 = vld [vmem:[%s4112 + $0x93] sm:$0xff]
        %v4158 = vld [vmem:[%s4112 + $0x9b] sm:$0xff]
        %v4159 = vld [vmem:[%s4112 + $0xab] sm:$0xff]
        %v4160 = vld [vmem:[%s4112 + $0xb3] sm:$0xff]
        %v4161 = vld [vmem:[%s4112 + $0xc3] sm:$0xff]
        %v4162 = vld [vmem:[%s4112 + $0xcb] sm:$0xff]
        %v4163 = vld [vmem:[%s4112 + $0xdb] sm:$0xff]
        %v4164 = vld [vmem:[%s4112 + $0xe3] sm:$0xff]
        %v4165 = vld [vmem:[%s4112 + $0xf3] sm:$0xff]
        %v4166 = vld [vmem:[%s4112 + $0xfb] sm:$0xff]
        %v4167 = vld [vmem:[%s4112 + $0x10b] sm:$0xff]
        %v4168 = vld [vmem:[%s4112 + $0x113] sm:$0xff]
        %v4169 = vld [vmem:[%s4112 + $0x123] sm:$0xff]
        %v4170 = vld [vmem:[%s4112 + $0x12b] sm:$0xff]
        %v4171 = vld [vmem:[%s4112 + $0x13b] sm:$0xff]
        %v4172 = vld [vmem:[%s4112 + $0x143] sm:$0xff]
        %v4173 = vld [vmem:[%s4112 + $0x153] sm:$0xff]
        %v4174 = vld [vmem:[%s4112 + $0x15b] sm:$0xff]
        %v4175 = vld [vmem:[%s4112 + $0x16b] sm:$0xff]
        %v4176 = vld [vmem:[%s4112 + $0x173] sm:$0xff]
        %v4177 = vld [vmem:[%s4112 + $0x5] sm:$0xff]
        %v4178 = vld [vmem:[%s4112 + $0xd] sm:$0xff]
        %v4179 = vld [vmem:[%s4112 + $0x1d] sm:$0xff]
        %v4180 = vld [vmem:[%s4112 + $0x25] sm:$0xff]
        %v4181 = vld [vmem:[%s4112 + $0x35] sm:$0xff]
        %v4182 = vld [vmem:[%s4112 + $0x3d] sm:$0xff]
        %v4183 = vld [vmem:[%s4112 + $0x4d] sm:$0xff]
        %v4184 = vld [vmem:[%s4112 + $0x55] sm:$0xff]
        %v4185 = vld [vmem:[%s4112 + $0x65] sm:$0xff]
        %v4186 = vld [vmem:[%s4112 + $0x6d] sm:$0xff]
        %v4187 = vld [vmem:[%s4112 + $0x7d] sm:$0xff]
        %v4188 = vld [vmem:[%s4112 + $0x85] sm:$0xff]
        %v4189 = vld [vmem:[%s4112 + $0x95] sm:$0xff]
        %v4190 = vld [vmem:[%s4112 + $0x9d] sm:$0xff]
        %v4191 = vld [vmem:[%s4112 + $0xad] sm:$0xff]
        %v4192 = vld [vmem:[%s4112 + $0xb5] sm:$0xff]
        %v4193 = vld [vmem:[%s4112 + $0xc5] sm:$0xff]
        %v4194 = vld [vmem:[%s4112 + $0xcd] sm:$0xff]
        %v4195 = vld [vmem:[%s4112 + $0xdd] sm:$0xff]
        %v4196 = vld [vmem:[%s4112 + $0xe5] sm:$0xff]
        %v4197 = vld [vmem:[%s4112 + $0xf5] sm:$0xff]
        %v4198 = vld [vmem:[%s4112 + $0xfd] sm:$0xff]
        %v4199 = vld [vmem:[%s4112 + $0x10d] sm:$0xff]
        %v4200 = vld [vmem:[%s4112 + $0x115] sm:$0xff]
        %v4201 = vld [vmem:[%s4112 + $0x125] sm:$0xff]
        %v4202 = vld [vmem:[%s4112 + $0x12d] sm:$0xff]
        %v4203 = vld [vmem:[%s4112 + $0x13d] sm:$0xff]
        %v4204 = vld [vmem:[%s4112 + $0x145] sm:$0xff]
        %v4205 = vld [vmem:[%s4112 + $0x155] sm:$0xff]
        %v4206 = vld [vmem:[%s4112 + $0x15d] sm:$0xff]
        %v4207 = vld [vmem:[%s4112 + $0x16d] sm:$0xff]
        %v4208 = vld [vmem:[%s4112 + $0x175] sm:$0xff]
        %v4209 = vld [vmem:[%s439 + $0x1] sm:$0xff]
        %v4210 = vld [vmem:[%s439 + $0x9] sm:$0xff]
        %v4211 = vld [vmem:[%s439 + $0x19] sm:$0xff]
        %v4212 = vld [vmem:[%s439 + $0x21] sm:$0xff]
        %v4213 = vld [vmem:[%s439 + $0x31] sm:$0xff]
        %v4214 = vld [vmem:[%s439 + $0x39] sm:$0xff]
        %v4215 = vld [vmem:[%s439 + $0x49] sm:$0xff]
        %v4216 = vld [vmem:[%s439 + $0x51] sm:$0xff]
        %v4217 = vld [vmem:[%s439 + $0x61] sm:$0xff]
        %v4218 = vld [vmem:[%s439 + $0x69] sm:$0xff]
        %v4219 = vld [vmem:[%s439 + $0x79] sm:$0xff]
        %v4220 = vld [vmem:[%s439 + $0x81] sm:$0xff]
        %v4221 = vld [vmem:[%s439 + $0x91] sm:$0xff]
        %v4222 = vld [vmem:[%s439 + $0x99] sm:$0xff]
        %v4223 = vld [vmem:[%s439 + $0xa9] sm:$0xff]
        %v4224 = vld [vmem:[%s439 + $0xb1] sm:$0xff]
        %v4225 = vld [vmem:[%s439 + $0xc1] sm:$0xff]
        %v4226 = vld [vmem:[%s439 + $0xc9] sm:$0xff]
        %v4227 = vld [vmem:[%s439 + $0xd9] sm:$0xff]
        %v4228 = vld [vmem:[%s439 + $0xe1] sm:$0xff]
        %v4229 = vld [vmem:[%s439 + $0xf1] sm:$0xff]
        %v4230 = vld [vmem:[%s439 + $0xf9] sm:$0xff]
        %v4231 = vld [vmem:[%s439 + $0x109] sm:$0xff]
        %v4232 = vld [vmem:[%s439 + $0x111] sm:$0xff]
        %v4233 = vld [vmem:[%s439 + $0x121] sm:$0xff]
        %v4234 = vld [vmem:[%s439 + $0x129] sm:$0xff]
        %v4235 = vld [vmem:[%s439 + $0x139] sm:$0xff]
        %v4236 = vld [vmem:[%s439 + $0x141] sm:$0xff]
        %v4237 = vld [vmem:[%s439 + $0x151] sm:$0xff]
        %v4238 = vld [vmem:[%s439 + $0x159] sm:$0xff]
        %v4239 = vld [vmem:[%s439 + $0x169] sm:$0xff]
        %v4240 = vld [vmem:[%s439 + $0x171] sm:$0xff]
        %v4241 = vld [vmem:[%s439 + $0x5] sm:$0xff]
        %v4242 = vld [vmem:[%s439 + $0xd] sm:$0xff]
        %v4243 = vld [vmem:[%s439 + $0x1d] sm:$0xff]
        %v4244 = vld [vmem:[%s439 + $0x25] sm:$0xff]
        %v4245 = vld [vmem:[%s439 + $0x35] sm:$0xff]
        %v4246 = vld [vmem:[%s439 + $0x3d] sm:$0xff]
        %v4247 = vld [vmem:[%s439 + $0x4d] sm:$0xff]
        %v4248 = vld [vmem:[%s439 + $0x55] sm:$0xff]
        %v4249 = vld [vmem:[%s439 + $0x65] sm:$0xff]
        %v4250 = vld [vmem:[%s439 + $0x6d] sm:$0xff]
        %v4251 = vld [vmem:[%s439 + $0x7d] sm:$0xff]
        %v4252 = vld [vmem:[%s439 + $0x85] sm:$0xff]
        %v4253 = vld [vmem:[%s439 + $0x95] sm:$0xff]
        %v4254 = vld [vmem:[%s439 + $0x9d] sm:$0xff]
        %v4255 = vld [vmem:[%s439 + $0xad] sm:$0xff]
        %v4256 = vld [vmem:[%s439 + $0xb5] sm:$0xff]
        %v4257 = vld [vmem:[%s439 + $0xc5] sm:$0xff]
        %v4258 = vld [vmem:[%s439 + $0xcd] sm:$0xff]
        %v4259 = vld [vmem:[%s439 + $0xdd] sm:$0xff]
        %v4260 = vld [vmem:[%s439 + $0xe5] sm:$0xff]
        %v4261 = vld [vmem:[%s439 + $0xf5] sm:$0xff]
        %v4262 = vld [vmem:[%s439 + $0xfd] sm:$0xff]
        %v4263 = vld [vmem:[%s439 + $0x10d] sm:$0xff]
        %v4264 = vld [vmem:[%s439 + $0x115] sm:$0xff]
        %v4265 = vld [vmem:[%s439 + $0x125] sm:$0xff]
        %v4266 = vld [vmem:[%s439 + $0x12d] sm:$0xff]
        %v4267 = vld [vmem:[%s439 + $0x13d] sm:$0xff]
        %v4268 = vld [vmem:[%s439 + $0x145] sm:$0xff]
        %v4269 = vld [vmem:[%s439 + $0x155] sm:$0xff]
        %v4270 = vld [vmem:[%s439 + $0x15d] sm:$0xff]
        %v4271 = vld [vmem:[%s439 + $0x16d] sm:$0xff]
        %v4272 = vld [vmem:[%s439 + $0x175] sm:$0xff]
        %s4273 = scalar_lea.vmem [#allocation2], 120
        %v4274 = vld [vmem:[%s4273 + $0x1] sm:$0xff]
        %v4275 = vld [vmem:[%s4273 + $0x9] sm:$0xff]
        %v4276 = vld [vmem:[%s4273 + $0x19] sm:$0xff]
        %v4277 = vld [vmem:[%s4273 + $0x21] sm:$0xff]
        %v4278 = vld [vmem:[%s4273 + $0x31] sm:$0xff]
        %v4279 = vld [vmem:[%s4273 + $0x39] sm:$0xff]
        %v4280 = vld [vmem:[%s4273 + $0x49] sm:$0xff]
        %v4281 = vld [vmem:[%s4273 + $0x51] sm:$0xff]
        %v4282 = vld [vmem:[%s4273 + $0x61] sm:$0xff]
        %v4283 = vld [vmem:[%s4273 + $0x69] sm:$0xff]
        %v4284 = vld [vmem:[%s4273 + $0x79] sm:$0xff]
        %v4285 = vld [vmem:[%s4273 + $0x81] sm:$0xff]
        %v4286 = vld [vmem:[%s4273 + $0x91] sm:$0xff]
        %v4287 = vld [vmem:[%s4273 + $0x99] sm:$0xff]
        %v4288 = vld [vmem:[%s4273 + $0xa9] sm:$0xff]
        %v4289 = vld [vmem:[%s4273 + $0xb1] sm:$0xff]
        %v4290 = vld [vmem:[%s4273 + $0xc1] sm:$0xff]
        %v4291 = vld [vmem:[%s4273 + $0xc9] sm:$0xff]
        %v4292 = vld [vmem:[%s4273 + $0xd9] sm:$0xff]
        %v4293 = vld [vmem:[%s4273 + $0xe1] sm:$0xff]
        %v4294 = vld [vmem:[%s4273 + $0xf1] sm:$0xff]
        %v4295 = vld [vmem:[%s4273 + $0xf9] sm:$0xff]
        %v4296 = vld [vmem:[%s4273 + $0x109] sm:$0xff]
        %v4297 = vld [vmem:[%s4273 + $0x111] sm:$0xff]
        %v4298 = vld [vmem:[%s4273 + $0x121] sm:$0xff]
        %v4299 = vld [vmem:[%s4273 + $0x129] sm:$0xff]
        %v4300 = vld [vmem:[%s4273 + $0x139] sm:$0xff]
        %v4301 = vld [vmem:[%s4273 + $0x141] sm:$0xff]
        %v4302 = vld [vmem:[%s4273 + $0x151] sm:$0xff]
        %v4303 = vld [vmem:[%s4273 + $0x159] sm:$0xff]
        %v4304 = vld [vmem:[%s4273 + $0x169] sm:$0xff]
        %v4305 = vld [vmem:[%s4273 + $0x171] sm:$0xff]
        %v4306 = vld [vmem:[%s4273 + $0x3] sm:$0xff]
        %v4307 = vld [vmem:[%s4273 + $0xb] sm:$0xff]
        %v4308 = vld [vmem:[%s4273 + $0x1b] sm:$0xff]
        %v4309 = vld [vmem:[%s4273 + $0x23] sm:$0xff]
        %v4310 = vld [vmem:[%s4273 + $0x33] sm:$0xff]
        %v4311 = vld [vmem:[%s4273 + $0x3b] sm:$0xff]
        %v4312 = vld [vmem:[%s4273 + $0x4b] sm:$0xff]
        %v4313 = vld [vmem:[%s4273 + $0x53] sm:$0xff]
        %v4314 = vld [vmem:[%s4273 + $0x63] sm:$0xff]
        %v4315 = vld [vmem:[%s4273 + $0x6b] sm:$0xff]
        %v4316 = vld [vmem:[%s4273 + $0x7b] sm:$0xff]
        %v4317 = vld [vmem:[%s4273 + $0x83] sm:$0xff]
        %v4318 = vld [vmem:[%s4273 + $0x93] sm:$0xff]
        %v4319 = vld [vmem:[%s4273 + $0x9b] sm:$0xff]
        %v4320 = vld [vmem:[%s4273 + $0xab] sm:$0xff]
        %v4321 = vld [vmem:[%s4273 + $0xb3] sm:$0xff]
        %v4322 = vld [vmem:[%s4273 + $0xc3] sm:$0xff]
        %v4323 = vld [vmem:[%s4273 + $0xcb] sm:$0xff]
        %v4324 = vld [vmem:[%s4273 + $0xdb] sm:$0xff]
        %v4325 = vld [vmem:[%s4273 + $0xe3] sm:$0xff]
        %v4326 = vld [vmem:[%s4273 + $0xf3] sm:$0xff]
        %v4327 = vld [vmem:[%s4273 + $0xfb] sm:$0xff]
        %v4328 = vld [vmem:[%s4273 + $0x10b] sm:$0xff]
        %v4329 = vld [vmem:[%s4273 + $0x113] sm:$0xff]
        %v4330 = vld [vmem:[%s4273 + $0x123] sm:$0xff]
        %v4331 = vld [vmem:[%s4273 + $0x12b] sm:$0xff]
        %v4332 = vld [vmem:[%s4273 + $0x13b] sm:$0xff]
        %v4333 = vld [vmem:[%s4273 + $0x143] sm:$0xff]
        %v4334 = vld [vmem:[%s4273 + $0x153] sm:$0xff]
        %v4335 = vld [vmem:[%s4273 + $0x15b] sm:$0xff]
        %v4336 = vld [vmem:[%s4273 + $0x16b] sm:$0xff]
        %v4337 = vld [vmem:[%s4273 + $0x173] sm:$0xff]
        %v4338 = vld [vmem:[%s4273 + $0x5] sm:$0xff]
        %v4339 = vld [vmem:[%s4273 + $0xd] sm:$0xff]
        %v4340 = vld [vmem:[%s4273 + $0x1d] sm:$0xff]
        %v4341 = vld [vmem:[%s4273 + $0x25] sm:$0xff]
        %v4342 = vld [vmem:[%s4273 + $0x35] sm:$0xff]
        %v4343 = vld [vmem:[%s4273 + $0x3d] sm:$0xff]
        %v4344 = vld [vmem:[%s4273 + $0x4d] sm:$0xff]
        %v4345 = vld [vmem:[%s4273 + $0x55] sm:$0xff]
        %v4346 = vld [vmem:[%s4273 + $0x65] sm:$0xff]
        %v4347 = vld [vmem:[%s4273 + $0x6d] sm:$0xff]
        %v4348 = vld [vmem:[%s4273 + $0x7d] sm:$0xff]
        %v4349 = vld [vmem:[%s4273 + $0x85] sm:$0xff]
        %v4350 = vld [vmem:[%s4273 + $0x95] sm:$0xff]
        %v4351 = vld [vmem:[%s4273 + $0x9d] sm:$0xff]
        %v4352 = vld [vmem:[%s4273 + $0xad] sm:$0xff]
        %v4353 = vld [vmem:[%s4273 + $0xb5] sm:$0xff]
        %v4354 = vld [vmem:[%s4273 + $0xc5] sm:$0xff]
        %v4355 = vld [vmem:[%s4273 + $0xcd] sm:$0xff]
        %v4356 = vld [vmem:[%s4273 + $0xdd] sm:$0xff]
        %v4357 = vld [vmem:[%s4273 + $0xe5] sm:$0xff]
        %v4358 = vld [vmem:[%s4273 + $0xf5] sm:$0xff]
        %v4359 = vld [vmem:[%s4273 + $0xfd] sm:$0xff]
        %v4360 = vld [vmem:[%s4273 + $0x10d] sm:$0xff]
        %v4361 = vld [vmem:[%s4273 + $0x115] sm:$0xff]
        %v4362 = vld [vmem:[%s4273 + $0x125] sm:$0xff]
        %v4363 = vld [vmem:[%s4273 + $0x12d] sm:$0xff]
        %v4364 = vld [vmem:[%s4273 + $0x13d] sm:$0xff]
        %v4365 = vld [vmem:[%s4273 + $0x145] sm:$0xff]
        %v4366 = vld [vmem:[%s4273 + $0x155] sm:$0xff]
        %v4367 = vld [vmem:[%s4273 + $0x15d] sm:$0xff]
        %v4368 = vld [vmem:[%s4273 + $0x16d] sm:$0xff]
        %v4369 = vld [vmem:[%s4273 + $0x175] sm:$0xff]
        %4402 = vrot.lane.b32.xlu0 %v4145, 16
        %v4403 = vpop.permute.xlu0 %4402
        %4404 = vrot.lane.b32.xlu0 %v4146, 16
        %v4405 = vpop.permute.xlu0 %4404
        %4406 = vrot.lane.b32.xlu0 %v4147, 16
        %v4407 = vpop.permute.xlu0 %4406
        %4408 = vrot.lane.b32.xlu0 %v4148, 16
        %v4409 = vpop.permute.xlu0 %4408
        %4410 = vrot.lane.b32.xlu0 %v4149, 16
        %v4411 = vpop.permute.xlu0 %4410
        %4412 = vrot.lane.b32.xlu0 %v4150, 16
        %v4413 = vpop.permute.xlu0 %4412
        %4414 = vrot.lane.b32.xlu0 %v4151, 16
        %v4415 = vpop.permute.xlu0 %4414
        %4416 = vrot.lane.b32.xlu0 %v4152, 16
        %v4417 = vpop.permute.xlu0 %4416
        %4418 = vrot.lane.b32.xlu0 %v4153, 16
        %v4419 = vpop.permute.xlu0 %4418
        %4420 = vrot.lane.b32.xlu0 %v4154, 16
        %v4421 = vpop.permute.xlu0 %4420
        %4422 = vrot.lane.b32.xlu0 %v4155, 16
        %v4423 = vpop.permute.xlu0 %4422
        %4424 = vrot.lane.b32.xlu0 %v4156, 16
        %v4425 = vpop.permute.xlu0 %4424
        %4426 = vrot.lane.b32.xlu0 %v4157, 16
        %v4427 = vpop.permute.xlu0 %4426
        %4428 = vrot.lane.b32.xlu0 %v4158, 16
        %v4429 = vpop.permute.xlu0 %4428
        %4430 = vrot.lane.b32.xlu0 %v4159, 16
        %v4431 = vpop.permute.xlu0 %4430
        %4432 = vrot.lane.b32.xlu0 %v4160, 16
        %v4433 = vpop.permute.xlu0 %4432
        %4434 = vrot.lane.b32.xlu0 %v4161, 16
        %v4435 = vpop.permute.xlu0 %4434
        %4436 = vrot.lane.b32.xlu0 %v4162, 16
        %v4437 = vpop.permute.xlu0 %4436
        %4438 = vrot.lane.b32.xlu0 %v4163, 16
        %v4439 = vpop.permute.xlu0 %4438
        %4440 = vrot.lane.b32.xlu0 %v4164, 16
        %v4441 = vpop.permute.xlu0 %4440
        %4442 = vrot.lane.b32.xlu0 %v4165, 16
        %v4443 = vpop.permute.xlu0 %4442
        %4444 = vrot.lane.b32.xlu0 %v4166, 16
        %v4445 = vpop.permute.xlu0 %4444
        %4446 = vrot.lane.b32.xlu0 %v4167, 16
        %v4447 = vpop.permute.xlu0 %4446
        %4448 = vrot.lane.b32.xlu0 %v4168, 16
        %v4449 = vpop.permute.xlu0 %4448
        %4450 = vrot.lane.b32.xlu0 %v4169, 16
        %v4451 = vpop.permute.xlu0 %4450
        %4452 = vrot.lane.b32.xlu0 %v4170, 16
        %v4453 = vpop.permute.xlu0 %4452
        %4454 = vrot.lane.b32.xlu0 %v4171, 16
        %v4455 = vpop.permute.xlu0 %4454
        %4456 = vrot.lane.b32.xlu0 %v4172, 16
        %v4457 = vpop.permute.xlu0 %4456
        %4458 = vrot.lane.b32.xlu0 %v4173, 16
        %v4459 = vpop.permute.xlu0 %4458
        %4460 = vrot.lane.b32.xlu0 %v4174, 16
        %v4461 = vpop.permute.xlu0 %4460
        %4462 = vrot.lane.b32.xlu0 %v4175, 16
        %v4463 = vpop.permute.xlu0 %4462
        %4464 = vrot.lane.b32.xlu0 %v4176, 16
        %v4465 = vpop.permute.xlu0 %4464
        %4530 = vrot.lane.b32.xlu0 %v4177, 32
        %v4531 = vpop.permute.xlu0 %4530
        %4532 = vrot.lane.b32.xlu0 %v4178, 32
        %v4533 = vpop.permute.xlu0 %4532
        %4534 = vrot.lane.b32.xlu0 %v4179, 32
        %v4535 = vpop.permute.xlu0 %4534
        %4536 = vrot.lane.b32.xlu0 %v4180, 32
        %v4537 = vpop.permute.xlu0 %4536
        %4538 = vrot.lane.b32.xlu0 %v4181, 32
        %v4539 = vpop.permute.xlu0 %4538
        %4540 = vrot.lane.b32.xlu0 %v4182, 32
        %v4541 = vpop.permute.xlu0 %4540
        %4542 = vrot.lane.b32.xlu0 %v4183, 32
        %v4543 = vpop.permute.xlu0 %4542
        %4544 = vrot.lane.b32.xlu0 %v4184, 32
        %v4545 = vpop.permute.xlu0 %4544
        %4546 = vrot.lane.b32.xlu0 %v4185, 32
        %v4547 = vpop.permute.xlu0 %4546
        %4548 = vrot.lane.b32.xlu0 %v4186, 32
        %v4549 = vpop.permute.xlu0 %4548
        %4550 = vrot.lane.b32.xlu0 %v4187, 32
        %v4551 = vpop.permute.xlu0 %4550
        %4552 = vrot.lane.b32.xlu0 %v4188, 32
        %v4553 = vpop.permute.xlu0 %4552
        %4554 = vrot.lane.b32.xlu0 %v4189, 32
        %v4555 = vpop.permute.xlu0 %4554
        %4556 = vrot.lane.b32.xlu0 %v4190, 32
        %v4557 = vpop.permute.xlu0 %4556
        %4558 = vrot.lane.b32.xlu0 %v4191, 32
        %v4559 = vpop.permute.xlu0 %4558
        %4560 = vrot.lane.b32.xlu0 %v4192, 32
        %v4561 = vpop.permute.xlu0 %4560
        %4562 = vrot.lane.b32.xlu0 %v4193, 32
        %v4563 = vpop.permute.xlu0 %4562
        %4564 = vrot.lane.b32.xlu0 %v4194, 32
        %v4565 = vpop.permute.xlu0 %4564
        %4566 = vrot.lane.b32.xlu0 %v4195, 32
        %v4567 = vpop.permute.xlu0 %4566
        %4568 = vrot.lane.b32.xlu0 %v4196, 32
        %v4569 = vpop.permute.xlu0 %4568
        %4570 = vrot.lane.b32.xlu0 %v4197, 32
        %v4571 = vpop.permute.xlu0 %4570
        %4572 = vrot.lane.b32.xlu0 %v4198, 32
        %v4573 = vpop.permute.xlu0 %4572
        %4574 = vrot.lane.b32.xlu0 %v4199, 32
        %v4575 = vpop.permute.xlu0 %4574
        %4576 = vrot.lane.b32.xlu0 %v4200, 32
        %v4577 = vpop.permute.xlu0 %4576
        %4578 = vrot.lane.b32.xlu0 %v4201, 32
        %v4579 = vpop.permute.xlu0 %4578
        %4580 = vrot.lane.b32.xlu0 %v4202, 32
        %v4581 = vpop.permute.xlu0 %4580
        %4582 = vrot.lane.b32.xlu0 %v4203, 32
        %v4583 = vpop.permute.xlu0 %4582
        %4584 = vrot.lane.b32.xlu0 %v4204, 32
        %v4585 = vpop.permute.xlu0 %4584
        %4586 = vrot.lane.b32.xlu0 %v4205, 32
        %v4587 = vpop.permute.xlu0 %4586
        %4588 = vrot.lane.b32.xlu0 %v4206, 32
        %v4589 = vpop.permute.xlu0 %4588
        %4590 = vrot.lane.b32.xlu0 %v4207, 32
        %v4591 = vpop.permute.xlu0 %4590
        %4592 = vrot.lane.b32.xlu0 %v4208, 32
        %v4593 = vpop.permute.xlu0 %4592
        %4658 = vrot.lane.b32.xlu0 %v4209, 48
        %v4659 = vpop.permute.xlu0 %4658
        %4660 = vrot.lane.b32.xlu0 %v4210, 48
        %v4661 = vpop.permute.xlu0 %4660
        %4662 = vrot.lane.b32.xlu0 %v4211, 48
        %v4663 = vpop.permute.xlu0 %4662
        %4664 = vrot.lane.b32.xlu0 %v4212, 48
        %v4665 = vpop.permute.xlu0 %4664
        %4666 = vrot.lane.b32.xlu0 %v4213, 48
        %v4667 = vpop.permute.xlu0 %4666
        %4668 = vrot.lane.b32.xlu0 %v4214, 48
        %v4669 = vpop.permute.xlu0 %4668
        %4670 = vrot.lane.b32.xlu0 %v4215, 48
        %v4671 = vpop.permute.xlu0 %4670
        %4672 = vrot.lane.b32.xlu0 %v4216, 48
        %v4673 = vpop.permute.xlu0 %4672
        %4674 = vrot.lane.b32.xlu0 %v4217, 48
        %v4675 = vpop.permute.xlu0 %4674
        %4676 = vrot.lane.b32.xlu0 %v4218, 48
        %v4677 = vpop.permute.xlu0 %4676
        %4678 = vrot.lane.b32.xlu0 %v4219, 48
        %v4679 = vpop.permute.xlu0 %4678
        %4680 = vrot.lane.b32.xlu0 %v4220, 48
        %v4681 = vpop.permute.xlu0 %4680
        %4682 = vrot.lane.b32.xlu0 %v4221, 48
        %v4683 = vpop.permute.xlu0 %4682
        %4684 = vrot.lane.b32.xlu0 %v4222, 48
        %v4685 = vpop.permute.xlu0 %4684
        %4686 = vrot.lane.b32.xlu0 %v4223, 48
        %v4687 = vpop.permute.xlu0 %4686
        %4688 = vrot.lane.b32.xlu0 %v4224, 48
        %v4689 = vpop.permute.xlu0 %4688
        %4690 = vrot.lane.b32.xlu0 %v4225, 48
        %v4691 = vpop.permute.xlu0 %4690
        %4692 = vrot.lane.b32.xlu0 %v4226, 48
        %v4693 = vpop.permute.xlu0 %4692
        %4694 = vrot.lane.b32.xlu0 %v4227, 48
        %v4695 = vpop.permute.xlu0 %4694
        %4696 = vrot.lane.b32.xlu0 %v4228, 48
        %v4697 = vpop.permute.xlu0 %4696
        %4698 = vrot.lane.b32.xlu0 %v4229, 48
        %v4699 = vpop.permute.xlu0 %4698
        %4700 = vrot.lane.b32.xlu0 %v4230, 48
        %v4701 = vpop.permute.xlu0 %4700
        %4702 = vrot.lane.b32.xlu0 %v4231, 48
        %v4703 = vpop.permute.xlu0 %4702
        %4704 = vrot.lane.b32.xlu0 %v4232, 48
        %v4705 = vpop.permute.xlu0 %4704
        %4706 = vrot.lane.b32.xlu0 %v4233, 48
        %v4707 = vpop.permute.xlu0 %4706
        %4708 = vrot.lane.b32.xlu0 %v4234, 48
        %v4709 = vpop.permute.xlu0 %4708
        %4710 = vrot.lane.b32.xlu0 %v4235, 48
        %v4711 = vpop.permute.xlu0 %4710
        %4712 = vrot.lane.b32.xlu0 %v4236, 48
        %v4713 = vpop.permute.xlu0 %4712
        %4714 = vrot.lane.b32.xlu0 %v4237, 48
        %v4715 = vpop.permute.xlu0 %4714
        %4716 = vrot.lane.b32.xlu0 %v4238, 48
        %v4717 = vpop.permute.xlu0 %4716
        %4718 = vrot.lane.b32.xlu0 %v4239, 48
        %v4719 = vpop.permute.xlu0 %4718
        %4720 = vrot.lane.b32.xlu0 %v4240, 48
        %v4721 = vpop.permute.xlu0 %4720
        %4786 = vrot.lane.b32.xlu0 %v4241, 80
        %v4787 = vpop.permute.xlu0 %4786
        %4788 = vrot.lane.b32.xlu0 %v4242, 80
        %v4789 = vpop.permute.xlu0 %4788
        %4790 = vrot.lane.b32.xlu0 %v4243, 80
        %v4791 = vpop.permute.xlu0 %4790
        %4792 = vrot.lane.b32.xlu0 %v4244, 80
        %v4793 = vpop.permute.xlu0 %4792
        %4794 = vrot.lane.b32.xlu0 %v4245, 80
        %v4795 = vpop.permute.xlu0 %4794
        %4796 = vrot.lane.b32.xlu0 %v4246, 80
        %v4797 = vpop.permute.xlu0 %4796
        %4798 = vrot.lane.b32.xlu0 %v4247, 80
        %v4799 = vpop.permute.xlu0 %4798
        %4800 = vrot.lane.b32.xlu0 %v4248, 80
        %v4801 = vpop.permute.xlu0 %4800
        %4802 = vrot.lane.b32.xlu0 %v4249, 80
        %v4803 = vpop.permute.xlu0 %4802
        %4804 = vrot.lane.b32.xlu0 %v4250, 80
        %v4805 = vpop.permute.xlu0 %4804
        %4806 = vrot.lane.b32.xlu0 %v4251, 80
        %v4807 = vpop.permute.xlu0 %4806
        %4808 = vrot.lane.b32.xlu0 %v4252, 80
        %v4809 = vpop.permute.xlu0 %4808
        %4810 = vrot.lane.b32.xlu0 %v4253, 80
        %v4811 = vpop.permute.xlu0 %4810
        %4812 = vrot.lane.b32.xlu0 %v4254, 80
        %v4813 = vpop.permute.xlu0 %4812
        %4814 = vrot.lane.b32.xlu0 %v4255, 80
        %v4815 = vpop.permute.xlu0 %4814
        %4816 = vrot.lane.b32.xlu0 %v4256, 80
        %v4817 = vpop.permute.xlu0 %4816
        %4818 = vrot.lane.b32.xlu0 %v4257, 80
        %v4819 = vpop.permute.xlu0 %4818
        %4820 = vrot.lane.b32.xlu0 %v4258, 80
        %v4821 = vpop.permute.xlu0 %4820
        %4822 = vrot.lane.b32.xlu0 %v4259, 80
        %v4823 = vpop.permute.xlu0 %4822
        %4824 = vrot.lane.b32.xlu0 %v4260, 80
        %v4825 = vpop.permute.xlu0 %4824
        %4826 = vrot.lane.b32.xlu0 %v4261, 80
        %v4827 = vpop.permute.xlu0 %4826
        %4828 = vrot.lane.b32.xlu0 %v4262, 80
        %v4829 = vpop.permute.xlu0 %4828
        %4830 = vrot.lane.b32.xlu0 %v4263, 80
        %v4831 = vpop.permute.xlu0 %4830
        %4832 = vrot.lane.b32.xlu0 %v4264, 80
        %v4833 = vpop.permute.xlu0 %4832
        %4834 = vrot.lane.b32.xlu0 %v4265, 80
        %v4835 = vpop.permute.xlu0 %4834
        %4836 = vrot.lane.b32.xlu0 %v4266, 80
        %v4837 = vpop.permute.xlu0 %4836
        %4838 = vrot.lane.b32.xlu0 %v4267, 80
        %v4839 = vpop.permute.xlu0 %4838
        %4840 = vrot.lane.b32.xlu0 %v4268, 80
        %v4841 = vpop.permute.xlu0 %4840
        %4842 = vrot.lane.b32.xlu0 %v4269, 80
        %v4843 = vpop.permute.xlu0 %4842
        %4844 = vrot.lane.b32.xlu0 %v4270, 80
        %v4845 = vpop.permute.xlu0 %4844
        %4846 = vrot.lane.b32.xlu0 %v4271, 80
        %v4847 = vpop.permute.xlu0 %4846
        %4848 = vrot.lane.b32.xlu0 %v4272, 80
        %v4849 = vpop.permute.xlu0 %4848
        %4914 = vrot.lane.b32.xlu0 %v4274, 96
        %v4915 = vpop.permute.xlu0 %4914
        %4916 = vrot.lane.b32.xlu0 %v4275, 96
        %v4917 = vpop.permute.xlu0 %4916
        %4918 = vrot.lane.b32.xlu0 %v4276, 96
        %v4919 = vpop.permute.xlu0 %4918
        %4920 = vrot.lane.b32.xlu0 %v4277, 96
        %v4921 = vpop.permute.xlu0 %4920
        %4922 = vrot.lane.b32.xlu0 %v4278, 96
        %v4923 = vpop.permute.xlu0 %4922
        %4924 = vrot.lane.b32.xlu0 %v4279, 96
        %v4925 = vpop.permute.xlu0 %4924
        %4926 = vrot.lane.b32.xlu0 %v4280, 96
        %v4927 = vpop.permute.xlu0 %4926
        %4928 = vrot.lane.b32.xlu0 %v4281, 96
        %v4929 = vpop.permute.xlu0 %4928
        %4930 = vrot.lane.b32.xlu0 %v4282, 96
        %v4931 = vpop.permute.xlu0 %4930
        %4932 = vrot.lane.b32.xlu0 %v4283, 96
        %v4933 = vpop.permute.xlu0 %4932
        %4934 = vrot.lane.b32.xlu0 %v4284, 96
        %v4935 = vpop.permute.xlu0 %4934
        %4936 = vrot.lane.b32.xlu0 %v4285, 96
        %v4937 = vpop.permute.xlu0 %4936
        %4938 = vrot.lane.b32.xlu0 %v4286, 96
        %v4939 = vpop.permute.xlu0 %4938
        %4940 = vrot.lane.b32.xlu0 %v4287, 96
        %v4941 = vpop.permute.xlu0 %4940
        %4942 = vrot.lane.b32.xlu0 %v4288, 96
        %v4943 = vpop.permute.xlu0 %4942
        %4944 = vrot.lane.b32.xlu0 %v4289, 96
        %v4945 = vpop.permute.xlu0 %4944
        %4946 = vrot.lane.b32.xlu0 %v4290, 96
        %v4947 = vpop.permute.xlu0 %4946
        %4948 = vrot.lane.b32.xlu0 %v4291, 96
        %v4949 = vpop.permute.xlu0 %4948
        %4950 = vrot.lane.b32.xlu0 %v4292, 96
        %v4951 = vpop.permute.xlu0 %4950
        %4952 = vrot.lane.b32.xlu0 %v4293, 96
        %v4953 = vpop.permute.xlu0 %4952
        %4954 = vrot.lane.b32.xlu0 %v4294, 96
        %v4955 = vpop.permute.xlu0 %4954
        %4956 = vrot.lane.b32.xlu0 %v4295, 96
        %v4957 = vpop.permute.xlu0 %4956
        %4958 = vrot.lane.b32.xlu0 %v4296, 96
        %v4959 = vpop.permute.xlu0 %4958
        %4960 = vrot.lane.b32.xlu0 %v4297, 96
        %v4961 = vpop.permute.xlu0 %4960
        %4962 = vrot.lane.b32.xlu0 %v4298, 96
        %v4963 = vpop.permute.xlu0 %4962
        %4964 = vrot.lane.b32.xlu0 %v4299, 96
        %v4965 = vpop.permute.xlu0 %4964
        %4966 = vrot.lane.b32.xlu0 %v4300, 96
        %v4967 = vpop.permute.xlu0 %4966
        %4968 = vrot.lane.b32.xlu0 %v4301, 96
        %v4969 = vpop.permute.xlu0 %4968
        %4970 = vrot.lane.b32.xlu0 %v4302, 96
        %v4971 = vpop.permute.xlu0 %4970
        %4972 = vrot.lane.b32.xlu0 %v4303, 96
        %v4973 = vpop.permute.xlu0 %4972
        %4974 = vrot.lane.b32.xlu0 %v4304, 96
        %v4975 = vpop.permute.xlu0 %4974
        %4976 = vrot.lane.b32.xlu0 %v4305, 96
        %v4977 = vpop.permute.xlu0 %4976
        %5042 = vrot.lane.b32.xlu0 %v4306, 112
        %v5043 = vpop.permute.xlu0 %5042
        %5044 = vrot.lane.b32.xlu0 %v4307, 112
        %v5045 = vpop.permute.xlu0 %5044
        %5046 = vrot.lane.b32.xlu0 %v4308, 112
        %v5047 = vpop.permute.xlu0 %5046
        %5048 = vrot.lane.b32.xlu0 %v4309, 112
        %v5049 = vpop.permute.xlu0 %5048
        %5050 = vrot.lane.b32.xlu0 %v4310, 112
        %v5051 = vpop.permute.xlu0 %5050
        %5052 = vrot.lane.b32.xlu0 %v4311, 112
        %v5053 = vpop.permute.xlu0 %5052
        %5054 = vrot.lane.b32.xlu0 %v4312, 112
        %v5055 = vpop.permute.xlu0 %5054
        %5056 = vrot.lane.b32.xlu0 %v4313, 112
        %v5057 = vpop.permute.xlu0 %5056
        %5058 = vrot.lane.b32.xlu0 %v4314, 112
        %v5059 = vpop.permute.xlu0 %5058
        %5060 = vrot.lane.b32.xlu0 %v4315, 112
        %v5061 = vpop.permute.xlu0 %5060
        %5062 = vrot.lane.b32.xlu0 %v4316, 112
        %v5063 = vpop.permute.xlu0 %5062
        %5064 = vrot.lane.b32.xlu0 %v4317, 112
        %v5065 = vpop.permute.xlu0 %5064
        %5066 = vrot.lane.b32.xlu0 %v4318, 112
        %v5067 = vpop.permute.xlu0 %5066
        %5068 = vrot.lane.b32.xlu0 %v4319, 112
        %v5069 = vpop.permute.xlu0 %5068
        %5070 = vrot.lane.b32.xlu0 %v4320, 112
        %v5071 = vpop.permute.xlu0 %5070
        %5072 = vrot.lane.b32.xlu0 %v4321, 112
        %v5073 = vpop.permute.xlu0 %5072
        %5074 = vrot.lane.b32.xlu0 %v4322, 112
        %v5075 = vpop.permute.xlu0 %5074
        %5076 = vrot.lane.b32.xlu0 %v4323, 112
        %v5077 = vpop.permute.xlu0 %5076
        %5078 = vrot.lane.b32.xlu0 %v4324, 112
        %v5079 = vpop.permute.xlu0 %5078
        %5080 = vrot.lane.b32.xlu0 %v4325, 112
        %v5081 = vpop.permute.xlu0 %5080
        %5082 = vrot.lane.b32.xlu0 %v4326, 112
        %v5083 = vpop.permute.xlu0 %5082
        %5084 = vrot.lane.b32.xlu0 %v4327, 112
        %v5085 = vpop.permute.xlu0 %5084
        %5086 = vrot.lane.b32.xlu0 %v4328, 112
        %v5087 = vpop.permute.xlu0 %5086
        %5088 = vrot.lane.b32.xlu0 %v4329, 112
        %v5089 = vpop.permute.xlu0 %5088
        %5090 = vrot.lane.b32.xlu0 %v4330, 112
        %v5091 = vpop.permute.xlu0 %5090
        %5092 = vrot.lane.b32.xlu0 %v4331, 112
        %v5093 = vpop.permute.xlu0 %5092
        %5094 = vrot.lane.b32.xlu0 %v4332, 112
        %v5095 = vpop.permute.xlu0 %5094
        %5096 = vrot.lane.b32.xlu0 %v4333, 112
        %v5097 = vpop.permute.xlu0 %5096
        %5098 = vrot.lane.b32.xlu0 %v4334, 112
        %v5099 = vpop.permute.xlu0 %5098
        %5100 = vrot.lane.b32.xlu0 %v4335, 112
        %v5101 = vpop.permute.xlu0 %5100
        %5102 = vrot.lane.b32.xlu0 %v4336, 112
        %v5103 = vpop.permute.xlu0 %5102
        %5104 = vrot.lane.b32.xlu0 %v4337, 112
        %v5105 = vpop.permute.xlu0 %5104
        %v5138 = vsel %vm309, %v4113, %v4403
        %v5139 = vsel %vm309, %v4114, %v4405
        %v5140 = vsel %vm309, %v4115, %v4407
        %v5141 = vsel %vm309, %v4116, %v4409
        %v5142 = vsel %vm309, %v4117, %v4411
        %v5143 = vsel %vm309, %v4118, %v4413
        %v5144 = vsel %vm309, %v4119, %v4415
        %v5145 = vsel %vm309, %v4120, %v4417
        %v5146 = vsel %vm309, %v4121, %v4419
        %v5147 = vsel %vm309, %v4122, %v4421
        %v5148 = vsel %vm309, %v4123, %v4423
        %v5149 = vsel %vm309, %v4124, %v4425
        %v5150 = vsel %vm309, %v4125, %v4427
        %v5151 = vsel %vm309, %v4126, %v4429
        %v5152 = vsel %vm309, %v4127, %v4431
        %v5153 = vsel %vm309, %v4128, %v4433
        %v5154 = vsel %vm309, %v4129, %v4435
        %v5155 = vsel %vm309, %v4130, %v4437
        %v5156 = vsel %vm309, %v4131, %v4439
        %v5157 = vsel %vm309, %v4132, %v4441
        %v5158 = vsel %vm309, %v4133, %v4443
        %v5159 = vsel %vm309, %v4134, %v4445
        %v5160 = vsel %vm309, %v4135, %v4447
        %v5161 = vsel %vm309, %v4136, %v4449
        %v5162 = vsel %vm309, %v4137, %v4451
        %v5163 = vsel %vm309, %v4138, %v4453
        %v5164 = vsel %vm309, %v4139, %v4455
        %v5165 = vsel %vm309, %v4140, %v4457
        %v5166 = vsel %vm309, %v4141, %v4459
        %v5167 = vsel %vm309, %v4142, %v4461
        %v5168 = vsel %vm309, %v4143, %v4463
        %v5169 = vsel %vm309, %v4144, %v4465
        %v5170 = vsel %vm904, %v5138, %v4531
        %v5171 = vsel %vm904, %v5139, %v4533
        %v5172 = vsel %vm904, %v5140, %v4535
        %v5173 = vsel %vm904, %v5141, %v4537
        %v5174 = vsel %vm904, %v5142, %v4539
        %v5175 = vsel %vm904, %v5143, %v4541
        %v5176 = vsel %vm904, %v5144, %v4543
        %v5177 = vsel %vm904, %v5145, %v4545
        %v5178 = vsel %vm904, %v5146, %v4547
        %v5179 = vsel %vm904, %v5147, %v4549
        %v5180 = vsel %vm904, %v5148, %v4551
        %v5181 = vsel %vm904, %v5149, %v4553
        %v5182 = vsel %vm904, %v5150, %v4555
        %v5183 = vsel %vm904, %v5151, %v4557
        %v5184 = vsel %vm904, %v5152, %v4559
        %v5185 = vsel %vm904, %v5153, %v4561
        %v5186 = vsel %vm904, %v5154, %v4563
        %v5187 = vsel %vm904, %v5155, %v4565
        %v5188 = vsel %vm904, %v5156, %v4567
        %v5189 = vsel %vm904, %v5157, %v4569
        %v5190 = vsel %vm904, %v5158, %v4571
        %v5191 = vsel %vm904, %v5159, %v4573
        %v5192 = vsel %vm904, %v5160, %v4575
        %v5193 = vsel %vm904, %v5161, %v4577
        %v5194 = vsel %vm904, %v5162, %v4579
        %v5195 = vsel %vm904, %v5163, %v4581
        %v5196 = vsel %vm904, %v5164, %v4583
        %v5197 = vsel %vm904, %v5165, %v4585
        %v5198 = vsel %vm904, %v5166, %v4587
        %v5199 = vsel %vm904, %v5167, %v4589
        %v5200 = vsel %vm904, %v5168, %v4591
        %v5201 = vsel %vm904, %v5169, %v4593
        %v5202 = vsel %vm2674, %v5170, %v4659
        %v5203 = vsel %vm2674, %v5171, %v4661
        %v5204 = vsel %vm2674, %v5172, %v4663
        %v5205 = vsel %vm2674, %v5173, %v4665
        %v5206 = vsel %vm2674, %v5174, %v4667
        %v5207 = vsel %vm2674, %v5175, %v4669
        %v5208 = vsel %vm2674, %v5176, %v4671
        %v5209 = vsel %vm2674, %v5177, %v4673
        %v5210 = vsel %vm2674, %v5178, %v4675
        %v5211 = vsel %vm2674, %v5179, %v4677
        %v5212 = vsel %vm2674, %v5180, %v4679
        %v5213 = vsel %vm2674, %v5181, %v4681
        %v5214 = vsel %vm2674, %v5182, %v4683
        %v5215 = vsel %vm2674, %v5183, %v4685
        %v5216 = vsel %vm2674, %v5184, %v4687
        %v5217 = vsel %vm2674, %v5185, %v4689
        %v5218 = vsel %vm2674, %v5186, %v4691
        %v5219 = vsel %vm2674, %v5187, %v4693
        %v5220 = vsel %vm2674, %v5188, %v4695
        %v5221 = vsel %vm2674, %v5189, %v4697
        %v5222 = vsel %vm2674, %v5190, %v4699
        %v5223 = vsel %vm2674, %v5191, %v4701
        %v5224 = vsel %vm2674, %v5192, %v4703
        %v5225 = vsel %vm2674, %v5193, %v4705
        %v5226 = vsel %vm2674, %v5194, %v4707
        %v5227 = vsel %vm2674, %v5195, %v4709
        %v5228 = vsel %vm2674, %v5196, %v4711
        %v5229 = vsel %vm2674, %v5197, %v4713
        %v5230 = vsel %vm2674, %v5198, %v4715
        %v5231 = vsel %vm2674, %v5199, %v4717
        %v5232 = vsel %vm2674, %v5200, %v4719
        %v5233 = vsel %vm2674, %v5201, %v4721
        %v5234 = vsel %vm2707, %v5202, %v2131
        %v5235 = vsel %vm2707, %v5203, %v2133
        %v5236 = vsel %vm2707, %v5204, %v2135
        %v5237 = vsel %vm2707, %v5205, %v2137
        %v5238 = vsel %vm2707, %v5206, %v2139
        %v5239 = vsel %vm2707, %v5207, %v2141
        %v5240 = vsel %vm2707, %v5208, %v2143
        %v5241 = vsel %vm2707, %v5209, %v2145
        %v5242 = vsel %vm2707, %v5210, %v2147
        %v5243 = vsel %vm2707, %v5211, %v2149
        %v5244 = vsel %vm2707, %v5212, %v2151
        %v5245 = vsel %vm2707, %v5213, %v2153
        %v5246 = vsel %vm2707, %v5214, %v2155
        %v5247 = vsel %vm2707, %v5215, %v2157
        %v5248 = vsel %vm2707, %v5216, %v2159
        %v5249 = vsel %vm2707, %v5217, %v2161
        %v5250 = vsel %vm2707, %v5218, %v2163
        %v5251 = vsel %vm2707, %v5219, %v2165
        %v5252 = vsel %vm2707, %v5220, %v2167
        %v5253 = vsel %vm2707, %v5221, %v2169
        %v5254 = vsel %vm2707, %v5222, %v2171
        %v5255 = vsel %vm2707, %v5223, %v2173
        %v5256 = vsel %vm2707, %v5224, %v2175
        %v5257 = vsel %vm2707, %v5225, %v2177
        %v5258 = vsel %vm2707, %v5226, %v2179
        %v5259 = vsel %vm2707, %v5227, %v2181
        %v5260 = vsel %vm2707, %v5228, %v2183
        %v5261 = vsel %vm2707, %v5229, %v2185
        %v5262 = vsel %vm2707, %v5230, %v2187
        %v5263 = vsel %vm2707, %v5231, %v2189
        %v5264 = vsel %vm2707, %v5232, %v2191
        %v5265 = vsel %vm2707, %v5233, %v2193
        %v5266 = vsel %vm2740, %v5234, %v4787
        %v5267 = vsel %vm2740, %v5235, %v4789
        %v5268 = vsel %vm2740, %v5236, %v4791
        %v5269 = vsel %vm2740, %v5237, %v4793
        %v5270 = vsel %vm2740, %v5238, %v4795
        %v5271 = vsel %vm2740, %v5239, %v4797
        %v5272 = vsel %vm2740, %v5240, %v4799
        %v5273 = vsel %vm2740, %v5241, %v4801
        %v5274 = vsel %vm2740, %v5242, %v4803
        %v5275 = vsel %vm2740, %v5243, %v4805
        %v5276 = vsel %vm2740, %v5244, %v4807
        %v5277 = vsel %vm2740, %v5245, %v4809
        %v5278 = vsel %vm2740, %v5246, %v4811
        %v5279 = vsel %vm2740, %v5247, %v4813
        %v5280 = vsel %vm2740, %v5248, %v4815
        %v5281 = vsel %vm2740, %v5249, %v4817
        %v5282 = vsel %vm2740, %v5250, %v4819
        %v5283 = vsel %vm2740, %v5251, %v4821
        %v5284 = vsel %vm2740, %v5252, %v4823
        %v5285 = vsel %vm2740, %v5253, %v4825
        %v5286 = vsel %vm2740, %v5254, %v4827
        %v5287 = vsel %vm2740, %v5255, %v4829
        %v5288 = vsel %vm2740, %v5256, %v4831
        %v5289 = vsel %vm2740, %v5257, %v4833
        %v5290 = vsel %vm2740, %v5258, %v4835
        %v5291 = vsel %vm2740, %v5259, %v4837
        %v5292 = vsel %vm2740, %v5260, %v4839
        %v5293 = vsel %vm2740, %v5261, %v4841
        %v5294 = vsel %vm2740, %v5262, %v4843
        %v5295 = vsel %vm2740, %v5263, %v4845
        %v5296 = vsel %vm2740, %v5264, %v4847
        %v5297 = vsel %vm2740, %v5265, %v4849
        %v5298 = vsel %vm2773, %v5266, %v4915
        %v5299 = vsel %vm2773, %v5267, %v4917
        %v5300 = vsel %vm2773, %v5268, %v4919
        %v5301 = vsel %vm2773, %v5269, %v4921
        %v5302 = vsel %vm2773, %v5270, %v4923
        %v5303 = vsel %vm2773, %v5271, %v4925
        %v5304 = vsel %vm2773, %v5272, %v4927
        %v5305 = vsel %vm2773, %v5273, %v4929
        %v5306 = vsel %vm2773, %v5274, %v4931
        %v5307 = vsel %vm2773, %v5275, %v4933
        %v5308 = vsel %vm2773, %v5276, %v4935
        %v5309 = vsel %vm2773, %v5277, %v4937
        %v5310 = vsel %vm2773, %v5278, %v4939
        %v5311 = vsel %vm2773, %v5279, %v4941
        %v5312 = vsel %vm2773, %v5280, %v4943
        %v5313 = vsel %vm2773, %v5281, %v4945
        %v5314 = vsel %vm2773, %v5282, %v4947
        %v5315 = vsel %vm2773, %v5283, %v4949
        %v5316 = vsel %vm2773, %v5284, %v4951
        %v5317 = vsel %vm2773, %v5285, %v4953
        %v5318 = vsel %vm2773, %v5286, %v4955
        %v5319 = vsel %vm2773, %v5287, %v4957
        %v5320 = vsel %vm2773, %v5288, %v4959
        %v5321 = vsel %vm2773, %v5289, %v4961
        %v5322 = vsel %vm2773, %v5290, %v4963
        %v5323 = vsel %vm2773, %v5291, %v4965
        %v5324 = vsel %vm2773, %v5292, %v4967
        %v5325 = vsel %vm2773, %v5293, %v4969
        %v5326 = vsel %vm2773, %v5294, %v4971
        %v5327 = vsel %vm2773, %v5295, %v4973
        %v5328 = vsel %vm2773, %v5296, %v4975
        %v5329 = vsel %vm2773, %v5297, %v4977
        %v5330 = vsel %vm2806, %v5298, %v5043
        %v5331 = vsel %vm2806, %v5299, %v5045
        %v5332 = vsel %vm2806, %v5300, %v5047
        %v5333 = vsel %vm2806, %v5301, %v5049
        %v5334 = vsel %vm2806, %v5302, %v5051
        %v5335 = vsel %vm2806, %v5303, %v5053
        %v5336 = vsel %vm2806, %v5304, %v5055
        %v5337 = vsel %vm2806, %v5305, %v5057
        %v5338 = vsel %vm2806, %v5306, %v5059
        %v5339 = vsel %vm2806, %v5307, %v5061
        %v5340 = vsel %vm2806, %v5308, %v5063
        %v5341 = vsel %vm2806, %v5309, %v5065
        %v5342 = vsel %vm2806, %v5310, %v5067
        %v5343 = vsel %vm2806, %v5311, %v5069
        %v5344 = vsel %vm2806, %v5312, %v5071
        %v5345 = vsel %vm2806, %v5313, %v5073
        %v5346 = vsel %vm2806, %v5314, %v5075
        %v5347 = vsel %vm2806, %v5315, %v5077
        %v5348 = vsel %vm2806, %v5316, %v5079
        %v5349 = vsel %vm2806, %v5317, %v5081
        %v5350 = vsel %vm2806, %v5318, %v5083
        %v5351 = vsel %vm2806, %v5319, %v5085
        %v5352 = vsel %vm2806, %v5320, %v5087
        %v5353 = vsel %vm2806, %v5321, %v5089
        %v5354 = vsel %vm2806, %v5322, %v5091
        %v5355 = vsel %vm2806, %v5323, %v5093
        %v5356 = vsel %vm2806, %v5324, %v5095
        %v5357 = vsel %vm2806, %v5325, %v5097
        %v5358 = vsel %vm2806, %v5326, %v5099
        %v5359 = vsel %vm2806, %v5327, %v5101
        %v5360 = vsel %vm2806, %v5328, %v5103
        %v5361 = vsel %vm2806, %v5329, %v5105
        %s5362 = scalar_lea.vmem %s2, 72
        %v5363 = vld [vmem:[%s5362] sm:$0xf]
        %v5364 = vld [vmem:[%s5362 + $0x4] sm:$0xf]
        %v5365 = vld [vmem:[%s5362 + $0x8] sm:$0xf]
        %v5366 = vld [vmem:[%s5362 + $0xc] sm:$0xf]
        %v5367 = vld [vmem:[%s5362 + $0x10] sm:$0xf]
        %v5368 = vld [vmem:[%s5362 + $0x14] sm:$0xf]
        %v5369 = vld [vmem:[%s5362 + $0x18] sm:$0xf]
        %v5370 = vld [vmem:[%s5362 + $0x1c] sm:$0xf]
        %v5371 = vld [vmem:[%s5362 + $0x20] sm:$0xf]
        %v5372 = vld [vmem:[%s5362 + $0x24] sm:$0xf]
        %v5373 = vld [vmem:[%s5362 + $0x28] sm:$0xf]
        %v5374 = vld [vmem:[%s5362 + $0x2c] sm:$0xf]
        %v5375 = vld [vmem:[%s5362 + $0x30] sm:$0xf]
        %v5376 = vld [vmem:[%s5362 + $0x34] sm:$0xf]
        %v5377 = vld [vmem:[%s5362 + $0x38] sm:$0xf]
        %v5378 = vld [vmem:[%s5362 + $0x3c] sm:$0xf]
        %v5379 = vld [vmem:[%s5362 + $0x40] sm:$0xf]
        %v5380 = vld [vmem:[%s5362 + $0x44] sm:$0xf]
        %v5381 = vpack.c.bf16 %v5331, %v5330
        %v5382 = vpack.c.bf16 %v4339, %v4338
        %v5383 = vpack.c.bf16 %v5333, %v5332
        %v5384 = vpack.c.bf16 %v4341, %v4340
        %v5385 = vpack.c.bf16 %v5335, %v5334
        %v5386 = vpack.c.bf16 %v4343, %v4342
        %v5387 = vpack.c.bf16 %v5337, %v5336
        %v5388 = vpack.c.bf16 %v4345, %v4344
        %v5389 = vpack.c.bf16 %v5339, %v5338
        %v5390 = vpack.c.bf16 %v4347, %v4346
        %v5391 = vpack.c.bf16 %v5341, %v5340
        %v5392 = vpack.c.bf16 %v4349, %v4348
        %v5393 = vpack.c.bf16 %v5343, %v5342
        %v5394 = vpack.c.bf16 %v4351, %v4350
        %v5395 = vpack.c.bf16 %v5345, %v5344
        %v5396 = vpack.c.bf16 %v4353, %v4352
        %v5397 = vpack.c.bf16 %v5347, %v5346
        %v5398 = vpack.c.bf16 %v4355, %v4354
        %v5399 = vpack.c.bf16 %v5349, %v5348
        %v5400 = vpack.c.bf16 %v4357, %v4356
        %v5401 = vpack.c.bf16 %v5351, %v5350
        %v5402 = vpack.c.bf16 %v4359, %v4358
        %v5403 = vpack.c.bf16 %v5353, %v5352
        %v5404 = vpack.c.bf16 %v4361, %v4360
        %v5405 = vpack.c.bf16 %v5355, %v5354
        %v5406 = vpack.c.bf16 %v4363, %v4362
        %v5407 = vpack.c.bf16 %v5357, %v5356
        %v5408 = vpack.c.bf16 %v4365, %v4364
        %v5409 = vpack.c.bf16 %v5359, %v5358
        %v5410 = vpack.c.bf16 %v4367, %v4366
        %v5411 = vpack.c.bf16 %v5361, %v5360
        %v5412 = vpack.c.bf16 %v4369, %v4368
        %v5431 = vunpack.c.l.b16 %v5363
        %v5432 = vunpack.c.l.b16 %v5364
        %v5433 = vunpack.c.l.b16 %v5365
        %v5434 = vunpack.c.l.b16 %v5366
        %v5435 = vunpack.c.l.b16 %v5367
        %v5436 = vunpack.c.l.b16 %v5368
        %v5437 = vunpack.c.l.b16 %v5369
        %v5438 = vunpack.c.l.b16 %v5370
        %v5439 = vunpack.c.l.b16 %v5371
        %v5440 = vunpack.c.l.b16 %v5372
        %v5441 = vunpack.c.l.b16 %v5373
        %v5442 = vunpack.c.l.b16 %v5374
        %v5443 = vunpack.c.l.b16 %v5375
        %v5444 = vunpack.c.l.b16 %v5376
        %v5445 = vunpack.c.l.b16 %v5377
        %v5446 = vunpack.c.l.b16 %v5378
        %v5447 = vunpack.c.l.b16 %v5379
        %v5448 = vunpack.c.l.b16 %v5380
        %v5449 = vpack.c.b16 %v5432, %v5431
        %v5450 = vpack.c.b16 %v5434, %v5433
        %v5451 = vpack.c.b16 %v5436, %v5435
        %v5452 = vpack.c.b16 %v5438, %v5437
        %v5453 = vpack.c.b16 %v5440, %v5439
        %v5454 = vpack.c.b16 %v5442, %v5441
        %v5455 = vpack.c.b16 %v5444, %v5443
        %v5456 = vpack.c.b16 %v5446, %v5445
        %v5457 = vpack.c.b16 %v5448, %v5447
        %v5468 = vsel %vm309, %v5382, 0
        %v5471 = vsel %vm309, %v5384, 0
        %v5474 = vsel %vm309, %v5386, 0
        %v5477 = vsel %vm309, %v5388, 0
        %v5480 = vsel %vm309, %v5390, 0
        %v5483 = vsel %vm309, %v5392, 0
        %v5486 = vsel %vm309, %v5394, 0
        %v5489 = vsel %vm309, %v5396, 0
        %v5492 = vsel %vm309, %v5398, 0
        %v5495 = vsel %vm309, %v5400, 0
        %v5498 = vsel %vm309, %v5402, 0
        %v5501 = vsel %vm309, %v5404, 0
        %v5504 = vsel %vm309, %v5406, 0
        %v5507 = vsel %vm309, %v5408, 0
        %v5510 = vsel %vm309, %v5410, 0
        %v5513 = vsel %vm309, %v5412, 0
        %5515 = vmatprep.subr.bf16.mxu0 0
        %5516 = vmatpush1.bf16.msra.mxu0 %v5449
        %5517 = vmatprep.subr.bf16.mxu0 0
        %5518 = vmatpush1.bf16.msra.mxu0 %v5450
        %5519 = vmatprep.subr.bf16.mxu0 0
        %5520 = vmatpush1.bf16.msra.mxu0 %v5451
        %5521 = vmatprep.subr.bf16.mxu0 0
        %5522 = vmatpush1.bf16.msra.mxu0 %v5452
        %5523 = vmatprep.subr.bf16.mxu0 0
        %5524 = vmatpush1.bf16.msra.mxu0 %v5453
        %5525 = vmatprep.subr.bf16.mxu0 0
        %5526 = vmatpush1.bf16.msra.mxu0 %v5454
        %5527 = vmatprep.subr.bf16.mxu0 0
        %5528 = vmatpush1.bf16.msra.mxu0 %v5455
        %5529 = vmatprep.subr.bf16.mxu0 0
        %5530 = vmatpush1.bf16.msra.mxu0 %v5456
        %5531 = vmatprep.subr.bf16.mxu0 0
        %5532 = vmatpush1.bf16.msra.mxu0 %v5457
        %5533 = vmatprep.subr.bf16.mxu0 0
        %5534 = vmatpush1.bf16.msra.mxu0 0
        %5535 = vmatprep.subr.bf16.mxu0 0
        %5536 = vmatpush1.bf16.msra.mxu0 0
        %5537 = vmatprep.subr.bf16.mxu0 0
        %5538 = vmatpush1.bf16.msra.mxu0 0
        %5539 = vmatprep.subr.bf16.mxu0 0
        %5540 = vmatpush1.bf16.msra.mxu0 0
        %5541 = vmatprep.subr.bf16.mxu0 0
        %5542 = vmatpush1.bf16.msra.mxu0 0
        %5543 = vmatprep.subr.bf16.mxu0 0
        %5544 = vmatpush1.bf16.msra.mxu0 0
        %5545 = vmatprep.subr.bf16.mxu0 0
        %5546 = vmatpush1.bf16.msra.mxu0 0
        %5547 = vmatprep.mubr.bf16.mxu0 %v5468
        %5548 = vmatmul.mubr.bf16.gmra.mrb[0].mxu0 %v5381
        %v5549 = vpop.f32.mrb[0].mxu0
        %v5550 = vadd.f32 0.0, %v5549
        %v5551 = vpop.f32.mrb[0].mxu0
        %v5552 = vpop.f32.mrb[0].mxu0
        %v5553 = vadd.f32 0.0, %v5552
        %v5554 = vpop.f32.mrb[0].mxu0
        %5555 = vmatprep.mubr.bf16.mxu0 %v5471
        %5556 = vmatmul.mubr.bf16.gmra.mrb[0].mxu0 %v5383
        %v5557 = vpop.f32.mrb[0].mxu0
        %v5558 = vadd.f32 0.0, %v5557
        %v5559 = vpop.f32.mrb[0].mxu0
        %v5560 = vpop.f32.mrb[0].mxu0
        %v5561 = vadd.f32 0.0, %v5560
        %v5562 = vpop.f32.mrb[0].mxu0
        %5563 = vmatprep.mubr.bf16.mxu0 %v5474
        %5564 = vmatmul.mubr.bf16.gmra.mrb[0].mxu0 %v5385
        %v5565 = vpop.f32.mrb[0].mxu0
        %v5566 = vadd.f32 0.0, %v5565
        %v5567 = vpop.f32.mrb[0].mxu0
        %v5568 = vpop.f32.mrb[0].mxu0
        %v5569 = vadd.f32 0.0, %v5568
        %v5570 = vpop.f32.mrb[0].mxu0
        %5571 = vmatprep.mubr.bf16.mxu0 %v5477
        %5572 = vmatmul.mubr.bf16.gmra.mrb[0].mxu0 %v5387
        %v5573 = vpop.f32.mrb[0].mxu0
        %v5574 = vadd.f32 0.0, %v5573
        %v5575 = vpop.f32.mrb[0].mxu0
        %v5576 = vpop.f32.mrb[0].mxu0
        %v5577 = vadd.f32 0.0, %v5576
        %v5578 = vpop.f32.mrb[0].mxu0
        %5579 = vmatprep.mubr.bf16.mxu0 %v5480
        %5580 = vmatmul.mubr.bf16.gmra.mrb[0].mxu0 %v5389
        %v5581 = vpop.f32.mrb[0].mxu0
        %v5582 = vadd.f32 0.0, %v5581
        %v5583 = vpop.f32.mrb[0].mxu0
        %v5584 = vpop.f32.mrb[0].mxu0
        %v5585 = vadd.f32 0.0, %v5584
        %v5586 = vpop.f32.mrb[0].mxu0
        %5587 = vmatprep.mubr.bf16.mxu0 %v5483
        %5588 = vmatmul.mubr.bf16.gmra.mrb[0].mxu0 %v5391
        %v5589 = vpop.f32.mrb[0].mxu0
        %v5590 = vadd.f32 0.0, %v5589
        %v5591 = vpop.f32.mrb[0].mxu0
        %v5592 = vpop.f32.mrb[0].mxu0
        %v5593 = vadd.f32 0.0, %v5592
        %v5594 = vpop.f32.mrb[0].mxu0
        %5595 = vmatprep.mubr.bf16.mxu0 %v5486
        %5596 = vmatmul.mubr.bf16.gmra.mrb[0].mxu0 %v5393
        %v5597 = vpop.f32.mrb[0].mxu0
        %v5598 = vadd.f32 0.0, %v5597
        %v5599 = vpop.f32.mrb[0].mxu0
        %v5600 = vpop.f32.mrb[0].mxu0
        %v5601 = vadd.f32 0.0, %v5600
        %v5602 = vpop.f32.mrb[0].mxu0
        %5603 = vmatprep.mubr.bf16.mxu0 %v5489
        %5604 = vmatmul.mubr.bf16.gmra.mrb[0].mxu0 %v5395
        %v5605 = vpop.f32.mrb[0].mxu0
        %v5606 = vadd.f32 0.0, %v5605
        %v5607 = vpop.f32.mrb[0].mxu0
        %v5608 = vpop.f32.mrb[0].mxu0
        %v5609 = vadd.f32 0.0, %v5608
        %v5610 = vpop.f32.mrb[0].mxu0
        %5611 = vmatprep.mubr.bf16.mxu0 %v5492
        %5612 = vmatmul.mubr.bf16.gmra.mrb[0].mxu0 %v5397
        %v5613 = vpop.f32.mrb[0].mxu0
        %v5614 = vadd.f32 0.0, %v5613
        %v5615 = vpop.f32.mrb[0].mxu0
        %v5616 = vpop.f32.mrb[0].mxu0
        %v5617 = vadd.f32 0.0, %v5616
        %v5618 = vpop.f32.mrb[0].mxu0
        %5619 = vmatprep.mubr.bf16.mxu0 %v5495
        %5620 = vmatmul.mubr.bf16.gmra.mrb[0].mxu0 %v5399
        %v5621 = vpop.f32.mrb[0].mxu0
        %v5622 = vadd.f32 0.0, %v5621
        %v5623 = vpop.f32.mrb[0].mxu0
        %v5624 = vpop.f32.mrb[0].mxu0
        %v5625 = vadd.f32 0.0, %v5624
        %v5626 = vpop.f32.mrb[0].mxu0
        %5627 = vmatprep.mubr.bf16.mxu0 %v5498
        %5628 = vmatmul.mubr.bf16.gmra.mrb[0].mxu0 %v5401
        %v5629 = vpop.f32.mrb[0].mxu0
        %v5630 = vadd.f32 0.0, %v5629
        %v5631 = vpop.f32.mrb[0].mxu0
        %v5632 = vpop.f32.mrb[0].mxu0
        %v5633 = vadd.f32 0.0, %v5632
        %v5634 = vpop.f32.mrb[0].mxu0
        %5635 = vmatprep.mubr.bf16.mxu0 %v5501
        %5636 = vmatmul.mubr.bf16.gmra.mrb[0].mxu0 %v5403
        %v5637 = vpop.f32.mrb[0].mxu0
        %v5638 = vadd.f32 0.0, %v5637
        %v5639 = vpop.f32.mrb[0].mxu0
        %v5640 = vpop.f32.mrb[0].mxu0
        %v5641 = vadd.f32 0.0, %v5640
        %v5642 = vpop.f32.mrb[0].mxu0
        %5643 = vmatprep.mubr.bf16.mxu0 %v5504
        %5644 = vmatmul.mubr.bf16.gmra.mrb[0].mxu0 %v5405
        %v5645 = vpop.f32.mrb[0].mxu0
        %v5646 = vadd.f32 0.0, %v5645
        %v5647 = vpop.f32.mrb[0].mxu0
        %v5648 = vpop.f32.mrb[0].mxu0
        %v5649 = vadd.f32 0.0, %v5648
        %v5650 = vpop.f32.mrb[0].mxu0
        %5651 = vmatprep.mubr.bf16.mxu0 %v5507
        %5652 = vmatmul.mubr.bf16.gmra.mrb[0].mxu0 %v5407
        %v5653 = vpop.f32.mrb[0].mxu0
        %v5654 = vadd.f32 0.0, %v5653
        %v5655 = vpop.f32.mrb[0].mxu0
        %v5656 = vpop.f32.mrb[0].mxu0
        %v5657 = vadd.f32 0.0, %v5656
        %v5658 = vpop.f32.mrb[0].mxu0
        %5659 = vmatprep.mubr.bf16.mxu0 %v5510
        %5660 = vmatmul.mubr.bf16.gmra.mrb[0].mxu0 %v5409
        %v5661 = vpop.f32.mrb[0].mxu0
        %v5662 = vadd.f32 0.0, %v5661
        %v5663 = vpop.f32.mrb[0].mxu0
        %v5664 = vpop.f32.mrb[0].mxu0
        %v5665 = vadd.f32 0.0, %v5664
        %v5666 = vpop.f32.mrb[0].mxu0
        %5667 = vmatprep.mubr.bf16.mxu0 %v5513
        %5668 = vmatmul.mubr.bf16.gmra.mrb[0].mxu0 %v5411
        %v5669 = vpop.f32.mrb[0].mxu0
        %v5670 = vadd.f32 0.0, %v5669
        %v5671 = vpop.f32.mrb[0].mxu0
        %v5672 = vpop.f32.mrb[0].mxu0
        %v5673 = vadd.f32 0.0, %v5672
        %v5674 = vpop.f32.mrb[0].mxu0
        %5675 = vdwg.mxu0
        %v5676 = vsel %vm904, %v5550, 0.0
        %v5677 = vsel %vm904, %v5553, 0.0
        %v5678 = vadd.f32 %v5676, %v5677
        %v5679 = vsel %vm904, %v5558, 0.0
        %v5680 = vadd.f32 %v5678, %v5679
        %v5681 = vsel %vm904, %v5561, 0.0
        %v5682 = vadd.f32 %v5680, %v5681
        %v5683 = vsel %vm904, %v5566, 0.0
        %v5684 = vadd.f32 %v5682, %v5683
        %v5685 = vsel %vm904, %v5569, 0.0
        %v5686 = vadd.f32 %v5684, %v5685
        %v5687 = vsel %vm904, %v5574, 0.0
        %v5688 = vadd.f32 %v5686, %v5687
        %v5689 = vsel %vm904, %v5577, 0.0
        %v5690 = vadd.f32 %v5688, %v5689
        %v5691 = vsel %vm904, %v5582, 0.0
        %v5692 = vadd.f32 %v5690, %v5691
        %v5693 = vsel %vm904, %v5585, 0.0
        %v5694 = vadd.f32 %v5692, %v5693
        %v5695 = vsel %vm904, %v5590, 0.0
        %v5696 = vadd.f32 %v5694, %v5695
        %v5697 = vsel %vm904, %v5593, 0.0
        %v5698 = vadd.f32 %v5696, %v5697
        %v5699 = vsel %vm904, %v5598, 0.0
        %v5700 = vadd.f32 %v5698, %v5699
        %v5701 = vsel %vm904, %v5601, 0.0
        %v5702 = vadd.f32 %v5700, %v5701
        %v5703 = vsel %vm904, %v5606, 0.0
        %v5704 = vadd.f32 %v5702, %v5703
        %v5705 = vsel %vm904, %v5609, 0.0
        %v5706 = vadd.f32 %v5704, %v5705
        %v5707 = vsel %vm904, %v5614, 0.0
        %v5708 = vadd.f32 %v5706, %v5707
        %v5709 = vsel %vm904, %v5617, 0.0
        %v5710 = vadd.f32 %v5708, %v5709
        %v5711 = vsel %vm904, %v5622, 0.0
        %v5712 = vadd.f32 %v5710, %v5711
        %v5713 = vsel %vm904, %v5625, 0.0
        %v5714 = vadd.f32 %v5712, %v5713
        %v5715 = vsel %vm904, %v5630, 0.0
        %v5716 = vadd.f32 %v5714, %v5715
        %v5717 = vsel %vm904, %v5633, 0.0
        %v5718 = vadd.f32 %v5716, %v5717
        %v5719 = vsel %vm904, %v5638, 0.0
        %v5720 = vadd.f32 %v5718, %v5719
        %v5721 = vsel %vm904, %v5641, 0.0
        %v5722 = vadd.f32 %v5720, %v5721
        %v5723 = vsel %vm904, %v5646, 0.0
        %v5724 = vadd.f32 %v5722, %v5723
        %v5725 = vsel %vm904, %v5649, 0.0
        %v5726 = vadd.f32 %v5724, %v5725
        %v5727 = vsel %vm904, %v5654, 0.0
        %v5728 = vadd.f32 %v5726, %v5727
        %v5729 = vsel %vm904, %v5657, 0.0
        %v5730 = vadd.f32 %v5728, %v5729
        %v5731 = vsel %vm904, %v5662, 0.0
        %v5732 = vadd.f32 %v5730, %v5731
        %v5733 = vsel %vm904, %v5665, 0.0
        %v5734 = vadd.f32 %v5732, %v5733
        %v5735 = vsel %vm904, %v5670, 0.0
        %v5736 = vadd.f32 %v5734, %v5735
        %v5737 = vsel %vm904, %v5673, 0.0
        %v5738 = vadd.f32 %v5736, %v5737
        %v5739 = vrot.slane %v5738, 4
        %v5740 = vadd.f32 %v5738, %v5739
        %v5741 = vrot.slane %v5740, 2
        %v5742 = vadd.f32 %v5740, %v5741
        %v5743 = vrot.slane %v5742, 1
        %v5744 = vadd.f32 %v5742, %v5743
        %v5746 = vsel %vm904, %v5744, 0
        %5748 = vmatprep.subr.mxu0 0.0
        %5749 = vmatpush1.msra.mxu0 %v305
        %5750 = vmatprep.subr.mxu0 0.0
        %5751 = vmatpush1.msra.mxu0 %v306
        %5752 = vmatprep.subr.mxu0 0.0
        %5753 = vmatpush1.msra.mxu0 %v307
        %5754 = vmatprep.subr.mxu0 0.0
        %5755 = vmatpush1.msra.mxu0 %v308
        %5756 = vmatprep.subr.mxu0 0.0
        %5757 = vmatpush1.msra.mxu0 0.0
        %5758 = vmatprep.subr.mxu0 0.0
        %5759 = vmatpush1.msra.mxu0 0.0
        %5760 = vmatprep.subr.mxu0 0.0
        %5761 = vmatpush1.msra.mxu0 0.0
        %5762 = vmatprep.subr.mxu0 0.0
        %5763 = vmatpush1.msra.mxu0 0.0
        %5764 = vmatprep.subr.mxu0 0.0
        %5765 = vmatpush1.msra.mxu0 0.0
        %5766 = vmatprep.subr.mxu0 0.0
        %5767 = vmatpush1.msra.mxu0 0.0
        %5768 = vmatprep.subr.mxu0 0.0
        %5769 = vmatpush1.msra.mxu0 0.0
        %5770 = vmatprep.subr.mxu0 0.0
        %5771 = vmatpush1.msra.mxu0 0.0
        %5772 = vmatprep.subr.mxu0 0.0
        %5773 = vmatpush1.msra.mxu0 0.0
        %5774 = vmatprep.subr.mxu0 0.0
        %5775 = vmatpush1.msra.mxu0 0.0
        %5776 = vmatprep.subr.mxu0 0.0
        %5777 = vmatpush1.msra.mxu0 0.0
        %5778 = vmatprep.subr.mxu0 0.0
        %5779 = vmatpush1.msra.mxu0 0.0
        %5780 = vmatprep.subr.mxu0 0.0
        %5781 = vmatpush1.msra.mxu0 0.0
        %5782 = vmatprep.subr.mxu0 0.0
        %5783 = vmatpush1.msra.mxu0 0.0
        %5784 = vmatprep.subr.mxu0 0.0
        %5785 = vmatpush1.msra.mxu0 0.0
        %5786 = vmatprep.subr.mxu0 0.0
        %5787 = vmatpush1.msra.mxu0 0.0
        %5788 = vmatprep.subr.mxu0 0.0
        %5789 = vmatpush1.msra.mxu0 0.0
        %5790 = vmatprep.subr.mxu0 0.0
        %5791 = vmatpush1.msra.mxu0 0.0
        %5792 = vmatprep.subr.mxu0 0.0
        %5793 = vmatpush1.msra.mxu0 0.0
        %5794 = vmatprep.subr.mxu0 0.0
        %5795 = vmatpush1.msra.mxu0 0.0
        %5796 = vmatprep.subr.mxu0 0.0
        %5797 = vmatpush1.msra.mxu0 0.0
        %5798 = vmatprep.subr.mxu0 0.0
        %5799 = vmatpush1.msra.mxu0 0.0
        %5800 = vmatprep.subr.mxu0 0.0
        %5801 = vmatpush1.msra.mxu0 0.0
        %5802 = vmatprep.subr.mxu0 0.0
        %5803 = vmatpush1.msra.mxu0 0.0
        %5804 = vmatprep.subr.mxu0 0.0
        %5805 = vmatpush1.msra.mxu0 0.0
        %5806 = vmatprep.subr.mxu0 0.0
        %5807 = vmatpush1.msra.mxu0 0.0
        %5808 = vmatprep.subr.mxu0 0.0
        %5809 = vmatpush1.msra.mxu0 0.0
        %5810 = vmatprep.subr.mxu0 0.0
        %5811 = vmatpush1.msra.mxu0 0.0
        %5812 = vmatprep.mubr.f32.mxu0 0.0
        %5813 = vmatmul.mubr.f32.gmra.mrb[0].mxu0 %v5746
        %v5814 = vpop.f32.mrb[0].mxu0
        %v5815 = vadd.f32 0.0, %v5814
        %v5816 = vpop.f32.mrb[0].mxu0
        %5817 = vdwg.mxu0
        %v5818 = vmul.f32 %v5815, %v1047
        %v5819 = vlaneseq
        %v5820 = vshrl.u32 %v5819, 7
        %v5821 = vsub.s32 0, %v5820
        %v5822 = vrot.slane %v5818, %v5821
        %v5823 = vsub.f32 %v5550, %v5822
        %v5824 = vsub.f32 %v5553, %v5822
        %v5825 = vsub.f32 %v5558, %v5822
        %v5826 = vsub.f32 %v5561, %v5822
        %v5827 = vsub.f32 %v5566, %v5822
        %v5828 = vsub.f32 %v5569, %v5822
        %v5829 = vsub.f32 %v5574, %v5822
        %v5830 = vsub.f32 %v5577, %v5822
        %v5831 = vsub.f32 %v5582, %v5822
        %v5832 = vsub.f32 %v5585, %v5822
        %v5833 = vsub.f32 %v5590, %v5822
        %v5834 = vsub.f32 %v5593, %v5822
        %v5835 = vsub.f32 %v5598, %v5822
        %v5836 = vsub.f32 %v5601, %v5822
        %v5837 = vsub.f32 %v5606, %v5822
        %v5838 = vsub.f32 %v5609, %v5822
        %v5839 = vsub.f32 %v5614, %v5822
        %v5840 = vsub.f32 %v5617, %v5822
        %v5841 = vsub.f32 %v5622, %v5822
        %v5842 = vsub.f32 %v5625, %v5822
        %v5843 = vsub.f32 %v5630, %v5822
        %v5844 = vsub.f32 %v5633, %v5822
        %v5845 = vsub.f32 %v5638, %v5822
        %v5846 = vsub.f32 %v5641, %v5822
        %v5847 = vsub.f32 %v5646, %v5822
        %v5848 = vsub.f32 %v5649, %v5822
        %v5849 = vsub.f32 %v5654, %v5822
        %v5850 = vsub.f32 %v5657, %v5822
        %v5851 = vsub.f32 %v5662, %v5822
        %v5852 = vsub.f32 %v5665, %v5822
        %v5853 = vsub.f32 %v5670, %v5822
        %v5854 = vsub.f32 %v5673, %v5822
        %v5855 = vmul.f32 %v5823, %v5823
        %v5856 = vmul.f32 %v5824, %v5824
        %v5857 = vmul.f32 %v5825, %v5825
        %v5858 = vmul.f32 %v5826, %v5826
        %v5859 = vmul.f32 %v5827, %v5827
        %v5860 = vmul.f32 %v5828, %v5828
        %v5861 = vmul.f32 %v5829, %v5829
        %v5862 = vmul.f32 %v5830, %v5830
        %v5863 = vmul.f32 %v5831, %v5831
        %v5864 = vmul.f32 %v5832, %v5832
        %v5865 = vmul.f32 %v5833, %v5833
        %v5866 = vmul.f32 %v5834, %v5834
        %v5867 = vmul.f32 %v5835, %v5835
        %v5868 = vmul.f32 %v5836, %v5836
        %v5869 = vmul.f32 %v5837, %v5837
        %v5870 = vmul.f32 %v5838, %v5838
        %v5871 = vmul.f32 %v5839, %v5839
        %v5872 = vmul.f32 %v5840, %v5840
        %v5873 = vmul.f32 %v5841, %v5841
        %v5874 = vmul.f32 %v5842, %v5842
        %v5875 = vmul.f32 %v5843, %v5843
        %v5876 = vmul.f32 %v5844, %v5844
        %v5877 = vmul.f32 %v5845, %v5845
        %v5878 = vmul.f32 %v5846, %v5846
        %v5879 = vmul.f32 %v5847, %v5847
        %v5880 = vmul.f32 %v5848, %v5848
        %v5881 = vmul.f32 %v5849, %v5849
        %v5882 = vmul.f32 %v5850, %v5850
        %v5883 = vmul.f32 %v5851, %v5851
        %v5884 = vmul.f32 %v5852, %v5852
        %v5885 = vmul.f32 %v5853, %v5853
        %v5886 = vmul.f32 %v5854, %v5854
        %v5887 = vsel %vm904, %v5855, 0.0
        %v5888 = vsel %vm904, %v5856, 0.0
        %v5889 = vadd.f32 %v5887, %v5888
        %v5890 = vsel %vm904, %v5857, 0.0
        %v5891 = vadd.f32 %v5889, %v5890
        %v5892 = vsel %vm904, %v5858, 0.0
        %v5893 = vadd.f32 %v5891, %v5892
        %v5894 = vsel %vm904, %v5859, 0.0
        %v5895 = vadd.f32 %v5893, %v5894
        %v5896 = vsel %vm904, %v5860, 0.0
        %v5897 = vadd.f32 %v5895, %v5896
        %v5898 = vsel %vm904, %v5861, 0.0
        %v5899 = vadd.f32 %v5897, %v5898
        %v5900 = vsel %vm904, %v5862, 0.0
        %v5901 = vadd.f32 %v5899, %v5900
        %v5902 = vsel %vm904, %v5863, 0.0
        %v5903 = vadd.f32 %v5901, %v5902
        %v5904 = vsel %vm904, %v5864, 0.0
        %v5905 = vadd.f32 %v5903, %v5904
        %v5906 = vsel %vm904, %v5865, 0.0
        %v5907 = vadd.f32 %v5905, %v5906
        %v5908 = vsel %vm904, %v5866, 0.0
        %v5909 = vadd.f32 %v5907, %v5908
        %v5910 = vsel %vm904, %v5867, 0.0
        %v5911 = vadd.f32 %v5909, %v5910
        %v5912 = vsel %vm904, %v5868, 0.0
        %v5913 = vadd.f32 %v5911, %v5912
        %v5914 = vsel %vm904, %v5869, 0.0
        %v5915 = vadd.f32 %v5913, %v5914
        %v5916 = vsel %vm904, %v5870, 0.0
        %v5917 = vadd.f32 %v5915, %v5916
        %v5918 = vsel %vm904, %v5871, 0.0
        %v5919 = vadd.f32 %v5917, %v5918
        %v5920 = vsel %vm904, %v5872, 0.0
        %v5921 = vadd.f32 %v5919, %v5920
        %v5922 = vsel %vm904, %v5873, 0.0
        %v5923 = vadd.f32 %v5921, %v5922
        %v5924 = vsel %vm904, %v5874, 0.0
        %v5925 = vadd.f32 %v5923, %v5924
        %v5926 = vsel %vm904, %v5875, 0.0
        %v5927 = vadd.f32 %v5925, %v5926
        %v5928 = vsel %vm904, %v5876, 0.0
        %v5929 = vadd.f32 %v5927, %v5928
        %v5930 = vsel %vm904, %v5877, 0.0
        %v5931 = vadd.f32 %v5929, %v5930
        %v5932 = vsel %vm904, %v5878, 0.0
        %v5933 = vadd.f32 %v5931, %v5932
        %v5934 = vsel %vm904, %v5879, 0.0
        %v5935 = vadd.f32 %v5933, %v5934
        %v5936 = vsel %vm904, %v5880, 0.0
        %v5937 = vadd.f32 %v5935, %v5936
        %v5938 = vsel %vm904, %v5881, 0.0
        %v5939 = vadd.f32 %v5937, %v5938
        %v5940 = vsel %vm904, %v5882, 0.0
        %v5941 = vadd.f32 %v5939, %v5940
        %v5942 = vsel %vm904, %v5883, 0.0
        %v5943 = vadd.f32 %v5941, %v5942
        %v5944 = vsel %vm904, %v5884, 0.0
        %v5945 = vadd.f32 %v5943, %v5944
        %v5946 = vsel %vm904, %v5885, 0.0
        %v5947 = vadd.f32 %v5945, %v5946
        %v5948 = vsel %vm904, %v5886, 0.0
        %v5949 = vadd.f32 %v5947, %v5948
        %v5950 = vrot.slane %v5949, 4
        %v5951 = vadd.f32 %v5949, %v5950
        %v5952 = vrot.slane %v5951, 2
        %v5953 = vadd.f32 %v5951, %v5952
        %v5954 = vrot.slane %v5953, 1
        %v5955 = vadd.f32 %v5953, %v5954
        %v5957 = vsel %vm904, %v5955, 0
        %5959 = vmatprep.subr.mxu0 0.0
        %5960 = vmatpush1.msra.mxu0 %v305
        %5961 = vmatprep.subr.mxu0 0.0
        %5962 = vmatpush1.msra.mxu0 %v306
        %5963 = vmatprep.subr.mxu0 0.0
        %5964 = vmatpush1.msra.mxu0 %v307
        %5965 = vmatprep.subr.mxu0 0.0
        %5966 = vmatpush1.msra.mxu0 %v308
        %5967 = vmatprep.subr.mxu0 0.0
        %5968 = vmatpush1.msra.mxu0 0.0
        %5969 = vmatprep.subr.mxu0 0.0
        %5970 = vmatpush1.msra.mxu0 0.0
        %5971 = vmatprep.subr.mxu0 0.0
        %5972 = vmatpush1.msra.mxu0 0.0
        %5973 = vmatprep.subr.mxu0 0.0
        %5974 = vmatpush1.msra.mxu0 0.0
        %5975 = vmatprep.subr.mxu0 0.0
        %5976 = vmatpush1.msra.mxu0 0.0
        %5977 = vmatprep.subr.mxu0 0.0
        %5978 = vmatpush1.msra.mxu0 0.0
        %5979 = vmatprep.subr.mxu0 0.0
        %5980 = vmatpush1.msra.mxu0 0.0
        %5981 = vmatprep.subr.mxu0 0.0
        %5982 = vmatpush1.msra.mxu0 0.0
        %5983 = vmatprep.subr.mxu0 0.0
        %5984 = vmatpush1.msra.mxu0 0.0
        %5985 = vmatprep.subr.mxu0 0.0
        %5986 = vmatpush1.msra.mxu0 0.0
        %5987 = vmatprep.subr.mxu0 0.0
        %5988 = vmatpush1.msra.mxu0 0.0
        %5989 = vmatprep.subr.mxu0 0.0
        %5990 = vmatpush1.msra.mxu0 0.0
        %5991 = vmatprep.subr.mxu0 0.0
        %5992 = vmatpush1.msra.mxu0 0.0
        %5993 = vmatprep.subr.mxu0 0.0
        %5994 = vmatpush1.msra.mxu0 0.0
        %5995 = vmatprep.subr.mxu0 0.0
        %5996 = vmatpush1.msra.mxu0 0.0
        %5997 = vmatprep.subr.mxu0 0.0
        %5998 = vmatpush1.msra.mxu0 0.0
        %5999 = vmatprep.subr.mxu0 0.0
        %6000 = vmatpush1.msra.mxu0 0.0
        %6001 = vmatprep.subr.mxu0 0.0
        %6002 = vmatpush1.msra.mxu0 0.0
        %6003 = vmatprep.subr.mxu0 0.0
        %6004 = vmatpush1.msra.mxu0 0.0
        %6005 = vmatprep.subr.mxu0 0.0
        %6006 = vmatpush1.msra.mxu0 0.0
        %6007 = vmatprep.subr.mxu0 0.0
        %6008 = vmatpush1.msra.mxu0 0.0
        %6009 = vmatprep.subr.mxu0 0.0
        %6010 = vmatpush1.msra.mxu0 0.0
        %6011 = vmatprep.subr.mxu0 0.0
        %6012 = vmatpush1.msra.mxu0 0.0
        %6013 = vmatprep.subr.mxu0 0.0
        %6014 = vmatpush1.msra.mxu0 0.0
        %6015 = vmatprep.subr.mxu0 0.0
        %6016 = vmatpush1.msra.mxu0 0.0
        %6017 = vmatprep.subr.mxu0 0.0
        %6018 = vmatpush1.msra.mxu0 0.0
        %6019 = vmatprep.subr.mxu0 0.0
        %6020 = vmatpush1.msra.mxu0 0.0
        %6021 = vmatprep.subr.mxu0 0.0
        %6022 = vmatpush1.msra.mxu0 0.0
        %6023 = vmatprep.mubr.f32.mxu0 0.0
        %6024 = vmatmul.mubr.f32.gmra.mrb[0].mxu0 %v5957
        %v6025 = vpop.f32.mrb[0].mxu0
        %v6026 = vadd.f32 0.0, %v6025
        %v6027 = vpop.f32.mrb[0].mxu0
        %6028 = vdwg.mxu0
        %v6029 = vmul.f32 %v6026, %v1047
        %v6030 = vadd.f32 %v6029, 1e-05
        %v6031 = vrsqrt.pop %v6030
        %v6032 = vld [vmem:[%s5 + $0x2] sm:$0x1]
        %v6033 = vld [vmem:[%s6 + $0x2] sm:$0x1]
        %v6034 = vlaneseq
        %v6035 = vshrl.u32 %v6034, 7
        %v6036 = vsub.s32 0, %v6035
        %v6037 = vrot.slane %v6031, %v6036
        %v6038 = vmul.f32 %v5823, %v6037
        %v6039 = vmul.f32 %v5824, %v6037
        %v6040 = vmul.f32 %v5825, %v6037
        %v6041 = vmul.f32 %v5826, %v6037
        %v6042 = vmul.f32 %v5827, %v6037
        %v6043 = vmul.f32 %v5828, %v6037
        %v6044 = vmul.f32 %v5829, %v6037
        %v6045 = vmul.f32 %v5830, %v6037
        %v6046 = vmul.f32 %v5831, %v6037
        %v6047 = vmul.f32 %v5832, %v6037
        %v6048 = vmul.f32 %v5833, %v6037
        %v6049 = vmul.f32 %v5834, %v6037
        %v6050 = vmul.f32 %v5835, %v6037
        %v6051 = vmul.f32 %v5836, %v6037
        %v6052 = vmul.f32 %v5837, %v6037
        %v6053 = vmul.f32 %v5838, %v6037
        %v6054 = vmul.f32 %v5839, %v6037
        %v6055 = vmul.f32 %v5840, %v6037
        %v6056 = vmul.f32 %v5841, %v6037
        %v6057 = vmul.f32 %v5842, %v6037
        %v6058 = vmul.f32 %v5843, %v6037
        %v6059 = vmul.f32 %v5844, %v6037
        %v6060 = vmul.f32 %v5845, %v6037
        %v6061 = vmul.f32 %v5846, %v6037
        %v6062 = vmul.f32 %v5847, %v6037
        %v6063 = vmul.f32 %v5848, %v6037
        %v6064 = vmul.f32 %v5849, %v6037
        %v6065 = vmul.f32 %v5850, %v6037
        %v6066 = vmul.f32 %v5851, %v6037
        %v6067 = vmul.f32 %v5852, %v6037
        %v6068 = vmul.f32 %v5853, %v6037
        %v6069 = vmul.f32 %v5854, %v6037
        %v6070 = vlaneseq
        %v6071 = vshrl.u32 %v6070, 7
        %v6072 = vsub.s32 0, %v6071
        %v6073 = vrot.slane %v6032, %v6072
        %v6074 = vmul.f32 %v6038, %v6073
        %v6075 = vmul.f32 %v6039, %v6073
        %v6076 = vmul.f32 %v6040, %v6073
        %v6077 = vmul.f32 %v6041, %v6073
        %v6078 = vmul.f32 %v6042, %v6073
        %v6079 = vmul.f32 %v6043, %v6073
        %v6080 = vmul.f32 %v6044, %v6073
        %v6081 = vmul.f32 %v6045, %v6073
        %v6082 = vmul.f32 %v6046, %v6073
        %v6083 = vmul.f32 %v6047, %v6073
        %v6084 = vmul.f32 %v6048, %v6073
        %v6085 = vmul.f32 %v6049, %v6073
        %v6086 = vmul.f32 %v6050, %v6073
        %v6087 = vmul.f32 %v6051, %v6073
        %v6088 = vmul.f32 %v6052, %v6073
        %v6089 = vmul.f32 %v6053, %v6073
        %v6090 = vmul.f32 %v6054, %v6073
        %v6091 = vmul.f32 %v6055, %v6073
        %v6092 = vmul.f32 %v6056, %v6073
        %v6093 = vmul.f32 %v6057, %v6073
        %v6094 = vmul.f32 %v6058, %v6073
        %v6095 = vmul.f32 %v6059, %v6073
        %v6096 = vmul.f32 %v6060, %v6073
        %v6097 = vmul.f32 %v6061, %v6073
        %v6098 = vmul.f32 %v6062, %v6073
        %v6099 = vmul.f32 %v6063, %v6073
        %v6100 = vmul.f32 %v6064, %v6073
        %v6101 = vmul.f32 %v6065, %v6073
        %v6102 = vmul.f32 %v6066, %v6073
        %v6103 = vmul.f32 %v6067, %v6073
        %v6104 = vmul.f32 %v6068, %v6073
        %v6105 = vmul.f32 %v6069, %v6073
        %v6106 = vlaneseq
        %v6107 = vshrl.u32 %v6106, 7
        %v6108 = vsub.s32 0, %v6107
        %v6109 = vrot.slane %v6033, %v6108
        %v6110 = vadd.f32 %v6074, %v6109
        %v6111 = vadd.f32 %v6075, %v6109
        %v6112 = vadd.f32 %v6076, %v6109
        %v6113 = vadd.f32 %v6077, %v6109
        %v6114 = vadd.f32 %v6078, %v6109
        %v6115 = vadd.f32 %v6079, %v6109
        %v6116 = vadd.f32 %v6080, %v6109
        %v6117 = vadd.f32 %v6081, %v6109
        %v6118 = vadd.f32 %v6082, %v6109
        %v6119 = vadd.f32 %v6083, %v6109
        %v6120 = vadd.f32 %v6084, %v6109
        %v6121 = vadd.f32 %v6085, %v6109
        %v6122 = vadd.f32 %v6086, %v6109
        %v6123 = vadd.f32 %v6087, %v6109
        %v6124 = vadd.f32 %v6088, %v6109
        %v6125 = vadd.f32 %v6089, %v6109
        %v6126 = vadd.f32 %v6090, %v6109
        %v6127 = vadd.f32 %v6091, %v6109
        %v6128 = vadd.f32 %v6092, %v6109
        %v6129 = vadd.f32 %v6093, %v6109
        %v6130 = vadd.f32 %v6094, %v6109
        %v6131 = vadd.f32 %v6095, %v6109
        %v6132 = vadd.f32 %v6096, %v6109
        %v6133 = vadd.f32 %v6097, %v6109
        %v6134 = vadd.f32 %v6098, %v6109
        %v6135 = vadd.f32 %v6099, %v6109
        %v6136 = vadd.f32 %v6100, %v6109
        %v6137 = vadd.f32 %v6101, %v6109
        %v6138 = vadd.f32 %v6102, %v6109
        %v6139 = vadd.f32 %v6103, %v6109
        %v6140 = vadd.f32 %v6104, %v6109
        %v6141 = vadd.f32 %v6105, %v6109
        %v6142 = vmax.f32 %v6110, 0.0
        %v6143 = vmax.f32 %v6111, 0.0
        %v6144 = vmax.f32 %v6112, 0.0
        %v6145 = vmax.f32 %v6113, 0.0
        %v6146 = vmax.f32 %v6114, 0.0
        %v6147 = vmax.f32 %v6115, 0.0
        %v6148 = vmax.f32 %v6116, 0.0
        %v6149 = vmax.f32 %v6117, 0.0
        %v6150 = vmax.f32 %v6118, 0.0
        %v6151 = vmax.f32 %v6119, 0.0
        %v6152 = vmax.f32 %v6120, 0.0
        %v6153 = vmax.f32 %v6121, 0.0
        %v6154 = vmax.f32 %v6122, 0.0
        %v6155 = vmax.f32 %v6123, 0.0
        %v6156 = vmax.f32 %v6124, 0.0
        %v6157 = vmax.f32 %v6125, 0.0
        %v6158 = vmax.f32 %v6126, 0.0
        %v6159 = vmax.f32 %v6127, 0.0
        %v6160 = vmax.f32 %v6128, 0.0
        %v6161 = vmax.f32 %v6129, 0.0
        %v6162 = vmax.f32 %v6130, 0.0
        %v6163 = vmax.f32 %v6131, 0.0
        %v6164 = vmax.f32 %v6132, 0.0
        %v6165 = vmax.f32 %v6133, 0.0
        %v6166 = vmax.f32 %v6134, 0.0
        %v6167 = vmax.f32 %v6135, 0.0
        %v6168 = vmax.f32 %v6136, 0.0
        %v6169 = vmax.f32 %v6137, 0.0
        %v6170 = vmax.f32 %v6138, 0.0
        %v6171 = vmax.f32 %v6139, 0.0
        %v6172 = vmax.f32 %v6140, 0.0
        %v6173 = vmax.f32 %v6141, 0.0
        %v6174 = vld [vmem:[%s4 + $0x20] sm:$0xf]
        %v6175 = vld [vmem:[%s4 + $0x24] sm:$0xf]
        %v6176 = vld [vmem:[%s4 + $0x28] sm:$0xf]
        %v6177 = vld [vmem:[%s4 + $0x2c] sm:$0xf]
        %v6178 = vpack.c.bf16 %v6143, %v6142
        %v6179 = vpack.c.bf16 %v6145, %v6144
        %v6180 = vpack.c.bf16 %v6147, %v6146
        %v6181 = vpack.c.bf16 %v6149, %v6148
        %v6182 = vpack.c.bf16 %v6151, %v6150
        %v6183 = vpack.c.bf16 %v6153, %v6152
        %v6184 = vpack.c.bf16 %v6155, %v6154
        %v6185 = vpack.c.bf16 %v6157, %v6156
        %v6186 = vpack.c.bf16 %v6159, %v6158
        %v6187 = vpack.c.bf16 %v6161, %v6160
        %v6188 = vpack.c.bf16 %v6163, %v6162
        %v6189 = vpack.c.bf16 %v6165, %v6164
        %v6190 = vpack.c.bf16 %v6167, %v6166
        %v6191 = vpack.c.bf16 %v6169, %v6168
        %v6192 = vpack.c.bf16 %v6171, %v6170
        %v6193 = vpack.c.bf16 %v6173, %v6172
        %v6198 = vunpack.c.l.b16 %v6174
        %v6199 = vunpack.c.l.b16 %v6175
        %v6200 = vunpack.c.l.b16 %v6176
        %v6201 = vunpack.c.l.b16 %v6177
        %v6202 = vpack.c.b16 %v6199, %v6198
        %v6203 = vpack.c.b16 %v6201, %v6200
        %v6207 = vsel %vm904, %v6178, 0
        %v6210 = vsel %vm904, %v6179, 0
        %v6213 = vsel %vm904, %v6180, 0
        %v6216 = vsel %vm904, %v6181, 0
        %v6219 = vsel %vm904, %v6182, 0
        %v6222 = vsel %vm904, %v6183, 0
        %v6225 = vsel %vm904, %v6184, 0
        %v6228 = vsel %vm904, %v6185, 0
        %v6231 = vsel %vm904, %v6186, 0
        %v6234 = vsel %vm904, %v6187, 0
        %v6237 = vsel %vm904, %v6188, 0
        %v6240 = vsel %vm904, %v6189, 0
        %v6243 = vsel %vm904, %v6190, 0
        %v6246 = vsel %vm904, %v6191, 0
        %v6249 = vsel %vm904, %v6192, 0
        %v6252 = vsel %vm904, %v6193, 0
        %6254 = vmatprep.subr.bf16.mxu0 0
        %6255 = vmatpush1.bf16.msra.mxu0 %v6202
        %6256 = vmatprep.subr.bf16.mxu0 0
        %6257 = vmatpush1.bf16.msra.mxu0 %v6203
        %6258 = vmatprep.subr.bf16.mxu0 0
        %6259 = vmatpush1.bf16.msra.mxu0 0
        %6260 = vmatprep.subr.bf16.mxu0 0
        %6261 = vmatpush1.bf16.msra.mxu0 0
        %6262 = vmatprep.subr.bf16.mxu0 0
        %6263 = vmatpush1.bf16.msra.mxu0 0
        %6264 = vmatprep.subr.bf16.mxu0 0
        %6265 = vmatpush1.bf16.msra.mxu0 0
        %6266 = vmatprep.subr.bf16.mxu0 0
        %6267 = vmatpush1.bf16.msra.mxu0 0
        %6268 = vmatprep.subr.bf16.mxu0 0
        %6269 = vmatpush1.bf16.msra.mxu0 0
        %6270 = vmatprep.subr.bf16.mxu0 0
        %6271 = vmatpush1.bf16.msra.mxu0 0
        %6272 = vmatprep.subr.bf16.mxu0 0
        %6273 = vmatpush1.bf16.msra.mxu0 0
        %6274 = vmatprep.subr.bf16.mxu0 0
        %6275 = vmatpush1.bf16.msra.mxu0 0
        %6276 = vmatprep.subr.bf16.mxu0 0
        %6277 = vmatpush1.bf16.msra.mxu0 0
        %6278 = vmatprep.subr.bf16.mxu0 0
        %6279 = vmatpush1.bf16.msra.mxu0 0
        %6280 = vmatprep.subr.bf16.mxu0 0
        %6281 = vmatpush1.bf16.msra.mxu0 0
        %6282 = vmatprep.subr.bf16.mxu0 0
        %6283 = vmatpush1.bf16.msra.mxu0 0
        %6284 = vmatprep.subr.bf16.mxu0 0
        %6285 = vmatpush1.bf16.msra.mxu0 0
        %6286 = vmatprep.mubr.bf16.mxu0 0
        %6287 = vmatmul.mubr.bf16.gmra.mrb[0].mxu0 %v6207
        %v6288 = vpop.f32.mrb[0].mxu0
        %v6289 = vadd.f32 0.0, %v6288
        %v6290 = vpop.f32.mrb[0].mxu0
        %v6291 = vpop.f32.mrb[0].mxu0
        %v6292 = vadd.f32 0.0, %v6291
        %v6293 = vpop.f32.mrb[0].mxu0
        %6294 = vmatprep.mubr.bf16.mxu0 0
        %6295 = vmatmul.mubr.bf16.gmra.mrb[0].mxu0 %v6210
        %v6296 = vpop.f32.mrb[0].mxu0
        %v6297 = vadd.f32 0.0, %v6296
        %v6298 = vpop.f32.mrb[0].mxu0
        %v6299 = vpop.f32.mrb[0].mxu0
        %v6300 = vadd.f32 0.0, %v6299
        %v6301 = vpop.f32.mrb[0].mxu0
        %6302 = vmatprep.mubr.bf16.mxu0 0
        %6303 = vmatmul.mubr.bf16.gmra.mrb[0].mxu0 %v6213
        %v6304 = vpop.f32.mrb[0].mxu0
        %v6305 = vadd.f32 0.0, %v6304
        %v6306 = vpop.f32.mrb[0].mxu0
        %v6307 = vpop.f32.mrb[0].mxu0
        %v6308 = vadd.f32 0.0, %v6307
        %v6309 = vpop.f32.mrb[0].mxu0
        %6310 = vmatprep.mubr.bf16.mxu0 0
        %6311 = vmatmul.mubr.bf16.gmra.mrb[0].mxu0 %v6216
        %v6312 = vpop.f32.mrb[0].mxu0
        %v6313 = vadd.f32 0.0, %v6312
        %v6314 = vpop.f32.mrb[0].mxu0
        %v6315 = vpop.f32.mrb[0].mxu0
        %v6316 = vadd.f32 0.0, %v6315
        %v6317 = vpop.f32.mrb[0].mxu0
        %6318 = vmatprep.mubr.bf16.mxu0 0
        %6319 = vmatmul.mubr.bf16.gmra.mrb[0].mxu0 %v6219
        %v6320 = vpop.f32.mrb[0].mxu0
        %v6321 = vadd.f32 0.0, %v6320
        %v6322 = vpop.f32.mrb[0].mxu0
        %v6323 = vpop.f32.mrb[0].mxu0
        %v6324 = vadd.f32 0.0, %v6323
        %v6325 = vpop.f32.mrb[0].mxu0
        %6326 = vmatprep.mubr.bf16.mxu0 0
        %6327 = vmatmul.mubr.bf16.gmra.mrb[0].mxu0 %v6222
        %v6328 = vpop.f32.mrb[0].mxu0
        %v6329 = vadd.f32 0.0, %v6328
        %v6330 = vpop.f32.mrb[0].mxu0
        %v6331 = vpop.f32.mrb[0].mxu0
        %v6332 = vadd.f32 0.0, %v6331
        %v6333 = vpop.f32.mrb[0].mxu0
        %6334 = vmatprep.mubr.bf16.mxu0 0
        %6335 = vmatmul.mubr.bf16.gmra.mrb[0].mxu0 %v6225
        %v6336 = vpop.f32.mrb[0].mxu0
        %v6337 = vadd.f32 0.0, %v6336
        %v6338 = vpop.f32.mrb[0].mxu0
        %v6339 = vpop.f32.mrb[0].mxu0
        %v6340 = vadd.f32 0.0, %v6339
        %v6341 = vpop.f32.mrb[0].mxu0
        %6342 = vmatprep.mubr.bf16.mxu0 0
        %6343 = vmatmul.mubr.bf16.gmra.mrb[0].mxu0 %v6228
        %v6344 = vpop.f32.mrb[0].mxu0
        %v6345 = vadd.f32 0.0, %v6344
        %v6346 = vpop.f32.mrb[0].mxu0
        %v6347 = vpop.f32.mrb[0].mxu0
        %v6348 = vadd.f32 0.0, %v6347
        %v6349 = vpop.f32.mrb[0].mxu0
        %6350 = vmatprep.mubr.bf16.mxu0 0
        %6351 = vmatmul.mubr.bf16.gmra.mrb[0].mxu0 %v6231
        %v6352 = vpop.f32.mrb[0].mxu0
        %v6353 = vadd.f32 0.0, %v6352
        %v6354 = vpop.f32.mrb[0].mxu0
        %v6355 = vpop.f32.mrb[0].mxu0
        %v6356 = vadd.f32 0.0, %v6355
        %v6357 = vpop.f32.mrb[0].mxu0
        %6358 = vmatprep.mubr.bf16.mxu0 0
        %6359 = vmatmul.mubr.bf16.gmra.mrb[0].mxu0 %v6234
        %v6360 = vpop.f32.mrb[0].mxu0
        %v6361 = vadd.f32 0.0, %v6360
        %v6362 = vpop.f32.mrb[0].mxu0
        %v6363 = vpop.f32.mrb[0].mxu0
        %v6364 = vadd.f32 0.0, %v6363
        %v6365 = vpop.f32.mrb[0].mxu0
        %6366 = vmatprep.mubr.bf16.mxu0 0
        %6367 = vmatmul.mubr.bf16.gmra.mrb[0].mxu0 %v6237
        %v6368 = vpop.f32.mrb[0].mxu0
        %v6369 = vadd.f32 0.0, %v6368
        %v6370 = vpop.f32.mrb[0].mxu0
        %v6371 = vpop.f32.mrb[0].mxu0
        %v6372 = vadd.f32 0.0, %v6371
        %v6373 = vpop.f32.mrb[0].mxu0
        %6374 = vmatprep.mubr.bf16.mxu0 0
        %6375 = vmatmul.mubr.bf16.gmra.mrb[0].mxu0 %v6240
        %v6376 = vpop.f32.mrb[0].mxu0
        %v6377 = vadd.f32 0.0, %v6376
        %v6378 = vpop.f32.mrb[0].mxu0
        %v6379 = vpop.f32.mrb[0].mxu0
        %v6380 = vadd.f32 0.0, %v6379
        %v6381 = vpop.f32.mrb[0].mxu0
        %6382 = vmatprep.mubr.bf16.mxu0 0
        %6383 = vmatmul.mubr.bf16.gmra.mrb[0].mxu0 %v6243
        %v6384 = vpop.f32.mrb[0].mxu0
        %v6385 = vadd.f32 0.0, %v6384
        %v6386 = vpop.f32.mrb[0].mxu0
        %v6387 = vpop.f32.mrb[0].mxu0
        %v6388 = vadd.f32 0.0, %v6387
        %v6389 = vpop.f32.mrb[0].mxu0
        %6390 = vmatprep.mubr.bf16.mxu0 0
        %6391 = vmatmul.mubr.bf16.gmra.mrb[0].mxu0 %v6246
        %v6392 = vpop.f32.mrb[0].mxu0
        %v6393 = vadd.f32 0.0, %v6392
        %v6394 = vpop.f32.mrb[0].mxu0
        %v6395 = vpop.f32.mrb[0].mxu0
        %v6396 = vadd.f32 0.0, %v6395
        %v6397 = vpop.f32.mrb[0].mxu0
        %6398 = vmatprep.mubr.bf16.mxu0 0
        %6399 = vmatmul.mubr.bf16.gmra.mrb[0].mxu0 %v6249
        %v6400 = vpop.f32.mrb[0].mxu0
        %v6401 = vadd.f32 0.0, %v6400
        %v6402 = vpop.f32.mrb[0].mxu0
        %v6403 = vpop.f32.mrb[0].mxu0
        %v6404 = vadd.f32 0.0, %v6403
        %v6405 = vpop.f32.mrb[0].mxu0
        %6406 = vmatprep.mubr.bf16.mxu0 0
        %6407 = vmatmul.mubr.bf16.gmra.mrb[0].mxu0 %v6252
        %v6408 = vpop.f32.mrb[0].mxu0
        %v6409 = vadd.f32 0.0, %v6408
        %v6410 = vpop.f32.mrb[0].mxu0
        %v6411 = vpop.f32.mrb[0].mxu0
        %v6412 = vadd.f32 0.0, %v6411
        %v6413 = vpop.f32.mrb[0].mxu0
        %6414 = vdwg.mxu0
        %v6415 = vadd.f32 %v3986, %v6289
        %v6416 = vadd.f32 %v3989, %v6292
        %v6417 = vadd.f32 %v3994, %v6297
        %v6418 = vadd.f32 %v3997, %v6300
        %v6419 = vadd.f32 %v4002, %v6305
        %v6420 = vadd.f32 %v4005, %v6308
        %v6421 = vadd.f32 %v4010, %v6313
        %v6422 = vadd.f32 %v4013, %v6316
        %v6423 = vadd.f32 %v4018, %v6321
        %v6424 = vadd.f32 %v4021, %v6324
        %v6425 = vadd.f32 %v4026, %v6329
        %v6426 = vadd.f32 %v4029, %v6332
        %v6427 = vadd.f32 %v4034, %v6337
        %v6428 = vadd.f32 %v4037, %v6340
        %v6429 = vadd.f32 %v4042, %v6345
        %v6430 = vadd.f32 %v4045, %v6348
        %v6431 = vadd.f32 %v4050, %v6353
        %v6432 = vadd.f32 %v4053, %v6356
        %v6433 = vadd.f32 %v4058, %v6361
        %v6434 = vadd.f32 %v4061, %v6364
        %v6435 = vadd.f32 %v4066, %v6369
        %v6436 = vadd.f32 %v4069, %v6372
        %v6437 = vadd.f32 %v4074, %v6377
        %v6438 = vadd.f32 %v4077, %v6380
        %v6439 = vadd.f32 %v4082, %v6385
        %v6440 = vadd.f32 %v4085, %v6388
        %v6441 = vadd.f32 %v4090, %v6393
        %v6442 = vadd.f32 %v4093, %v6396
        %v6443 = vadd.f32 %v4098, %v6401
        %v6444 = vadd.f32 %v4101, %v6404
        %v6445 = vadd.f32 %v4106, %v6409
        %v6446 = vadd.f32 %v4109, %v6412
        %v6447 = vld [vmem:[#allocation2] sm:$0xff]
        %v6448 = vld [vmem:[#allocation2 + $0x8] sm:$0xff]
        %v6449 = vld [vmem:[#allocation2 + $0x18] sm:$0xff]
        %v6450 = vld [vmem:[#allocation2 + $0x20] sm:$0xff]
        %v6451 = vld [vmem:[#allocation2 + $0x30] sm:$0xff]
        %v6452 = vld [vmem:[#allocation2 + $0x38] sm:$0xff]
        %v6453 = vld [vmem:[#allocation2 + $0x48] sm:$0xff]
        %v6454 = vld [vmem:[#allocation2 + $0x50] sm:$0xff]
        %v6455 = vld [vmem:[#allocation2 + $0x60] sm:$0xff]
        %v6456 = vld [vmem:[#allocation2 + $0x68] sm:$0xff]
        %v6457 = vld [vmem:[#allocation2 + $0x78] sm:$0xff]
        %v6458 = vld [vmem:[#allocation2 + $0x80] sm:$0xff]
        %v6459 = vld [vmem:[#allocation2 + $0x90] sm:$0xff]
        %v6460 = vld [vmem:[#allocation2 + $0x98] sm:$0xff]
        %v6461 = vld [vmem:[#allocation2 + $0xa8] sm:$0xff]
        %v6462 = vld [vmem:[#allocation2 + $0xb0] sm:$0xff]
        %v6463 = vld [vmem:[#allocation2 + $0xc0] sm:$0xff]
        %v6464 = vld [vmem:[#allocation2 + $0xc8] sm:$0xff]
        %v6465 = vld [vmem:[#allocation2 + $0xd8] sm:$0xff]
        %v6466 = vld [vmem:[#allocation2 + $0xe0] sm:$0xff]
        %v6467 = vld [vmem:[#allocation2 + $0xf0] sm:$0xff]
        %v6468 = vld [vmem:[#allocation2 + $0xf8] sm:$0xff]
        %v6469 = vld [vmem:[#allocation2 + $0x108] sm:$0xff]
        %v6470 = vld [vmem:[#allocation2 + $0x110] sm:$0xff]
        %v6471 = vld [vmem:[#allocation2 + $0x120] sm:$0xff]
        %v6472 = vld [vmem:[#allocation2 + $0x128] sm:$0xff]
        %v6473 = vld [vmem:[#allocation2 + $0x138] sm:$0xff]
        %v6474 = vld [vmem:[#allocation2 + $0x140] sm:$0xff]
        %v6475 = vld [vmem:[#allocation2 + $0x150] sm:$0xff]
        %v6476 = vld [vmem:[#allocation2 + $0x158] sm:$0xff]
        %v6477 = vld [vmem:[#allocation2 + $0x168] sm:$0xff]
        %v6478 = vld [vmem:[#allocation2 + $0x170] sm:$0xff]
        %v6479 = vld [vmem:[#allocation2 + $0x3] sm:$0xff]
        %v6480 = vld [vmem:[#allocation2 + $0xb] sm:$0xff]
        %v6481 = vld [vmem:[#allocation2 + $0x1b] sm:$0xff]
        %v6482 = vld [vmem:[#allocation2 + $0x23] sm:$0xff]
        %v6483 = vld [vmem:[#allocation2 + $0x33] sm:$0xff]
        %v6484 = vld [vmem:[#allocation2 + $0x3b] sm:$0xff]
        %v6485 = vld [vmem:[#allocation2 + $0x4b] sm:$0xff]
        %v6486 = vld [vmem:[#allocation2 + $0x53] sm:$0xff]
        %v6487 = vld [vmem:[#allocation2 + $0x63] sm:$0xff]
        %v6488 = vld [vmem:[#allocation2 + $0x6b] sm:$0xff]
        %v6489 = vld [vmem:[#allocation2 + $0x7b] sm:$0xff]
        %v6490 = vld [vmem:[#allocation2 + $0x83] sm:$0xff]
        %v6491 = vld [vmem:[#allocation2 + $0x93] sm:$0xff]
        %v6492 = vld [vmem:[#allocation2 + $0x9b] sm:$0xff]
        %v6493 = vld [vmem:[#allocation2 + $0xab] sm:$0xff]
        %v6494 = vld [vmem:[#allocation2 + $0xb3] sm:$0xff]
        %v6495 = vld [vmem:[#allocation2 + $0xc3] sm:$0xff]
        %v6496 = vld [vmem:[#allocation2 + $0xcb] sm:$0xff]
        %v6497 = vld [vmem:[#allocation2 + $0xdb] sm:$0xff]
        %v6498 = vld [vmem:[#allocation2 + $0xe3] sm:$0xff]
        %v6499 = vld [vmem:[#allocation2 + $0xf3] sm:$0xff]
        %v6500 = vld [vmem:[#allocation2 + $0xfb] sm:$0xff]
        %v6501 = vld [vmem:[#allocation2 + $0x10b] sm:$0xff]
        %v6502 = vld [vmem:[#allocation2 + $0x113] sm:$0xff]
        %v6503 = vld [vmem:[#allocation2 + $0x123] sm:$0xff]
        %v6504 = vld [vmem:[#allocation2 + $0x12b] sm:$0xff]
        %v6505 = vld [vmem:[#allocation2 + $0x13b] sm:$0xff]
        %v6506 = vld [vmem:[#allocation2 + $0x143] sm:$0xff]
        %v6507 = vld [vmem:[#allocation2 + $0x153] sm:$0xff]
        %v6508 = vld [vmem:[#allocation2 + $0x15b] sm:$0xff]
        %v6509 = vld [vmem:[#allocation2 + $0x16b] sm:$0xff]
        %v6510 = vld [vmem:[#allocation2 + $0x173] sm:$0xff]
        %v6511 = vld [vmem:[#allocation2 + $0x6] sm:$0xff]
        %v6512 = vld [vmem:[#allocation2 + $0xe] sm:$0xff]
        %v6513 = vld [vmem:[#allocation2 + $0x1e] sm:$0xff]
        %v6514 = vld [vmem:[#allocation2 + $0x26] sm:$0xff]
        %v6515 = vld [vmem:[#allocation2 + $0x36] sm:$0xff]
        %v6516 = vld [vmem:[#allocation2 + $0x3e] sm:$0xff]
        %v6517 = vld [vmem:[#allocation2 + $0x4e] sm:$0xff]
        %v6518 = vld [vmem:[#allocation2 + $0x56] sm:$0xff]
        %v6519 = vld [vmem:[#allocation2 + $0x66] sm:$0xff]
        %v6520 = vld [vmem:[#allocation2 + $0x6e] sm:$0xff]
        %v6521 = vld [vmem:[#allocation2 + $0x7e] sm:$0xff]
        %v6522 = vld [vmem:[#allocation2 + $0x86] sm:$0xff]
        %v6523 = vld [vmem:[#allocation2 + $0x96] sm:$0xff]
        %v6524 = vld [vmem:[#allocation2 + $0x9e] sm:$0xff]
        %v6525 = vld [vmem:[#allocation2 + $0xae] sm:$0xff]
        %v6526 = vld [vmem:[#allocation2 + $0xb6] sm:$0xff]
        %v6527 = vld [vmem:[#allocation2 + $0xc6] sm:$0xff]
        %v6528 = vld [vmem:[#allocation2 + $0xce] sm:$0xff]
        %v6529 = vld [vmem:[#allocation2 + $0xde] sm:$0xff]
        %v6530 = vld [vmem:[#allocation2 + $0xe6] sm:$0xff]
        %v6531 = vld [vmem:[#allocation2 + $0xf6] sm:$0xff]
        %v6532 = vld [vmem:[#allocation2 + $0xfe] sm:$0xff]
        %v6533 = vld [vmem:[#allocation2 + $0x10e] sm:$0xff]
        %v6534 = vld [vmem:[#allocation2 + $0x116] sm:$0xff]
        %v6535 = vld [vmem:[#allocation2 + $0x126] sm:$0xff]
        %v6536 = vld [vmem:[#allocation2 + $0x12e] sm:$0xff]
        %v6537 = vld [vmem:[#allocation2 + $0x13e] sm:$0xff]
        %v6538 = vld [vmem:[#allocation2 + $0x146] sm:$0xff]
        %v6539 = vld [vmem:[#allocation2 + $0x156] sm:$0xff]
        %v6540 = vld [vmem:[#allocation2 + $0x15e] sm:$0xff]
        %v6541 = vld [vmem:[#allocation2 + $0x16e] sm:$0xff]
        %v6542 = vld [vmem:[#allocation2 + $0x176] sm:$0xff]
        %v6543 = vld [vmem:[%s439] sm:$0xff]
        %v6544 = vld [vmem:[%s439 + $0x8] sm:$0xff]
        %v6545 = vld [vmem:[%s439 + $0x18] sm:$0xff]
        %v6546 = vld [vmem:[%s439 + $0x20] sm:$0xff]
        %v6547 = vld [vmem:[%s439 + $0x30] sm:$0xff]
        %v6548 = vld [vmem:[%s439 + $0x38] sm:$0xff]
        %v6549 = vld [vmem:[%s439 + $0x48] sm:$0xff]
        %v6550 = vld [vmem:[%s439 + $0x50] sm:$0xff]
        %v6551 = vld [vmem:[%s439 + $0x60] sm:$0xff]
        %v6552 = vld [vmem:[%s439 + $0x68] sm:$0xff]
        %v6553 = vld [vmem:[%s439 + $0x78] sm:$0xff]
        %v6554 = vld [vmem:[%s439 + $0x80] sm:$0xff]
        %v6555 = vld [vmem:[%s439 + $0x90] sm:$0xff]
        %v6556 = vld [vmem:[%s439 + $0x98] sm:$0xff]
        %v6557 = vld [vmem:[%s439 + $0xa8] sm:$0xff]
        %v6558 = vld [vmem:[%s439 + $0xb0] sm:$0xff]
        %v6559 = vld [vmem:[%s439 + $0xc0] sm:$0xff]
        %v6560 = vld [vmem:[%s439 + $0xc8] sm:$0xff]
        %v6561 = vld [vmem:[%s439 + $0xd8] sm:$0xff]
        %v6562 = vld [vmem:[%s439 + $0xe0] sm:$0xff]
        %v6563 = vld [vmem:[%s439 + $0xf0] sm:$0xff]
        %v6564 = vld [vmem:[%s439 + $0xf8] sm:$0xff]
        %v6565 = vld [vmem:[%s439 + $0x108] sm:$0xff]
        %v6566 = vld [vmem:[%s439 + $0x110] sm:$0xff]
        %v6567 = vld [vmem:[%s439 + $0x120] sm:$0xff]
        %v6568 = vld [vmem:[%s439 + $0x128] sm:$0xff]
        %v6569 = vld [vmem:[%s439 + $0x138] sm:$0xff]
        %v6570 = vld [vmem:[%s439 + $0x140] sm:$0xff]
        %v6571 = vld [vmem:[%s439 + $0x150] sm:$0xff]
        %v6572 = vld [vmem:[%s439 + $0x158] sm:$0xff]
        %v6573 = vld [vmem:[%s439 + $0x168] sm:$0xff]
        %v6574 = vld [vmem:[%s439 + $0x170] sm:$0xff]
        %v6575 = vld [vmem:[%s439 + $0x6] sm:$0xff]
        %v6576 = vld [vmem:[%s439 + $0xe] sm:$0xff]
        %v6577 = vld [vmem:[%s439 + $0x1e] sm:$0xff]
        %v6578 = vld [vmem:[%s439 + $0x26] sm:$0xff]
        %v6579 = vld [vmem:[%s439 + $0x36] sm:$0xff]
        %v6580 = vld [vmem:[%s439 + $0x3e] sm:$0xff]
        %v6581 = vld [vmem:[%s439 + $0x4e] sm:$0xff]
        %v6582 = vld [vmem:[%s439 + $0x56] sm:$0xff]
        %v6583 = vld [vmem:[%s439 + $0x66] sm:$0xff]
        %v6584 = vld [vmem:[%s439 + $0x6e] sm:$0xff]
        %v6585 = vld [vmem:[%s439 + $0x7e] sm:$0xff]
        %v6586 = vld [vmem:[%s439 + $0x86] sm:$0xff]
        %v6587 = vld [vmem:[%s439 + $0x96] sm:$0xff]
        %v6588 = vld [vmem:[%s439 + $0x9e] sm:$0xff]
        %v6589 = vld [vmem:[%s439 + $0xae] sm:$0xff]
        %v6590 = vld [vmem:[%s439 + $0xb6] sm:$0xff]
        %v6591 = vld [vmem:[%s439 + $0xc6] sm:$0xff]
        %v6592 = vld [vmem:[%s439 + $0xce] sm:$0xff]
        %v6593 = vld [vmem:[%s439 + $0xde] sm:$0xff]
        %v6594 = vld [vmem:[%s439 + $0xe6] sm:$0xff]
        %v6595 = vld [vmem:[%s439 + $0xf6] sm:$0xff]
        %v6596 = vld [vmem:[%s439 + $0xfe] sm:$0xff]
        %v6597 = vld [vmem:[%s439 + $0x10e] sm:$0xff]
        %v6598 = vld [vmem:[%s439 + $0x116] sm:$0xff]
        %v6599 = vld [vmem:[%s439 + $0x126] sm:$0xff]
        %v6600 = vld [vmem:[%s439 + $0x12e] sm:$0xff]
        %v6601 = vld [vmem:[%s439 + $0x13e] sm:$0xff]
        %v6602 = vld [vmem:[%s439 + $0x146] sm:$0xff]
        %v6603 = vld [vmem:[%s439 + $0x156] sm:$0xff]
        %v6604 = vld [vmem:[%s439 + $0x15e] sm:$0xff]
        %v6605 = vld [vmem:[%s439 + $0x16e] sm:$0xff]
        %v6606 = vld [vmem:[%s439 + $0x176] sm:$0xff]
        %s6607 = scalar_lea.vmem [#allocation2], 144
        %v6608 = vld [vmem:[%s6607] sm:$0xff]
        %v6609 = vld [vmem:[%s6607 + $0x8] sm:$0xff]
        %v6610 = vld [vmem:[%s6607 + $0x18] sm:$0xff]
        %v6611 = vld [vmem:[%s6607 + $0x20] sm:$0xff]
        %v6612 = vld [vmem:[%s6607 + $0x30] sm:$0xff]
        %v6613 = vld [vmem:[%s6607 + $0x38] sm:$0xff]
        %v6614 = vld [vmem:[%s6607 + $0x48] sm:$0xff]
        %v6615 = vld [vmem:[%s6607 + $0x50] sm:$0xff]
        %v6616 = vld [vmem:[%s6607 + $0x60] sm:$0xff]
        %v6617 = vld [vmem:[%s6607 + $0x68] sm:$0xff]
        %v6618 = vld [vmem:[%s6607 + $0x78] sm:$0xff]
        %v6619 = vld [vmem:[%s6607 + $0x80] sm:$0xff]
        %v6620 = vld [vmem:[%s6607 + $0x90] sm:$0xff]
        %v6621 = vld [vmem:[%s6607 + $0x98] sm:$0xff]
        %v6622 = vld [vmem:[%s6607 + $0xa8] sm:$0xff]
        %v6623 = vld [vmem:[%s6607 + $0xb0] sm:$0xff]
        %v6624 = vld [vmem:[%s6607 + $0xc0] sm:$0xff]
        %v6625 = vld [vmem:[%s6607 + $0xc8] sm:$0xff]
        %v6626 = vld [vmem:[%s6607 + $0xd8] sm:$0xff]
        %v6627 = vld [vmem:[%s6607 + $0xe0] sm:$0xff]
        %v6628 = vld [vmem:[%s6607 + $0xf0] sm:$0xff]
        %v6629 = vld [vmem:[%s6607 + $0xf8] sm:$0xff]
        %v6630 = vld [vmem:[%s6607 + $0x108] sm:$0xff]
        %v6631 = vld [vmem:[%s6607 + $0x110] sm:$0xff]
        %v6632 = vld [vmem:[%s6607 + $0x120] sm:$0xff]
        %v6633 = vld [vmem:[%s6607 + $0x128] sm:$0xff]
        %v6634 = vld [vmem:[%s6607 + $0x138] sm:$0xff]
        %v6635 = vld [vmem:[%s6607 + $0x140] sm:$0xff]
        %v6636 = vld [vmem:[%s6607 + $0x150] sm:$0xff]
        %v6637 = vld [vmem:[%s6607 + $0x158] sm:$0xff]
        %v6638 = vld [vmem:[%s6607 + $0x168] sm:$0xff]
        %v6639 = vld [vmem:[%s6607 + $0x170] sm:$0xff]
        %v6640 = vld [vmem:[%s6607 + $0x3] sm:$0xff]
        %v6641 = vld [vmem:[%s6607 + $0xb] sm:$0xff]
        %v6642 = vld [vmem:[%s6607 + $0x1b] sm:$0xff]
        %v6643 = vld [vmem:[%s6607 + $0x23] sm:$0xff]
        %v6644 = vld [vmem:[%s6607 + $0x33] sm:$0xff]
        %v6645 = vld [vmem:[%s6607 + $0x3b] sm:$0xff]
        %v6646 = vld [vmem:[%s6607 + $0x4b] sm:$0xff]
        %v6647 = vld [vmem:[%s6607 + $0x53] sm:$0xff]
        %v6648 = vld [vmem:[%s6607 + $0x63] sm:$0xff]
        %v6649 = vld [vmem:[%s6607 + $0x6b] sm:$0xff]
        %v6650 = vld [vmem:[%s6607 + $0x7b] sm:$0xff]
        %v6651 = vld [vmem:[%s6607 + $0x83] sm:$0xff]
        %v6652 = vld [vmem:[%s6607 + $0x93] sm:$0xff]
        %v6653 = vld [vmem:[%s6607 + $0x9b] sm:$0xff]
        %v6654 = vld [vmem:[%s6607 + $0xab] sm:$0xff]
        %v6655 = vld [vmem:[%s6607 + $0xb3] sm:$0xff]
        %v6656 = vld [vmem:[%s6607 + $0xc3] sm:$0xff]
        %v6657 = vld [vmem:[%s6607 + $0xcb] sm:$0xff]
        %v6658 = vld [vmem:[%s6607 + $0xdb] sm:$0xff]
        %v6659 = vld [vmem:[%s6607 + $0xe3] sm:$0xff]
        %v6660 = vld [vmem:[%s6607 + $0xf3] sm:$0xff]
        %v6661 = vld [vmem:[%s6607 + $0xfb] sm:$0xff]
        %v6662 = vld [vmem:[%s6607 + $0x10b] sm:$0xff]
        %v6663 = vld [vmem:[%s6607 + $0x113] sm:$0xff]
        %v6664 = vld [vmem:[%s6607 + $0x123] sm:$0xff]
        %v6665 = vld [vmem:[%s6607 + $0x12b] sm:$0xff]
        %v6666 = vld [vmem:[%s6607 + $0x13b] sm:$0xff]
        %v6667 = vld [vmem:[%s6607 + $0x143] sm:$0xff]
        %v6668 = vld [vmem:[%s6607 + $0x153] sm:$0xff]
        %v6669 = vld [vmem:[%s6607 + $0x15b] sm:$0xff]
        %v6670 = vld [vmem:[%s6607 + $0x16b] sm:$0xff]
        %v6671 = vld [vmem:[%s6607 + $0x173] sm:$0xff]
        %v6672 = vld [vmem:[%s6607 + $0x6] sm:$0xff]
        %v6673 = vld [vmem:[%s6607 + $0xe] sm:$0xff]
        %v6674 = vld [vmem:[%s6607 + $0x1e] sm:$0xff]
        %v6675 = vld [vmem:[%s6607 + $0x26] sm:$0xff]
        %v6676 = vld [vmem:[%s6607 + $0x36] sm:$0xff]
        %v6677 = vld [vmem:[%s6607 + $0x3e] sm:$0xff]
        %v6678 = vld [vmem:[%s6607 + $0x4e] sm:$0xff]
        %v6679 = vld [vmem:[%s6607 + $0x56] sm:$0xff]
        %v6680 = vld [vmem:[%s6607 + $0x66] sm:$0xff]
        %v6681 = vld [vmem:[%s6607 + $0x6e] sm:$0xff]
        %v6682 = vld [vmem:[%s6607 + $0x7e] sm:$0xff]
        %v6683 = vld [vmem:[%s6607 + $0x86] sm:$0xff]
        %v6684 = vld [vmem:[%s6607 + $0x96] sm:$0xff]
        %v6685 = vld [vmem:[%s6607 + $0x9e] sm:$0xff]
        %v6686 = vld [vmem:[%s6607 + $0xae] sm:$0xff]
        %v6687 = vld [vmem:[%s6607 + $0xb6] sm:$0xff]
        %v6688 = vld [vmem:[%s6607 + $0xc6] sm:$0xff]
        %v6689 = vld [vmem:[%s6607 + $0xce] sm:$0xff]
        %v6690 = vld [vmem:[%s6607 + $0xde] sm:$0xff]
        %v6691 = vld [vmem:[%s6607 + $0xe6] sm:$0xff]
        %v6692 = vld [vmem:[%s6607 + $0xf6] sm:$0xff]
        %v6693 = vld [vmem:[%s6607 + $0xfe] sm:$0xff]
        %v6694 = vld [vmem:[%s6607 + $0x10e] sm:$0xff]
        %v6695 = vld [vmem:[%s6607 + $0x116] sm:$0xff]
        %v6696 = vld [vmem:[%s6607 + $0x126] sm:$0xff]
        %v6697 = vld [vmem:[%s6607 + $0x12e] sm:$0xff]
        %v6698 = vld [vmem:[%s6607 + $0x13e] sm:$0xff]
        %v6699 = vld [vmem:[%s6607 + $0x146] sm:$0xff]
        %v6700 = vld [vmem:[%s6607 + $0x156] sm:$0xff]
        %v6701 = vld [vmem:[%s6607 + $0x15e] sm:$0xff]
        %v6702 = vld [vmem:[%s6607 + $0x16e] sm:$0xff]
        %v6703 = vld [vmem:[%s6607 + $0x176] sm:$0xff]
        %6736 = vrot.lane.b32.xlu0 %v6479, 16
        %v6737 = vpop.permute.xlu0 %6736
        %6738 = vrot.lane.b32.xlu0 %v6480, 16
        %v6739 = vpop.permute.xlu0 %6738
        %6740 = vrot.lane.b32.xlu0 %v6481, 16
        %v6741 = vpop.permute.xlu0 %6740
        %6742 = vrot.lane.b32.xlu0 %v6482, 16
        %v6743 = vpop.permute.xlu0 %6742
        %6744 = vrot.lane.b32.xlu0 %v6483, 16
        %v6745 = vpop.permute.xlu0 %6744
        %6746 = vrot.lane.b32.xlu0 %v6484, 16
        %v6747 = vpop.permute.xlu0 %6746
        %6748 = vrot.lane.b32.xlu0 %v6485, 16
        %v6749 = vpop.permute.xlu0 %6748
        %6750 = vrot.lane.b32.xlu0 %v6486, 16
        %v6751 = vpop.permute.xlu0 %6750
        %6752 = vrot.lane.b32.xlu0 %v6487, 16
        %v6753 = vpop.permute.xlu0 %6752
        %6754 = vrot.lane.b32.xlu0 %v6488, 16
        %v6755 = vpop.permute.xlu0 %6754
        %6756 = vrot.lane.b32.xlu0 %v6489, 16
        %v6757 = vpop.permute.xlu0 %6756
        %6758 = vrot.lane.b32.xlu0 %v6490, 16
        %v6759 = vpop.permute.xlu0 %6758
        %6760 = vrot.lane.b32.xlu0 %v6491, 16
        %v6761 = vpop.permute.xlu0 %6760
        %6762 = vrot.lane.b32.xlu0 %v6492, 16
        %v6763 = vpop.permute.xlu0 %6762
        %6764 = vrot.lane.b32.xlu0 %v6493, 16
        %v6765 = vpop.permute.xlu0 %6764
        %6766 = vrot.lane.b32.xlu0 %v6494, 16
        %v6767 = vpop.permute.xlu0 %6766
        %6768 = vrot.lane.b32.xlu0 %v6495, 16
        %v6769 = vpop.permute.xlu0 %6768
        %6770 = vrot.lane.b32.xlu0 %v6496, 16
        %v6771 = vpop.permute.xlu0 %6770
        %6772 = vrot.lane.b32.xlu0 %v6497, 16
        %v6773 = vpop.permute.xlu0 %6772
        %6774 = vrot.lane.b32.xlu0 %v6498, 16
        %v6775 = vpop.permute.xlu0 %6774
        %6776 = vrot.lane.b32.xlu0 %v6499, 16
        %v6777 = vpop.permute.xlu0 %6776
        %6778 = vrot.lane.b32.xlu0 %v6500, 16
        %v6779 = vpop.permute.xlu0 %6778
        %6780 = vrot.lane.b32.xlu0 %v6501, 16
        %v6781 = vpop.permute.xlu0 %6780
        %6782 = vrot.lane.b32.xlu0 %v6502, 16
        %v6783 = vpop.permute.xlu0 %6782
        %6784 = vrot.lane.b32.xlu0 %v6503, 16
        %v6785 = vpop.permute.xlu0 %6784
        %6786 = vrot.lane.b32.xlu0 %v6504, 16
        %v6787 = vpop.permute.xlu0 %6786
        %6788 = vrot.lane.b32.xlu0 %v6505, 16
        %v6789 = vpop.permute.xlu0 %6788
        %6790 = vrot.lane.b32.xlu0 %v6506, 16
        %v6791 = vpop.permute.xlu0 %6790
        %6792 = vrot.lane.b32.xlu0 %v6507, 16
        %v6793 = vpop.permute.xlu0 %6792
        %6794 = vrot.lane.b32.xlu0 %v6508, 16
        %v6795 = vpop.permute.xlu0 %6794
        %6796 = vrot.lane.b32.xlu0 %v6509, 16
        %v6797 = vpop.permute.xlu0 %6796
        %6798 = vrot.lane.b32.xlu0 %v6510, 16
        %v6799 = vpop.permute.xlu0 %6798
        %6864 = vrot.lane.b32.xlu0 %v6511, 32
        %v6865 = vpop.permute.xlu0 %6864
        %6866 = vrot.lane.b32.xlu0 %v6512, 32
        %v6867 = vpop.permute.xlu0 %6866
        %6868 = vrot.lane.b32.xlu0 %v6513, 32
        %v6869 = vpop.permute.xlu0 %6868
        %6870 = vrot.lane.b32.xlu0 %v6514, 32
        %v6871 = vpop.permute.xlu0 %6870
        %6872 = vrot.lane.b32.xlu0 %v6515, 32
        %v6873 = vpop.permute.xlu0 %6872
        %6874 = vrot.lane.b32.xlu0 %v6516, 32
        %v6875 = vpop.permute.xlu0 %6874
        %6876 = vrot.lane.b32.xlu0 %v6517, 32
        %v6877 = vpop.permute.xlu0 %6876
        %6878 = vrot.lane.b32.xlu0 %v6518, 32
        %v6879 = vpop.permute.xlu0 %6878
        %6880 = vrot.lane.b32.xlu0 %v6519, 32
        %v6881 = vpop.permute.xlu0 %6880
        %6882 = vrot.lane.b32.xlu0 %v6520, 32
        %v6883 = vpop.permute.xlu0 %6882
        %6884 = vrot.lane.b32.xlu0 %v6521, 32
        %v6885 = vpop.permute.xlu0 %6884
        %6886 = vrot.lane.b32.xlu0 %v6522, 32
        %v6887 = vpop.permute.xlu0 %6886
        %6888 = vrot.lane.b32.xlu0 %v6523, 32
        %v6889 = vpop.permute.xlu0 %6888
        %6890 = vrot.lane.b32.xlu0 %v6524, 32
        %v6891 = vpop.permute.xlu0 %6890
        %6892 = vrot.lane.b32.xlu0 %v6525, 32
        %v6893 = vpop.permute.xlu0 %6892
        %6894 = vrot.lane.b32.xlu0 %v6526, 32
        %v6895 = vpop.permute.xlu0 %6894
        %6896 = vrot.lane.b32.xlu0 %v6527, 32
        %v6897 = vpop.permute.xlu0 %6896
        %6898 = vrot.lane.b32.xlu0 %v6528, 32
        %v6899 = vpop.permute.xlu0 %6898
        %6900 = vrot.lane.b32.xlu0 %v6529, 32
        %v6901 = vpop.permute.xlu0 %6900
        %6902 = vrot.lane.b32.xlu0 %v6530, 32
        %v6903 = vpop.permute.xlu0 %6902
        %6904 = vrot.lane.b32.xlu0 %v6531, 32
        %v6905 = vpop.permute.xlu0 %6904
        %6906 = vrot.lane.b32.xlu0 %v6532, 32
        %v6907 = vpop.permute.xlu0 %6906
        %6908 = vrot.lane.b32.xlu0 %v6533, 32
        %v6909 = vpop.permute.xlu0 %6908
        %6910 = vrot.lane.b32.xlu0 %v6534, 32
        %v6911 = vpop.permute.xlu0 %6910
        %6912 = vrot.lane.b32.xlu0 %v6535, 32
        %v6913 = vpop.permute.xlu0 %6912
        %6914 = vrot.lane.b32.xlu0 %v6536, 32
        %v6915 = vpop.permute.xlu0 %6914
        %6916 = vrot.lane.b32.xlu0 %v6537, 32
        %v6917 = vpop.permute.xlu0 %6916
        %6918 = vrot.lane.b32.xlu0 %v6538, 32
        %v6919 = vpop.permute.xlu0 %6918
        %6920 = vrot.lane.b32.xlu0 %v6539, 32
        %v6921 = vpop.permute.xlu0 %6920
        %6922 = vrot.lane.b32.xlu0 %v6540, 32
        %v6923 = vpop.permute.xlu0 %6922
        %6924 = vrot.lane.b32.xlu0 %v6541, 32
        %v6925 = vpop.permute.xlu0 %6924
        %6926 = vrot.lane.b32.xlu0 %v6542, 32
        %v6927 = vpop.permute.xlu0 %6926
        %6992 = vrot.lane.b32.xlu0 %v6543, 48
        %v6993 = vpop.permute.xlu0 %6992
        %6994 = vrot.lane.b32.xlu0 %v6544, 48
        %v6995 = vpop.permute.xlu0 %6994
        %6996 = vrot.lane.b32.xlu0 %v6545, 48
        %v6997 = vpop.permute.xlu0 %6996
        %6998 = vrot.lane.b32.xlu0 %v6546, 48
        %v6999 = vpop.permute.xlu0 %6998
        %7000 = vrot.lane.b32.xlu0 %v6547, 48
        %v7001 = vpop.permute.xlu0 %7000
        %7002 = vrot.lane.b32.xlu0 %v6548, 48
        %v7003 = vpop.permute.xlu0 %7002
        %7004 = vrot.lane.b32.xlu0 %v6549, 48
        %v7005 = vpop.permute.xlu0 %7004
        %7006 = vrot.lane.b32.xlu0 %v6550, 48
        %v7007 = vpop.permute.xlu0 %7006
        %7008 = vrot.lane.b32.xlu0 %v6551, 48
        %v7009 = vpop.permute.xlu0 %7008
        %7010 = vrot.lane.b32.xlu0 %v6552, 48
        %v7011 = vpop.permute.xlu0 %7010
        %7012 = vrot.lane.b32.xlu0 %v6553, 48
        %v7013 = vpop.permute.xlu0 %7012
        %7014 = vrot.lane.b32.xlu0 %v6554, 48
        %v7015 = vpop.permute.xlu0 %7014
        %7016 = vrot.lane.b32.xlu0 %v6555, 48
        %v7017 = vpop.permute.xlu0 %7016
        %7018 = vrot.lane.b32.xlu0 %v6556, 48
        %v7019 = vpop.permute.xlu0 %7018
        %7020 = vrot.lane.b32.xlu0 %v6557, 48
        %v7021 = vpop.permute.xlu0 %7020
        %7022 = vrot.lane.b32.xlu0 %v6558, 48
        %v7023 = vpop.permute.xlu0 %7022
        %7024 = vrot.lane.b32.xlu0 %v6559, 48
        %v7025 = vpop.permute.xlu0 %7024
        %7026 = vrot.lane.b32.xlu0 %v6560, 48
        %v7027 = vpop.permute.xlu0 %7026
        %7028 = vrot.lane.b32.xlu0 %v6561, 48
        %v7029 = vpop.permute.xlu0 %7028
        %7030 = vrot.lane.b32.xlu0 %v6562, 48
        %v7031 = vpop.permute.xlu0 %7030
        %7032 = vrot.lane.b32.xlu0 %v6563, 48
        %v7033 = vpop.permute.xlu0 %7032
        %7034 = vrot.lane.b32.xlu0 %v6564, 48
        %v7035 = vpop.permute.xlu0 %7034
        %7036 = vrot.lane.b32.xlu0 %v6565, 48
        %v7037 = vpop.permute.xlu0 %7036
        %7038 = vrot.lane.b32.xlu0 %v6566, 48
        %v7039 = vpop.permute.xlu0 %7038
        %7040 = vrot.lane.b32.xlu0 %v6567, 48
        %v7041 = vpop.permute.xlu0 %7040
        %7042 = vrot.lane.b32.xlu0 %v6568, 48
        %v7043 = vpop.permute.xlu0 %7042
        %7044 = vrot.lane.b32.xlu0 %v6569, 48
        %v7045 = vpop.permute.xlu0 %7044
        %7046 = vrot.lane.b32.xlu0 %v6570, 48
        %v7047 = vpop.permute.xlu0 %7046
        %7048 = vrot.lane.b32.xlu0 %v6571, 48
        %v7049 = vpop.permute.xlu0 %7048
        %7050 = vrot.lane.b32.xlu0 %v6572, 48
        %v7051 = vpop.permute.xlu0 %7050
        %7052 = vrot.lane.b32.xlu0 %v6573, 48
        %v7053 = vpop.permute.xlu0 %7052
        %7054 = vrot.lane.b32.xlu0 %v6574, 48
        %v7055 = vpop.permute.xlu0 %7054
        %7120 = vrot.lane.b32.xlu0 %v6575, 80
        %v7121 = vpop.permute.xlu0 %7120
        %7122 = vrot.lane.b32.xlu0 %v6576, 80
        %v7123 = vpop.permute.xlu0 %7122
        %7124 = vrot.lane.b32.xlu0 %v6577, 80
        %v7125 = vpop.permute.xlu0 %7124
        %7126 = vrot.lane.b32.xlu0 %v6578, 80
        %v7127 = vpop.permute.xlu0 %7126
        %7128 = vrot.lane.b32.xlu0 %v6579, 80
        %v7129 = vpop.permute.xlu0 %7128
        %7130 = vrot.lane.b32.xlu0 %v6580, 80
        %v7131 = vpop.permute.xlu0 %7130
        %7132 = vrot.lane.b32.xlu0 %v6581, 80
        %v7133 = vpop.permute.xlu0 %7132
        %7134 = vrot.lane.b32.xlu0 %v6582, 80
        %v7135 = vpop.permute.xlu0 %7134
        %7136 = vrot.lane.b32.xlu0 %v6583, 80
        %v7137 = vpop.permute.xlu0 %7136
        %7138 = vrot.lane.b32.xlu0 %v6584, 80
        %v7139 = vpop.permute.xlu0 %7138
        %7140 = vrot.lane.b32.xlu0 %v6585, 80
        %v7141 = vpop.permute.xlu0 %7140
        %7142 = vrot.lane.b32.xlu0 %v6586, 80
        %v7143 = vpop.permute.xlu0 %7142
        %7144 = vrot.lane.b32.xlu0 %v6587, 80
        %v7145 = vpop.permute.xlu0 %7144
        %7146 = vrot.lane.b32.xlu0 %v6588, 80
        %v7147 = vpop.permute.xlu0 %7146
        %7148 = vrot.lane.b32.xlu0 %v6589, 80
        %v7149 = vpop.permute.xlu0 %7148
        %7150 = vrot.lane.b32.xlu0 %v6590, 80
        %v7151 = vpop.permute.xlu0 %7150
        %7152 = vrot.lane.b32.xlu0 %v6591, 80
        %v7153 = vpop.permute.xlu0 %7152
        %7154 = vrot.lane.b32.xlu0 %v6592, 80
        %v7155 = vpop.permute.xlu0 %7154
        %7156 = vrot.lane.b32.xlu0 %v6593, 80
        %v7157 = vpop.permute.xlu0 %7156
        %7158 = vrot.lane.b32.xlu0 %v6594, 80
        %v7159 = vpop.permute.xlu0 %7158
        %7160 = vrot.lane.b32.xlu0 %v6595, 80
        %v7161 = vpop.permute.xlu0 %7160
        %7162 = vrot.lane.b32.xlu0 %v6596, 80
        %v7163 = vpop.permute.xlu0 %7162
        %7164 = vrot.lane.b32.xlu0 %v6597, 80
        %v7165 = vpop.permute.xlu0 %7164
        %7166 = vrot.lane.b32.xlu0 %v6598, 80
        %v7167 = vpop.permute.xlu0 %7166
        %7168 = vrot.lane.b32.xlu0 %v6599, 80
        %v7169 = vpop.permute.xlu0 %7168
        %7170 = vrot.lane.b32.xlu0 %v6600, 80
        %v7171 = vpop.permute.xlu0 %7170
        %7172 = vrot.lane.b32.xlu0 %v6601, 80
        %v7173 = vpop.permute.xlu0 %7172
        %7174 = vrot.lane.b32.xlu0 %v6602, 80
        %v7175 = vpop.permute.xlu0 %7174
        %7176 = vrot.lane.b32.xlu0 %v6603, 80
        %v7177 = vpop.permute.xlu0 %7176
        %7178 = vrot.lane.b32.xlu0 %v6604, 80
        %v7179 = vpop.permute.xlu0 %7178
        %7180 = vrot.lane.b32.xlu0 %v6605, 80
        %v7181 = vpop.permute.xlu0 %7180
        %7182 = vrot.lane.b32.xlu0 %v6606, 80
        %v7183 = vpop.permute.xlu0 %7182
        %7248 = vrot.lane.b32.xlu0 %v6608, 96
        %v7249 = vpop.permute.xlu0 %7248
        %7250 = vrot.lane.b32.xlu0 %v6609, 96
        %v7251 = vpop.permute.xlu0 %7250
        %7252 = vrot.lane.b32.xlu0 %v6610, 96
        %v7253 = vpop.permute.xlu0 %7252
        %7254 = vrot.lane.b32.xlu0 %v6611, 96
        %v7255 = vpop.permute.xlu0 %7254
        %7256 = vrot.lane.b32.xlu0 %v6612, 96
        %v7257 = vpop.permute.xlu0 %7256
        %7258 = vrot.lane.b32.xlu0 %v6613, 96
        %v7259 = vpop.permute.xlu0 %7258
        %7260 = vrot.lane.b32.xlu0 %v6614, 96
        %v7261 = vpop.permute.xlu0 %7260
        %7262 = vrot.lane.b32.xlu0 %v6615, 96
        %v7263 = vpop.permute.xlu0 %7262
        %7264 = vrot.lane.b32.xlu0 %v6616, 96
        %v7265 = vpop.permute.xlu0 %7264
        %7266 = vrot.lane.b32.xlu0 %v6617, 96
        %v7267 = vpop.permute.xlu0 %7266
        %7268 = vrot.lane.b32.xlu0 %v6618, 96
        %v7269 = vpop.permute.xlu0 %7268
        %7270 = vrot.lane.b32.xlu0 %v6619, 96
        %v7271 = vpop.permute.xlu0 %7270
        %7272 = vrot.lane.b32.xlu0 %v6620, 96
        %v7273 = vpop.permute.xlu0 %7272
        %7274 = vrot.lane.b32.xlu0 %v6621, 96
        %v7275 = vpop.permute.xlu0 %7274
        %7276 = vrot.lane.b32.xlu0 %v6622, 96
        %v7277 = vpop.permute.xlu0 %7276
        %7278 = vrot.lane.b32.xlu0 %v6623, 96
        %v7279 = vpop.permute.xlu0 %7278
        %7280 = vrot.lane.b32.xlu0 %v6624, 96
        %v7281 = vpop.permute.xlu0 %7280
        %7282 = vrot.lane.b32.xlu0 %v6625, 96
        %v7283 = vpop.permute.xlu0 %7282
        %7284 = vrot.lane.b32.xlu0 %v6626, 96
        %v7285 = vpop.permute.xlu0 %7284
        %7286 = vrot.lane.b32.xlu0 %v6627, 96
        %v7287 = vpop.permute.xlu0 %7286
        %7288 = vrot.lane.b32.xlu0 %v6628, 96
        %v7289 = vpop.permute.xlu0 %7288
        %7290 = vrot.lane.b32.xlu0 %v6629, 96
        %v7291 = vpop.permute.xlu0 %7290
        %7292 = vrot.lane.b32.xlu0 %v6630, 96
        %v7293 = vpop.permute.xlu0 %7292
        %7294 = vrot.lane.b32.xlu0 %v6631, 96
        %v7295 = vpop.permute.xlu0 %7294
        %7296 = vrot.lane.b32.xlu0 %v6632, 96
        %v7297 = vpop.permute.xlu0 %7296
        %7298 = vrot.lane.b32.xlu0 %v6633, 96
        %v7299 = vpop.permute.xlu0 %7298
        %7300 = vrot.lane.b32.xlu0 %v6634, 96
        %v7301 = vpop.permute.xlu0 %7300
        %7302 = vrot.lane.b32.xlu0 %v6635, 96
        %v7303 = vpop.permute.xlu0 %7302
        %7304 = vrot.lane.b32.xlu0 %v6636, 96
        %v7305 = vpop.permute.xlu0 %7304
        %7306 = vrot.lane.b32.xlu0 %v6637, 96
        %v7307 = vpop.permute.xlu0 %7306
        %7308 = vrot.lane.b32.xlu0 %v6638, 96
        %v7309 = vpop.permute.xlu0 %7308
        %7310 = vrot.lane.b32.xlu0 %v6639, 96
        %v7311 = vpop.permute.xlu0 %7310
        %7376 = vrot.lane.b32.xlu0 %v6640, 112
        %v7377 = vpop.permute.xlu0 %7376
        %7378 = vrot.lane.b32.xlu0 %v6641, 112
        %v7379 = vpop.permute.xlu0 %7378
        %7380 = vrot.lane.b32.xlu0 %v6642, 112
        %v7381 = vpop.permute.xlu0 %7380
        %7382 = vrot.lane.b32.xlu0 %v6643, 112
        %v7383 = vpop.permute.xlu0 %7382
        %7384 = vrot.lane.b32.xlu0 %v6644, 112
        %v7385 = vpop.permute.xlu0 %7384
        %7386 = vrot.lane.b32.xlu0 %v6645, 112
        %v7387 = vpop.permute.xlu0 %7386
        %7388 = vrot.lane.b32.xlu0 %v6646, 112
        %v7389 = vpop.permute.xlu0 %7388
        %7390 = vrot.lane.b32.xlu0 %v6647, 112
        %v7391 = vpop.permute.xlu0 %7390
        %7392 = vrot.lane.b32.xlu0 %v6648, 112
        %v7393 = vpop.permute.xlu0 %7392
        %7394 = vrot.lane.b32.xlu0 %v6649, 112
        %v7395 = vpop.permute.xlu0 %7394
        %7396 = vrot.lane.b32.xlu0 %v6650, 112
        %v7397 = vpop.permute.xlu0 %7396
        %7398 = vrot.lane.b32.xlu0 %v6651, 112
        %v7399 = vpop.permute.xlu0 %7398
        %7400 = vrot.lane.b32.xlu0 %v6652, 112
        %v7401 = vpop.permute.xlu0 %7400
        %7402 = vrot.lane.b32.xlu0 %v6653, 112
        %v7403 = vpop.permute.xlu0 %7402
        %7404 = vrot.lane.b32.xlu0 %v6654, 112
        %v7405 = vpop.permute.xlu0 %7404
        %7406 = vrot.lane.b32.xlu0 %v6655, 112
        %v7407 = vpop.permute.xlu0 %7406
        %7408 = vrot.lane.b32.xlu0 %v6656, 112
        %v7409 = vpop.permute.xlu0 %7408
        %7410 = vrot.lane.b32.xlu0 %v6657, 112
        %v7411 = vpop.permute.xlu0 %7410
        %7412 = vrot.lane.b32.xlu0 %v6658, 112
        %v7413 = vpop.permute.xlu0 %7412
        %7414 = vrot.lane.b32.xlu0 %v6659, 112
        %v7415 = vpop.permute.xlu0 %7414
        %7416 = vrot.lane.b32.xlu0 %v6660, 112
        %v7417 = vpop.permute.xlu0 %7416
        %7418 = vrot.lane.b32.xlu0 %v6661, 112
        %v7419 = vpop.permute.xlu0 %7418
        %7420 = vrot.lane.b32.xlu0 %v6662, 112
        %v7421 = vpop.permute.xlu0 %7420
        %7422 = vrot.lane.b32.xlu0 %v6663, 112
        %v7423 = vpop.permute.xlu0 %7422
        %7424 = vrot.lane.b32.xlu0 %v6664, 112
        %v7425 = vpop.permute.xlu0 %7424
        %7426 = vrot.lane.b32.xlu0 %v6665, 112
        %v7427 = vpop.permute.xlu0 %7426
        %7428 = vrot.lane.b32.xlu0 %v6666, 112
        %v7429 = vpop.permute.xlu0 %7428
        %7430 = vrot.lane.b32.xlu0 %v6667, 112
        %v7431 = vpop.permute.xlu0 %7430
        %7432 = vrot.lane.b32.xlu0 %v6668, 112
        %v7433 = vpop.permute.xlu0 %7432
        %7434 = vrot.lane.b32.xlu0 %v6669, 112
        %v7435 = vpop.permute.xlu0 %7434
        %7436 = vrot.lane.b32.xlu0 %v6670, 112
        %v7437 = vpop.permute.xlu0 %7436
        %7438 = vrot.lane.b32.xlu0 %v6671, 112
        %v7439 = vpop.permute.xlu0 %7438
        %v7472 = vsel %vm309, %v6447, %v6737
        %v7473 = vsel %vm309, %v6448, %v6739
        %v7474 = vsel %vm309, %v6449, %v6741
        %v7475 = vsel %vm309, %v6450, %v6743
        %v7476 = vsel %vm309, %v6451, %v6745
        %v7477 = vsel %vm309, %v6452, %v6747
        %v7478 = vsel %vm309, %v6453, %v6749
        %v7479 = vsel %vm309, %v6454, %v6751
        %v7480 = vsel %vm309, %v6455, %v6753
        %v7481 = vsel %vm309, %v6456, %v6755
        %v7482 = vsel %vm309, %v6457, %v6757
        %v7483 = vsel %vm309, %v6458, %v6759
        %v7484 = vsel %vm309, %v6459, %v6761
        %v7485 = vsel %vm309, %v6460, %v6763
        %v7486 = vsel %vm309, %v6461, %v6765
        %v7487 = vsel %vm309, %v6462, %v6767
        %v7488 = vsel %vm309, %v6463, %v6769
        %v7489 = vsel %vm309, %v6464, %v6771
        %v7490 = vsel %vm309, %v6465, %v6773
        %v7491 = vsel %vm309, %v6466, %v6775
        %v7492 = vsel %vm309, %v6467, %v6777
        %v7493 = vsel %vm309, %v6468, %v6779
        %v7494 = vsel %vm309, %v6469, %v6781
        %v7495 = vsel %vm309, %v6470, %v6783
        %v7496 = vsel %vm309, %v6471, %v6785
        %v7497 = vsel %vm309, %v6472, %v6787
        %v7498 = vsel %vm309, %v6473, %v6789
        %v7499 = vsel %vm309, %v6474, %v6791
        %v7500 = vsel %vm309, %v6475, %v6793
        %v7501 = vsel %vm309, %v6476, %v6795
        %v7502 = vsel %vm309, %v6477, %v6797
        %v7503 = vsel %vm309, %v6478, %v6799
        %v7504 = vsel %vm904, %v7472, %v6865
        %v7505 = vsel %vm904, %v7473, %v6867
        %v7506 = vsel %vm904, %v7474, %v6869
        %v7507 = vsel %vm904, %v7475, %v6871
        %v7508 = vsel %vm904, %v7476, %v6873
        %v7509 = vsel %vm904, %v7477, %v6875
        %v7510 = vsel %vm904, %v7478, %v6877
        %v7511 = vsel %vm904, %v7479, %v6879
        %v7512 = vsel %vm904, %v7480, %v6881
        %v7513 = vsel %vm904, %v7481, %v6883
        %v7514 = vsel %vm904, %v7482, %v6885
        %v7515 = vsel %vm904, %v7483, %v6887
        %v7516 = vsel %vm904, %v7484, %v6889
        %v7517 = vsel %vm904, %v7485, %v6891
        %v7518 = vsel %vm904, %v7486, %v6893
        %v7519 = vsel %vm904, %v7487, %v6895
        %v7520 = vsel %vm904, %v7488, %v6897
        %v7521 = vsel %vm904, %v7489, %v6899
        %v7522 = vsel %vm904, %v7490, %v6901
        %v7523 = vsel %vm904, %v7491, %v6903
        %v7524 = vsel %vm904, %v7492, %v6905
        %v7525 = vsel %vm904, %v7493, %v6907
        %v7526 = vsel %vm904, %v7494, %v6909
        %v7527 = vsel %vm904, %v7495, %v6911
        %v7528 = vsel %vm904, %v7496, %v6913
        %v7529 = vsel %vm904, %v7497, %v6915
        %v7530 = vsel %vm904, %v7498, %v6917
        %v7531 = vsel %vm904, %v7499, %v6919
        %v7532 = vsel %vm904, %v7500, %v6921
        %v7533 = vsel %vm904, %v7501, %v6923
        %v7534 = vsel %vm904, %v7502, %v6925
        %v7535 = vsel %vm904, %v7503, %v6927
        %v7536 = vsel %vm2674, %v7504, %v6993
        %v7537 = vsel %vm2674, %v7505, %v6995
        %v7538 = vsel %vm2674, %v7506, %v6997
        %v7539 = vsel %vm2674, %v7507, %v6999
        %v7540 = vsel %vm2674, %v7508, %v7001
        %v7541 = vsel %vm2674, %v7509, %v7003
        %v7542 = vsel %vm2674, %v7510, %v7005
        %v7543 = vsel %vm2674, %v7511, %v7007
        %v7544 = vsel %vm2674, %v7512, %v7009
        %v7545 = vsel %vm2674, %v7513, %v7011
        %v7546 = vsel %vm2674, %v7514, %v7013
        %v7547 = vsel %vm2674, %v7515, %v7015
        %v7548 = vsel %vm2674, %v7516, %v7017
        %v7549 = vsel %vm2674, %v7517, %v7019
        %v7550 = vsel %vm2674, %v7518, %v7021
        %v7551 = vsel %vm2674, %v7519, %v7023
        %v7552 = vsel %vm2674, %v7520, %v7025
        %v7553 = vsel %vm2674, %v7521, %v7027
        %v7554 = vsel %vm2674, %v7522, %v7029
        %v7555 = vsel %vm2674, %v7523, %v7031
        %v7556 = vsel %vm2674, %v7524, %v7033
        %v7557 = vsel %vm2674, %v7525, %v7035
        %v7558 = vsel %vm2674, %v7526, %v7037
        %v7559 = vsel %vm2674, %v7527, %v7039
        %v7560 = vsel %vm2674, %v7528, %v7041
        %v7561 = vsel %vm2674, %v7529, %v7043
        %v7562 = vsel %vm2674, %v7530, %v7045
        %v7563 = vsel %vm2674, %v7531, %v7047
        %v7564 = vsel %vm2674, %v7532, %v7049
        %v7565 = vsel %vm2674, %v7533, %v7051
        %v7566 = vsel %vm2674, %v7534, %v7053
        %v7567 = vsel %vm2674, %v7535, %v7055
        %v7568 = vsel %vm2707, %v7536, %v2131
        %v7569 = vsel %vm2707, %v7537, %v2133
        %v7570 = vsel %vm2707, %v7538, %v2135
        %v7571 = vsel %vm2707, %v7539, %v2137
        %v7572 = vsel %vm2707, %v7540, %v2139
        %v7573 = vsel %vm2707, %v7541, %v2141
        %v7574 = vsel %vm2707, %v7542, %v2143
        %v7575 = vsel %vm2707, %v7543, %v2145
        %v7576 = vsel %vm2707, %v7544, %v2147
        %v7577 = vsel %vm2707, %v7545, %v2149
        %v7578 = vsel %vm2707, %v7546, %v2151
        %v7579 = vsel %vm2707, %v7547, %v2153
        %v7580 = vsel %vm2707, %v7548, %v2155
        %v7581 = vsel %vm2707, %v7549, %v2157
        %v7582 = vsel %vm2707, %v7550, %v2159
        %v7583 = vsel %vm2707, %v7551, %v2161
        %v7584 = vsel %vm2707, %v7552, %v2163
        %v7585 = vsel %vm2707, %v7553, %v2165
        %v7586 = vsel %vm2707, %v7554, %v2167
        %v7587 = vsel %vm2707, %v7555, %v2169
        %v7588 = vsel %vm2707, %v7556, %v2171
        %v7589 = vsel %vm2707, %v7557, %v2173
        %v7590 = vsel %vm2707, %v7558, %v2175
        %v7591 = vsel %vm2707, %v7559, %v2177
        %v7592 = vsel %vm2707, %v7560, %v2179
        %v7593 = vsel %vm2707, %v7561, %v2181
        %v7594 = vsel %vm2707, %v7562, %v2183
        %v7595 = vsel %vm2707, %v7563, %v2185
        %v7596 = vsel %vm2707, %v7564, %v2187
        %v7597 = vsel %vm2707, %v7565, %v2189
        %v7598 = vsel %vm2707, %v7566, %v2191
        %v7599 = vsel %vm2707, %v7567, %v2193
        %v7600 = vsel %vm2740, %v7568, %v7121
        %v7601 = vsel %vm2740, %v7569, %v7123
        %v7602 = vsel %vm2740, %v7570, %v7125
        %v7603 = vsel %vm2740, %v7571, %v7127
        %v7604 = vsel %vm2740, %v7572, %v7129
        %v7605 = vsel %vm2740, %v7573, %v7131
        %v7606 = vsel %vm2740, %v7574, %v7133
        %v7607 = vsel %vm2740, %v7575, %v7135
        %v7608 = vsel %vm2740, %v7576, %v7137
        %v7609 = vsel %vm2740, %v7577, %v7139
        %v7610 = vsel %vm2740, %v7578, %v7141
        %v7611 = vsel %vm2740, %v7579, %v7143
        %v7612 = vsel %vm2740, %v7580, %v7145
        %v7613 = vsel %vm2740, %v7581, %v7147
        %v7614 = vsel %vm2740, %v7582, %v7149
        %v7615 = vsel %vm2740, %v7583, %v7151
        %v7616 = vsel %vm2740, %v7584, %v7153
        %v7617 = vsel %vm2740, %v7585, %v7155
        %v7618 = vsel %vm2740, %v7586, %v7157
        %v7619 = vsel %vm2740, %v7587, %v7159
        %v7620 = vsel %vm2740, %v7588, %v7161
        %v7621 = vsel %vm2740, %v7589, %v7163
        %v7622 = vsel %vm2740, %v7590, %v7165
        %v7623 = vsel %vm2740, %v7591, %v7167
        %v7624 = vsel %vm2740, %v7592, %v7169
        %v7625 = vsel %vm2740, %v7593, %v7171
        %v7626 = vsel %vm2740, %v7594, %v7173
        %v7627 = vsel %vm2740, %v7595, %v7175
        %v7628 = vsel %vm2740, %v7596, %v7177
        %v7629 = vsel %vm2740, %v7597, %v7179
        %v7630 = vsel %vm2740, %v7598, %v7181
        %v7631 = vsel %vm2740, %v7599, %v7183
        %v7632 = vsel %vm2773, %v7600, %v7249
        %v7633 = vsel %vm2773, %v7601, %v7251
        %v7634 = vsel %vm2773, %v7602, %v7253
        %v7635 = vsel %vm2773, %v7603, %v7255
        %v7636 = vsel %vm2773, %v7604, %v7257
        %v7637 = vsel %vm2773, %v7605, %v7259
        %v7638 = vsel %vm2773, %v7606, %v7261
        %v7639 = vsel %vm2773, %v7607, %v7263
        %v7640 = vsel %vm2773, %v7608, %v7265
        %v7641 = vsel %vm2773, %v7609, %v7267
        %v7642 = vsel %vm2773, %v7610, %v7269
        %v7643 = vsel %vm2773, %v7611, %v7271
        %v7644 = vsel %vm2773, %v7612, %v7273
        %v7645 = vsel %vm2773, %v7613, %v7275
        %v7646 = vsel %vm2773, %v7614, %v7277
        %v7647 = vsel %vm2773, %v7615, %v7279
        %v7648 = vsel %vm2773, %v7616, %v7281
        %v7649 = vsel %vm2773, %v7617, %v7283
        %v7650 = vsel %vm2773, %v7618, %v7285
        %v7651 = vsel %vm2773, %v7619, %v7287
        %v7652 = vsel %vm2773, %v7620, %v7289
        %v7653 = vsel %vm2773, %v7621, %v7291
        %v7654 = vsel %vm2773, %v7622, %v7293
        %v7655 = vsel %vm2773, %v7623, %v7295
        %v7656 = vsel %vm2773, %v7624, %v7297
        %v7657 = vsel %vm2773, %v7625, %v7299
        %v7658 = vsel %vm2773, %v7626, %v7301
        %v7659 = vsel %vm2773, %v7627, %v7303
        %v7660 = vsel %vm2773, %v7628, %v7305
        %v7661 = vsel %vm2773, %v7629, %v7307
        %v7662 = vsel %vm2773, %v7630, %v7309
        %v7663 = vsel %vm2773, %v7631, %v7311
        %v7664 = vsel %vm2806, %v7632, %v7377
        %v7665 = vsel %vm2806, %v7633, %v7379
        %v7666 = vsel %vm2806, %v7634, %v7381
        %v7667 = vsel %vm2806, %v7635, %v7383
        %v7668 = vsel %vm2806, %v7636, %v7385
        %v7669 = vsel %vm2806, %v7637, %v7387
        %v7670 = vsel %vm2806, %v7638, %v7389
        %v7671 = vsel %vm2806, %v7639, %v7391
        %v7672 = vsel %vm2806, %v7640, %v7393
        %v7673 = vsel %vm2806, %v7641, %v7395
        %v7674 = vsel %vm2806, %v7642, %v7397
        %v7675 = vsel %vm2806, %v7643, %v7399
        %v7676 = vsel %vm2806, %v7644, %v7401
        %v7677 = vsel %vm2806, %v7645, %v7403
        %v7678 = vsel %vm2806, %v7646, %v7405
        %v7679 = vsel %vm2806, %v7647, %v7407
        %v7680 = vsel %vm2806, %v7648, %v7409
        %v7681 = vsel %vm2806, %v7649, %v7411
        %v7682 = vsel %vm2806, %v7650, %v7413
        %v7683 = vsel %vm2806, %v7651, %v7415
        %v7684 = vsel %vm2806, %v7652, %v7417
        %v7685 = vsel %vm2806, %v7653, %v7419
        %v7686 = vsel %vm2806, %v7654, %v7421
        %v7687 = vsel %vm2806, %v7655, %v7423
        %v7688 = vsel %vm2806, %v7656, %v7425
        %v7689 = vsel %vm2806, %v7657, %v7427
        %v7690 = vsel %vm2806, %v7658, %v7429
        %v7691 = vsel %vm2806, %v7659, %v7431
        %v7692 = vsel %vm2806, %v7660, %v7433
        %v7693 = vsel %vm2806, %v7661, %v7435
        %v7694 = vsel %vm2806, %v7662, %v7437
        %v7695 = vsel %vm2806, %v7663, %v7439
        %s7696 = scalar_lea.vmem %s2, 144
        %v7697 = vld [vmem:[%s7696] sm:$0xf]
        %v7698 = vld [vmem:[%s7696 + $0x4] sm:$0xf]
        %v7699 = vld [vmem:[%s7696 + $0x8] sm:$0xf]
        %v7700 = vld [vmem:[%s7696 + $0xc] sm:$0xf]
        %v7701 = vld [vmem:[%s7696 + $0x10] sm:$0xf]
        %v7702 = vld [vmem:[%s7696 + $0x14] sm:$0xf]
        %v7703 = vld [vmem:[%s7696 + $0x18] sm:$0xf]
        %v7704 = vld [vmem:[%s7696 + $0x1c] sm:$0xf]
        %v7705 = vld [vmem:[%s7696 + $0x20] sm:$0xf]
        %v7706 = vld [vmem:[%s7696 + $0x24] sm:$0xf]
        %v7707 = vld [vmem:[%s7696 + $0x28] sm:$0xf]
        %v7708 = vld [vmem:[%s7696 + $0x2c] sm:$0xf]
        %v7709 = vld [vmem:[%s7696 + $0x30] sm:$0xf]
        %v7710 = vld [vmem:[%s7696 + $0x34] sm:$0xf]
        %v7711 = vld [vmem:[%s7696 + $0x38] sm:$0xf]
        %v7712 = vld [vmem:[%s7696 + $0x3c] sm:$0xf]
        %v7713 = vld [vmem:[%s7696 + $0x40] sm:$0xf]
        %v7714 = vld [vmem:[%s7696 + $0x44] sm:$0xf]
        %v7715 = vpack.c.bf16 %v7665, %v7664
        %v7716 = vpack.c.bf16 %v6673, %v6672
        %v7717 = vpack.c.bf16 %v7667, %v7666
        %v7718 = vpack.c.bf16 %v6675, %v6674
        %v7719 = vpack.c.bf16 %v7669, %v7668
        %v7720 = vpack.c.bf16 %v6677, %v6676
        %v7721 = vpack.c.bf16 %v7671, %v7670
        %v7722 = vpack.c.bf16 %v6679, %v6678
        %v7723 = vpack.c.bf16 %v7673, %v7672
        %v7724 = vpack.c.bf16 %v6681, %v6680
        %v7725 = vpack.c.bf16 %v7675, %v7674
        %v7726 = vpack.c.bf16 %v6683, %v6682
        %v7727 = vpack.c.bf16 %v7677, %v7676
        %v7728 = vpack.c.bf16 %v6685, %v6684
        %v7729 = vpack.c.bf16 %v7679, %v7678
        %v7730 = vpack.c.bf16 %v6687, %v6686
        %v7731 = vpack.c.bf16 %v7681, %v7680
        %v7732 = vpack.c.bf16 %v6689, %v6688
        %v7733 = vpack.c.bf16 %v7683, %v7682
        %v7734 = vpack.c.bf16 %v6691, %v6690
        %v7735 = vpack.c.bf16 %v7685, %v7684
        %v7736 = vpack.c.bf16 %v6693, %v6692
        %v7737 = vpack.c.bf16 %v7687, %v7686
        %v7738 = vpack.c.bf16 %v6695, %v6694
        %v7739 = vpack.c.bf16 %v7689, %v7688
        %v7740 = vpack.c.bf16 %v6697, %v6696
        %v7741 = vpack.c.bf16 %v7691, %v7690
        %v7742 = vpack.c.bf16 %v6699, %v6698
        %v7743 = vpack.c.bf16 %v7693, %v7692
        %v7744 = vpack.c.bf16 %v6701, %v6700
        %v7745 = vpack.c.bf16 %v7695, %v7694
        %v7746 = vpack.c.bf16 %v6703, %v6702
        %v7765 = vunpack.c.l.b16 %v7697
        %v7766 = vunpack.c.l.b16 %v7698
        %v7767 = vunpack.c.l.b16 %v7699
        %v7768 = vunpack.c.l.b16 %v7700
        %v7769 = vunpack.c.l.b16 %v7701
        %v7770 = vunpack.c.l.b16 %v7702
        %v7771 = vunpack.c.l.b16 %v7703
        %v7772 = vunpack.c.l.b16 %v7704
        %v7773 = vunpack.c.l.b16 %v7705
        %v7774 = vunpack.c.l.b16 %v7706
        %v7775 = vunpack.c.l.b16 %v7707
        %v7776 = vunpack.c.l.b16 %v7708
        %v7777 = vunpack.c.l.b16 %v7709
        %v7778 = vunpack.c.l.b16 %v7710
        %v7779 = vunpack.c.l.b16 %v7711
        %v7780 = vunpack.c.l.b16 %v7712
        %v7781 = vunpack.c.l.b16 %v7713
        %v7782 = vunpack.c.l.b16 %v7714
        %v7783 = vpack.c.b16 %v7766, %v7765
        %v7784 = vpack.c.b16 %v7768, %v7767
        %v7785 = vpack.c.b16 %v7770, %v7769
        %v7786 = vpack.c.b16 %v7772, %v7771
        %v7787 = vpack.c.b16 %v7774, %v7773
        %v7788 = vpack.c.b16 %v7776, %v7775
        %v7789 = vpack.c.b16 %v7778, %v7777
        %v7790 = vpack.c.b16 %v7780, %v7779
        %v7791 = vpack.c.b16 %v7782, %v7781
        %v7802 = vsel %vm309, %v7716, 0
        %v7805 = vsel %vm309, %v7718, 0
        %v7808 = vsel %vm309, %v7720, 0
        %v7811 = vsel %vm309, %v7722, 0
        %v7814 = vsel %vm309, %v7724, 0
        %v7817 = vsel %vm309, %v7726, 0
        %v7820 = vsel %vm309, %v7728, 0
        %v7823 = vsel %vm309, %v7730, 0
        %v7826 = vsel %vm309, %v7732, 0
        %v7829 = vsel %vm309, %v7734, 0
        %v7832 = vsel %vm309, %v7736, 0
        %v7835 = vsel %vm309, %v7738, 0
        %v7838 = vsel %vm309, %v7740, 0
        %v7841 = vsel %vm309, %v7742, 0
        %v7844 = vsel %vm309, %v7744, 0
        %v7847 = vsel %vm309, %v7746, 0
        %7849 = vmatprep.subr.bf16.mxu0 0
        %7850 = vmatpush1.bf16.msra.mxu0 %v7783
        %7851 = vmatprep.subr.bf16.mxu0 0
        %7852 = vmatpush1.bf16.msra.mxu0 %v7784
        %7853 = vmatprep.subr.bf16.mxu0 0
        %7854 = vmatpush1.bf16.msra.mxu0 %v7785
        %7855 = vmatprep.subr.bf16.mxu0 0
        %7856 = vmatpush1.bf16.msra.mxu0 %v7786
        %7857 = vmatprep.subr.bf16.mxu0 0
        %7858 = vmatpush1.bf16.msra.mxu0 %v7787
        %7859 = vmatprep.subr.bf16.mxu0 0
        %7860 = vmatpush1.bf16.msra.mxu0 %v7788
        %7861 = vmatprep.subr.bf16.mxu0 0
        %7862 = vmatpush1.bf16.msra.mxu0 %v7789
        %7863 = vmatprep.subr.bf16.mxu0 0
        %7864 = vmatpush1.bf16.msra.mxu0 %v7790
        %7865 = vmatprep.subr.bf16.mxu0 0
        %7866 = vmatpush1.bf16.msra.mxu0 %v7791
        %7867 = vmatprep.subr.bf16.mxu0 0
        %7868 = vmatpush1.bf16.msra.mxu0 0
        %7869 = vmatprep.subr.bf16.mxu0 0
        %7870 = vmatpush1.bf16.msra.mxu0 0
        %7871 = vmatprep.subr.bf16.mxu0 0
        %7872 = vmatpush1.bf16.msra.mxu0 0
        %7873 = vmatprep.subr.bf16.mxu0 0
        %7874 = vmatpush1.bf16.msra.mxu0 0
        %7875 = vmatprep.subr.bf16.mxu0 0
        %7876 = vmatpush1.bf16.msra.mxu0 0
        %7877 = vmatprep.subr.bf16.mxu0 0
        %7878 = vmatpush1.bf16.msra.mxu0 0
        %7879 = vmatprep.subr.bf16.mxu0 0
        %7880 = vmatpush1.bf16.msra.mxu0 0
        %7881 = vmatprep.mubr.bf16.mxu0 %v7802
        %7882 = vmatmul.mubr.bf16.gmra.mrb[0].mxu0 %v7715
        %v7883 = vpop.f32.mrb[0].mxu0
        %v7884 = vadd.f32 0.0, %v7883
        %v7885 = vpop.f32.mrb[0].mxu0
        %v7886 = vpop.f32.mrb[0].mxu0
        %v7887 = vadd.f32 0.0, %v7886
        %v7888 = vpop.f32.mrb[0].mxu0
        %7889 = vmatprep.mubr.bf16.mxu0 %v7805
        %7890 = vmatmul.mubr.bf16.gmra.mrb[0].mxu0 %v7717
        %v7891 = vpop.f32.mrb[0].mxu0
        %v7892 = vadd.f32 0.0, %v7891
        %v7893 = vpop.f32.mrb[0].mxu0
        %v7894 = vpop.f32.mrb[0].mxu0
        %v7895 = vadd.f32 0.0, %v7894
        %v7896 = vpop.f32.mrb[0].mxu0
        %7897 = vmatprep.mubr.bf16.mxu0 %v7808
        %7898 = vmatmul.mubr.bf16.gmra.mrb[0].mxu0 %v7719
        %v7899 = vpop.f32.mrb[0].mxu0
        %v7900 = vadd.f32 0.0, %v7899
        %v7901 = vpop.f32.mrb[0].mxu0
        %v7902 = vpop.f32.mrb[0].mxu0
        %v7903 = vadd.f32 0.0, %v7902
        %v7904 = vpop.f32.mrb[0].mxu0
        %7905 = vmatprep.mubr.bf16.mxu0 %v7811
        %7906 = vmatmul.mubr.bf16.gmra.mrb[0].mxu0 %v7721
        %v7907 = vpop.f32.mrb[0].mxu0
        %v7908 = vadd.f32 0.0, %v7907
        %v7909 = vpop.f32.mrb[0].mxu0
        %v7910 = vpop.f32.mrb[0].mxu0
        %v7911 = vadd.f32 0.0, %v7910
        %v7912 = vpop.f32.mrb[0].mxu0
        %7913 = vmatprep.mubr.bf16.mxu0 %v7814
        %7914 = vmatmul.mubr.bf16.gmra.mrb[0].mxu0 %v7723
        %v7915 = vpop.f32.mrb[0].mxu0
        %v7916 = vadd.f32 0.0, %v7915
        %v7917 = vpop.f32.mrb[0].mxu0
        %v7918 = vpop.f32.mrb[0].mxu0
        %v7919 = vadd.f32 0.0, %v7918
        %v7920 = vpop.f32.mrb[0].mxu0
        %7921 = vmatprep.mubr.bf16.mxu0 %v7817
        %7922 = vmatmul.mubr.bf16.gmra.mrb[0].mxu0 %v7725
        %v7923 = vpop.f32.mrb[0].mxu0
        %v7924 = vadd.f32 0.0, %v7923
        %v7925 = vpop.f32.mrb[0].mxu0
        %v7926 = vpop.f32.mrb[0].mxu0
        %v7927 = vadd.f32 0.0, %v7926
        %v7928 = vpop.f32.mrb[0].mxu0
        %7929 = vmatprep.mubr.bf16.mxu0 %v7820
        %7930 = vmatmul.mubr.bf16.gmra.mrb[0].mxu0 %v7727
        %v7931 = vpop.f32.mrb[0].mxu0
        %v7932 = vadd.f32 0.0, %v7931
        %v7933 = vpop.f32.mrb[0].mxu0
        %v7934 = vpop.f32.mrb[0].mxu0
        %v7935 = vadd.f32 0.0, %v7934
        %v7936 = vpop.f32.mrb[0].mxu0
        %7937 = vmatprep.mubr.bf16.mxu0 %v7823
        %7938 = vmatmul.mubr.bf16.gmra.mrb[0].mxu0 %v7729
        %v7939 = vpop.f32.mrb[0].mxu0
        %v7940 = vadd.f32 0.0, %v7939
        %v7941 = vpop.f32.mrb[0].mxu0
        %v7942 = vpop.f32.mrb[0].mxu0
        %v7943 = vadd.f32 0.0, %v7942
        %v7944 = vpop.f32.mrb[0].mxu0
        %7945 = vmatprep.mubr.bf16.mxu0 %v7826
        %7946 = vmatmul.mubr.bf16.gmra.mrb[0].mxu0 %v7731
        %v7947 = vpop.f32.mrb[0].mxu0
        %v7948 = vadd.f32 0.0, %v7947
        %v7949 = vpop.f32.mrb[0].mxu0
        %v7950 = vpop.f32.mrb[0].mxu0
        %v7951 = vadd.f32 0.0, %v7950
        %v7952 = vpop.f32.mrb[0].mxu0
        %7953 = vmatprep.mubr.bf16.mxu0 %v7829
        %7954 = vmatmul.mubr.bf16.gmra.mrb[0].mxu0 %v7733
        %v7955 = vpop.f32.mrb[0].mxu0
        %v7956 = vadd.f32 0.0, %v7955
        %v7957 = vpop.f32.mrb[0].mxu0
        %v7958 = vpop.f32.mrb[0].mxu0
        %v7959 = vadd.f32 0.0, %v7958
        %v7960 = vpop.f32.mrb[0].mxu0
        %7961 = vmatprep.mubr.bf16.mxu0 %v7832
        %7962 = vmatmul.mubr.bf16.gmra.mrb[0].mxu0 %v7735
        %v7963 = vpop.f32.mrb[0].mxu0
        %v7964 = vadd.f32 0.0, %v7963
        %v7965 = vpop.f32.mrb[0].mxu0
        %v7966 = vpop.f32.mrb[0].mxu0
        %v7967 = vadd.f32 0.0, %v7966
        %v7968 = vpop.f32.mrb[0].mxu0
        %7969 = vmatprep.mubr.bf16.mxu0 %v7835
        %7970 = vmatmul.mubr.bf16.gmra.mrb[0].mxu0 %v7737
        %v7971 = vpop.f32.mrb[0].mxu0
        %v7972 = vadd.f32 0.0, %v7971
        %v7973 = vpop.f32.mrb[0].mxu0
        %v7974 = vpop.f32.mrb[0].mxu0
        %v7975 = vadd.f32 0.0, %v7974
        %v7976 = vpop.f32.mrb[0].mxu0
        %7977 = vmatprep.mubr.bf16.mxu0 %v7838
        %7978 = vmatmul.mubr.bf16.gmra.mrb[0].mxu0 %v7739
        %v7979 = vpop.f32.mrb[0].mxu0
        %v7980 = vadd.f32 0.0, %v7979
        %v7981 = vpop.f32.mrb[0].mxu0
        %v7982 = vpop.f32.mrb[0].mxu0
        %v7983 = vadd.f32 0.0, %v7982
        %v7984 = vpop.f32.mrb[0].mxu0
        %7985 = vmatprep.mubr.bf16.mxu0 %v7841
        %7986 = vmatmul.mubr.bf16.gmra.mrb[0].mxu0 %v7741
        %v7987 = vpop.f32.mrb[0].mxu0
        %v7988 = vadd.f32 0.0, %v7987
        %v7989 = vpop.f32.mrb[0].mxu0
        %v7990 = vpop.f32.mrb[0].mxu0
        %v7991 = vadd.f32 0.0, %v7990
        %v7992 = vpop.f32.mrb[0].mxu0
        %7993 = vmatprep.mubr.bf16.mxu0 %v7844
        %7994 = vmatmul.mubr.bf16.gmra.mrb[0].mxu0 %v7743
        %v7995 = vpop.f32.mrb[0].mxu0
        %v7996 = vadd.f32 0.0, %v7995
        %v7997 = vpop.f32.mrb[0].mxu0
        %v7998 = vpop.f32.mrb[0].mxu0
        %v7999 = vadd.f32 0.0, %v7998
        %v8000 = vpop.f32.mrb[0].mxu0
        %8001 = vmatprep.mubr.bf16.mxu0 %v7847
        %8002 = vmatmul.mubr.bf16.gmra.mrb[0].mxu0 %v7745
        %v8003 = vpop.f32.mrb[0].mxu0
        %v8004 = vadd.f32 0.0, %v8003
        %v8005 = vpop.f32.mrb[0].mxu0
        %v8006 = vpop.f32.mrb[0].mxu0
        %v8007 = vadd.f32 0.0, %v8006
        %v8008 = vpop.f32.mrb[0].mxu0
        %8009 = vdwg.mxu0
        %v8010 = vsel %vm904, %v7884, 0.0
        %v8011 = vsel %vm904, %v7887, 0.0
        %v8012 = vadd.f32 %v8010, %v8011
        %v8013 = vsel %vm904, %v7892, 0.0
        %v8014 = vadd.f32 %v8012, %v8013
        %v8015 = vsel %vm904, %v7895, 0.0
        %v8016 = vadd.f32 %v8014, %v8015
        %v8017 = vsel %vm904, %v7900, 0.0
        %v8018 = vadd.f32 %v8016, %v8017
        %v8019 = vsel %vm904, %v7903, 0.0
        %v8020 = vadd.f32 %v8018, %v8019
        %v8021 = vsel %vm904, %v7908, 0.0
        %v8022 = vadd.f32 %v8020, %v8021
        %v8023 = vsel %vm904, %v7911, 0.0
        %v8024 = vadd.f32 %v8022, %v8023
        %v8025 = vsel %vm904, %v7916, 0.0
        %v8026 = vadd.f32 %v8024, %v8025
        %v8027 = vsel %vm904, %v7919, 0.0
        %v8028 = vadd.f32 %v8026, %v8027
        %v8029 = vsel %vm904, %v7924, 0.0
        %v8030 = vadd.f32 %v8028, %v8029
        %v8031 = vsel %vm904, %v7927, 0.0
        %v8032 = vadd.f32 %v8030, %v8031
        %v8033 = vsel %vm904, %v7932, 0.0
        %v8034 = vadd.f32 %v8032, %v8033
        %v8035 = vsel %vm904, %v7935, 0.0
        %v8036 = vadd.f32 %v8034, %v8035
        %v8037 = vsel %vm904, %v7940, 0.0
        %v8038 = vadd.f32 %v8036, %v8037
        %v8039 = vsel %vm904, %v7943, 0.0
        %v8040 = vadd.f32 %v8038, %v8039
        %v8041 = vsel %vm904, %v7948, 0.0
        %v8042 = vadd.f32 %v8040, %v8041
        %v8043 = vsel %vm904, %v7951, 0.0
        %v8044 = vadd.f32 %v8042, %v8043
        %v8045 = vsel %vm904, %v7956, 0.0
        %v8046 = vadd.f32 %v8044, %v8045
        %v8047 = vsel %vm904, %v7959, 0.0
        %v8048 = vadd.f32 %v8046, %v8047
        %v8049 = vsel %vm904, %v7964, 0.0
        %v8050 = vadd.f32 %v8048, %v8049
        %v8051 = vsel %vm904, %v7967, 0.0
        %v8052 = vadd.f32 %v8050, %v8051
        %v8053 = vsel %vm904, %v7972, 0.0
        %v8054 = vadd.f32 %v8052, %v8053
        %v8055 = vsel %vm904, %v7975, 0.0
        %v8056 = vadd.f32 %v8054, %v8055
        %v8057 = vsel %vm904, %v7980, 0.0
        %v8058 = vadd.f32 %v8056, %v8057
        %v8059 = vsel %vm904, %v7983, 0.0
        %v8060 = vadd.f32 %v8058, %v8059
        %v8061 = vsel %vm904, %v7988, 0.0
        %v8062 = vadd.f32 %v8060, %v8061
        %v8063 = vsel %vm904, %v7991, 0.0
        %v8064 = vadd.f32 %v8062, %v8063
        %v8065 = vsel %vm904, %v7996, 0.0
        %v8066 = vadd.f32 %v8064, %v8065
        %v8067 = vsel %vm904, %v7999, 0.0
        %v8068 = vadd.f32 %v8066, %v8067
        %v8069 = vsel %vm904, %v8004, 0.0
        %v8070 = vadd.f32 %v8068, %v8069
        %v8071 = vsel %vm904, %v8007, 0.0
        %v8072 = vadd.f32 %v8070, %v8071
        %v8073 = vrot.slane %v8072, 4
        %v8074 = vadd.f32 %v8072, %v8073
        %v8075 = vrot.slane %v8074, 2
        %v8076 = vadd.f32 %v8074, %v8075
        %v8077 = vrot.slane %v8076, 1
        %v8078 = vadd.f32 %v8076, %v8077
        %v8080 = vsel %vm904, %v8078, 0
        %8082 = vmatprep.subr.mxu0 0.0
        %8083 = vmatpush1.msra.mxu0 %v305
        %8084 = vmatprep.subr.mxu0 0.0
        %8085 = vmatpush1.msra.mxu0 %v306
        %8086 = vmatprep.subr.mxu0 0.0
        %8087 = vmatpush1.msra.mxu0 %v307
        %8088 = vmatprep.subr.mxu0 0.0
        %8089 = vmatpush1.msra.mxu0 %v308
        %8090 = vmatprep.subr.mxu0 0.0
        %8091 = vmatpush1.msra.mxu0 0.0
        %8092 = vmatprep.subr.mxu0 0.0
        %8093 = vmatpush1.msra.mxu0 0.0
        %8094 = vmatprep.subr.mxu0 0.0
        %8095 = vmatpush1.msra.mxu0 0.0
        %8096 = vmatprep.subr.mxu0 0.0
        %8097 = vmatpush1.msra.mxu0 0.0
        %8098 = vmatprep.subr.mxu0 0.0
        %8099 = vmatpush1.msra.mxu0 0.0
        %8100 = vmatprep.subr.mxu0 0.0
        %8101 = vmatpush1.msra.mxu0 0.0
        %8102 = vmatprep.subr.mxu0 0.0
        %8103 = vmatpush1.msra.mxu0 0.0
        %8104 = vmatprep.subr.mxu0 0.0
        %8105 = vmatpush1.msra.mxu0 0.0
        %8106 = vmatprep.subr.mxu0 0.0
        %8107 = vmatpush1.msra.mxu0 0.0
        %8108 = vmatprep.subr.mxu0 0.0
        %8109 = vmatpush1.msra.mxu0 0.0
        %8110 = vmatprep.subr.mxu0 0.0
        %8111 = vmatpush1.msra.mxu0 0.0
        %8112 = vmatprep.subr.mxu0 0.0
        %8113 = vmatpush1.msra.mxu0 0.0
        %8114 = vmatprep.subr.mxu0 0.0
        %8115 = vmatpush1.msra.mxu0 0.0
        %8116 = vmatprep.subr.mxu0 0.0
        %8117 = vmatpush1.msra.mxu0 0.0
        %8118 = vmatprep.subr.mxu0 0.0
        %8119 = vmatpush1.msra.mxu0 0.0
        %8120 = vmatprep.subr.mxu0 0.0
        %8121 = vmatpush1.msra.mxu0 0.0
        %8122 = vmatprep.subr.mxu0 0.0
        %8123 = vmatpush1.msra.mxu0 0.0
        %8124 = vmatprep.subr.mxu0 0.0
        %8125 = vmatpush1.msra.mxu0 0.0
        %8126 = vmatprep.subr.mxu0 0.0
        %8127 = vmatpush1.msra.mxu0 0.0
        %8128 = vmatprep.subr.mxu0 0.0
        %8129 = vmatpush1.msra.mxu0 0.0
        %8130 = vmatprep.subr.mxu0 0.0
        %8131 = vmatpush1.msra.mxu0 0.0
        %8132 = vmatprep.subr.mxu0 0.0
        %8133 = vmatpush1.msra.mxu0 0.0
        %8134 = vmatprep.subr.mxu0 0.0
        %8135 = vmatpush1.msra.mxu0 0.0
        %8136 = vmatprep.subr.mxu0 0.0
        %8137 = vmatpush1.msra.mxu0 0.0
        %8138 = vmatprep.subr.mxu0 0.0
        %8139 = vmatpush1.msra.mxu0 0.0
        %8140 = vmatprep.subr.mxu0 0.0
        %8141 = vmatpush1.msra.mxu0 0.0
        %8142 = vmatprep.subr.mxu0 0.0
        %8143 = vmatpush1.msra.mxu0 0.0
        %8144 = vmatprep.subr.mxu0 0.0
        %8145 = vmatpush1.msra.mxu0 0.0
        %8146 = vmatprep.mubr.f32.mxu0 0.0
        %8147 = vmatmul.mubr.f32.gmra.mrb[0].mxu0 %v8080
        %v8148 = vpop.f32.mrb[0].mxu0
        %v8149 = vadd.f32 0.0, %v8148
        %v8150 = vpop.f32.mrb[0].mxu0
        %8151 = vdwg.mxu0
        %v8152 = vmul.f32 %v8149, %v1047
        %v8153 = vlaneseq
        %v8154 = vshrl.u32 %v8153, 7
        %v8155 = vsub.s32 0, %v8154
        %v8156 = vrot.slane %v8152, %v8155
        %v8157 = vsub.f32 %v7884, %v8156
        %v8158 = vsub.f32 %v7887, %v8156
        %v8159 = vsub.f32 %v7892, %v8156
        %v8160 = vsub.f32 %v7895, %v8156
        %v8161 = vsub.f32 %v7900, %v8156
        %v8162 = vsub.f32 %v7903, %v8156
        %v8163 = vsub.f32 %v7908, %v8156
        %v8164 = vsub.f32 %v7911, %v8156
        %v8165 = vsub.f32 %v7916, %v8156
        %v8166 = vsub.f32 %v7919, %v8156
        %v8167 = vsub.f32 %v7924, %v8156
        %v8168 = vsub.f32 %v7927, %v8156
        %v8169 = vsub.f32 %v7932, %v8156
        %v8170 = vsub.f32 %v7935, %v8156
        %v8171 = vsub.f32 %v7940, %v8156
        %v8172 = vsub.f32 %v7943, %v8156
        %v8173 = vsub.f32 %v7948, %v8156
        %v8174 = vsub.f32 %v7951, %v8156
        %v8175 = vsub.f32 %v7956, %v8156
        %v8176 = vsub.f32 %v7959, %v8156
        %v8177 = vsub.f32 %v7964, %v8156
        %v8178 = vsub.f32 %v7967, %v8156
        %v8179 = vsub.f32 %v7972, %v8156
        %v8180 = vsub.f32 %v7975, %v8156
        %v8181 = vsub.f32 %v7980, %v8156
        %v8182 = vsub.f32 %v7983, %v8156
        %v8183 = vsub.f32 %v7988, %v8156
        %v8184 = vsub.f32 %v7991, %v8156
        %v8185 = vsub.f32 %v7996, %v8156
        %v8186 = vsub.f32 %v7999, %v8156
        %v8187 = vsub.f32 %v8004, %v8156
        %v8188 = vsub.f32 %v8007, %v8156
        %v8189 = vmul.f32 %v8157, %v8157
        %v8190 = vmul.f32 %v8158, %v8158
        %v8191 = vmul.f32 %v8159, %v8159
        %v8192 = vmul.f32 %v8160, %v8160
        %v8193 = vmul.f32 %v8161, %v8161
        %v8194 = vmul.f32 %v8162, %v8162
        %v8195 = vmul.f32 %v8163, %v8163
        %v8196 = vmul.f32 %v8164, %v8164
        %v8197 = vmul.f32 %v8165, %v8165
        %v8198 = vmul.f32 %v8166, %v8166
        %v8199 = vmul.f32 %v8167, %v8167
        %v8200 = vmul.f32 %v8168, %v8168
        %v8201 = vmul.f32 %v8169, %v8169
        %v8202 = vmul.f32 %v8170, %v8170
        %v8203 = vmul.f32 %v8171, %v8171
        %v8204 = vmul.f32 %v8172, %v8172
        %v8205 = vmul.f32 %v8173, %v8173
        %v8206 = vmul.f32 %v8174, %v8174
        %v8207 = vmul.f32 %v8175, %v8175
        %v8208 = vmul.f32 %v8176, %v8176
        %v8209 = vmul.f32 %v8177, %v8177
        %v8210 = vmul.f32 %v8178, %v8178
        %v8211 = vmul.f32 %v8179, %v8179
        %v8212 = vmul.f32 %v8180, %v8180
        %v8213 = vmul.f32 %v8181, %v8181
        %v8214 = vmul.f32 %v8182, %v8182
        %v8215 = vmul.f32 %v8183, %v8183
        %v8216 = vmul.f32 %v8184, %v8184
        %v8217 = vmul.f32 %v8185, %v8185
        %v8218 = vmul.f32 %v8186, %v8186
        %v8219 = vmul.f32 %v8187, %v8187
        %v8220 = vmul.f32 %v8188, %v8188
        %v8221 = vsel %vm904, %v8189, 0.0
        %v8222 = vsel %vm904, %v8190, 0.0
        %v8223 = vadd.f32 %v8221, %v8222
        %v8224 = vsel %vm904, %v8191, 0.0
        %v8225 = vadd.f32 %v8223, %v8224
        %v8226 = vsel %vm904, %v8192, 0.0
        %v8227 = vadd.f32 %v8225, %v8226
        %v8228 = vsel %vm904, %v8193, 0.0
        %v8229 = vadd.f32 %v8227, %v8228
        %v8230 = vsel %vm904, %v8194, 0.0
        %v8231 = vadd.f32 %v8229, %v8230
        %v8232 = vsel %vm904, %v8195, 0.0
        %v8233 = vadd.f32 %v8231, %v8232
        %v8234 = vsel %vm904, %v8196, 0.0
        %v8235 = vadd.f32 %v8233, %v8234
        %v8236 = vsel %vm904, %v8197, 0.0
        %v8237 = vadd.f32 %v8235, %v8236
        %v8238 = vsel %vm904, %v8198, 0.0
        %v8239 = vadd.f32 %v8237, %v8238
        %v8240 = vsel %vm904, %v8199, 0.0
        %v8241 = vadd.f32 %v8239, %v8240
        %v8242 = vsel %vm904, %v8200, 0.0
        %v8243 = vadd.f32 %v8241, %v8242
        %v8244 = vsel %vm904, %v8201, 0.0
        %v8245 = vadd.f32 %v8243, %v8244
        %v8246 = vsel %vm904, %v8202, 0.0
        %v8247 = vadd.f32 %v8245, %v8246
        %v8248 = vsel %vm904, %v8203, 0.0
        %v8249 = vadd.f32 %v8247, %v8248
        %v8250 = vsel %vm904, %v8204, 0.0
        %v8251 = vadd.f32 %v8249, %v8250
        %v8252 = vsel %vm904, %v8205, 0.0
        %v8253 = vadd.f32 %v8251, %v8252
        %v8254 = vsel %vm904, %v8206, 0.0
        %v8255 = vadd.f32 %v8253, %v8254
        %v8256 = vsel %vm904, %v8207, 0.0
        %v8257 = vadd.f32 %v8255, %v8256
        %v8258 = vsel %vm904, %v8208, 0.0
        %v8259 = vadd.f32 %v8257, %v8258
        %v8260 = vsel %vm904, %v8209, 0.0
        %v8261 = vadd.f32 %v8259, %v8260
        %v8262 = vsel %vm904, %v8210, 0.0
        %v8263 = vadd.f32 %v8261, %v8262
        %v8264 = vsel %vm904, %v8211, 0.0
        %v8265 = vadd.f32 %v8263, %v8264
        %v8266 = vsel %vm904, %v8212, 0.0
        %v8267 = vadd.f32 %v8265, %v8266
        %v8268 = vsel %vm904, %v8213, 0.0
        %v8269 = vadd.f32 %v8267, %v8268
        %v8270 = vsel %vm904, %v8214, 0.0
        %v8271 = vadd.f32 %v8269, %v8270
        %v8272 = vsel %vm904, %v8215, 0.0
        %v8273 = vadd.f32 %v8271, %v8272
        %v8274 = vsel %vm904, %v8216, 0.0
        %v8275 = vadd.f32 %v8273, %v8274
        %v8276 = vsel %vm904, %v8217, 0.0
        %v8277 = vadd.f32 %v8275, %v8276
        %v8278 = vsel %vm904, %v8218, 0.0
        %v8279 = vadd.f32 %v8277, %v8278
        %v8280 = vsel %vm904, %v8219, 0.0
        %v8281 = vadd.f32 %v8279, %v8280
        %v8282 = vsel %vm904, %v8220, 0.0
        %v8283 = vadd.f32 %v8281, %v8282
        %v8284 = vrot.slane %v8283, 4
        %v8285 = vadd.f32 %v8283, %v8284
        %v8286 = vrot.slane %v8285, 2
        %v8287 = vadd.f32 %v8285, %v8286
        %v8288 = vrot.slane %v8287, 1
        %v8289 = vadd.f32 %v8287, %v8288
        %v8291 = vsel %vm904, %v8289, 0
        %8293 = vmatprep.subr.mxu0 0.0
        %8294 = vmatpush1.msra.mxu0 %v305
        %8295 = vmatprep.subr.mxu0 0.0
        %8296 = vmatpush1.msra.mxu0 %v306
        %8297 = vmatprep.subr.mxu0 0.0
        %8298 = vmatpush1.msra.mxu0 %v307
        %8299 = vmatprep.subr.mxu0 0.0
        %8300 = vmatpush1.msra.mxu0 %v308
        %8301 = vmatprep.subr.mxu0 0.0
        %8302 = vmatpush1.msra.mxu0 0.0
        %8303 = vmatprep.subr.mxu0 0.0
        %8304 = vmatpush1.msra.mxu0 0.0
        %8305 = vmatprep.subr.mxu0 0.0
        %8306 = vmatpush1.msra.mxu0 0.0
        %8307 = vmatprep.subr.mxu0 0.0
        %8308 = vmatpush1.msra.mxu0 0.0
        %8309 = vmatprep.subr.mxu0 0.0
        %8310 = vmatpush1.msra.mxu0 0.0
        %8311 = vmatprep.subr.mxu0 0.0
        %8312 = vmatpush1.msra.mxu0 0.0
        %8313 = vmatprep.subr.mxu0 0.0
        %8314 = vmatpush1.msra.mxu0 0.0
        %8315 = vmatprep.subr.mxu0 0.0
        %8316 = vmatpush1.msra.mxu0 0.0
        %8317 = vmatprep.subr.mxu0 0.0
        %8318 = vmatpush1.msra.mxu0 0.0
        %8319 = vmatprep.subr.mxu0 0.0
        %8320 = vmatpush1.msra.mxu0 0.0
        %8321 = vmatprep.subr.mxu0 0.0
        %8322 = vmatpush1.msra.mxu0 0.0
        %8323 = vmatprep.subr.mxu0 0.0
        %8324 = vmatpush1.msra.mxu0 0.0
        %8325 = vmatprep.subr.mxu0 0.0
        %8326 = vmatpush1.msra.mxu0 0.0
        %8327 = vmatprep.subr.mxu0 0.0
        %8328 = vmatpush1.msra.mxu0 0.0
        %8329 = vmatprep.subr.mxu0 0.0
        %8330 = vmatpush1.msra.mxu0 0.0
        %8331 = vmatprep.subr.mxu0 0.0
        %8332 = vmatpush1.msra.mxu0 0.0
        %8333 = vmatprep.subr.mxu0 0.0
        %8334 = vmatpush1.msra.mxu0 0.0
        %8335 = vmatprep.subr.mxu0 0.0
        %8336 = vmatpush1.msra.mxu0 0.0
        %8337 = vmatprep.subr.mxu0 0.0
        %8338 = vmatpush1.msra.mxu0 0.0
        %8339 = vmatprep.subr.mxu0 0.0
        %8340 = vmatpush1.msra.mxu0 0.0
        %8341 = vmatprep.subr.mxu0 0.0
        %8342 = vmatpush1.msra.mxu0 0.0
        %8343 = vmatprep.subr.mxu0 0.0
        %8344 = vmatpush1.msra.mxu0 0.0
        %8345 = vmatprep.subr.mxu0 0.0
        %8346 = vmatpush1.msra.mxu0 0.0
        %8347 = vmatprep.subr.mxu0 0.0
        %8348 = vmatpush1.msra.mxu0 0.0
        %8349 = vmatprep.subr.mxu0 0.0
        %8350 = vmatpush1.msra.mxu0 0.0
        %8351 = vmatprep.subr.mxu0 0.0
        %8352 = vmatpush1.msra.mxu0 0.0
        %8353 = vmatprep.subr.mxu0 0.0
        %8354 = vmatpush1.msra.mxu0 0.0
        %8355 = vmatprep.subr.mxu0 0.0
        %8356 = vmatpush1.msra.mxu0 0.0
        %8357 = vmatprep.mubr.f32.mxu0 0.0
        %8358 = vmatmul.mubr.f32.gmra.mrb[0].mxu0 %v8291
        %v8359 = vpop.f32.mrb[0].mxu0
        %v8360 = vadd.f32 0.0, %v8359
        %v8361 = vpop.f32.mrb[0].mxu0
        %8362 = vdwg.mxu0
        %v8363 = vmul.f32 %v8360, %v1047
        %v8364 = vadd.f32 %v8363, 1e-05
        %v8365 = vrsqrt.pop %v8364
        %v8366 = vld [vmem:[%s5 + $0x3] sm:$0x1]
        %v8367 = vld [vmem:[%s6 + $0x3] sm:$0x1]
        %v8368 = vlaneseq
        %v8369 = vshrl.u32 %v8368, 7
        %v8370 = vsub.s32 0, %v8369
        %v8371 = vrot.slane %v8365, %v8370
        %v8372 = vmul.f32 %v8157, %v8371
        %v8373 = vmul.f32 %v8158, %v8371
        %v8374 = vmul.f32 %v8159, %v8371
        %v8375 = vmul.f32 %v8160, %v8371
        %v8376 = vmul.f32 %v8161, %v8371
        %v8377 = vmul.f32 %v8162, %v8371
        %v8378 = vmul.f32 %v8163, %v8371
        %v8379 = vmul.f32 %v8164, %v8371
        %v8380 = vmul.f32 %v8165, %v8371
        %v8381 = vmul.f32 %v8166, %v8371
        %v8382 = vmul.f32 %v8167, %v8371
        %v8383 = vmul.f32 %v8168, %v8371
        %v8384 = vmul.f32 %v8169, %v8371
        %v8385 = vmul.f32 %v8170, %v8371
        %v8386 = vmul.f32 %v8171, %v8371
        %v8387 = vmul.f32 %v8172, %v8371
        %v8388 = vmul.f32 %v8173, %v8371
        %v8389 = vmul.f32 %v8174, %v8371
        %v8390 = vmul.f32 %v8175, %v8371
        %v8391 = vmul.f32 %v8176, %v8371
        %v8392 = vmul.f32 %v8177, %v8371
        %v8393 = vmul.f32 %v8178, %v8371
        %v8394 = vmul.f32 %v8179, %v8371
        %v8395 = vmul.f32 %v8180, %v8371
        %v8396 = vmul.f32 %v8181, %v8371
        %v8397 = vmul.f32 %v8182, %v8371
        %v8398 = vmul.f32 %v8183, %v8371
        %v8399 = vmul.f32 %v8184, %v8371
        %v8400 = vmul.f32 %v8185, %v8371
        %v8401 = vmul.f32 %v8186, %v8371
        %v8402 = vmul.f32 %v8187, %v8371
        %v8403 = vmul.f32 %v8188, %v8371
        %v8404 = vlaneseq
        %v8405 = vshrl.u32 %v8404, 7
        %v8406 = vsub.s32 0, %v8405
        %v8407 = vrot.slane %v8366, %v8406
        %v8408 = vmul.f32 %v8372, %v8407
        %v8409 = vmul.f32 %v8373, %v8407
        %v8410 = vmul.f32 %v8374, %v8407
        %v8411 = vmul.f32 %v8375, %v8407
        %v8412 = vmul.f32 %v8376, %v8407
        %v8413 = vmul.f32 %v8377, %v8407
        %v8414 = vmul.f32 %v8378, %v8407
        %v8415 = vmul.f32 %v8379, %v8407
        %v8416 = vmul.f32 %v8380, %v8407
        %v8417 = vmul.f32 %v8381, %v8407
        %v8418 = vmul.f32 %v8382, %v8407
        %v8419 = vmul.f32 %v8383, %v8407
        %v8420 = vmul.f32 %v8384, %v8407
        %v8421 = vmul.f32 %v8385, %v8407
        %v8422 = vmul.f32 %v8386, %v8407
        %v8423 = vmul.f32 %v8387, %v8407
        %v8424 = vmul.f32 %v8388, %v8407
        %v8425 = vmul.f32 %v8389, %v8407
        %v8426 = vmul.f32 %v8390, %v8407
        %v8427 = vmul.f32 %v8391, %v8407
        %v8428 = vmul.f32 %v8392, %v8407
        %v8429 = vmul.f32 %v8393, %v8407
        %v8430 = vmul.f32 %v8394, %v8407
        %v8431 = vmul.f32 %v8395, %v8407
        %v8432 = vmul.f32 %v8396, %v8407
        %v8433 = vmul.f32 %v8397, %v8407
        %v8434 = vmul.f32 %v8398, %v8407
        %v8435 = vmul.f32 %v8399, %v8407
        %v8436 = vmul.f32 %v8400, %v8407
        %v8437 = vmul.f32 %v8401, %v8407
        %v8438 = vmul.f32 %v8402, %v8407
        %v8439 = vmul.f32 %v8403, %v8407
        %v8440 = vlaneseq
        %v8441 = vshrl.u32 %v8440, 7
        %v8442 = vsub.s32 0, %v8441
        %v8443 = vrot.slane %v8367, %v8442
        %v8444 = vadd.f32 %v8408, %v8443
        %v8445 = vadd.f32 %v8409, %v8443
        %v8446 = vadd.f32 %v8410, %v8443
        %v8447 = vadd.f32 %v8411, %v8443
        %v8448 = vadd.f32 %v8412, %v8443
        %v8449 = vadd.f32 %v8413, %v8443
        %v8450 = vadd.f32 %v8414, %v8443
        %v8451 = vadd.f32 %v8415, %v8443
        %v8452 = vadd.f32 %v8416, %v8443
        %v8453 = vadd.f32 %v8417, %v8443
        %v8454 = vadd.f32 %v8418, %v8443
        %v8455 = vadd.f32 %v8419, %v8443
        %v8456 = vadd.f32 %v8420, %v8443
        %v8457 = vadd.f32 %v8421, %v8443
        %v8458 = vadd.f32 %v8422, %v8443
        %v8459 = vadd.f32 %v8423, %v8443
        %v8460 = vadd.f32 %v8424, %v8443
        %v8461 = vadd.f32 %v8425, %v8443
        %v8462 = vadd.f32 %v8426, %v8443
        %v8463 = vadd.f32 %v8427, %v8443
        %v8464 = vadd.f32 %v8428, %v8443
        %v8465 = vadd.f32 %v8429, %v8443
        %v8466 = vadd.f32 %v8430, %v8443
        %v8467 = vadd.f32 %v8431, %v8443
        %v8468 = vadd.f32 %v8432, %v8443
        %v8469 = vadd.f32 %v8433, %v8443
        %v8470 = vadd.f32 %v8434, %v8443
        %v8471 = vadd.f32 %v8435, %v8443
        %v8472 = vadd.f32 %v8436, %v8443
        %v8473 = vadd.f32 %v8437, %v8443
        %v8474 = vadd.f32 %v8438, %v8443
        %v8475 = vadd.f32 %v8439, %v8443
        %v8476 = vmax.f32 %v8444, 0.0
        %v8477 = vmax.f32 %v8445, 0.0
        %v8478 = vmax.f32 %v8446, 0.0
        %v8479 = vmax.f32 %v8447, 0.0
        %v8480 = vmax.f32 %v8448, 0.0
        %v8481 = vmax.f32 %v8449, 0.0
        %v8482 = vmax.f32 %v8450, 0.0
        %v8483 = vmax.f32 %v8451, 0.0
        %v8484 = vmax.f32 %v8452, 0.0
        %v8485 = vmax.f32 %v8453, 0.0
        %v8486 = vmax.f32 %v8454, 0.0
        %v8487 = vmax.f32 %v8455, 0.0
        %v8488 = vmax.f32 %v8456, 0.0
        %v8489 = vmax.f32 %v8457, 0.0
        %v8490 = vmax.f32 %v8458, 0.0
        %v8491 = vmax.f32 %v8459, 0.0
        %v8492 = vmax.f32 %v8460, 0.0
        %v8493 = vmax.f32 %v8461, 0.0
        %v8494 = vmax.f32 %v8462, 0.0
        %v8495 = vmax.f32 %v8463, 0.0
        %v8496 = vmax.f32 %v8464, 0.0
        %v8497 = vmax.f32 %v8465, 0.0
        %v8498 = vmax.f32 %v8466, 0.0
        %v8499 = vmax.f32 %v8467, 0.0
        %v8500 = vmax.f32 %v8468, 0.0
        %v8501 = vmax.f32 %v8469, 0.0
        %v8502 = vmax.f32 %v8470, 0.0
        %v8503 = vmax.f32 %v8471, 0.0
        %v8504 = vmax.f32 %v8472, 0.0
        %v8505 = vmax.f32 %v8473, 0.0
        %v8506 = vmax.f32 %v8474, 0.0
        %v8507 = vmax.f32 %v8475, 0.0
        %v8508 = vld [vmem:[%s4 + $0x30] sm:$0xf]
        %v8509 = vld [vmem:[%s4 + $0x34] sm:$0xf]
        %v8510 = vld [vmem:[%s4 + $0x38] sm:$0xf]
        %v8511 = vld [vmem:[%s4 + $0x3c] sm:$0xf]
        %v8512 = vpack.c.bf16 %v8477, %v8476
        %v8513 = vpack.c.bf16 %v8479, %v8478
        %v8514 = vpack.c.bf16 %v8481, %v8480
        %v8515 = vpack.c.bf16 %v8483, %v8482
        %v8516 = vpack.c.bf16 %v8485, %v8484
        %v8517 = vpack.c.bf16 %v8487, %v8486
        %v8518 = vpack.c.bf16 %v8489, %v8488
        %v8519 = vpack.c.bf16 %v8491, %v8490
        %v8520 = vpack.c.bf16 %v8493, %v8492
        %v8521 = vpack.c.bf16 %v8495, %v8494
        %v8522 = vpack.c.bf16 %v8497, %v8496
        %v8523 = vpack.c.bf16 %v8499, %v8498
        %v8524 = vpack.c.bf16 %v8501, %v8500
        %v8525 = vpack.c.bf16 %v8503, %v8502
        %v8526 = vpack.c.bf16 %v8505, %v8504
        %v8527 = vpack.c.bf16 %v8507, %v8506
        %v8532 = vunpack.c.l.b16 %v8508
        %v8533 = vunpack.c.l.b16 %v8509
        %v8534 = vunpack.c.l.b16 %v8510
        %v8535 = vunpack.c.l.b16 %v8511
        %v8536 = vpack.c.b16 %v8533, %v8532
        %v8537 = vpack.c.b16 %v8535, %v8534
        %v8541 = vsel %vm904, %v8512, 0
        %v8544 = vsel %vm904, %v8513, 0
        %v8547 = vsel %vm904, %v8514, 0
        %v8550 = vsel %vm904, %v8515, 0
        %v8553 = vsel %vm904, %v8516, 0
        %v8556 = vsel %vm904, %v8517, 0
        %v8559 = vsel %vm904, %v8518, 0
        %v8562 = vsel %vm904, %v8519, 0
        %v8565 = vsel %vm904, %v8520, 0
        %v8568 = vsel %vm904, %v8521, 0
        %v8571 = vsel %vm904, %v8522, 0
        %v8574 = vsel %vm904, %v8523, 0
        %v8577 = vsel %vm904, %v8524, 0
        %v8580 = vsel %vm904, %v8525, 0
        %v8583 = vsel %vm904, %v8526, 0
        %v8586 = vsel %vm904, %v8527, 0
        %8588 = vmatprep.subr.bf16.mxu0 0
        %8589 = vmatpush1.bf16.msra.mxu0 %v8536
        %8590 = vmatprep.subr.bf16.mxu0 0
        %8591 = vmatpush1.bf16.msra.mxu0 %v8537
        %8592 = vmatprep.subr.bf16.mxu0 0
        %8593 = vmatpush1.bf16.msra.mxu0 0
        %8594 = vmatprep.subr.bf16.mxu0 0
        %8595 = vmatpush1.bf16.msra.mxu0 0
        %8596 = vmatprep.subr.bf16.mxu0 0
        %8597 = vmatpush1.bf16.msra.mxu0 0
        %8598 = vmatprep.subr.bf16.mxu0 0
        %8599 = vmatpush1.bf16.msra.mxu0 0
        %8600 = vmatprep.subr.bf16.mxu0 0
        %8601 = vmatpush1.bf16.msra.mxu0 0
        %8602 = vmatprep.subr.bf16.mxu0 0
        %8603 = vmatpush1.bf16.msra.mxu0 0
        %8604 = vmatprep.subr.bf16.mxu0 0
        %8605 = vmatpush1.bf16.msra.mxu0 0
        %8606 = vmatprep.subr.bf16.mxu0 0
        %8607 = vmatpush1.bf16.msra.mxu0 0
        %8608 = vmatprep.subr.bf16.mxu0 0
        %8609 = vmatpush1.bf16.msra.mxu0 0
        %8610 = vmatprep.subr.bf16.mxu0 0
        %8611 = vmatpush1.bf16.msra.mxu0 0
        %8612 = vmatprep.subr.bf16.mxu0 0
        %8613 = vmatpush1.bf16.msra.mxu0 0
        %8614 = vmatprep.subr.bf16.mxu0 0
        %8615 = vmatpush1.bf16.msra.mxu0 0
        %8616 = vmatprep.subr.bf16.mxu0 0
        %8617 = vmatpush1.bf16.msra.mxu0 0
        %8618 = vmatprep.subr.bf16.mxu0 0
        %8619 = vmatpush1.bf16.msra.mxu0 0
        %8620 = vmatprep.mubr.bf16.mxu0 0
        %8621 = vmatmul.mubr.bf16.gmra.mrb[0].mxu0 %v8541
        %v8622 = vpop.f32.mrb[0].mxu0
        %v8623 = vadd.f32 0.0, %v8622
        %v8624 = vpop.f32.mrb[0].mxu0
        %v8625 = vpop.f32.mrb[0].mxu0
        %v8626 = vadd.f32 0.0, %v8625
        %v8627 = vpop.f32.mrb[0].mxu0
        %8628 = vmatprep.mubr.bf16.mxu0 0
        %8629 = vmatmul.mubr.bf16.gmra.mrb[0].mxu0 %v8544
        %v8630 = vpop.f32.mrb[0].mxu0
        %v8631 = vadd.f32 0.0, %v8630
        %v8632 = vpop.f32.mrb[0].mxu0
        %v8633 = vpop.f32.mrb[0].mxu0
        %v8634 = vadd.f32 0.0, %v8633
        %v8635 = vpop.f32.mrb[0].mxu0
        %8636 = vmatprep.mubr.bf16.mxu0 0
        %8637 = vmatmul.mubr.bf16.gmra.mrb[0].mxu0 %v8547
        %v8638 = vpop.f32.mrb[0].mxu0
        %v8639 = vadd.f32 0.0, %v8638
        %v8640 = vpop.f32.mrb[0].mxu0
        %v8641 = vpop.f32.mrb[0].mxu0
        %v8642 = vadd.f32 0.0, %v8641
        %v8643 = vpop.f32.mrb[0].mxu0
        %8644 = vmatprep.mubr.bf16.mxu0 0
        %8645 = vmatmul.mubr.bf16.gmra.mrb[0].mxu0 %v8550
        %v8646 = vpop.f32.mrb[0].mxu0
        %v8647 = vadd.f32 0.0, %v8646
        %v8648 = vpop.f32.mrb[0].mxu0
        %v8649 = vpop.f32.mrb[0].mxu0
        %v8650 = vadd.f32 0.0, %v8649
        %v8651 = vpop.f32.mrb[0].mxu0
        %8652 = vmatprep.mubr.bf16.mxu0 0
        %8653 = vmatmul.mubr.bf16.gmra.mrb[0].mxu0 %v8553
        %v8654 = vpop.f32.mrb[0].mxu0
        %v8655 = vadd.f32 0.0, %v8654
        %v8656 = vpop.f32.mrb[0].mxu0
        %v8657 = vpop.f32.mrb[0].mxu0
        %v8658 = vadd.f32 0.0, %v8657
        %v8659 = vpop.f32.mrb[0].mxu0
        %8660 = vmatprep.mubr.bf16.mxu0 0
        %8661 = vmatmul.mubr.bf16.gmra.mrb[0].mxu0 %v8556
        %v8662 = vpop.f32.mrb[0].mxu0
        %v8663 = vadd.f32 0.0, %v8662
        %v8664 = vpop.f32.mrb[0].mxu0
        %v8665 = vpop.f32.mrb[0].mxu0
        %v8666 = vadd.f32 0.0, %v8665
        %v8667 = vpop.f32.mrb[0].mxu0
        %8668 = vmatprep.mubr.bf16.mxu0 0
        %8669 = vmatmul.mubr.bf16.gmra.mrb[0].mxu0 %v8559
        %v8670 = vpop.f32.mrb[0].mxu0
        %v8671 = vadd.f32 0.0, %v8670
        %v8672 = vpop.f32.mrb[0].mxu0
        %v8673 = vpop.f32.mrb[0].mxu0
        %v8674 = vadd.f32 0.0, %v8673
        %v8675 = vpop.f32.mrb[0].mxu0
        %8676 = vmatprep.mubr.bf16.mxu0 0
        %8677 = vmatmul.mubr.bf16.gmra.mrb[0].mxu0 %v8562
        %v8678 = vpop.f32.mrb[0].mxu0
        %v8679 = vadd.f32 0.0, %v8678
        %v8680 = vpop.f32.mrb[0].mxu0
        %v8681 = vpop.f32.mrb[0].mxu0
        %v8682 = vadd.f32 0.0, %v8681
        %v8683 = vpop.f32.mrb[0].mxu0
        %8684 = vmatprep.mubr.bf16.mxu0 0
        %8685 = vmatmul.mubr.bf16.gmra.mrb[0].mxu0 %v8565
        %v8686 = vpop.f32.mrb[0].mxu0
        %v8687 = vadd.f32 0.0, %v8686
        %v8688 = vpop.f32.mrb[0].mxu0
        %v8689 = vpop.f32.mrb[0].mxu0
        %v8690 = vadd.f32 0.0, %v8689
        %v8691 = vpop.f32.mrb[0].mxu0
        %8692 = vmatprep.mubr.bf16.mxu0 0
        %8693 = vmatmul.mubr.bf16.gmra.mrb[0].mxu0 %v8568
        %v8694 = vpop.f32.mrb[0].mxu0
        %v8695 = vadd.f32 0.0, %v8694
        %v8696 = vpop.f32.mrb[0].mxu0
        %v8697 = vpop.f32.mrb[0].mxu0
        %v8698 = vadd.f32 0.0, %v8697
        %v8699 = vpop.f32.mrb[0].mxu0
        %8700 = vmatprep.mubr.bf16.mxu0 0
        %8701 = vmatmul.mubr.bf16.gmra.mrb[0].mxu0 %v8571
        %v8702 = vpop.f32.mrb[0].mxu0
        %v8703 = vadd.f32 0.0, %v8702
        %v8704 = vpop.f32.mrb[0].mxu0
        %v8705 = vpop.f32.mrb[0].mxu0
        %v8706 = vadd.f32 0.0, %v8705
        %v8707 = vpop.f32.mrb[0].mxu0
        %8708 = vmatprep.mubr.bf16.mxu0 0
        %8709 = vmatmul.mubr.bf16.gmra.mrb[0].mxu0 %v8574
        %v8710 = vpop.f32.mrb[0].mxu0
        %v8711 = vadd.f32 0.0, %v8710
        %v8712 = vpop.f32.mrb[0].mxu0
        %v8713 = vpop.f32.mrb[0].mxu0
        %v8714 = vadd.f32 0.0, %v8713
        %v8715 = vpop.f32.mrb[0].mxu0
        %8716 = vmatprep.mubr.bf16.mxu0 0
        %8717 = vmatmul.mubr.bf16.gmra.mrb[0].mxu0 %v8577
        %v8718 = vpop.f32.mrb[0].mxu0
        %v8719 = vadd.f32 0.0, %v8718
        %v8720 = vpop.f32.mrb[0].mxu0
        %v8721 = vpop.f32.mrb[0].mxu0
        %v8722 = vadd.f32 0.0, %v8721
        %v8723 = vpop.f32.mrb[0].mxu0
        %8724 = vmatprep.mubr.bf16.mxu0 0
        %8725 = vmatmul.mubr.bf16.gmra.mrb[0].mxu0 %v8580
        %v8726 = vpop.f32.mrb[0].mxu0
        %v8727 = vadd.f32 0.0, %v8726
        %v8728 = vpop.f32.mrb[0].mxu0
        %v8729 = vpop.f32.mrb[0].mxu0
        %v8730 = vadd.f32 0.0, %v8729
        %v8731 = vpop.f32.mrb[0].mxu0
        %8732 = vmatprep.mubr.bf16.mxu0 0
        %8733 = vmatmul.mubr.bf16.gmra.mrb[0].mxu0 %v8583
        %v8734 = vpop.f32.mrb[0].mxu0
        %v8735 = vadd.f32 0.0, %v8734
        %v8736 = vpop.f32.mrb[0].mxu0
        %v8737 = vpop.f32.mrb[0].mxu0
        %v8738 = vadd.f32 0.0, %v8737
        %v8739 = vpop.f32.mrb[0].mxu0
        %8740 = vmatprep.mubr.bf16.mxu0 0
        %8741 = vmatmul.mubr.bf16.gmra.mrb[0].mxu0 %v8586
        %v8742 = vpop.f32.mrb[0].mxu0
        %v8743 = vadd.f32 0.0, %v8742
        %v8744 = vpop.f32.mrb[0].mxu0
        %v8745 = vpop.f32.mrb[0].mxu0
        %v8746 = vadd.f32 0.0, %v8745
        %v8747 = vpop.f32.mrb[0].mxu0
        %8748 = vdwg.mxu0
        %v8749 = vadd.f32 %v6415, %v8623
        %v8750 = vadd.f32 %v6416, %v8626
        %v8751 = vadd.f32 %v6417, %v8631
        %v8752 = vadd.f32 %v6418, %v8634
        %v8753 = vadd.f32 %v6419, %v8639
        %v8754 = vadd.f32 %v6420, %v8642
        %v8755 = vadd.f32 %v6421, %v8647
        %v8756 = vadd.f32 %v6422, %v8650
        %v8757 = vadd.f32 %v6423, %v8655
        %v8758 = vadd.f32 %v6424, %v8658
        %v8759 = vadd.f32 %v6425, %v8663
        %v8760 = vadd.f32 %v6426, %v8666
        %v8761 = vadd.f32 %v6427, %v8671
        %v8762 = vadd.f32 %v6428, %v8674
        %v8763 = vadd.f32 %v6429, %v8679
        %v8764 = vadd.f32 %v6430, %v8682
        %v8765 = vadd.f32 %v6431, %v8687
        %v8766 = vadd.f32 %v6432, %v8690
        %v8767 = vadd.f32 %v6433, %v8695
        %v8768 = vadd.f32 %v6434, %v8698
        %v8769 = vadd.f32 %v6435, %v8703
        %v8770 = vadd.f32 %v6436, %v8706
        %v8771 = vadd.f32 %v6437, %v8711
        %v8772 = vadd.f32 %v6438, %v8714
        %v8773 = vadd.f32 %v6439, %v8719
        %v8774 = vadd.f32 %v6440, %v8722
        %v8775 = vadd.f32 %v6441, %v8727
        %v8776 = vadd.f32 %v6442, %v8730
        %v8777 = vadd.f32 %v6443, %v8735
        %v8778 = vadd.f32 %v6444, %v8738
        %v8779 = vadd.f32 %v6445, %v8743
        %v8780 = vadd.f32 %v6446, %v8746
        %v8781 = vld [vmem:[%s3] sm:$0xf]
        %v8782 = vld [vmem:[%s3 + $0x4] sm:$0xf]
        %v8783 = vpack.c.bf16 %v606, %v606
        %v8786 = vunpack.c.l.b16 %v8781
        %v8787 = vunpack.c.l.b16 %v8782
        %v8788 = vpack.c.b16 %v8787, %v8786
        %v8791 = vsel %vm309, %v8783, 0
        %8793 = vmatprep.subr.bf16.mxu0 0
        %8794 = vmatpush1.bf16.msra.mxu0 %v8788
        %8795 = vmatprep.subr.bf16.mxu0 0
        %8796 = vmatpush1.bf16.msra.mxu0 0
        %8797 = vmatprep.subr.bf16.mxu0 0
        %8798 = vmatpush1.bf16.msra.mxu0 0
        %8799 = vmatprep.subr.bf16.mxu0 0
        %8800 = vmatpush1.bf16.msra.mxu0 0
        %8801 = vmatprep.subr.bf16.mxu0 0
        %8802 = vmatpush1.bf16.msra.mxu0 0
        %8803 = vmatprep.subr.bf16.mxu0 0
        %8804 = vmatpush1.bf16.msra.mxu0 0
        %8805 = vmatprep.subr.bf16.mxu0 0
        %8806 = vmatpush1.bf16.msra.mxu0 0
        %8807 = vmatprep.subr.bf16.mxu0 0
        %8808 = vmatpush1.bf16.msra.mxu0 0
        %8809 = vmatprep.subr.bf16.mxu0 0
        %8810 = vmatpush1.bf16.msra.mxu0 0
        %8811 = vmatprep.subr.bf16.mxu0 0
        %8812 = vmatpush1.bf16.msra.mxu0 0
        %8813 = vmatprep.subr.bf16.mxu0 0
        %8814 = vmatpush1.bf16.msra.mxu0 0
        %8815 = vmatprep.subr.bf16.mxu0 0
        %8816 = vmatpush1.bf16.msra.mxu0 0
        %8817 = vmatprep.subr.bf16.mxu0 0
        %8818 = vmatpush1.bf16.msra.mxu0 0
        %8819 = vmatprep.subr.bf16.mxu0 0
        %8820 = vmatpush1.bf16.msra.mxu0 0
        %8821 = vmatprep.subr.bf16.mxu0 0
        %8822 = vmatpush1.bf16.msra.mxu0 0
        %8823 = vmatprep.subr.bf16.mxu0 0
        %8824 = vmatpush1.bf16.msra.mxu0 0
        %8825 = vmatprep.mubr.bf16.mxu0 0
        %8826 = vmatmul.mubr.bf16.gmra.mrb[0].mxu0 %v8791
        %v8827 = vpop.f32.mrb[0].mxu0
        %v8828 = vadd.f32 0.0, %v8827
        %v8829 = vpop.f32.mrb[0].mxu0
        %v8830 = vpop.f32.mrb[0].mxu0
        %v8831 = vpop.f32.mrb[0].mxu0
        %8832 = vdwg.mxu0
        %v8833 = vadd.f32 %v8828, 0.0
        %v8835 = vsel %vm904, %v8833, 0
        %8837 = vmatprep.subr.mxu0 0.0
        %8838 = vmatpush1.msra.mxu0 %v305
        %8839 = vmatprep.subr.mxu0 0.0
        %8840 = vmatpush1.msra.mxu0 %v306
        %8841 = vmatprep.subr.mxu0 0.0
        %8842 = vmatpush1.msra.mxu0 %v307
        %8843 = vmatprep.subr.mxu0 0.0
        %8844 = vmatpush1.msra.mxu0 %v308
        %8845 = vmatprep.subr.mxu0 0.0
        %8846 = vmatpush1.msra.mxu0 0.0
        %8847 = vmatprep.subr.mxu0 0.0
        %8848 = vmatpush1.msra.mxu0 0.0
        %8849 = vmatprep.subr.mxu0 0.0
        %8850 = vmatpush1.msra.mxu0 0.0
        %8851 = vmatprep.subr.mxu0 0.0
        %8852 = vmatpush1.msra.mxu0 0.0
        %8853 = vmatprep.subr.mxu0 0.0
        %8854 = vmatpush1.msra.mxu0 0.0
        %8855 = vmatprep.subr.mxu0 0.0
        %8856 = vmatpush1.msra.mxu0 0.0
        %8857 = vmatprep.subr.mxu0 0.0
        %8858 = vmatpush1.msra.mxu0 0.0
        %8859 = vmatprep.subr.mxu0 0.0
        %8860 = vmatpush1.msra.mxu0 0.0
        %8861 = vmatprep.subr.mxu0 0.0
        %8862 = vmatpush1.msra.mxu0 0.0
        %8863 = vmatprep.subr.mxu0 0.0
        %8864 = vmatpush1.msra.mxu0 0.0
        %8865 = vmatprep.subr.mxu0 0.0
        %8866 = vmatpush1.msra.mxu0 0.0
        %8867 = vmatprep.subr.mxu0 0.0
        %8868 = vmatpush1.msra.mxu0 0.0
        %8869 = vmatprep.subr.mxu0 0.0
        %8870 = vmatpush1.msra.mxu0 0.0
        %8871 = vmatprep.subr.mxu0 0.0
        %8872 = vmatpush1.msra.mxu0 0.0
        %8873 = vmatprep.subr.mxu0 0.0
        %8874 = vmatpush1.msra.mxu0 0.0
        %8875 = vmatprep.subr.mxu0 0.0
        %8876 = vmatpush1.msra.mxu0 0.0
        %8877 = vmatprep.subr.mxu0 0.0
        %8878 = vmatpush1.msra.mxu0 0.0
        %8879 = vmatprep.subr.mxu0 0.0
        %8880 = vmatpush1.msra.mxu0 0.0
        %8881 = vmatprep.subr.mxu0 0.0
        %8882 = vmatpush1.msra.mxu0 0.0
        %8883 = vmatprep.subr.mxu0 0.0
        %8884 = vmatpush1.msra.mxu0 0.0
        %8885 = vmatprep.subr.mxu0 0.0
        %8886 = vmatpush1.msra.mxu0 0.0
        %8887 = vmatprep.subr.mxu0 0.0
        %8888 = vmatpush1.msra.mxu0 0.0
        %8889 = vmatprep.subr.mxu0 0.0
        %8890 = vmatpush1.msra.mxu0 0.0
        %8891 = vmatprep.subr.mxu0 0.0
        %8892 = vmatpush1.msra.mxu0 0.0
        %8893 = vmatprep.subr.mxu0 0.0
        %8894 = vmatpush1.msra.mxu0 0.0
        %8895 = vmatprep.subr.mxu0 0.0
        %8896 = vmatpush1.msra.mxu0 0.0
        %8897 = vmatprep.subr.mxu0 0.0
        %8898 = vmatpush1.msra.mxu0 0.0
        %8899 = vmatprep.subr.mxu0 0.0
        %8900 = vmatpush1.msra.mxu0 0.0
        %8901 = vmatprep.mubr.f32.mxu0 0.0
        %8902 = vmatmul.mubr.f32.gmra.mrb[0].mxu0 %v8835
        %v8903 = vpop.f32.mrb[0].mxu0
        %v8904 = vadd.f32 0.0, %v8903
        %v8905 = vpop.f32.mrb[0].mxu0
        %8906 = vdwg.mxu0
        %v8907 = vrcp.pop 4.0
        %v8908 = vmul.f32 %v8904, %v8907
        %v8909 = vsub.f32 %v8828, %v8908
        %v8910 = vmul.f32 %v8909, %v8909
        %v8911 = vadd.f32 %v8910, 0.0
        %v8913 = vsel %vm904, %v8911, 0
        %8915 = vmatprep.subr.mxu0 0.0
        %8916 = vmatpush1.msra.mxu0 %v305
        %8917 = vmatprep.subr.mxu0 0.0
        %8918 = vmatpush1.msra.mxu0 %v306
        %8919 = vmatprep.subr.mxu0 0.0
        %8920 = vmatpush1.msra.mxu0 %v307
        %8921 = vmatprep.subr.mxu0 0.0
        %8922 = vmatpush1.msra.mxu0 %v308
        %8923 = vmatprep.subr.mxu0 0.0
        %8924 = vmatpush1.msra.mxu0 0.0
        %8925 = vmatprep.subr.mxu0 0.0
        %8926 = vmatpush1.msra.mxu0 0.0
        %8927 = vmatprep.subr.mxu0 0.0
        %8928 = vmatpush1.msra.mxu0 0.0
        %8929 = vmatprep.subr.mxu0 0.0
        %8930 = vmatpush1.msra.mxu0 0.0
        %8931 = vmatprep.subr.mxu0 0.0
        %8932 = vmatpush1.msra.mxu0 0.0
        %8933 = vmatprep.subr.mxu0 0.0
        %8934 = vmatpush1.msra.mxu0 0.0
        %8935 = vmatprep.subr.mxu0 0.0
        %8936 = vmatpush1.msra.mxu0 0.0
        %8937 = vmatprep.subr.mxu0 0.0
        %8938 = vmatpush1.msra.mxu0 0.0
        %8939 = vmatprep.subr.mxu0 0.0
        %8940 = vmatpush1.msra.mxu0 0.0
        %8941 = vmatprep.subr.mxu0 0.0
        %8942 = vmatpush1.msra.mxu0 0.0
        %8943 = vmatprep.subr.mxu0 0.0
        %8944 = vmatpush1.msra.mxu0 0.0
        %8945 = vmatprep.subr.mxu0 0.0
        %8946 = vmatpush1.msra.mxu0 0.0
        %8947 = vmatprep.subr.mxu0 0.0
        %8948 = vmatpush1.msra.mxu0 0.0
        %8949 = vmatprep.subr.mxu0 0.0
        %8950 = vmatpush1.msra.mxu0 0.0
        %8951 = vmatprep.subr.mxu0 0.0
        %8952 = vmatpush1.msra.mxu0 0.0
        %8953 = vmatprep.subr.mxu0 0.0
        %8954 = vmatpush1.msra.mxu0 0.0
        %8955 = vmatprep.subr.mxu0 0.0
        %8956 = vmatpush1.msra.mxu0 0.0
        %8957 = vmatprep.subr.mxu0 0.0
        %8958 = vmatpush1.msra.mxu0 0.0
        %8959 = vmatprep.subr.mxu0 0.0
        %8960 = vmatpush1.msra.mxu0 0.0
        %8961 = vmatprep.subr.mxu0 0.0
        %8962 = vmatpush1.msra.mxu0 0.0
        %8963 = vmatprep.subr.mxu0 0.0
        %8964 = vmatpush1.msra.mxu0 0.0
        %8965 = vmatprep.subr.mxu0 0.0
        %8966 = vmatpush1.msra.mxu0 0.0
        %8967 = vmatprep.subr.mxu0 0.0
        %8968 = vmatpush1.msra.mxu0 0.0
        %8969 = vmatprep.subr.mxu0 0.0
        %8970 = vmatpush1.msra.mxu0 0.0
        %8971 = vmatprep.subr.mxu0 0.0
        %8972 = vmatpush1.msra.mxu0 0.0
        %8973 = vmatprep.subr.mxu0 0.0
        %8974 = vmatpush1.msra.mxu0 0.0
        %8975 = vmatprep.subr.mxu0 0.0
        %8976 = vmatpush1.msra.mxu0 0.0
        %8977 = vmatprep.subr.mxu0 0.0
        %8978 = vmatpush1.msra.mxu0 0.0
        %8979 = vmatprep.mubr.f32.mxu0 0.0
        %8980 = vmatmul.mubr.f32.gmra.mrb[0].mxu0 %v8913
        %v8981 = vpop.f32.mrb[0].mxu0
        %v8982 = vadd.f32 0.0, %v8981
        %v8983 = vpop.f32.mrb[0].mxu0
        %8984 = vdwg.mxu0
        %v8985 = vmul.f32 %v8982, %v8907
        %v8986 = vadd.f32 %v8985, 1e-05
        %v8987 = vrsqrt.pop %v8986
        %v8988 = vld [vmem:[%s5 + $0x4] sm:$0x1]
        %v8989 = vld [vmem:[%s6 + $0x4] sm:$0x1]
        %v8990 = vmul.f32 %v8909, %v8987
        %v8991 = vmul.f32 %v8990, %v8988
        %v8992 = vadd.f32 %v8991, %v8989
        %v8993 = vmax.f32 %v8992, 0.0
        %v8994 = vld [vmem:[%s4 + $0x40] sm:$0xf]
        %v8995 = vld [vmem:[%s4 + $0x44] sm:$0xf]
        %v8996 = vld [vmem:[%s4 + $0x48] sm:$0xf]
        %v8997 = vld [vmem:[%s4 + $0x4c] sm:$0xf]
        %v8998 = vpack.c.bf16 %v8993, %v8993
        %v9003 = vunpack.c.l.b16 %v8994
        %v9004 = vunpack.c.l.b16 %v8995
        %v9005 = vunpack.c.l.b16 %v8996
        %v9006 = vunpack.c.l.b16 %v8997
        %v9007 = vpack.c.b16 %v9004, %v9003
        %v9008 = vpack.c.b16 %v9006, %v9005
        %v9012 = vsel %vm904, %v8998, 0
        %9014 = vmatprep.subr.bf16.mxu0 0
        %9015 = vmatpush1.bf16.msra.mxu0 %v9007
        %9016 = vmatprep.subr.bf16.mxu0 0
        %9017 = vmatpush1.bf16.msra.mxu0 %v9008
        %9018 = vmatprep.subr.bf16.mxu0 0
        %9019 = vmatpush1.bf16.msra.mxu0 0
        %9020 = vmatprep.subr.bf16.mxu0 0
        %9021 = vmatpush1.bf16.msra.mxu0 0
        %9022 = vmatprep.subr.bf16.mxu0 0
        %9023 = vmatpush1.bf16.msra.mxu0 0
        %9024 = vmatprep.subr.bf16.mxu0 0
        %9025 = vmatpush1.bf16.msra.mxu0 0
        %9026 = vmatprep.subr.bf16.mxu0 0
        %9027 = vmatpush1.bf16.msra.mxu0 0
        %9028 = vmatprep.subr.bf16.mxu0 0
        %9029 = vmatpush1.bf16.msra.mxu0 0
        %9030 = vmatprep.subr.bf16.mxu0 0
        %9031 = vmatpush1.bf16.msra.mxu0 0
        %9032 = vmatprep.subr.bf16.mxu0 0
        %9033 = vmatpush1.bf16.msra.mxu0 0
        %9034 = vmatprep.subr.bf16.mxu0 0
        %9035 = vmatpush1.bf16.msra.mxu0 0
        %9036 = vmatprep.subr.bf16.mxu0 0
        %9037 = vmatpush1.bf16.msra.mxu0 0
        %9038 = vmatprep.subr.bf16.mxu0 0
        %9039 = vmatpush1.bf16.msra.mxu0 0
        %9040 = vmatprep.subr.bf16.mxu0 0
        %9041 = vmatpush1.bf16.msra.mxu0 0
        %9042 = vmatprep.subr.bf16.mxu0 0
        %9043 = vmatpush1.bf16.msra.mxu0 0
        %9044 = vmatprep.subr.bf16.mxu0 0
        %9045 = vmatpush1.bf16.msra.mxu0 0
        %9046 = vmatprep.mubr.bf16.mxu0 0
        %9047 = vmatmul.mubr.bf16.gmra.mrb[0].mxu0 %v9012
        %v9048 = vpop.f32.mrb[0].mxu0
        %v9049 = vadd.f32 0.0, %v9048
        %v9050 = vpop.f32.mrb[0].mxu0
        %v9051 = vpop.f32.mrb[0].mxu0
        %v9052 = vpop.f32.mrb[0].mxu0
        %9053 = vdwg.mxu0
        %v9054 = vlaneseq
        %v9055 = vshrl.u32 %v9054, 7
        %v9056 = vsub.s32 0, %v9055
        %v9057 = vrot.slane %v9049, %v9056
        %v9058 = vadd.f32 %v8749, %v9057
        %v9059 = vadd.f32 %v8750, %v9057
        %v9060 = vadd.f32 %v8751, %v9057
        %v9061 = vadd.f32 %v8752, %v9057
        %v9062 = vadd.f32 %v8753, %v9057
        %v9063 = vadd.f32 %v8754, %v9057
        %v9064 = vadd.f32 %v8755, %v9057
        %v9065 = vadd.f32 %v8756, %v9057
        %v9066 = vadd.f32 %v8757, %v9057
        %v9067 = vadd.f32 %v8758, %v9057
        %v9068 = vadd.f32 %v8759, %v9057
        %v9069 = vadd.f32 %v8760, %v9057
        %v9070 = vadd.f32 %v8761, %v9057
        %v9071 = vadd.f32 %v8762, %v9057
        %v9072 = vadd.f32 %v8763, %v9057
        %v9073 = vadd.f32 %v8764, %v9057
        %v9074 = vadd.f32 %v8765, %v9057
        %v9075 = vadd.f32 %v8766, %v9057
        %v9076 = vadd.f32 %v8767, %v9057
        %v9077 = vadd.f32 %v8768, %v9057
        %v9078 = vadd.f32 %v8769, %v9057
        %v9079 = vadd.f32 %v8770, %v9057
        %v9080 = vadd.f32 %v8771, %v9057
        %v9081 = vadd.f32 %v8772, %v9057
        %v9082 = vadd.f32 %v8773, %v9057
        %v9083 = vadd.f32 %v8774, %v9057
        %v9084 = vadd.f32 %v8775, %v9057
        %v9085 = vadd.f32 %v8776, %v9057
        %v9086 = vadd.f32 %v8777, %v9057
        %v9087 = vadd.f32 %v8778, %v9057
        %v9088 = vadd.f32 %v8779, %v9057
        %v9089 = vadd.f32 %v8780, %v9057
        %v9090 = vsel %vm904, %v9058, 0.0
        %v9091 = vsel %vm904, %v9059, 0.0
        %v9092 = vadd.f32 %v9090, %v9091
        %v9093 = vsel %vm904, %v9060, 0.0
        %v9094 = vadd.f32 %v9092, %v9093
        %v9095 = vsel %vm904, %v9061, 0.0
        %v9096 = vadd.f32 %v9094, %v9095
        %v9097 = vsel %vm904, %v9062, 0.0
        %v9098 = vadd.f32 %v9096, %v9097
        %v9099 = vsel %vm904, %v9063, 0.0
        %v9100 = vadd.f32 %v9098, %v9099
        %v9101 = vsel %vm904, %v9064, 0.0
        %v9102 = vadd.f32 %v9100, %v9101
        %v9103 = vsel %vm904, %v9065, 0.0
        %v9104 = vadd.f32 %v9102, %v9103
        %v9105 = vsel %vm904, %v9066, 0.0
        %v9106 = vadd.f32 %v9104, %v9105
        %v9107 = vsel %vm904, %v9067, 0.0
        %v9108 = vadd.f32 %v9106, %v9107
        %v9109 = vsel %vm904, %v9068, 0.0
        %v9110 = vadd.f32 %v9108, %v9109
        %v9111 = vsel %vm904, %v9069, 0.0
        %v9112 = vadd.f32 %v9110, %v9111
        %v9113 = vsel %vm904, %v9070, 0.0
        %v9114 = vadd.f32 %v9112, %v9113
        %v9115 = vsel %vm904, %v9071, 0.0
        %v9116 = vadd.f32 %v9114, %v9115
        %v9117 = vsel %vm904, %v9072, 0.0
        %v9118 = vadd.f32 %v9116, %v9117
        %v9119 = vsel %vm904, %v9073, 0.0
        %v9120 = vadd.f32 %v9118, %v9119
        %v9121 = vsel %vm904, %v9074, 0.0
        %v9122 = vadd.f32 %v9120, %v9121
        %v9123 = vsel %vm904, %v9075, 0.0
        %v9124 = vadd.f32 %v9122, %v9123
        %v9125 = vsel %vm904, %v9076, 0.0
        %v9126 = vadd.f32 %v9124, %v9125
        %v9127 = vsel %vm904, %v9077, 0.0
        %v9128 = vadd.f32 %v9126, %v9127
        %v9129 = vsel %vm904, %v9078, 0.0
        %v9130 = vadd.f32 %v9128, %v9129
        %v9131 = vsel %vm904, %v9079, 0.0
        %v9132 = vadd.f32 %v9130, %v9131
        %v9133 = vsel %vm904, %v9080, 0.0
        %v9134 = vadd.f32 %v9132, %v9133
        %v9135 = vsel %vm904, %v9081, 0.0
        %v9136 = vadd.f32 %v9134, %v9135
        %v9137 = vsel %vm904, %v9082, 0.0
        %v9138 = vadd.f32 %v9136, %v9137
        %v9139 = vsel %vm904, %v9083, 0.0
        %v9140 = vadd.f32 %v9138, %v9139
        %v9141 = vsel %vm904, %v9084, 0.0
        %v9142 = vadd.f32 %v9140, %v9141
        %v9143 = vsel %vm904, %v9085, 0.0
        %v9144 = vadd.f32 %v9142, %v9143
        %v9145 = vsel %vm904, %v9086, 0.0
        %v9146 = vadd.f32 %v9144, %v9145
        %v9147 = vsel %vm904, %v9087, 0.0
        %v9148 = vadd.f32 %v9146, %v9147
        %v9149 = vsel %vm904, %v9088, 0.0
        %v9150 = vadd.f32 %v9148, %v9149
        %v9151 = vsel %vm904, %v9089, 0.0
        %v9152 = vadd.f32 %v9150, %v9151
        %v9153 = vrot.slane %v9152, 4
        %v9154 = vadd.f32 %v9152, %v9153
        %v9155 = vrot.slane %v9154, 2
        %v9156 = vadd.f32 %v9154, %v9155
        %v9157 = vrot.slane %v9156, 1
        %v9158 = vadd.f32 %v9156, %v9157
        %v9160 = vsel %vm904, %v9158, 0
        %9162 = vmatprep.subr.mxu0 0.0
        %9163 = vmatpush1.msra.mxu0 %v305
        %9164 = vmatprep.subr.mxu0 0.0
        %9165 = vmatpush1.msra.mxu0 %v306
        %9166 = vmatprep.subr.mxu0 0.0
        %9167 = vmatpush1.msra.mxu0 %v307
        %9168 = vmatprep.subr.mxu0 0.0
        %9169 = vmatpush1.msra.mxu0 %v308
        %9170 = vmatprep.subr.mxu0 0.0
        %9171 = vmatpush1.msra.mxu0 0.0
        %9172 = vmatprep.subr.mxu0 0.0
        %9173 = vmatpush1.msra.mxu0 0.0
        %9174 = vmatprep.subr.mxu0 0.0
        %9175 = vmatpush1.msra.mxu0 0.0
        %9176 = vmatprep.subr.mxu0 0.0
        %9177 = vmatpush1.msra.mxu0 0.0
        %9178 = vmatprep.subr.mxu0 0.0
        %9179 = vmatpush1.msra.mxu0 0.0
        %9180 = vmatprep.subr.mxu0 0.0
        %9181 = vmatpush1.msra.mxu0 0.0
        %9182 = vmatprep.subr.mxu0 0.0
        %9183 = vmatpush1.msra.mxu0 0.0
        %9184 = vmatprep.subr.mxu0 0.0
        %9185 = vmatpush1.msra.mxu0 0.0
        %9186 = vmatprep.subr.mxu0 0.0
        %9187 = vmatpush1.msra.mxu0 0.0
        %9188 = vmatprep.subr.mxu0 0.0
        %9189 = vmatpush1.msra.mxu0 0.0
        %9190 = vmatprep.subr.mxu0 0.0
        %9191 = vmatpush1.msra.mxu0 0.0
        %9192 = vmatprep.subr.mxu0 0.0
        %9193 = vmatpush1.msra.mxu0 0.0
        %9194 = vmatprep.subr.mxu0 0.0
        %9195 = vmatpush1.msra.mxu0 0.0
        %9196 = vmatprep.subr.mxu0 0.0
        %9197 = vmatpush1.msra.mxu0 0.0
        %9198 = vmatprep.subr.mxu0 0.0
        %9199 = vmatpush1.msra.mxu0 0.0
        %9200 = vmatprep.subr.mxu0 0.0
        %9201 = vmatpush1.msra.mxu0 0.0
        %9202 = vmatprep.subr.mxu0 0.0
        %9203 = vmatpush1.msra.mxu0 0.0
        %9204 = vmatprep.subr.mxu0 0.0
        %9205 = vmatpush1.msra.mxu0 0.0
        %9206 = vmatprep.subr.mxu0 0.0
        %9207 = vmatpush1.msra.mxu0 0.0
        %9208 = vmatprep.subr.mxu0 0.0
        %9209 = vmatpush1.msra.mxu0 0.0
        %9210 = vmatprep.subr.mxu0 0.0
        %9211 = vmatpush1.msra.mxu0 0.0
        %9212 = vmatprep.subr.mxu0 0.0
        %9213 = vmatpush1.msra.mxu0 0.0
        %9214 = vmatprep.subr.mxu0 0.0
        %9215 = vmatpush1.msra.mxu0 0.0
        %9216 = vmatprep.subr.mxu0 0.0
        %9217 = vmatpush1.msra.mxu0 0.0
        %9218 = vmatprep.subr.mxu0 0.0
        %9219 = vmatpush1.msra.mxu0 0.0
        %9220 = vmatprep.subr.mxu0 0.0
        %9221 = vmatpush1.msra.mxu0 0.0
        %9222 = vmatprep.subr.mxu0 0.0
        %9223 = vmatpush1.msra.mxu0 0.0
        %9224 = vmatprep.subr.mxu0 0.0
        %9225 = vmatpush1.msra.mxu0 0.0
        %9226 = vmatprep.mubr.f32.mxu0 0.0
        %9227 = vmatmul.mubr.f32.gmra.mrb[0].mxu0 %v9160
        %v9228 = vpop.f32.mrb[0].mxu0
        %v9229 = vadd.f32 0.0, %v9228
        %v9230 = vpop.f32.mrb[0].mxu0
        %9231 = vdwg.mxu0
        %v9232 = vmul.f32 %v9229, %v1047
        %v9233 = vlaneseq
        %v9234 = vshrl.u32 %v9233, 7
        %v9235 = vsub.s32 0, %v9234
        %v9236 = vrot.slane %v9232, %v9235
        %v9237 = vsub.f32 %v9058, %v9236
        %v9238 = vsub.f32 %v9059, %v9236
        %v9239 = vsub.f32 %v9060, %v9236
        %v9240 = vsub.f32 %v9061, %v9236
        %v9241 = vsub.f32 %v9062, %v9236
        %v9242 = vsub.f32 %v9063, %v9236
        %v9243 = vsub.f32 %v9064, %v9236
        %v9244 = vsub.f32 %v9065, %v9236
        %v9245 = vsub.f32 %v9066, %v9236
        %v9246 = vsub.f32 %v9067, %v9236
        %v9247 = vsub.f32 %v9068, %v9236
        %v9248 = vsub.f32 %v9069, %v9236
        %v9249 = vsub.f32 %v9070, %v9236
        %v9250 = vsub.f32 %v9071, %v9236
        %v9251 = vsub.f32 %v9072, %v9236
        %v9252 = vsub.f32 %v9073, %v9236
        %v9253 = vsub.f32 %v9074, %v9236
        %v9254 = vsub.f32 %v9075, %v9236
        %v9255 = vsub.f32 %v9076, %v9236
        %v9256 = vsub.f32 %v9077, %v9236
        %v9257 = vsub.f32 %v9078, %v9236
        %v9258 = vsub.f32 %v9079, %v9236
        %v9259 = vsub.f32 %v9080, %v9236
        %v9260 = vsub.f32 %v9081, %v9236
        %v9261 = vsub.f32 %v9082, %v9236
        %v9262 = vsub.f32 %v9083, %v9236
        %v9263 = vsub.f32 %v9084, %v9236
        %v9264 = vsub.f32 %v9085, %v9236
        %v9265 = vsub.f32 %v9086, %v9236
        %v9266 = vsub.f32 %v9087, %v9236
        %v9267 = vsub.f32 %v9088, %v9236
        %v9268 = vsub.f32 %v9089, %v9236
        %v9269 = vmul.f32 %v9237, %v9237
        %v9270 = vmul.f32 %v9238, %v9238
        %v9271 = vmul.f32 %v9239, %v9239
        %v9272 = vmul.f32 %v9240, %v9240
        %v9273 = vmul.f32 %v9241, %v9241
        %v9274 = vmul.f32 %v9242, %v9242
        %v9275 = vmul.f32 %v9243, %v9243
        %v9276 = vmul.f32 %v9244, %v9244
        %v9277 = vmul.f32 %v9245, %v9245
        %v9278 = vmul.f32 %v9246, %v9246
        %v9279 = vmul.f32 %v9247, %v9247
        %v9280 = vmul.f32 %v9248, %v9248
        %v9281 = vmul.f32 %v9249, %v9249
        %v9282 = vmul.f32 %v9250, %v9250
        %v9283 = vmul.f32 %v9251, %v9251
        %v9284 = vmul.f32 %v9252, %v9252
        %v9285 = vmul.f32 %v9253, %v9253
        %v9286 = vmul.f32 %v9254, %v9254
        %v9287 = vmul.f32 %v9255, %v9255
        %v9288 = vmul.f32 %v9256, %v9256
        %v9289 = vmul.f32 %v9257, %v9257
        %v9290 = vmul.f32 %v9258, %v9258
        %v9291 = vmul.f32 %v9259, %v9259
        %v9292 = vmul.f32 %v9260, %v9260
        %v9293 = vmul.f32 %v9261, %v9261
        %v9294 = vmul.f32 %v9262, %v9262
        %v9295 = vmul.f32 %v9263, %v9263
        %v9296 = vmul.f32 %v9264, %v9264
        %v9297 = vmul.f32 %v9265, %v9265
        %v9298 = vmul.f32 %v9266, %v9266
        %v9299 = vmul.f32 %v9267, %v9267
        %v9300 = vmul.f32 %v9268, %v9268
        %v9301 = vsel %vm904, %v9269, 0.0
        %v9302 = vsel %vm904, %v9270, 0.0
        %v9303 = vadd.f32 %v9301, %v9302
        %v9304 = vsel %vm904, %v9271, 0.0
        %v9305 = vadd.f32 %v9303, %v9304
        %v9306 = vsel %vm904, %v9272, 0.0
        %v9307 = vadd.f32 %v9305, %v9306
        %v9308 = vsel %vm904, %v9273, 0.0
        %v9309 = vadd.f32 %v9307, %v9308
        %v9310 = vsel %vm904, %v9274, 0.0
        %v9311 = vadd.f32 %v9309, %v9310
        %v9312 = vsel %vm904, %v9275, 0.0
        %v9313 = vadd.f32 %v9311, %v9312
        %v9314 = vsel %vm904, %v9276, 0.0
        %v9315 = vadd.f32 %v9313, %v9314
        %v9316 = vsel %vm904, %v9277, 0.0
        %v9317 = vadd.f32 %v9315, %v9316
        %v9318 = vsel %vm904, %v9278, 0.0
        %v9319 = vadd.f32 %v9317, %v9318
        %v9320 = vsel %vm904, %v9279, 0.0
        %v9321 = vadd.f32 %v9319, %v9320
        %v9322 = vsel %vm904, %v9280, 0.0
        %v9323 = vadd.f32 %v9321, %v9322
        %v9324 = vsel %vm904, %v9281, 0.0
        %v9325 = vadd.f32 %v9323, %v9324
        %v9326 = vsel %vm904, %v9282, 0.0
        %v9327 = vadd.f32 %v9325, %v9326
        %v9328 = vsel %vm904, %v9283, 0.0
        %v9329 = vadd.f32 %v9327, %v9328
        %v9330 = vsel %vm904, %v9284, 0.0
        %v9331 = vadd.f32 %v9329, %v9330
        %v9332 = vsel %vm904, %v9285, 0.0
        %v9333 = vadd.f32 %v9331, %v9332
        %v9334 = vsel %vm904, %v9286, 0.0
        %v9335 = vadd.f32 %v9333, %v9334
        %v9336 = vsel %vm904, %v9287, 0.0
        %v9337 = vadd.f32 %v9335, %v9336
        %v9338 = vsel %vm904, %v9288, 0.0
        %v9339 = vadd.f32 %v9337, %v9338
        %v9340 = vsel %vm904, %v9289, 0.0
        %v9341 = vadd.f32 %v9339, %v9340
        %v9342 = vsel %vm904, %v9290, 0.0
        %v9343 = vadd.f32 %v9341, %v9342
        %v9344 = vsel %vm904, %v9291, 0.0
        %v9345 = vadd.f32 %v9343, %v9344
        %v9346 = vsel %vm904, %v9292, 0.0
        %v9347 = vadd.f32 %v9345, %v9346
        %v9348 = vsel %vm904, %v9293, 0.0
        %v9349 = vadd.f32 %v9347, %v9348
        %v9350 = vsel %vm904, %v9294, 0.0
        %v9351 = vadd.f32 %v9349, %v9350
        %v9352 = vsel %vm904, %v9295, 0.0
        %v9353 = vadd.f32 %v9351, %v9352
        %v9354 = vsel %vm904, %v9296, 0.0
        %v9355 = vadd.f32 %v9353, %v9354
        %v9356 = vsel %vm904, %v9297, 0.0
        %v9357 = vadd.f32 %v9355, %v9356
        %v9358 = vsel %vm904, %v9298, 0.0
        %v9359 = vadd.f32 %v9357, %v9358
        %v9360 = vsel %vm904, %v9299, 0.0
        %v9361 = vadd.f32 %v9359, %v9360
        %v9362 = vsel %vm904, %v9300, 0.0
        %v9363 = vadd.f32 %v9361, %v9362
        %v9364 = vrot.slane %v9363, 4
        %v9365 = vadd.f32 %v9363, %v9364
        %v9366 = vrot.slane %v9365, 2
        %v9367 = vadd.f32 %v9365, %v9366
        %v9368 = vrot.slane %v9367, 1
        %v9369 = vadd.f32 %v9367, %v9368
        %v9371 = vsel %vm904, %v9369, 0
        %9373 = vmatprep.subr.mxu0 0.0
        %9374 = vmatpush1.msra.mxu0 %v305
        %9375 = vmatprep.subr.mxu0 0.0
        %9376 = vmatpush1.msra.mxu0 %v306
        %9377 = vmatprep.subr.mxu0 0.0
        %9378 = vmatpush1.msra.mxu0 %v307
        %9379 = vmatprep.subr.mxu0 0.0
        %9380 = vmatpush1.msra.mxu0 %v308
        %9381 = vmatprep.subr.mxu0 0.0
        %9382 = vmatpush1.msra.mxu0 0.0
        %9383 = vmatprep.subr.mxu0 0.0
        %9384 = vmatpush1.msra.mxu0 0.0
        %9385 = vmatprep.subr.mxu0 0.0
        %9386 = vmatpush1.msra.mxu0 0.0
        %9387 = vmatprep.subr.mxu0 0.0
        %9388 = vmatpush1.msra.mxu0 0.0
        %9389 = vmatprep.subr.mxu0 0.0
        %9390 = vmatpush1.msra.mxu0 0.0
        %9391 = vmatprep.subr.mxu0 0.0
        %9392 = vmatpush1.msra.mxu0 0.0
        %9393 = vmatprep.subr.mxu0 0.0
        %9394 = vmatpush1.msra.mxu0 0.0
        %9395 = vmatprep.subr.mxu0 0.0
        %9396 = vmatpush1.msra.mxu0 0.0
        %9397 = vmatprep.subr.mxu0 0.0
        %9398 = vmatpush1.msra.mxu0 0.0
        %9399 = vmatprep.subr.mxu0 0.0
        %9400 = vmatpush1.msra.mxu0 0.0
        %9401 = vmatprep.subr.mxu0 0.0
        %9402 = vmatpush1.msra.mxu0 0.0
        %9403 = vmatprep.subr.mxu0 0.0
        %9404 = vmatpush1.msra.mxu0 0.0
        %9405 = vmatprep.subr.mxu0 0.0
        %9406 = vmatpush1.msra.mxu0 0.0
        %9407 = vmatprep.subr.mxu0 0.0
        %9408 = vmatpush1.msra.mxu0 0.0
        %9409 = vmatprep.subr.mxu0 0.0
        %9410 = vmatpush1.msra.mxu0 0.0
        %9411 = vmatprep.subr.mxu0 0.0
        %9412 = vmatpush1.msra.mxu0 0.0
        %9413 = vmatprep.subr.mxu0 0.0
        %9414 = vmatpush1.msra.mxu0 0.0
        %9415 = vmatprep.subr.mxu0 0.0
        %9416 = vmatpush1.msra.mxu0 0.0
        %9417 = vmatprep.subr.mxu0 0.0
        %9418 = vmatpush1.msra.mxu0 0.0
        %9419 = vmatprep.subr.mxu0 0.0
        %9420 = vmatpush1.msra.mxu0 0.0
        %9421 = vmatprep.subr.mxu0 0.0
        %9422 = vmatpush1.msra.mxu0 0.0
        %9423 = vmatprep.subr.mxu0 0.0
        %9424 = vmatpush1.msra.mxu0 0.0
        %9425 = vmatprep.subr.mxu0 0.0
        %9426 = vmatpush1.msra.mxu0 0.0
        %9427 = vmatprep.subr.mxu0 0.0
        %9428 = vmatpush1.msra.mxu0 0.0
        %9429 = vmatprep.subr.mxu0 0.0
        %9430 = vmatpush1.msra.mxu0 0.0
        %9431 = vmatprep.subr.mxu0 0.0
        %9432 = vmatpush1.msra.mxu0 0.0
        %9433 = vmatprep.subr.mxu0 0.0
        %9434 = vmatpush1.msra.mxu0 0.0
        %9435 = vmatprep.subr.mxu0 0.0
        %9436 = vmatpush1.msra.mxu0 0.0
        %9437 = vmatprep.mubr.f32.mxu0 0.0
        %9438 = vmatmul.mubr.f32.gmra.mrb[0].mxu0 %v9371
        %v9439 = vpop.f32.mrb[0].mxu0
        %v9440 = vadd.f32 0.0, %v9439
        %v9441 = vpop.f32.mrb[0].mxu0
        %9442 = vdwg.mxu0
        %v9443 = vmul.f32 %v9440, %v1047
        %v9444 = vadd.f32 %v9443, 1e-05
        %v9445 = vrsqrt.pop %v9444
        %v9446 = vld [vmem:[%s5 + $0x5] sm:$0x1]
        %v9447 = vld [vmem:[%s6 + $0x5] sm:$0x1]
        %v9448 = vlaneseq
        %v9449 = vshrl.u32 %v9448, 7
        %v9450 = vsub.s32 0, %v9449
        %v9451 = vrot.slane %v9445, %v9450
        %v9452 = vmul.f32 %v9237, %v9451
        %v9453 = vmul.f32 %v9238, %v9451
        %v9454 = vmul.f32 %v9239, %v9451
        %v9455 = vmul.f32 %v9240, %v9451
        %v9456 = vmul.f32 %v9241, %v9451
        %v9457 = vmul.f32 %v9242, %v9451
        %v9458 = vmul.f32 %v9243, %v9451
        %v9459 = vmul.f32 %v9244, %v9451
        %v9460 = vmul.f32 %v9245, %v9451
        %v9461 = vmul.f32 %v9246, %v9451
        %v9462 = vmul.f32 %v9247, %v9451
        %v9463 = vmul.f32 %v9248, %v9451
        %v9464 = vmul.f32 %v9249, %v9451
        %v9465 = vmul.f32 %v9250, %v9451
        %v9466 = vmul.f32 %v9251, %v9451
        %v9467 = vmul.f32 %v9252, %v9451
        %v9468 = vmul.f32 %v9253, %v9451
        %v9469 = vmul.f32 %v9254, %v9451
        %v9470 = vmul.f32 %v9255, %v9451
        %v9471 = vmul.f32 %v9256, %v9451
        %v9472 = vmul.f32 %v9257, %v9451
        %v9473 = vmul.f32 %v9258, %v9451
        %v9474 = vmul.f32 %v9259, %v9451
        %v9475 = vmul.f32 %v9260, %v9451
        %v9476 = vmul.f32 %v9261, %v9451
        %v9477 = vmul.f32 %v9262, %v9451
        %v9478 = vmul.f32 %v9263, %v9451
        %v9479 = vmul.f32 %v9264, %v9451
        %v9480 = vmul.f32 %v9265, %v9451
        %v9481 = vmul.f32 %v9266, %v9451
        %v9482 = vmul.f32 %v9267, %v9451
        %v9483 = vmul.f32 %v9268, %v9451
        %v9484 = vlaneseq
        %v9485 = vshrl.u32 %v9484, 7
        %v9486 = vsub.s32 0, %v9485
        %v9487 = vrot.slane %v9446, %v9486
        %v9488 = vmul.f32 %v9452, %v9487
        %v9489 = vmul.f32 %v9453, %v9487
        %v9490 = vmul.f32 %v9454, %v9487
        %v9491 = vmul.f32 %v9455, %v9487
        %v9492 = vmul.f32 %v9456, %v9487
        %v9493 = vmul.f32 %v9457, %v9487
        %v9494 = vmul.f32 %v9458, %v9487
        %v9495 = vmul.f32 %v9459, %v9487
        %v9496 = vmul.f32 %v9460, %v9487
        %v9497 = vmul.f32 %v9461, %v9487
        %v9498 = vmul.f32 %v9462, %v9487
        %v9499 = vmul.f32 %v9463, %v9487
        %v9500 = vmul.f32 %v9464, %v9487
        %v9501 = vmul.f32 %v9465, %v9487
        %v9502 = vmul.f32 %v9466, %v9487
        %v9503 = vmul.f32 %v9467, %v9487
        %v9504 = vmul.f32 %v9468, %v9487
        %v9505 = vmul.f32 %v9469, %v9487
        %v9506 = vmul.f32 %v9470, %v9487
        %v9507 = vmul.f32 %v9471, %v9487
        %v9508 = vmul.f32 %v9472, %v9487
        %v9509 = vmul.f32 %v9473, %v9487
        %v9510 = vmul.f32 %v9474, %v9487
        %v9511 = vmul.f32 %v9475, %v9487
        %v9512 = vmul.f32 %v9476, %v9487
        %v9513 = vmul.f32 %v9477, %v9487
        %v9514 = vmul.f32 %v9478, %v9487
        %v9515 = vmul.f32 %v9479, %v9487
        %v9516 = vmul.f32 %v9480, %v9487
        %v9517 = vmul.f32 %v9481, %v9487
        %v9518 = vmul.f32 %v9482, %v9487
        %v9519 = vmul.f32 %v9483, %v9487
        %v9520 = vlaneseq
        %v9521 = vshrl.u32 %v9520, 7
        %v9522 = vsub.s32 0, %v9521
        %v9523 = vrot.slane %v9447, %v9522
        %v9524 = vadd.f32 %v9488, %v9523
        %v9525 = vadd.f32 %v9489, %v9523
        %v9526 = vadd.f32 %v9490, %v9523
        %v9527 = vadd.f32 %v9491, %v9523
        %v9528 = vadd.f32 %v9492, %v9523
        %v9529 = vadd.f32 %v9493, %v9523
        %v9530 = vadd.f32 %v9494, %v9523
        %v9531 = vadd.f32 %v9495, %v9523
        %v9532 = vadd.f32 %v9496, %v9523
        %v9533 = vadd.f32 %v9497, %v9523
        %v9534 = vadd.f32 %v9498, %v9523
        %v9535 = vadd.f32 %v9499, %v9523
        %v9536 = vadd.f32 %v9500, %v9523
        %v9537 = vadd.f32 %v9501, %v9523
        %v9538 = vadd.f32 %v9502, %v9523
        %v9539 = vadd.f32 %v9503, %v9523
        %v9540 = vadd.f32 %v9504, %v9523
        %v9541 = vadd.f32 %v9505, %v9523
        %v9542 = vadd.f32 %v9506, %v9523
        %v9543 = vadd.f32 %v9507, %v9523
        %v9544 = vadd.f32 %v9508, %v9523
        %v9545 = vadd.f32 %v9509, %v9523
        %v9546 = vadd.f32 %v9510, %v9523
        %v9547 = vadd.f32 %v9511, %v9523
        %v9548 = vadd.f32 %v9512, %v9523
        %v9549 = vadd.f32 %v9513, %v9523
        %v9550 = vadd.f32 %v9514, %v9523
        %v9551 = vadd.f32 %v9515, %v9523
        %v9552 = vadd.f32 %v9516, %v9523
        %v9553 = vadd.f32 %v9517, %v9523
        %v9554 = vadd.f32 %v9518, %v9523
        %v9555 = vadd.f32 %v9519, %v9523
        %v9556 = vmax.f32 %v9524, 0.0
        %v9557 = vmax.f32 %v9525, 0.0
        %v9558 = vmax.f32 %v9526, 0.0
        %v9559 = vmax.f32 %v9527, 0.0
        %v9560 = vmax.f32 %v9528, 0.0
        %v9561 = vmax.f32 %v9529, 0.0
        %v9562 = vmax.f32 %v9530, 0.0
        %v9563 = vmax.f32 %v9531, 0.0
        %v9564 = vmax.f32 %v9532, 0.0
        %v9565 = vmax.f32 %v9533, 0.0
        %v9566 = vmax.f32 %v9534, 0.0
        %v9567 = vmax.f32 %v9535, 0.0
        %v9568 = vmax.f32 %v9536, 0.0
        %v9569 = vmax.f32 %v9537, 0.0
        %v9570 = vmax.f32 %v9538, 0.0
        %v9571 = vmax.f32 %v9539, 0.0
        %v9572 = vmax.f32 %v9540, 0.0
        %v9573 = vmax.f32 %v9541, 0.0
        %v9574 = vmax.f32 %v9542, 0.0
        %v9575 = vmax.f32 %v9543, 0.0
        %v9576 = vmax.f32 %v9544, 0.0
        %v9577 = vmax.f32 %v9545, 0.0
        %v9578 = vmax.f32 %v9546, 0.0
        %v9579 = vmax.f32 %v9547, 0.0
        %v9580 = vmax.f32 %v9548, 0.0
        %v9581 = vmax.f32 %v9549, 0.0
        %v9582 = vmax.f32 %v9550, 0.0
        %v9583 = vmax.f32 %v9551, 0.0
        %v9584 = vmax.f32 %v9552, 0.0
        %v9585 = vmax.f32 %v9553, 0.0
        %v9586 = vmax.f32 %v9554, 0.0
        %v9587 = vmax.f32 %v9555, 0.0
        %9588 = vst.msk [vmem:[%s298] sm:$0xff] %vm904, %v9556
        %9589 = vst.msk [vmem:[%s298 + $0x8] sm:$0xff] %vm904, %v9557
        %9590 = vst.msk [vmem:[%s298 + $0x10] sm:$0xff] %vm904, %v9558
        %9591 = vst.msk [vmem:[%s298 + $0x18] sm:$0xff] %vm904, %v9559
        %9592 = vst.msk [vmem:[%s298 + $0x20] sm:$0xff] %vm904, %v9560
        %9593 = vst.msk [vmem:[%s298 + $0x28] sm:$0xff] %vm904, %v9561
        %9594 = vst.msk [vmem:[%s298 + $0x30] sm:$0xff] %vm904, %v9562
        %9595 = vst.msk [vmem:[%s298 + $0x38] sm:$0xff] %vm904, %v9563
        %9596 = vst.msk [vmem:[%s298 + $0x40] sm:$0xff] %vm904, %v9564
        %9597 = vst.msk [vmem:[%s298 + $0x48] sm:$0xff] %vm904, %v9565
        %9598 = vst.msk [vmem:[%s298 + $0x50] sm:$0xff] %vm904, %v9566
        %9599 = vst.msk [vmem:[%s298 + $0x58] sm:$0xff] %vm904, %v9567
        %9600 = vst.msk [vmem:[%s298 + $0x60] sm:$0xff] %vm904, %v9568
        %9601 = vst.msk [vmem:[%s298 + $0x68] sm:$0xff] %vm904, %v9569
        %9602 = vst.msk [vmem:[%s298 + $0x70] sm:$0xff] %vm904, %v9570
        %9603 = vst.msk [vmem:[%s298 + $0x78] sm:$0xff] %vm904, %v9571
        %9604 = vst.msk [vmem:[%s298 + $0x80] sm:$0xff] %vm904, %v9572
        %9605 = vst.msk [vmem:[%s298 + $0x88] sm:$0xff] %vm904, %v9573
        %9606 = vst.msk [vmem:[%s298 + $0x90] sm:$0xff] %vm904, %v9574
        %9607 = vst.msk [vmem:[%s298 + $0x98] sm:$0xff] %vm904, %v9575
        %9608 = vst.msk [vmem:[%s298 + $0xa0] sm:$0xff] %vm904, %v9576
        %9609 = vst.msk [vmem:[%s298 + $0xa8] sm:$0xff] %vm904, %v9577
        %9610 = vst.msk [vmem:[%s298 + $0xb0] sm:$0xff] %vm904, %v9578
        %9611 = vst.msk [vmem:[%s298 + $0xb8] sm:$0xff] %vm904, %v9579
        %9612 = vst.msk [vmem:[%s298 + $0xc0] sm:$0xff] %vm904, %v9580
        %9613 = vst.msk [vmem:[%s298 + $0xc8] sm:$0xff] %vm904, %v9581
        %9614 = vst.msk [vmem:[%s298 + $0xd0] sm:$0xff] %vm904, %v9582
        %9615 = vst.msk [vmem:[%s298 + $0xd8] sm:$0xff] %vm904, %v9583
        %9616 = vst.msk [vmem:[%s298 + $0xe0] sm:$0xff] %vm904, %v9584
        %9617 = vst.msk [vmem:[%s298 + $0xe8] sm:$0xff] %vm904, %v9585
        %9618 = vst.msk [vmem:[%s298 + $0xf0] sm:$0xff] %vm904, %v9586
        %9619 = vst.msk [vmem:[%s298 + $0xf8] sm:$0xff] %vm904, %v9587
        %s9620 = sand.u32 %s203, 1
        %s9621 = scalar_lea.sflag [#allocation4], %s9620
        %s9622 = sand.u32 %s203, 1
        %s9623 = smul.addr %s9622, 256
        %s9624 = scalar_lea.vmem [#allocation3], %s9623
        // Predicated region
        $region53: #{tpu_custom_call.1} parent=51 // pred_check
          %p9625 = pneg %p213
        $region54: #{tpu_custom_call.1} parent=51 // pred_check_branch
          %9627 = sbr.rel (%p9625) target = $region56
        $region55: #{tpu_custom_call.1} parent=51 // pred_region
          %s9629 = ssub.s32 4096, 4096
          %9630 = vsyncadd %s9621, %s9629
          %s9631 = smul.addr %s22, 32
          %s9632 = smul.addr %s9631, 128
          %s9633 = scalar_lea.hbm %s8, %s9632
          %s9634 = sshll.u32 %s9624, 4
          %s9635 = int_to_ptr.vmem [resolvable:$true] %s9634
          %9640 = dma.vmem_to_hbm [thread:$0]  %s9635, 4096, %s9633, %s9621, 128, 128, 8
        $region56: #{tpu_custom_call.1} parent=51 // pred_fallthru
          _
      $region52: #{tpu_custom_call.1} parent=5 // pred_fallthru
        _
      %p9641 = scmp.le.s32.totalorder 2, %s17
      // Predicated region
      $region57: #{tpu_custom_call.1} parent=5 // pred_check
        %p9642 = pneg %p9641
      $region58: #{tpu_custom_call.1} parent=5 // pred_check_branch
        %9644 = sbr.rel (%p9642) target = $region60
      $region59: #{tpu_custom_call.1} parent=5 // pred_region
        %s9645 = ssub.s32 %s17, 2
        // Predicated region
        $region61: #{tpu_custom_call.1} parent=59 // pred_check
          %p9646 = pneg %p219
        $region62: #{tpu_custom_call.1} parent=59 // pred_check_branch
          %9648 = sbr.rel (%p9646) target = $region64
        $region63: #{tpu_custom_call.1} parent=59 // pred_region
          %s9649 = sand.u32 %s204, 1
          %s9650 = scalar_lea.sflag [#allocation4], %s9649
          %s9651 = sand.u32 %s204, 1
          %s9652 = smul.addr %s9651, 256
          %s9653 = scalar_lea.vmem [#allocation3], %s9652
          %9654 = dma.done %s9650, 4096
        $region64: #{tpu_custom_call.1} parent=59 // pred_fallthru
          _
      $region60: #{tpu_custom_call.1} parent=5 // pred_fallthru
        _
    $region6: #{tpu_custom_call.1} parent=1 // loop_footer
      %s21 = sadd.s32 1, %s17
    $region7: #{tpu_custom_call.1} parent=1 // loop_footer_branch
      %16 = sbr.rel target = $region3
    $region8: #{tpu_custom_call.1} parent=1 // loop_exit
      _
    %9655 = vsyncpa [#allocation4], 1
    %s9656 = scalar_lea.sflag [#allocation4], 1
    %9657 = vsyncpa %s9656, 1

</llo_original>
